<compile_context>
chip_gen: v6e
topology: v6e:2x2x1
jax: 0.10.0
libtpu: 0.0.40
codegen_flags: <defaults>
</compile_context>

<pallas_src>
import functools

import numpy as np
import jax
import jax.numpy as jnp
from jax.experimental import pallas as pl
from jax.experimental.pallas import tpu as pltpu


# ----------------------------------------------------------------------------
# Fused Pallas kernel: whole LeNet forward for one batch tile of B images.
# Activation layout inside the kernel: rows = (b, h), lanes = (w, c) flattened.
# ----------------------------------------------------------------------------
def _lenet_kernel(x_ref, t1_ref, bf1_ref, pw1_ref,
                  t2_ref, bf2_ref, pw2_ref,
                  t3_ref, b3_ref, w1_ref, b1_ref, w2_ref, b2_ref,
                  o_ref, *, B):
    f32 = jnp.float32

    # ---- conv1: 32x32x1 -> 28x28x6, result layout (B*28, 28*6) -------------
    x3 = x_ref[...].reshape(B, 32, 32)                      # (B, H, W*CI)
    acc = jnp.zeros((B * 28, 28 * 6), f32)
    for kh in range(5):                                     # 5 dense matmuls, K=32
        slab = x3[:, kh:kh + 28, :].reshape(B * 28, 32)
        acc = acc + jnp.dot(slab, t1_ref[kh], preferred_element_type=f32)
    acc = jnp.maximum(acc + bf1_ref[...], 0.0)

    # ---- 2x2 avg-pool -> (B*14, 14*6): H pair on VPU, W pair via lane matmul
    r = acc.reshape(B * 14, 2, 28 * 6)
    hsum = r[:, 0, :] + r[:, 1, :]                          # (B*14, 168)
    p1 = jnp.dot(hsum, pw1_ref[...], preferred_element_type=f32)   # (B*14, 84)

    # ---- conv2: 14x14x6 -> 10x10x16, result layout (B*10, 10*16) -----------
    x3 = p1.reshape(B, 14, 14 * 6)
    acc = jnp.zeros((B * 10, 10 * 16), f32)
    for kh in range(5):                                     # K = 84
        slab = x3[:, kh:kh + 10, :].reshape(B * 10, 14 * 6)
        acc = acc + jnp.dot(slab, t2_ref[kh], preferred_element_type=f32)
    acc = jnp.maximum(acc + bf2_ref[...], 0.0)

    # ---- 2x2 avg-pool -> (B*5, 5*16) ----------------------------------------
    r = acc.reshape(B * 5, 2, 10 * 16)
    hsum = r[:, 0, :] + r[:, 1, :]                          # (B*5, 160)
    p2 = jnp.dot(hsum, pw2_ref[...], preferred_element_type=f32)   # (B*5, 80)

    # ---- conv3: 5x5x16 -> 1x1x120 (zero-padded to 128 lanes) ----------------
    x3 = p2.reshape(B, 5, 5 * 16)
    acc = jnp.zeros((B, 128), f32)
    for kh in range(5):                                     # K = 80
        slab = x3[:, kh:kh + 1, :].reshape(B, 5 * 16)
        acc = acc + jnp.dot(slab, t3_ref[kh], preferred_element_type=f32)
    acc = jnp.maximum(acc + b3_ref[...], 0.0)               # (B, 128)

    # ---- linear1 + relu + linear2 (all 128-lane padded) ---------------------
    h = jnp.maximum(jnp.dot(acc, w1_ref[...], preferred_element_type=f32)
                    + b1_ref[...], 0.0)
    o_ref[...] = jnp.dot(h, w2_ref[...], preferred_element_type=f32) + b2_ref[...]


# ----------------------------------------------------------------------------
# Host-side (exact) weight preprocessing: Toeplitz conv weights, tiled biases,
# lane-contraction pool matrices, 128-lane zero padding for the head.
# ----------------------------------------------------------------------------
def _prepare_operands(p):
    def toeplitz(w, w_in):
        # w: (KH, KW, CI, CO) -> T: (KH, W_in*CI, OW*CO) such that for each kh
        #   y[., ow*CO+co] = sum_{w,ci} x[., w*CI+ci] * T[kh, w*CI+ci, ow*CO+co]
        KH, KW, CI, CO = w.shape
        OW = w_in - KW + 1
        sel = (np.arange(w_in)[None, :, None] ==
               (np.arange(KW)[:, None, None] + np.arange(OW)[None, None, :]))
        sel = jnp.asarray(sel.astype(np.float32))            # (KW, W_in, OW)
        t = jnp.einsum("xwv,kxio->kwivo", sel, w)            # (KH, W_in, CI, OW, CO)
        return t.reshape(KH, w_in * CI, OW * CO)

    def wpool(ow, co):
        # (OW*CO, (OW//2)*CO) matrix averaging adjacent W pairs; the 0.25 also
        # accounts for the preceding H-pair *sum*.
        pairs = np.kron(np.eye(ow // 2, dtype=np.float32),
                        np.ones((2, 1), np.float32))         # (OW, OW//2)
        return jnp.asarray(0.25 * np.kron(pairs, np.eye(co, dtype=np.float32)))

    return dict(
        t1=toeplitz(p["conv1_w"], 32),                 # (5, 32, 168)
        bf1=jnp.tile(p["conv1_b"], (1, 28)),           # (1, 168)
        pw1=wpool(28, 6),                              # (168, 84)
        t2=toeplitz(p["conv2_w"], 14),                 # (5, 84, 160)
        bf2=jnp.tile(p["conv2_b"], (1, 10)),           # (1, 160)
        pw2=wpool(10, 16),                             # (160, 80)
        t3=jnp.pad(p["conv3_w"].reshape(5, 80, 120), ((0, 0), (0, 0), (0, 8))),
        b3=jnp.pad(p["conv3_b"], ((0, 0), (0, 8))),    # (1, 128)
        w1=jnp.pad(p["lin1_w"], ((0, 8), (0, 44))),    # (128, 128)
        b1=jnp.pad(p["lin1_b"], ((0, 0), (0, 44))),    # (1, 128)
        w2=jnp.pad(p["lin2_w"], ((0, 44), (0, 118))),  # (128, 128)
        b2=jnp.pad(p["lin2_b"], ((0, 0), (0, 118))),   # (1, 128)
    )


# ----------------------------------------------------------------------------
# Wrapper: one fused pallas_call, grid over batch tiles.
# ----------------------------------------------------------------------------
def lenet_pallas(x_nchw, params, *, b_tile=8):
    """x_nchw: (N, 1, 32, 32) float32 -> (N, 10) logits."""
    N = x_nchw.shape[0]
    ops = _prepare_operands(params)

    # NCHW -> rows (n, h), lanes (w, ci=1): the layout the kernel expects.
    x2 = jnp.transpose(x_nchw, (0, 2, 3, 1)).reshape(N * 32, 32)
    n_pad = ((N + b_tile - 1) // b_tile) * b_tile
    if n_pad != N:
        x2 = jnp.pad(x2, ((0, (n_pad - N) * 32), (0, 0)))

    def full(a):
        return pl.BlockSpec(a.shape, lambda i, nd=a.ndim: (0,) * nd)

    out = pl.pallas_call(
        functools.partial(_lenet_kernel, B=b_tile),
        out_shape=jax.ShapeDtypeStruct((n_pad, 128), jnp.float32),
        grid=(n_pad // b_tile,),
        in_specs=[
            pl.BlockSpec((b_tile * 32, 32), lambda i: (i, 0)),
            full(ops["t1"]), full(ops["bf1"]), full(ops["pw1"]),
            full(ops["t2"]), full(ops["bf2"]), full(ops["pw2"]),
            full(ops["t3"]), full(ops["b3"]),
            full(ops["w1"]), full(ops["b1"]),
            full(ops["w2"]), full(ops["b2"]),
        ],
        out_specs=pl.BlockSpec((b_tile, 128), lambda i: (i, 0)),
        compiler_params=pltpu.CompilerParams(
            dimension_semantics=("parallel",)),
    )(x2, ops["t1"], ops["bf1"], ops["pw1"],
      ops["t2"], ops["bf2"], ops["pw2"],
      ops["t3"], ops["b3"], ops["w1"], ops["b1"], ops["w2"], ops["b2"])

    return out[:N, :10]


# ----------------------------------------------------------------------------
# Parameter init (deterministic, PyTorch-default-style uniform bounds)
# ----------------------------------------------------------------------------
def init_params(key):
    def uniform(key, shape, fan_in):
        bound = 1.0 / np.sqrt(fan_in)
        return jax.random.uniform(key, shape, jnp.float32, -bound, bound)

    ks = jax.random.split(key, 10)
    return dict(
        conv1_w=uniform(ks[0], (5, 5, 1, 6), 1 * 25),
        conv1_b=uniform(ks[1], (1, 6), 1 * 25),
        conv2_w=uniform(ks[2], (5, 5, 6, 16), 6 * 25),
        conv2_b=uniform(ks[3], (1, 16), 6 * 25),
        conv3_w=uniform(ks[4], (5, 5, 16, 120), 16 * 25),
        conv3_b=uniform(ks[5], (1, 120), 16 * 25),
        lin1_w=uniform(ks[6], (120, 84), 120),
        lin1_b=uniform(ks[7], (1, 84), 120),
        lin2_w=uniform(ks[8], (84, 10), 84),
        lin2_b=uniform(ks[9], (1, 10), 84),
    )


# ----------------------------------------------------------------------------
# Pure-JAX reference (same math as the PyTorch module)
# ----------------------------------------------------------------------------
def lenet_reference(x_nchw, p):
    x = jnp.transpose(x_nchw, (0, 2, 3, 1))

    def conv(x, w, b):
        y = jax.lax.conv_general_dilated(
            x, w, (1, 1), "VALID",
            dimension_numbers=("NHWC", "HWIO", "NHWC"))
        return jnp.maximum(y + b, 0.0)

    def pool(x):
        N, H, W, C = x.shape
        return x.reshape(N, H // 2, 2, W // 2, 2, C).mean(axis=(2, 4))

    x = pool(conv(x, p["conv1_w"], p["conv1_b"]))
    x = pool(conv(x, p["conv2_w"], p["conv2_b"]))
    x = conv(x, p["conv3_w"], p["conv3_b"])
    x = x.reshape(x.shape[0], -1)
    x = jnp.maximum(x @ p["lin1_w"] + p["lin1_b"], 0.0)
    return x @ p["lin2_w"] + p["lin2_b"]


if __name__ == "__main__":
    key = jax.random.PRNGKey(0)
    k_in, k_params = jax.random.split(key)

    # LeNet-5 requires 32x32 single-channel NCHW input (like PyTorch).
    batch = 16                       # two batch tiles of 8 -> 2 parallel grid steps
    x = jax.random.normal(k_in, (batch, 1, 32, 32), jnp.float32)
    params = init_params(k_params)

    out = jax.block_until_ready(lenet_pallas(x, params))
    assert out.shape == (batch, 10), out.shape

    ref = jax.block_until_ready(lenet_reference(x, params))
    np.testing.assert_allclose(np.asarray(out), np.asarray(ref),
                               rtol=1e-4, atol=1e-3)

    print("KERNEL_OK")
</pallas_src>

<mosaic_0001>
module attributes {stable_mosaic.version = 11 : i64} {
  func.func @_lenet_kernel(%arg0: i32, %arg1: memref<256x32xf32, #tpu.memory_space<vmem>>, %arg2: memref<5x32x168xf32, #tpu.memory_space<vmem>>, %arg3: memref<1x168xf32, #tpu.memory_space<vmem>>, %arg4: memref<168x84xf32, #tpu.memory_space<vmem>>, %arg5: memref<5x84x160xf32, #tpu.memory_space<vmem>>, %arg6: memref<1x160xf32, #tpu.memory_space<vmem>>, %arg7: memref<160x80xf32, #tpu.memory_space<vmem>>, %arg8: memref<5x80x128xf32, #tpu.memory_space<vmem>>, %arg9: memref<1x128xf32, #tpu.memory_space<vmem>>, %arg10: memref<128x128xf32, #tpu.memory_space<vmem>>, %arg11: memref<1x128xf32, #tpu.memory_space<vmem>>, %arg12: memref<128x128xf32, #tpu.memory_space<vmem>>, %arg13: memref<1x128xf32, #tpu.memory_space<vmem>>, %arg14: memref<8x128xf32, #tpu.memory_space<vmem>>) attributes {dimension_semantics = [#tpu.dimension_semantics<parallel>], iteration_bounds = array<i64: 2>, scalar_prefetch = 0 : i64, scratch_operands = 0 : i64, tpu.core_type = #tpu.core_type<tc>, window_params = [{transform_indices = @transform_0, window_bounds = array<i64: 256, 32>}, {pipeline_mode = #tpu.pipeline_mode<synchronous>, transform_indices = @transform_1, window_bounds = array<i64: 5, 32, 168>}, {pipeline_mode = #tpu.pipeline_mode<synchronous>, transform_indices = @transform_2, window_bounds = array<i64: 1, 168>}, {pipeline_mode = #tpu.pipeline_mode<synchronous>, transform_indices = @transform_3, window_bounds = array<i64: 168, 84>}, {pipeline_mode = #tpu.pipeline_mode<synchronous>, transform_indices = @transform_4, window_bounds = array<i64: 5, 84, 160>}, {pipeline_mode = #tpu.pipeline_mode<synchronous>, transform_indices = @transform_5, window_bounds = array<i64: 1, 160>}, {pipeline_mode = #tpu.pipeline_mode<synchronous>, transform_indices = @transform_6, window_bounds = array<i64: 160, 80>}, {pipeline_mode = #tpu.pipeline_mode<synchronous>, transform_indices = @transform_7, window_bounds = array<i64: 5, 80, 128>}, {pipeline_mode = #tpu.pipeline_mode<synchronous>, transform_indices = @transform_8, window_bounds = array<i64: 1, 128>}, {pipeline_mode = #tpu.pipeline_mode<synchronous>, transform_indices = @transform_9, window_bounds = array<i64: 128, 128>}, {pipeline_mode = #tpu.pipeline_mode<synchronous>, transform_indices = @transform_10, window_bounds = array<i64: 1, 128>}, {pipeline_mode = #tpu.pipeline_mode<synchronous>, transform_indices = @transform_11, window_bounds = array<i64: 128, 128>}, {pipeline_mode = #tpu.pipeline_mode<synchronous>, transform_indices = @transform_12, window_bounds = array<i64: 1, 128>}, {transform_indices = @transform_13, window_bounds = array<i64: 8, 128>}]} {
    %c0 = arith.constant 0 : index
    %c0_0 = arith.constant 0 : index
    %0 = vector.load %arg1[%c0, %c0_0] : memref<256x32xf32, #tpu.memory_space<vmem>>, vector<256x32xf32>
    %1 = vector.shape_cast %0 : vector<256x32xf32> to vector<8x32x32xf32>
    %cst = arith.constant 0.000000e+00 : f32
    %2 = vector.broadcast %cst : f32 to vector<224x168xf32>
    %3 = vector.extract_strided_slice %1 {offsets = [0, 0, 0], sizes = [8, 28, 32], strides = [1, 1, 1]} : vector<8x32x32xf32> to vector<8x28x32xf32>
    %4 = vector.shape_cast %3 : vector<8x28x32xf32> to vector<224x32xf32>
    %c0_1 = arith.constant 0 : index
    %c0_2 = arith.constant 0 : index
    %c0_3 = arith.constant 0 : index
    %5 = vector.load %arg2[%c0_1, %c0_2, %c0_3] : memref<5x32x168xf32, #tpu.memory_space<vmem>>, vector<1x32x168xf32>
    %6 = vector.shape_cast %5 : vector<1x32x168xf32> to vector<32x168xf32>
    %cst_4 = arith.constant dense<0.000000e+00> : vector<224x168xf32>
    %7 = tpu.matmul %4, %6, %cst_4 {dimension_numbers = #tpu.dot_dimension_numbers<[1], [0], [0], [1], [0, 0, 1, 1], [], []>} : vector<224x32xf32>, vector<32x168xf32>, vector<224x168xf32> -> vector<224x168xf32>
    %8 = arith.addf %2, %7 : vector<224x168xf32>
    %9 = vector.extract_strided_slice %1 {offsets = [0, 1, 0], sizes = [8, 28, 32], strides = [1, 1, 1]} : vector<8x32x32xf32> to vector<8x28x32xf32>
    %10 = vector.shape_cast %9 : vector<8x28x32xf32> to vector<224x32xf32>
    %c1 = arith.constant 1 : index
    %c0_5 = arith.constant 0 : index
    %c0_6 = arith.constant 0 : index
    %11 = vector.load %arg2[%c1, %c0_5, %c0_6] : memref<5x32x168xf32, #tpu.memory_space<vmem>>, vector<1x32x168xf32>
    %12 = vector.shape_cast %11 : vector<1x32x168xf32> to vector<32x168xf32>
    %cst_7 = arith.constant dense<0.000000e+00> : vector<224x168xf32>
    %13 = tpu.matmul %10, %12, %cst_7 {dimension_numbers = #tpu.dot_dimension_numbers<[1], [0], [0], [1], [0, 0, 1, 1], [], []>} : vector<224x32xf32>, vector<32x168xf32>, vector<224x168xf32> -> vector<224x168xf32>
    %14 = arith.addf %8, %13 : vector<224x168xf32>
    %15 = vector.extract_strided_slice %1 {offsets = [0, 2, 0], sizes = [8, 28, 32], strides = [1, 1, 1]} : vector<8x32x32xf32> to vector<8x28x32xf32>
    %16 = vector.shape_cast %15 : vector<8x28x32xf32> to vector<224x32xf32>
    %c2 = arith.constant 2 : index
    %c0_8 = arith.constant 0 : index
    %c0_9 = arith.constant 0 : index
    %17 = vector.load %arg2[%c2, %c0_8, %c0_9] : memref<5x32x168xf32, #tpu.memory_space<vmem>>, vector<1x32x168xf32>
    %18 = vector.shape_cast %17 : vector<1x32x168xf32> to vector<32x168xf32>
    %cst_10 = arith.constant dense<0.000000e+00> : vector<224x168xf32>
    %19 = tpu.matmul %16, %18, %cst_10 {dimension_numbers = #tpu.dot_dimension_numbers<[1], [0], [0], [1], [0, 0, 1, 1], [], []>} : vector<224x32xf32>, vector<32x168xf32>, vector<224x168xf32> -> vector<224x168xf32>
    %20 = arith.addf %14, %19 : vector<224x168xf32>
    %21 = vector.extract_strided_slice %1 {offsets = [0, 3, 0], sizes = [8, 28, 32], strides = [1, 1, 1]} : vector<8x32x32xf32> to vector<8x28x32xf32>
    %22 = vector.shape_cast %21 : vector<8x28x32xf32> to vector<224x32xf32>
    %c3 = arith.constant 3 : index
    %c0_11 = arith.constant 0 : index
    %c0_12 = arith.constant 0 : index
    %23 = vector.load %arg2[%c3, %c0_11, %c0_12] : memref<5x32x168xf32, #tpu.memory_space<vmem>>, vector<1x32x168xf32>
    %24 = vector.shape_cast %23 : vector<1x32x168xf32> to vector<32x168xf32>
    %cst_13 = arith.constant dense<0.000000e+00> : vector<224x168xf32>
    %25 = tpu.matmul %22, %24, %cst_13 {dimension_numbers = #tpu.dot_dimension_numbers<[1], [0], [0], [1], [0, 0, 1, 1], [], []>} : vector<224x32xf32>, vector<32x168xf32>, vector<224x168xf32> -> vector<224x168xf32>
    %26 = arith.addf %20, %25 : vector<224x168xf32>
    %27 = vector.extract_strided_slice %1 {offsets = [0, 4, 0], sizes = [8, 28, 32], strides = [1, 1, 1]} : vector<8x32x32xf32> to vector<8x28x32xf32>
    %28 = vector.shape_cast %27 : vector<8x28x32xf32> to vector<224x32xf32>
    %c4 = arith.constant 4 : index
    %c0_14 = arith.constant 0 : index
    %c0_15 = arith.constant 0 : index
    %29 = vector.load %arg2[%c4, %c0_14, %c0_15] : memref<5x32x168xf32, #tpu.memory_space<vmem>>, vector<1x32x168xf32>
    %30 = vector.shape_cast %29 : vector<1x32x168xf32> to vector<32x168xf32>
    %cst_16 = arith.constant dense<0.000000e+00> : vector<224x168xf32>
    %31 = tpu.matmul %28, %30, %cst_16 {dimension_numbers = #tpu.dot_dimension_numbers<[1], [0], [0], [1], [0, 0, 1, 1], [], []>} : vector<224x32xf32>, vector<32x168xf32>, vector<224x168xf32> -> vector<224x168xf32>
    %32 = arith.addf %26, %31 : vector<224x168xf32>
    %c0_17 = arith.constant 0 : index
    %c0_18 = arith.constant 0 : index
    %33 = vector.load %arg3[%c0_17, %c0_18] : memref<1x168xf32, #tpu.memory_space<vmem>>, vector<1x168xf32>
    %34 = vector.broadcast %33 : vector<1x168xf32> to vector<224x168xf32>
    %35 = arith.addf %32, %34 : vector<224x168xf32>
    %cst_19 = arith.constant 0.000000e+00 : f32
    %36 = vector.broadcast %cst_19 : f32 to vector<224x168xf32>
    %37 = arith.maximumf %35, %36 : vector<224x168xf32>
    %38 = vector.shape_cast %37 : vector<224x168xf32> to vector<112x2x168xf32>
    %39 = vector.extract_strided_slice %38 {offsets = [0, 0, 0], sizes = [112, 1, 168], strides = [1, 1, 1]} : vector<112x2x168xf32> to vector<112x1x168xf32>
    %40 = vector.shape_cast %39 : vector<112x1x168xf32> to vector<112x168xf32>
    %41 = vector.extract_strided_slice %38 {offsets = [0, 1, 0], sizes = [112, 1, 168], strides = [1, 1, 1]} : vector<112x2x168xf32> to vector<112x1x168xf32>
    %42 = vector.shape_cast %41 : vector<112x1x168xf32> to vector<112x168xf32>
    %43 = arith.addf %40, %42 : vector<112x168xf32>
    %c0_20 = arith.constant 0 : index
    %c0_21 = arith.constant 0 : index
    %44 = vector.load %arg4[%c0_20, %c0_21] : memref<168x84xf32, #tpu.memory_space<vmem>>, vector<168x84xf32>
    %cst_22 = arith.constant dense<0.000000e+00> : vector<112x84xf32>
    %45 = tpu.matmul %43, %44, %cst_22 {dimension_numbers = #tpu.dot_dimension_numbers<[1], [0], [0], [1], [0, 0, 1, 1], [], []>} : vector<112x168xf32>, vector<168x84xf32>, vector<112x84xf32> -> vector<112x84xf32>
    %46 = vector.shape_cast %45 : vector<112x84xf32> to vector<8x14x84xf32>
    %cst_23 = arith.constant 0.000000e+00 : f32
    %47 = vector.broadcast %cst_23 : f32 to vector<80x160xf32>
    %48 = vector.extract_strided_slice %46 {offsets = [0, 0, 0], sizes = [8, 10, 84], strides = [1, 1, 1]} : vector<8x14x84xf32> to vector<8x10x84xf32>
    %49 = vector.shape_cast %48 : vector<8x10x84xf32> to vector<80x84xf32>
    %c0_24 = arith.constant 0 : index
    %c0_25 = arith.constant 0 : index
    %c0_26 = arith.constant 0 : index
    %50 = vector.load %arg5[%c0_24, %c0_25, %c0_26] : memref<5x84x160xf32, #tpu.memory_space<vmem>>, vector<1x84x160xf32>
    %51 = vector.shape_cast %50 : vector<1x84x160xf32> to vector<84x160xf32>
    %cst_27 = arith.constant dense<0.000000e+00> : vector<80x160xf32>
    %52 = tpu.matmul %49, %51, %cst_27 {dimension_numbers = #tpu.dot_dimension_numbers<[1], [0], [0], [1], [0, 0, 1, 1], [], []>} : vector<80x84xf32>, vector<84x160xf32>, vector<80x160xf32> -> vector<80x160xf32>
    %53 = arith.addf %47, %52 : vector<80x160xf32>
    %54 = vector.extract_strided_slice %46 {offsets = [0, 1, 0], sizes = [8, 10, 84], strides = [1, 1, 1]} : vector<8x14x84xf32> to vector<8x10x84xf32>
    %55 = vector.shape_cast %54 : vector<8x10x84xf32> to vector<80x84xf32>
    %c1_28 = arith.constant 1 : index
    %c0_29 = arith.constant 0 : index
    %c0_30 = arith.constant 0 : index
    %56 = vector.load %arg5[%c1_28, %c0_29, %c0_30] : memref<5x84x160xf32, #tpu.memory_space<vmem>>, vector<1x84x160xf32>
    %57 = vector.shape_cast %56 : vector<1x84x160xf32> to vector<84x160xf32>
    %cst_31 = arith.constant dense<0.000000e+00> : vector<80x160xf32>
    %58 = tpu.matmul %55, %57, %cst_31 {dimension_numbers = #tpu.dot_dimension_numbers<[1], [0], [0], [1], [0, 0, 1, 1], [], []>} : vector<80x84xf32>, vector<84x160xf32>, vector<80x160xf32> -> vector<80x160xf32>
    %59 = arith.addf %53, %58 : vector<80x160xf32>
    %60 = vector.extract_strided_slice %46 {offsets = [0, 2, 0], sizes = [8, 10, 84], strides = [1, 1, 1]} : vector<8x14x84xf32> to vector<8x10x84xf32>
    %61 = vector.shape_cast %60 : vector<8x10x84xf32> to vector<80x84xf32>
    %c2_32 = arith.constant 2 : index
    %c0_33 = arith.constant 0 : index
    %c0_34 = arith.constant 0 : index
    %62 = vector.load %arg5[%c2_32, %c0_33, %c0_34] : memref<5x84x160xf32, #tpu.memory_space<vmem>>, vector<1x84x160xf32>
    %63 = vector.shape_cast %62 : vector<1x84x160xf32> to vector<84x160xf32>
    %cst_35 = arith.constant dense<0.000000e+00> : vector<80x160xf32>
    %64 = tpu.matmul %61, %63, %cst_35 {dimension_numbers = #tpu.dot_dimension_numbers<[1], [0], [0], [1], [0, 0, 1, 1], [], []>} : vector<80x84xf32>, vector<84x160xf32>, vector<80x160xf32> -> vector<80x160xf32>
    %65 = arith.addf %59, %64 : vector<80x160xf32>
    %66 = vector.extract_strided_slice %46 {offsets = [0, 3, 0], sizes = [8, 10, 84], strides = [1, 1, 1]} : vector<8x14x84xf32> to vector<8x10x84xf32>
    %67 = vector.shape_cast %66 : vector<8x10x84xf32> to vector<80x84xf32>
    %c3_36 = arith.constant 3 : index
    %c0_37 = arith.constant 0 : index
    %c0_38 = arith.constant 0 : index
    %68 = vector.load %arg5[%c3_36, %c0_37, %c0_38] : memref<5x84x160xf32, #tpu.memory_space<vmem>>, vector<1x84x160xf32>
    %69 = vector.shape_cast %68 : vector<1x84x160xf32> to vector<84x160xf32>
    %cst_39 = arith.constant dense<0.000000e+00> : vector<80x160xf32>
    %70 = tpu.matmul %67, %69, %cst_39 {dimension_numbers = #tpu.dot_dimension_numbers<[1], [0], [0], [1], [0, 0, 1, 1], [], []>} : vector<80x84xf32>, vector<84x160xf32>, vector<80x160xf32> -> vector<80x160xf32>
    %71 = arith.addf %65, %70 : vector<80x160xf32>
    %72 = vector.extract_strided_slice %46 {offsets = [0, 4, 0], sizes = [8, 10, 84], strides = [1, 1, 1]} : vector<8x14x84xf32> to vector<8x10x84xf32>
    %73 = vector.shape_cast %72 : vector<8x10x84xf32> to vector<80x84xf32>
    %c4_40 = arith.constant 4 : index
    %c0_41 = arith.constant 0 : index
    %c0_42 = arith.constant 0 : index
    %74 = vector.load %arg5[%c4_40, %c0_41, %c0_42] : memref<5x84x160xf32, #tpu.memory_space<vmem>>, vector<1x84x160xf32>
    %75 = vector.shape_cast %74 : vector<1x84x160xf32> to vector<84x160xf32>
    %cst_43 = arith.constant dense<0.000000e+00> : vector<80x160xf32>
    %76 = tpu.matmul %73, %75, %cst_43 {dimension_numbers = #tpu.dot_dimension_numbers<[1], [0], [0], [1], [0, 0, 1, 1], [], []>} : vector<80x84xf32>, vector<84x160xf32>, vector<80x160xf32> -> vector<80x160xf32>
    %77 = arith.addf %71, %76 : vector<80x160xf32>
    %c0_44 = arith.constant 0 : index
    %c0_45 = arith.constant 0 : index
    %78 = vector.load %arg6[%c0_44, %c0_45] : memref<1x160xf32, #tpu.memory_space<vmem>>, vector<1x160xf32>
    %79 = vector.broadcast %78 : vector<1x160xf32> to vector<80x160xf32>
    %80 = arith.addf %77, %79 : vector<80x160xf32>
    %cst_46 = arith.constant 0.000000e+00 : f32
    %81 = vector.broadcast %cst_46 : f32 to vector<80x160xf32>
    %82 = arith.maximumf %80, %81 : vector<80x160xf32>
    %83 = vector.shape_cast %82 : vector<80x160xf32> to vector<40x2x160xf32>
    %84 = vector.extract_strided_slice %83 {offsets = [0, 0, 0], sizes = [40, 1, 160], strides = [1, 1, 1]} : vector<40x2x160xf32> to vector<40x1x160xf32>
    %85 = vector.shape_cast %84 : vector<40x1x160xf32> to vector<40x160xf32>
    %86 = vector.extract_strided_slice %83 {offsets = [0, 1, 0], sizes = [40, 1, 160], strides = [1, 1, 1]} : vector<40x2x160xf32> to vector<40x1x160xf32>
    %87 = vector.shape_cast %86 : vector<40x1x160xf32> to vector<40x160xf32>
    %88 = arith.addf %85, %87 : vector<40x160xf32>
    %c0_47 = arith.constant 0 : index
    %c0_48 = arith.constant 0 : index
    %89 = vector.load %arg7[%c0_47, %c0_48] : memref<160x80xf32, #tpu.memory_space<vmem>>, vector<160x80xf32>
    %cst_49 = arith.constant dense<0.000000e+00> : vector<40x80xf32>
    %90 = tpu.matmul %88, %89, %cst_49 {dimension_numbers = #tpu.dot_dimension_numbers<[1], [0], [0], [1], [0, 0, 1, 1], [], []>} : vector<40x160xf32>, vector<160x80xf32>, vector<40x80xf32> -> vector<40x80xf32>
    %91 = vector.shape_cast %90 : vector<40x80xf32> to vector<8x5x80xf32>
    %cst_50 = arith.constant 0.000000e+00 : f32
    %92 = vector.broadcast %cst_50 : f32 to vector<8x128xf32>
    %93 = vector.extract_strided_slice %91 {offsets = [0, 0, 0], sizes = [8, 1, 80], strides = [1, 1, 1]} : vector<8x5x80xf32> to vector<8x1x80xf32>
    %94 = vector.shape_cast %93 : vector<8x1x80xf32> to vector<8x80xf32>
    %c0_51 = arith.constant 0 : index
    %c0_52 = arith.constant 0 : index
    %c0_53 = arith.constant 0 : index
    %95 = vector.load %arg8[%c0_51, %c0_52, %c0_53] : memref<5x80x128xf32, #tpu.memory_space<vmem>>, vector<1x80x128xf32>
    %96 = vector.shape_cast %95 : vector<1x80x128xf32> to vector<80x128xf32>
    %cst_54 = arith.constant dense<0.000000e+00> : vector<8x128xf32>
    %97 = tpu.matmul %94, %96, %cst_54 {dimension_numbers = #tpu.dot_dimension_numbers<[1], [0], [0], [1], [0, 0, 1, 1], [], []>} : vector<8x80xf32>, vector<80x128xf32>, vector<8x128xf32> -> vector<8x128xf32>
    %98 = arith.addf %92, %97 : vector<8x128xf32>
    %99 = vector.extract_strided_slice %91 {offsets = [0, 1, 0], sizes = [8, 1, 80], strides = [1, 1, 1]} : vector<8x5x80xf32> to vector<8x1x80xf32>
    %100 = vector.shape_cast %99 : vector<8x1x80xf32> to vector<8x80xf32>
    %c1_55 = arith.constant 1 : index
    %c0_56 = arith.constant 0 : index
    %c0_57 = arith.constant 0 : index
    %101 = vector.load %arg8[%c1_55, %c0_56, %c0_57] : memref<5x80x128xf32, #tpu.memory_space<vmem>>, vector<1x80x128xf32>
    %102 = vector.shape_cast %101 : vector<1x80x128xf32> to vector<80x128xf32>
    %cst_58 = arith.constant dense<0.000000e+00> : vector<8x128xf32>
    %103 = tpu.matmul %100, %102, %cst_58 {dimension_numbers = #tpu.dot_dimension_numbers<[1], [0], [0], [1], [0, 0, 1, 1], [], []>} : vector<8x80xf32>, vector<80x128xf32>, vector<8x128xf32> -> vector<8x128xf32>
    %104 = arith.addf %98, %103 : vector<8x128xf32>
    %105 = vector.extract_strided_slice %91 {offsets = [0, 2, 0], sizes = [8, 1, 80], strides = [1, 1, 1]} : vector<8x5x80xf32> to vector<8x1x80xf32>
    %106 = vector.shape_cast %105 : vector<8x1x80xf32> to vector<8x80xf32>
    %c2_59 = arith.constant 2 : index
    %c0_60 = arith.constant 0 : index
    %c0_61 = arith.constant 0 : index
    %107 = vector.load %arg8[%c2_59, %c0_60, %c0_61] : memref<5x80x128xf32, #tpu.memory_space<vmem>>, vector<1x80x128xf32>
    %108 = vector.shape_cast %107 : vector<1x80x128xf32> to vector<80x128xf32>
    %cst_62 = arith.constant dense<0.000000e+00> : vector<8x128xf32>
    %109 = tpu.matmul %106, %108, %cst_62 {dimension_numbers = #tpu.dot_dimension_numbers<[1], [0], [0], [1], [0, 0, 1, 1], [], []>} : vector<8x80xf32>, vector<80x128xf32>, vector<8x128xf32> -> vector<8x128xf32>
    %110 = arith.addf %104, %109 : vector<8x128xf32>
    %111 = vector.extract_strided_slice %91 {offsets = [0, 3, 0], sizes = [8, 1, 80], strides = [1, 1, 1]} : vector<8x5x80xf32> to vector<8x1x80xf32>
    %112 = vector.shape_cast %111 : vector<8x1x80xf32> to vector<8x80xf32>
    %c3_63 = arith.constant 3 : index
    %c0_64 = arith.constant 0 : index
    %c0_65 = arith.constant 0 : index
    %113 = vector.load %arg8[%c3_63, %c0_64, %c0_65] : memref<5x80x128xf32, #tpu.memory_space<vmem>>, vector<1x80x128xf32>
    %114 = vector.shape_cast %113 : vector<1x80x128xf32> to vector<80x128xf32>
    %cst_66 = arith.constant dense<0.000000e+00> : vector<8x128xf32>
    %115 = tpu.matmul %112, %114, %cst_66 {dimension_numbers = #tpu.dot_dimension_numbers<[1], [0], [0], [1], [0, 0, 1, 1], [], []>} : vector<8x80xf32>, vector<80x128xf32>, vector<8x128xf32> -> vector<8x128xf32>
    %116 = arith.addf %110, %115 : vector<8x128xf32>
    %117 = vector.extract_strided_slice %91 {offsets = [0, 4, 0], sizes = [8, 1, 80], strides = [1, 1, 1]} : vector<8x5x80xf32> to vector<8x1x80xf32>
    %118 = vector.shape_cast %117 : vector<8x1x80xf32> to vector<8x80xf32>
    %c4_67 = arith.constant 4 : index
    %c0_68 = arith.constant 0 : index
    %c0_69 = arith.constant 0 : index
    %119 = vector.load %arg8[%c4_67, %c0_68, %c0_69] : memref<5x80x128xf32, #tpu.memory_space<vmem>>, vector<1x80x128xf32>
    %120 = vector.shape_cast %119 : vector<1x80x128xf32> to vector<80x128xf32>
    %cst_70 = arith.constant dense<0.000000e+00> : vector<8x128xf32>
    %121 = tpu.matmul %118, %120, %cst_70 {dimension_numbers = #tpu.dot_dimension_numbers<[1], [0], [0], [1], [0, 0, 1, 1], [], []>} : vector<8x80xf32>, vector<80x128xf32>, vector<8x128xf32> -> vector<8x128xf32>
    %122 = arith.addf %116, %121 : vector<8x128xf32>
    %c0_71 = arith.constant 0 : index
    %c0_72 = arith.constant 0 : index
    %123 = vector.load %arg9[%c0_71, %c0_72] : memref<1x128xf32, #tpu.memory_space<vmem>>, vector<1x128xf32>
    %124 = vector.broadcast %123 : vector<1x128xf32> to vector<8x128xf32>
    %125 = arith.addf %122, %124 : vector<8x128xf32>
    %cst_73 = arith.constant 0.000000e+00 : f32
    %126 = vector.broadcast %cst_73 : f32 to vector<8x128xf32>
    %127 = arith.maximumf %125, %126 : vector<8x128xf32>
    %c0_74 = arith.constant 0 : index
    %c0_75 = arith.constant 0 : index
    %128 = vector.load %arg10[%c0_74, %c0_75] : memref<128x128xf32, #tpu.memory_space<vmem>>, vector<128x128xf32>
    %cst_76 = arith.constant dense<0.000000e+00> : vector<8x128xf32>
    %129 = tpu.matmul %127, %128, %cst_76 {dimension_numbers = #tpu.dot_dimension_numbers<[1], [0], [0], [1], [0, 0, 1, 1], [], []>} : vector<8x128xf32>, vector<128x128xf32>, vector<8x128xf32> -> vector<8x128xf32>
    %c0_77 = arith.constant 0 : index
    %c0_78 = arith.constant 0 : index
    %130 = vector.load %arg11[%c0_77, %c0_78] : memref<1x128xf32, #tpu.memory_space<vmem>>, vector<1x128xf32>
    %131 = vector.broadcast %130 : vector<1x128xf32> to vector<8x128xf32>
    %132 = arith.addf %129, %131 : vector<8x128xf32>
    %cst_79 = arith.constant 0.000000e+00 : f32
    %133 = vector.broadcast %cst_79 : f32 to vector<8x128xf32>
    %134 = arith.maximumf %132, %133 : vector<8x128xf32>
    %c0_80 = arith.constant 0 : index
    %c0_81 = arith.constant 0 : index
    %135 = vector.load %arg12[%c0_80, %c0_81] : memref<128x128xf32, #tpu.memory_space<vmem>>, vector<128x128xf32>
    %cst_82 = arith.constant dense<0.000000e+00> : vector<8x128xf32>
    %136 = tpu.matmul %134, %135, %cst_82 {dimension_numbers = #tpu.dot_dimension_numbers<[1], [0], [0], [1], [0, 0, 1, 1], [], []>} : vector<8x128xf32>, vector<128x128xf32>, vector<8x128xf32> -> vector<8x128xf32>
    %c0_83 = arith.constant 0 : index
    %c0_84 = arith.constant 0 : index
    %137 = vector.load %arg13[%c0_83, %c0_84] : memref<1x128xf32, #tpu.memory_space<vmem>>, vector<1x128xf32>
    %138 = vector.broadcast %137 : vector<1x128xf32> to vector<8x128xf32>
    %139 = arith.addf %136, %138 : vector<8x128xf32>
    %c0_85 = arith.constant 0 : index
    %c0_86 = arith.constant 0 : index
    %140 = vector.load %arg14[%c0_85, %c0_86] : memref<8x128xf32, #tpu.memory_space<vmem>>, vector<8x128xf32>
    tpu.vector_store %arg14[%c0_85, %c0_86], %139 {strides = array<i32>} : memref<8x128xf32, #tpu.memory_space<vmem>>, vector<8x128xf32>,
    return
  }
  func.func @transform_0(%arg0: i32) -> (i32, i32) {
    %c0_i32 = arith.constant 0 : i32
    %c0_i32_0 = arith.constant 0 : i32
    return %arg0, %c0_i32 : i32, i32
  }
  func.func @transform_1(%arg0: i32) -> (i32, i32, i32) {
    %c0_i32 = arith.constant 0 : i32
    %c0_i32_0 = arith.constant 0 : i32
    %c0_i32_1 = arith.constant 0 : i32
    %c0_i32_2 = arith.constant 0 : i32
    return %c0_i32, %c0_i32_0, %c0_i32_1 : i32, i32, i32
  }
  func.func @transform_2(%arg0: i32) -> (i32, i32) {
    %c0_i32 = arith.constant 0 : i32
    %c0_i32_0 = arith.constant 0 : i32
    %c0_i32_1 = arith.constant 0 : i32
    return %c0_i32, %c0_i32_0 : i32, i32
  }
  func.func @transform_3(%arg0: i32) -> (i32, i32) {
    %c0_i32 = arith.constant 0 : i32
    %c0_i32_0 = arith.constant 0 : i32
    %c0_i32_1 = arith.constant 0 : i32
    return %c0_i32, %c0_i32_0 : i32, i32
  }
  func.func @transform_4(%arg0: i32) -> (i32, i32, i32) {
    %c0_i32 = arith.constant 0 : i32
    %c0_i32_0 = arith.constant 0 : i32
    %c0_i32_1 = arith.constant 0 : i32
    %c0_i32_2 = arith.constant 0 : i32
    return %c0_i32, %c0_i32_0, %c0_i32_1 : i32, i32, i32
  }
  func.func @transform_5(%arg0: i32) -> (i32, i32) {
    %c0_i32 = arith.constant 0 : i32
    %c0_i32_0 = arith.constant 0 : i32
    %c0_i32_1 = arith.constant 0 : i32
    return %c0_i32, %c0_i32_0 : i32, i32
  }
  func.func @transform_6(%arg0: i32) -> (i32, i32) {
    %c0_i32 = arith.constant 0 : i32
    %c0_i32_0 = arith.constant 0 : i32
    %c0_i32_1 = arith.constant 0 : i32
    return %c0_i32, %c0_i32_0 : i32, i32
  }
  func.func @transform_7(%arg0: i32) -> (i32, i32, i32) {
    %c0_i32 = arith.constant 0 : i32
    %c0_i32_0 = arith.constant 0 : i32
    %c0_i32_1 = arith.constant 0 : i32
    %c0_i32_2 = arith.constant 0 : i32
    return %c0_i32, %c0_i32_0, %c0_i32_1 : i32, i32, i32
  }
  func.func @transform_8(%arg0: i32) -> (i32, i32) {
    %c0_i32 = arith.constant 0 : i32
    %c0_i32_0 = arith.constant 0 : i32
    %c0_i32_1 = arith.constant 0 : i32
    return %c0_i32, %c0_i32_0 : i32, i32
  }
  func.func @transform_9(%arg0: i32) -> (i32, i32) {
    %c0_i32 = arith.constant 0 : i32
    %c0_i32_0 = arith.constant 0 : i32
    %c0_i32_1 = arith.constant 0 : i32
    return %c0_i32, %c0_i32_0 : i32, i32
  }
  func.func @transform_10(%arg0: i32) -> (i32, i32) {
    %c0_i32 = arith.constant 0 : i32
    %c0_i32_0 = arith.constant 0 : i32
    %c0_i32_1 = arith.constant 0 : i32
    return %c0_i32, %c0_i32_0 : i32, i32
  }
  func.func @transform_11(%arg0: i32) -> (i32, i32) {
    %c0_i32 = arith.constant 0 : i32
    %c0_i32_0 = arith.constant 0 : i32
    %c0_i32_1 = arith.constant 0 : i32
    return %c0_i32, %c0_i32_0 : i32, i32
  }
  func.func @transform_12(%arg0: i32) -> (i32, i32) {
    %c0_i32 = arith.constant 0 : i32
    %c0_i32_0 = arith.constant 0 : i32
    %c0_i32_1 = arith.constant 0 : i32
    return %c0_i32, %c0_i32_0 : i32, i32
  }
  func.func @transform_13(%arg0: i32) -> (i32, i32) {
    %c0_i32 = arith.constant 0 : i32
    %c0_i32_0 = arith.constant 0 : i32
    return %arg0, %c0_i32 : i32, i32
  }
}

</mosaic_0001>

<llo_original>
// kernel: tpu_custom_call.1
$region0: #{tpu_custom_call.1}
  #allocation0 [shape = 'u32[]', space=smem, size = 0x4, offset = 0x4, fixed_abs, tag = 'smem constant byte address 0x4 - core index']
  #allocation1 [shape = 'u32[144,128]{1,0:T(1,128)}', space=vmem, size = 0x12000, scoped, tag = 'internal scratch']
  %s0 = inlined_call_operand.vmem [shape: f32[512,32], index: 0, kind: input, shape index: {}]
  %s1 = inlined_call_operand.vmem [shape: f32[5,32,168], index: 1, kind: input, shape index: {}]
  %s2 = inlined_call_operand.vmem [shape: f32[1,168], index: 2, kind: input, shape index: {}]
  %s3 = inlined_call_operand.vmem [shape: f32[168,84], index: 3, kind: input, shape index: {}]
  %s4 = inlined_call_operand.vmem [shape: f32[5,84,160], index: 4, kind: input, shape index: {}]
  %s5 = inlined_call_operand.vmem [shape: f32[1,160], index: 5, kind: input, shape index: {}]
  %s6 = inlined_call_operand.vmem [shape: f32[160,80], index: 6, kind: input, shape index: {}]
  %s7 = inlined_call_operand.vmem [shape: f32[5,80,128], index: 7, kind: input, shape index: {}]
  %s8 = inlined_call_operand.vmem [shape: f32[1,128], index: 8, kind: input, shape index: {}]
  %s9 = inlined_call_operand.vmem [shape: f32[128,128], index: 9, kind: input, shape index: {}]
  %s10 = inlined_call_operand.vmem [shape: f32[1,128], index: 10, kind: input, shape index: {}]
  %s11 = inlined_call_operand.vmem [shape: f32[128,128], index: 11, kind: input, shape index: {}]
  %s12 = inlined_call_operand.vmem [shape: f32[1,128], index: 12, kind: input, shape index: {}]
  %s13 = inlined_call_operand.hbm [shape: f32[16,128], index: 13, kind: output, shape index: {}]
  %s14 = sld [smem:[#allocation0]]
  $region85: #{tpu_custom_call.1} parent=0
    _
  %s16 = ssub.s32 1, %s14
  %s17 = scalar_select 0, %s16, %s14
  $region1: #{tpu_custom_call.1} parent=0
    #allocation2 [shape = 'u8[8192]{0}', space=vmem, size = 0x2000, scoped, tag = 'output window, operand 0']
    #allocation3 [shape = 's32[2]{0}', space=sflag, size = 0x8, scoped, tag = 'scoped memory for tpu_custom_call.1']
    %18 = vsyncpa [#allocation3], 0
    %s19 = scalar_lea.sflag [#allocation3], 1
    %20 = vsyncpa %s19, 0
    loop: start=0, step=1, limit=4
    $region2: #{tpu_custom_call.1} parent=1 // loop_pre_header
      _
    $region3: #{tpu_custom_call.1} parent=1 // loop_header
      %s22 = sphi 0, %s26
      %p23 = scmp.ge.s32.totalorder %s22, 4
      %s32 = sphi 0, %s34
      %s35 = sphi 0, %s32
      %s36 = sphi 0, %s35
      %s52 = sphi 0, %s36
      %s56 = sphi 0, %s56
      %s58 = sphi 0, %s56
      %s59 = sphi 0, %s58
      %s73 = sphi 0, %s59
      %s77 = sphi 0, %s77
      %s79 = sphi 0, %s77
      %s80 = sphi 0, %s79
      %s94 = sphi 0, %s80
      %s98 = sphi 0, %s98
      %s100 = sphi 0, %s98
      %s101 = sphi 0, %s100
      %s115 = sphi 0, %s101
      %s119 = sphi 0, %s119
      %s121 = sphi 0, %s119
      %s122 = sphi 0, %s121
      %s136 = sphi 0, %s122
      %s140 = sphi 0, %s140
      %s142 = sphi 0, %s140
      %s143 = sphi 0, %s142
      %s157 = sphi 0, %s143
      %s161 = sphi 0, %s161
      %s163 = sphi 0, %s161
      %s164 = sphi 0, %s163
      %s178 = sphi 0, %s164
      %s182 = sphi 0, %s182
      %s184 = sphi 0, %s182
      %s185 = sphi 0, %s184
      %s199 = sphi 0, %s185
      %s203 = sphi 0, %s203
      %s205 = sphi 0, %s203
      %s206 = sphi 0, %s205
      %s220 = sphi 0, %s206
      %s224 = sphi 0, %s224
      %s226 = sphi 0, %s224
      %s227 = sphi 0, %s226
      %s241 = sphi 0, %s227
      %s245 = sphi 0, %s245
      %s247 = sphi 0, %s245
      %s248 = sphi 0, %s247
      %s262 = sphi 0, %s248
      %s266 = sphi 0, %s266
      %s268 = sphi 0, %s266
      %s269 = sphi 0, %s268
      %s283 = sphi 0, %s269
      %s287 = sphi 0, %s287
      %s289 = sphi 0, %s287
      %s290 = sphi 0, %s289
      %s304 = sphi 0, %s290
      %s310 = sphi 0, %s312
      %s313 = sphi 0, %s310
      %s314 = sphi 0, %s313
      %s330 = sphi 0, %s314
    $region4: #{tpu_custom_call.1} parent=1 // loop_header_branch
      %25 = sbr.rel (%p23) target = $region8
    $region5: #{tpu_custom_call.1} parent=1 // loop_body
      %s27 = ssub.s32 %s22, 1
      %s28 = ssub.s32 %s22, 2
      %s29 = sadd.s32 %s22, 1
      %s30 = ssub.s32 %s22, %s29
      %p31 = scmp.eq.s32.totalorder %s30, 0
      %s33 = sadd.s32 %s32, 1
      %s34 = scalar_select %p31, %s32, %s33
      %p37 = pneg %p31
      %p38 = scmp.eq.s32.totalorder %s22, 1
      %p39 = por %p37, %p38
      %p40 = scmp.ne.s32.totalorder %s32, %s35
      %p41 = scmp.eq.s32.totalorder %s22, 0
      %p42 = por %p40, %p41
      %p43 = scmp.ne.s32.totalorder %s32, %s35
      %p44 = scmp.eq.s32.totalorder %s27, 1
      %p45 = por %p43, %p44
      %p46 = scmp.ne.s32.totalorder %s35, %s36
      %p47 = scmp.eq.s32.totalorder %s27, 0
      %p48 = por %p46, %p47
      %p49 = scmp.ne.s32.totalorder %s35, %s36
      %p50 = scmp.eq.s32.totalorder %s28, 1
      %p51 = por %p49, %p50
      %p53 = scmp.ne.s32.totalorder %s36, %s52
      %p54 = scmp.eq.s32.totalorder %s28, 0
      %p55 = por %p53, %p54
      %s57 = sadd.s32 %s56, 1
      %p60 = scmp.eq.s32.totalorder %s22, 1
      %p61 = scmp.ne.s32.totalorder %s56, %s58
      %p62 = scmp.eq.s32.totalorder %s22, 0
      %p63 = por %p61, %p62
      %p64 = scmp.ne.s32.totalorder %s56, %s58
      %p65 = scmp.eq.s32.totalorder %s27, 1
      %p66 = por %p64, %p65
      %p67 = scmp.ne.s32.totalorder %s58, %s59
      %p68 = scmp.eq.s32.totalorder %s27, 0
      %p69 = por %p67, %p68
      %p70 = scmp.ne.s32.totalorder %s58, %s59
      %p71 = scmp.eq.s32.totalorder %s28, 1
      %p72 = por %p70, %p71
      %p74 = scmp.ne.s32.totalorder %s59, %s73
      %p75 = scmp.eq.s32.totalorder %s28, 0
      %p76 = por %p74, %p75
      %s78 = sadd.s32 %s77, 1
      %p81 = scmp.eq.s32.totalorder %s22, 1
      %p82 = scmp.ne.s32.totalorder %s77, %s79
      %p83 = scmp.eq.s32.totalorder %s22, 0
      %p84 = por %p82, %p83
      %p85 = scmp.ne.s32.totalorder %s77, %s79
      %p86 = scmp.eq.s32.totalorder %s27, 1
      %p87 = por %p85, %p86
      %p88 = scmp.ne.s32.totalorder %s79, %s80
      %p89 = scmp.eq.s32.totalorder %s27, 0
      %p90 = por %p88, %p89
      %p91 = scmp.ne.s32.totalorder %s79, %s80
      %p92 = scmp.eq.s32.totalorder %s28, 1
      %p93 = por %p91, %p92
      %p95 = scmp.ne.s32.totalorder %s80, %s94
      %p96 = scmp.eq.s32.totalorder %s28, 0
      %p97 = por %p95, %p96
      %s99 = sadd.s32 %s98, 1
      %p102 = scmp.eq.s32.totalorder %s22, 1
      %p103 = scmp.ne.s32.totalorder %s98, %s100
      %p104 = scmp.eq.s32.totalorder %s22, 0
      %p105 = por %p103, %p104
      %p106 = scmp.ne.s32.totalorder %s98, %s100
      %p107 = scmp.eq.s32.totalorder %s27, 1
      %p108 = por %p106, %p107
      %p109 = scmp.ne.s32.totalorder %s100, %s101
      %p110 = scmp.eq.s32.totalorder %s27, 0
      %p111 = por %p109, %p110
      %p112 = scmp.ne.s32.totalorder %s100, %s101
      %p113 = scmp.eq.s32.totalorder %s28, 1
      %p114 = por %p112, %p113
      %p116 = scmp.ne.s32.totalorder %s101, %s115
      %p117 = scmp.eq.s32.totalorder %s28, 0
      %p118 = por %p116, %p117
      %s120 = sadd.s32 %s119, 1
      %p123 = scmp.eq.s32.totalorder %s22, 1
      %p124 = scmp.ne.s32.totalorder %s119, %s121
      %p125 = scmp.eq.s32.totalorder %s22, 0
      %p126 = por %p124, %p125
      %p127 = scmp.ne.s32.totalorder %s119, %s121
      %p128 = scmp.eq.s32.totalorder %s27, 1
      %p129 = por %p127, %p128
      %p130 = scmp.ne.s32.totalorder %s121, %s122
      %p131 = scmp.eq.s32.totalorder %s27, 0
      %p132 = por %p130, %p131
      %p133 = scmp.ne.s32.totalorder %s121, %s122
      %p134 = scmp.eq.s32.totalorder %s28, 1
      %p135 = por %p133, %p134
      %p137 = scmp.ne.s32.totalorder %s122, %s136
      %p138 = scmp.eq.s32.totalorder %s28, 0
      %p139 = por %p137, %p138
      %s141 = sadd.s32 %s140, 1
      %p144 = scmp.eq.s32.totalorder %s22, 1
      %p145 = scmp.ne.s32.totalorder %s140, %s142
      %p146 = scmp.eq.s32.totalorder %s22, 0
      %p147 = por %p145, %p146
      %p148 = scmp.ne.s32.totalorder %s140, %s142
      %p149 = scmp.eq.s32.totalorder %s27, 1
      %p150 = por %p148, %p149
      %p151 = scmp.ne.s32.totalorder %s142, %s143
      %p152 = scmp.eq.s32.totalorder %s27, 0
      %p153 = por %p151, %p152
      %p154 = scmp.ne.s32.totalorder %s142, %s143
      %p155 = scmp.eq.s32.totalorder %s28, 1
      %p156 = por %p154, %p155
      %p158 = scmp.ne.s32.totalorder %s143, %s157
      %p159 = scmp.eq.s32.totalorder %s28, 0
      %p160 = por %p158, %p159
      %s162 = sadd.s32 %s161, 1
      %p165 = scmp.eq.s32.totalorder %s22, 1
      %p166 = scmp.ne.s32.totalorder %s161, %s163
      %p167 = scmp.eq.s32.totalorder %s22, 0
      %p168 = por %p166, %p167
      %p169 = scmp.ne.s32.totalorder %s161, %s163
      %p170 = scmp.eq.s32.totalorder %s27, 1
      %p171 = por %p169, %p170
      %p172 = scmp.ne.s32.totalorder %s163, %s164
      %p173 = scmp.eq.s32.totalorder %s27, 0
      %p174 = por %p172, %p173
      %p175 = scmp.ne.s32.totalorder %s163, %s164
      %p176 = scmp.eq.s32.totalorder %s28, 1
      %p177 = por %p175, %p176
      %p179 = scmp.ne.s32.totalorder %s164, %s178
      %p180 = scmp.eq.s32.totalorder %s28, 0
      %p181 = por %p179, %p180
      %s183 = sadd.s32 %s182, 1
      %p186 = scmp.eq.s32.totalorder %s22, 1
      %p187 = scmp.ne.s32.totalorder %s182, %s184
      %p188 = scmp.eq.s32.totalorder %s22, 0
      %p189 = por %p187, %p188
      %p190 = scmp.ne.s32.totalorder %s182, %s184
      %p191 = scmp.eq.s32.totalorder %s27, 1
      %p192 = por %p190, %p191
      %p193 = scmp.ne.s32.totalorder %s184, %s185
      %p194 = scmp.eq.s32.totalorder %s27, 0
      %p195 = por %p193, %p194
      %p196 = scmp.ne.s32.totalorder %s184, %s185
      %p197 = scmp.eq.s32.totalorder %s28, 1
      %p198 = por %p196, %p197
      %p200 = scmp.ne.s32.totalorder %s185, %s199
      %p201 = scmp.eq.s32.totalorder %s28, 0
      %p202 = por %p200, %p201
      %s204 = sadd.s32 %s203, 1
      %p207 = scmp.eq.s32.totalorder %s22, 1
      %p208 = scmp.ne.s32.totalorder %s203, %s205
      %p209 = scmp.eq.s32.totalorder %s22, 0
      %p210 = por %p208, %p209
      %p211 = scmp.ne.s32.totalorder %s203, %s205
      %p212 = scmp.eq.s32.totalorder %s27, 1
      %p213 = por %p211, %p212
      %p214 = scmp.ne.s32.totalorder %s205, %s206
      %p215 = scmp.eq.s32.totalorder %s27, 0
      %p216 = por %p214, %p215
      %p217 = scmp.ne.s32.totalorder %s205, %s206
      %p218 = scmp.eq.s32.totalorder %s28, 1
      %p219 = por %p217, %p218
      %p221 = scmp.ne.s32.totalorder %s206, %s220
      %p222 = scmp.eq.s32.totalorder %s28, 0
      %p223 = por %p221, %p222
      %s225 = sadd.s32 %s224, 1
      %p228 = scmp.eq.s32.totalorder %s22, 1
      %p229 = scmp.ne.s32.totalorder %s224, %s226
      %p230 = scmp.eq.s32.totalorder %s22, 0
      %p231 = por %p229, %p230
      %p232 = scmp.ne.s32.totalorder %s224, %s226
      %p233 = scmp.eq.s32.totalorder %s27, 1
      %p234 = por %p232, %p233
      %p235 = scmp.ne.s32.totalorder %s226, %s227
      %p236 = scmp.eq.s32.totalorder %s27, 0
      %p237 = por %p235, %p236
      %p238 = scmp.ne.s32.totalorder %s226, %s227
      %p239 = scmp.eq.s32.totalorder %s28, 1
      %p240 = por %p238, %p239
      %p242 = scmp.ne.s32.totalorder %s227, %s241
      %p243 = scmp.eq.s32.totalorder %s28, 0
      %p244 = por %p242, %p243
      %s246 = sadd.s32 %s245, 1
      %p249 = scmp.eq.s32.totalorder %s22, 1
      %p250 = scmp.ne.s32.totalorder %s245, %s247
      %p251 = scmp.eq.s32.totalorder %s22, 0
      %p252 = por %p250, %p251
      %p253 = scmp.ne.s32.totalorder %s245, %s247
      %p254 = scmp.eq.s32.totalorder %s27, 1
      %p255 = por %p253, %p254
      %p256 = scmp.ne.s32.totalorder %s247, %s248
      %p257 = scmp.eq.s32.totalorder %s27, 0
      %p258 = por %p256, %p257
      %p259 = scmp.ne.s32.totalorder %s247, %s248
      %p260 = scmp.eq.s32.totalorder %s28, 1
      %p261 = por %p259, %p260
      %p263 = scmp.ne.s32.totalorder %s248, %s262
      %p264 = scmp.eq.s32.totalorder %s28, 0
      %p265 = por %p263, %p264
      %s267 = sadd.s32 %s266, 1
      %p270 = scmp.eq.s32.totalorder %s22, 1
      %p271 = scmp.ne.s32.totalorder %s266, %s268
      %p272 = scmp.eq.s32.totalorder %s22, 0
      %p273 = por %p271, %p272
      %p274 = scmp.ne.s32.totalorder %s266, %s268
      %p275 = scmp.eq.s32.totalorder %s27, 1
      %p276 = por %p274, %p275
      %p277 = scmp.ne.s32.totalorder %s268, %s269
      %p278 = scmp.eq.s32.totalorder %s27, 0
      %p279 = por %p277, %p278
      %p280 = scmp.ne.s32.totalorder %s268, %s269
      %p281 = scmp.eq.s32.totalorder %s28, 1
      %p282 = por %p280, %p281
      %p284 = scmp.ne.s32.totalorder %s269, %s283
      %p285 = scmp.eq.s32.totalorder %s28, 0
      %p286 = por %p284, %p285
      %s288 = sadd.s32 %s287, 1
      %p291 = scmp.eq.s32.totalorder %s22, 1
      %p292 = scmp.ne.s32.totalorder %s287, %s289
      %p293 = scmp.eq.s32.totalorder %s22, 0
      %p294 = por %p292, %p293
      %p295 = scmp.ne.s32.totalorder %s287, %s289
      %p296 = scmp.eq.s32.totalorder %s27, 1
      %p297 = por %p295, %p296
      %p298 = scmp.ne.s32.totalorder %s289, %s290
      %p299 = scmp.eq.s32.totalorder %s27, 0
      %p300 = por %p298, %p299
      %p301 = scmp.ne.s32.totalorder %s289, %s290
      %p302 = scmp.eq.s32.totalorder %s28, 1
      %p303 = por %p301, %p302
      %p305 = scmp.ne.s32.totalorder %s290, %s304
      %p306 = scmp.eq.s32.totalorder %s28, 0
      %p307 = por %p305, %p306
      %s308 = ssub.s32 %s22, %s29
      %p309 = scmp.eq.s32.totalorder %s308, 0
      %s311 = sadd.s32 %s310, 1
      %s312 = scalar_select %p309, %s310, %s311
      %p315 = pneg %p309
      %p316 = scmp.eq.s32.totalorder %s22, 1
      %p317 = por %p315, %p316
      %p318 = scmp.ne.s32.totalorder %s310, %s313
      %p319 = scmp.eq.s32.totalorder %s22, 0
      %p320 = por %p318, %p319
      %p321 = scmp.ne.s32.totalorder %s310, %s313
      %p322 = scmp.eq.s32.totalorder %s27, 1
      %p323 = por %p321, %p322
      %p324 = scmp.ne.s32.totalorder %s313, %s314
      %p325 = scmp.eq.s32.totalorder %s27, 0
      %p326 = por %p324, %p325
      %p327 = scmp.ne.s32.totalorder %s313, %s314
      %p328 = scmp.eq.s32.totalorder %s28, 1
      %p329 = por %p327, %p328
      %p331 = scmp.ne.s32.totalorder %s314, %s330
      %p332 = scmp.eq.s32.totalorder %s28, 0
      %p333 = por %p331, %p332
      %p334 = scmp.le.s32.totalorder 1, %s22
      %p335 = scmp.lt.s32.totalorder %s22, 3
      %p336 = pnand %p334, %p335
      %p337 = pneg %p336
      // Predicated region
      $region9: #{tpu_custom_call.1} parent=5 // pred_check
        _
      $region10: #{tpu_custom_call.1} parent=5 // pred_check_branch
        %339 = sbr.rel (%p336) target = $region12
      $region11: #{tpu_custom_call.1} parent=5 // pred_region
        %s340 = ssub.s32 %s22, 1
        // Predicated region
        $region13: #{tpu_custom_call.1} parent=11 // pred_check
          %p341 = pneg %p69
        $region14: #{tpu_custom_call.1} parent=11 // pred_check_branch
          %343 = sbr.rel (%p341) target = $region16
        $region15: #{tpu_custom_call.1} parent=11 // pred_region
          _
        $region16: #{tpu_custom_call.1} parent=11 // pred_fallthru
          _
        // Predicated region
        $region17: #{tpu_custom_call.1} parent=11 // pred_check
          %p344 = pneg %p90
        $region18: #{tpu_custom_call.1} parent=11 // pred_check_branch
          %346 = sbr.rel (%p344) target = $region20
        $region19: #{tpu_custom_call.1} parent=11 // pred_region
          _
        $region20: #{tpu_custom_call.1} parent=11 // pred_fallthru
          _
        // Predicated region
        $region21: #{tpu_custom_call.1} parent=11 // pred_check
          %p347 = pneg %p111
        $region22: #{tpu_custom_call.1} parent=11 // pred_check_branch
          %349 = sbr.rel (%p347) target = $region24
        $region23: #{tpu_custom_call.1} parent=11 // pred_region
          _
        $region24: #{tpu_custom_call.1} parent=11 // pred_fallthru
          _
        // Predicated region
        $region25: #{tpu_custom_call.1} parent=11 // pred_check
          %p350 = pneg %p132
        $region26: #{tpu_custom_call.1} parent=11 // pred_check_branch
          %352 = sbr.rel (%p350) target = $region28
        $region27: #{tpu_custom_call.1} parent=11 // pred_region
          _
        $region28: #{tpu_custom_call.1} parent=11 // pred_fallthru
          _
        // Predicated region
        $region29: #{tpu_custom_call.1} parent=11 // pred_check
          %p353 = pneg %p153
        $region30: #{tpu_custom_call.1} parent=11 // pred_check_branch
          %355 = sbr.rel (%p353) target = $region32
        $region31: #{tpu_custom_call.1} parent=11 // pred_region
          _
        $region32: #{tpu_custom_call.1} parent=11 // pred_fallthru
          _
        // Predicated region
        $region33: #{tpu_custom_call.1} parent=11 // pred_check
          %p356 = pneg %p174
        $region34: #{tpu_custom_call.1} parent=11 // pred_check_branch
          %358 = sbr.rel (%p356) target = $region36
        $region35: #{tpu_custom_call.1} parent=11 // pred_region
          _
        $region36: #{tpu_custom_call.1} parent=11 // pred_fallthru
          _
        // Predicated region
        $region37: #{tpu_custom_call.1} parent=11 // pred_check
          %p359 = pneg %p195
        $region38: #{tpu_custom_call.1} parent=11 // pred_check_branch
          %361 = sbr.rel (%p359) target = $region40
        $region39: #{tpu_custom_call.1} parent=11 // pred_region
          _
        $region40: #{tpu_custom_call.1} parent=11 // pred_fallthru
          _
        // Predicated region
        $region41: #{tpu_custom_call.1} parent=11 // pred_check
          %p362 = pneg %p216
        $region42: #{tpu_custom_call.1} parent=11 // pred_check_branch
          %364 = sbr.rel (%p362) target = $region44
        $region43: #{tpu_custom_call.1} parent=11 // pred_region
          _
        $region44: #{tpu_custom_call.1} parent=11 // pred_fallthru
          _
        // Predicated region
        $region45: #{tpu_custom_call.1} parent=11 // pred_check
          %p365 = pneg %p237
        $region46: #{tpu_custom_call.1} parent=11 // pred_check_branch
          %367 = sbr.rel (%p365) target = $region48
        $region47: #{tpu_custom_call.1} parent=11 // pred_region
          _
        $region48: #{tpu_custom_call.1} parent=11 // pred_fallthru
          _
        // Predicated region
        $region49: #{tpu_custom_call.1} parent=11 // pred_check
          %p368 = pneg %p258
        $region50: #{tpu_custom_call.1} parent=11 // pred_check_branch
          %370 = sbr.rel (%p368) target = $region52
        $region51: #{tpu_custom_call.1} parent=11 // pred_region
          _
        $region52: #{tpu_custom_call.1} parent=11 // pred_fallthru
          _
        // Predicated region
        $region53: #{tpu_custom_call.1} parent=11 // pred_check
          %p371 = pneg %p279
        $region54: #{tpu_custom_call.1} parent=11 // pred_check_branch
          %373 = sbr.rel (%p371) target = $region56
        $region55: #{tpu_custom_call.1} parent=11 // pred_region
          _
        $region56: #{tpu_custom_call.1} parent=11 // pred_fallthru
          _
        // Predicated region
        $region57: #{tpu_custom_call.1} parent=11 // pred_check
          %p374 = pneg %p300
        $region58: #{tpu_custom_call.1} parent=11 // pred_check_branch
          %376 = sbr.rel (%p374) target = $region60
        $region59: #{tpu_custom_call.1} parent=11 // pred_region
          _
        $region60: #{tpu_custom_call.1} parent=11 // pred_fallthru
          _
      $region12: #{tpu_custom_call.1} parent=5 // pred_fallthru
        _
      %p377 = scmp.lt.s32.totalorder %s22, 2
      // Predicated region
      $region61: #{tpu_custom_call.1} parent=5 // pred_check
        %p378 = pneg %p377
      $region62: #{tpu_custom_call.1} parent=5 // pred_check_branch
        %380 = sbr.rel (%p378) target = $region64
      $region63: #{tpu_custom_call.1} parent=5 // pred_region
        // Predicated region
        $region65: #{tpu_custom_call.1} parent=63 // pred_check
          %p381 = pneg %p42
        $region66: #{tpu_custom_call.1} parent=63 // pred_check_branch
          %383 = sbr.rel (%p381) target = $region68
        $region67: #{tpu_custom_call.1} parent=63 // pred_region
          %s384 = smul.u32 32, %s22
          %p385 = scmp.lt.s32.totalorder %s384, 63
          %s386 = scalar_select %p385, %s384, 63
          %s387 = smul.addr %s386, 8
          %s388 = scalar_lea.vmem %s0, %s387
          %s389 = smul.u32 32, %s22
        $region68: #{tpu_custom_call.1} parent=63 // pred_fallthru
          _
      $region64: #{tpu_custom_call.1} parent=5 // pred_fallthru
        _
      %p390 = scmp.le.s32.totalorder 1, %s22
      %p391 = scmp.lt.s32.totalorder %s22, 3
      %p392 = pnand %p390, %p391
      %p393 = pneg %p392
      // Predicated region
      $region69: #{tpu_custom_call.1} parent=5 // pred_check
        _
      $region70: #{tpu_custom_call.1} parent=5 // pred_check_branch
        %395 = sbr.rel (%p392) target = $region72
      $region71: #{tpu_custom_call.1} parent=5 // pred_region
        %s396 = ssub.s32 %s22, 1
        %s397 = smul.u32 32, %s27
        %p398 = scmp.lt.s32.totalorder %s397, 63
        %s399 = scalar_select %p398, %s397, 63
        %s400 = smul.addr %s399, 8
        %s401 = scalar_lea.vmem %s0, %s400
        %p402 = pneg %p48
        %p403 = pneg %p45
        %p404 = pneg %p69
        %p405 = pneg %p66
        %p406 = pneg %p90
        %p407 = pneg %p87
        %p408 = pneg %p111
        %p409 = pneg %p108
        %p410 = pneg %p132
        %p411 = pneg %p129
        %p412 = pneg %p153
        %p413 = pneg %p150
        %p414 = pneg %p174
        %p415 = pneg %p171
        %p416 = pneg %p195
        %p417 = pneg %p192
        %p418 = pneg %p216
        %p419 = pneg %p213
        %p420 = pneg %p237
        %p421 = pneg %p234
        %p422 = pneg %p258
        %p423 = pneg %p255
        %p424 = pneg %p279
        %p425 = pneg %p276
        %p426 = pneg %p300
        %p427 = pneg %p297
        %p428 = pneg %p326
        %p429 = pneg %p323
        %s430 = sand.u32 %s313, 1
        %s431 = scalar_lea.sflag [#allocation3], %s430
        %s432 = sand.u32 %s313, 1
        %s433 = smul.addr %s432, 8
        %s434 = scalar_lea.vmem [#allocation2], %s433
        %s435 = smul.u32 32, %s27
        %p436 = scmp.lt.s32.totalorder %s435, 63
        %s437 = scalar_select %p436, %s435, 63
        %s438 = smul.addr %s437, 8
        %s439 = scalar_lea.vmem %s0, %s438
        %s440 = smul.u32 32, %s27
        %v441 = vld [vmem:[%s439] sm:$0xff]
        %v442 = vld [vmem:[%s439 + $0x8] sm:$0xff]
        %v443 = vld [vmem:[%s439 + $0x10] sm:$0xff]
        %v444 = vld [vmem:[%s439 + $0x18] sm:$0xff]
        %v445 = vld [vmem:[%s439 + $0x20] sm:$0xff]
        %v446 = vld [vmem:[%s439 + $0x28] sm:$0xff]
        %v447 = vld [vmem:[%s439 + $0x30] sm:$0xff]
        %v448 = vld [vmem:[%s439 + $0x38] sm:$0xff]
        %v449 = vld [vmem:[%s439 + $0x40] sm:$0xff]
        %v450 = vld [vmem:[%s439 + $0x48] sm:$0xff]
        %v451 = vld [vmem:[%s439 + $0x50] sm:$0xff]
        %v452 = vld [vmem:[%s439 + $0x58] sm:$0xff]
        %v453 = vld [vmem:[%s439 + $0x60] sm:$0xff]
        %v454 = vld [vmem:[%s439 + $0x68] sm:$0xff]
        %v455 = vld [vmem:[%s439 + $0x70] sm:$0xff]
        %v456 = vld [vmem:[%s439 + $0x78] sm:$0xff]
        %v457 = vld [vmem:[%s439 + $0x80] sm:$0xff]
        %v458 = vld [vmem:[%s439 + $0x88] sm:$0xff]
        %v459 = vld [vmem:[%s439 + $0x90] sm:$0xff]
        %v460 = vld [vmem:[%s439 + $0x98] sm:$0xff]
        %v461 = vld [vmem:[%s439 + $0xa0] sm:$0xff]
        %v462 = vld [vmem:[%s439 + $0xa8] sm:$0xff]
        %v463 = vld [vmem:[%s439 + $0xb0] sm:$0xff]
        %v464 = vld [vmem:[%s439 + $0xb8] sm:$0xff]
        %v465 = vld [vmem:[%s439 + $0xc0] sm:$0xff]
        %v466 = vld [vmem:[%s439 + $0xc8] sm:$0xff]
        %v467 = vld [vmem:[%s439 + $0xd0] sm:$0xff]
        %v468 = vld [vmem:[%s439 + $0xd8] sm:$0xff]
        %v469 = vld [vmem:[%s439 + $0xe0] sm:$0xff]
        %v470 = vld [vmem:[%s439 + $0xe8] sm:$0xff]
        %v471 = vld [vmem:[%s439 + $0xf0] sm:$0xff]
        %v472 = vld [vmem:[%s439 + $0xf8] sm:$0xff]
        %v505 = vcombine.high %v441, %v441
        %v506 = vcombine.high %v442, %v442
        %v507 = vcombine.high %v443, %v443
        %v508 = vcombine.high %v445, %v445
        %v509 = vcombine.high %v446, %v446
        %v510 = vcombine.high %v447, %v447
        %v511 = vcombine.high %v449, %v449
        %v512 = vcombine.high %v450, %v450
        %v513 = vcombine.high %v451, %v451
        %v514 = vcombine.high %v453, %v453
        %v515 = vcombine.high %v454, %v454
        %v516 = vcombine.high %v455, %v455
        %v517 = vcombine.high %v457, %v457
        %v518 = vcombine.high %v458, %v458
        %v519 = vcombine.high %v459, %v459
        %v520 = vcombine.high %v461, %v461
        %v521 = vcombine.high %v462, %v462
        %v522 = vcombine.high %v463, %v463
        %v523 = vcombine.high %v465, %v465
        %v524 = vcombine.high %v466, %v466
        %v525 = vcombine.high %v467, %v467
        %v526 = vcombine.high %v469, %v469
        %v527 = vcombine.high %v470, %v470
        %v528 = vcombine.high %v471, %v471
        %v529 = vld [vmem:[%s1] sm:$0xff]
        %v530 = vld [vmem:[%s1 + $0x8] sm:$0xff]
        %v531 = vld [vmem:[%s1 + $0x10] sm:$0xff]
        %v532 = vld [vmem:[%s1 + $0x18] sm:$0xff]
        %v533 = vld [vmem:[%s1 + $0x20] sm:$0xff]
        %v534 = vld [vmem:[%s1 + $0x28] sm:$0xff]
        %v535 = vld [vmem:[%s1 + $0x30] sm:$0xff]
        %v536 = vld [vmem:[%s1 + $0x38] sm:$0xff]
        %v537 = vcombine.high %v444, %v444
        %v538 = vcombine.high %v448, %v448
        %v539 = vcombine.high %v452, %v452
        %v540 = vcombine.high %v456, %v456
        %v541 = vcombine.high %v460, %v460
        %v542 = vcombine.high %v464, %v464
        %v543 = vcombine.high %v468, %v468
        %v544 = vcombine.high %v472, %v472
        %vm545 = vcmask 1042432
        %vm546 = vcmask 1046532
        %vm547 = vmor %vm545, %vm546
        %v548 = vrot.slane %v441, 5
        %v549 = vrot.slane %v548, 4
        %v550 = vrot.slane %v505, 5
        %v551 = vsel %vm547, %v549, %v550
        %v552 = vrot.slane %v550, 4
        %v553 = vrot.slane %v442, 5
        %v554 = vsel %vm547, %v552, %v553
        %v555 = vrot.slane %v553, 4
        %v556 = vrot.slane %v506, 5
        %v557 = vsel %vm547, %v555, %v556
        %v558 = vrot.slane %v556, 4
        %v559 = vrot.slane %v443, 5
        %v560 = vsel %vm547, %v558, %v559
        %v561 = vrot.slane %v559, 4
        %v562 = vrot.slane %v507, 5
        %v563 = vsel %vm547, %v561, %v562
        %v564 = vrot.slane %v562, 4
        %v565 = vrot.slane %v444, 5
        %v566 = vsel %vm547, %v564, %v565
        %v567 = vrot.slane %v565, 4
        %v568 = vrot.slane %v537, 5
        %v569 = vsel %vm547, %v567, %v568
        %v570 = vrot.slane %v445, 5
        %v571 = vrot.slane %v570, 4
        %v572 = vrot.slane %v508, 5
        %v573 = vsel %vm547, %v571, %v572
        %v574 = vrot.slane %v572, 4
        %v575 = vrot.slane %v446, 5
        %v576 = vsel %vm547, %v574, %v575
        %v577 = vrot.slane %v575, 4
        %v578 = vrot.slane %v509, 5
        %v579 = vsel %vm547, %v577, %v578
        %v580 = vrot.slane %v578, 4
        %v581 = vrot.slane %v447, 5
        %v582 = vsel %vm547, %v580, %v581
        %v583 = vrot.slane %v581, 4
        %v584 = vrot.slane %v510, 5
        %v585 = vsel %vm547, %v583, %v584
        %v586 = vrot.slane %v584, 4
        %v587 = vrot.slane %v448, 5
        %v588 = vsel %vm547, %v586, %v587
        %v589 = vrot.slane %v587, 4
        %v590 = vrot.slane %v538, 5
        %v591 = vsel %vm547, %v589, %v590
        %v592 = vrot.slane %v449, 5
        %v593 = vrot.slane %v592, 4
        %v594 = vrot.slane %v511, 5
        %v595 = vsel %vm547, %v593, %v594
        %v596 = vrot.slane %v594, 4
        %v597 = vrot.slane %v450, 5
        %v598 = vsel %vm547, %v596, %v597
        %v599 = vrot.slane %v597, 4
        %v600 = vrot.slane %v512, 5
        %v601 = vsel %vm547, %v599, %v600
        %v602 = vrot.slane %v600, 4
        %v603 = vrot.slane %v451, 5
        %v604 = vsel %vm547, %v602, %v603
        %v605 = vrot.slane %v603, 4
        %v606 = vrot.slane %v513, 5
        %v607 = vsel %vm547, %v605, %v606
        %v608 = vrot.slane %v606, 4
        %v609 = vrot.slane %v452, 5
        %v610 = vsel %vm547, %v608, %v609
        %v611 = vrot.slane %v609, 4
        %v612 = vrot.slane %v539, 5
        %v613 = vsel %vm547, %v611, %v612
        %v614 = vrot.slane %v453, 5
        %v615 = vrot.slane %v614, 4
        %v616 = vrot.slane %v514, 5
        %v617 = vsel %vm547, %v615, %v616
        %v618 = vrot.slane %v616, 4
        %v619 = vrot.slane %v454, 5
        %v620 = vsel %vm547, %v618, %v619
        %v621 = vrot.slane %v619, 4
        %v622 = vrot.slane %v515, 5
        %v623 = vsel %vm547, %v621, %v622
        %v624 = vrot.slane %v622, 4
        %v625 = vrot.slane %v455, 5
        %v626 = vsel %vm547, %v624, %v625
        %v627 = vrot.slane %v625, 4
        %v628 = vrot.slane %v516, 5
        %v629 = vsel %vm547, %v627, %v628
        %v630 = vrot.slane %v628, 4
        %v631 = vrot.slane %v456, 5
        %v632 = vsel %vm547, %v630, %v631
        %v633 = vrot.slane %v631, 4
        %v634 = vrot.slane %v540, 5
        %v635 = vsel %vm547, %v633, %v634
        %v636 = vrot.slane %v457, 5
        %v637 = vrot.slane %v636, 4
        %v638 = vrot.slane %v517, 5
        %v639 = vsel %vm547, %v637, %v638
        %v640 = vrot.slane %v638, 4
        %v641 = vrot.slane %v458, 5
        %v642 = vsel %vm547, %v640, %v641
        %v643 = vrot.slane %v641, 4
        %v644 = vrot.slane %v518, 5
        %v645 = vsel %vm547, %v643, %v644
        %v646 = vrot.slane %v644, 4
        %v647 = vrot.slane %v459, 5
        %v648 = vsel %vm547, %v646, %v647
        %v649 = vrot.slane %v647, 4
        %v650 = vrot.slane %v519, 5
        %v651 = vsel %vm547, %v649, %v650
        %v652 = vrot.slane %v650, 4
        %v653 = vrot.slane %v460, 5
        %v654 = vsel %vm547, %v652, %v653
        %v655 = vrot.slane %v653, 4
        %v656 = vrot.slane %v541, 5
        %v657 = vsel %vm547, %v655, %v656
        %v658 = vrot.slane %v461, 5
        %v659 = vrot.slane %v658, 4
        %v660 = vrot.slane %v520, 5
        %v661 = vsel %vm547, %v659, %v660
        %v662 = vrot.slane %v660, 4
        %v663 = vrot.slane %v462, 5
        %v664 = vsel %vm547, %v662, %v663
        %v665 = vrot.slane %v663, 4
        %v666 = vrot.slane %v521, 5
        %v667 = vsel %vm547, %v665, %v666
        %v668 = vrot.slane %v666, 4
        %v669 = vrot.slane %v463, 5
        %v670 = vsel %vm547, %v668, %v669
        %v671 = vrot.slane %v669, 4
        %v672 = vrot.slane %v522, 5
        %v673 = vsel %vm547, %v671, %v672
        %v674 = vrot.slane %v672, 4
        %v675 = vrot.slane %v464, 5
        %v676 = vsel %vm547, %v674, %v675
        %v677 = vrot.slane %v675, 4
        %v678 = vrot.slane %v542, 5
        %v679 = vsel %vm547, %v677, %v678
        %v680 = vrot.slane %v465, 5
        %v681 = vrot.slane %v680, 4
        %v682 = vrot.slane %v523, 5
        %v683 = vsel %vm547, %v681, %v682
        %v684 = vrot.slane %v682, 4
        %v685 = vrot.slane %v466, 5
        %v686 = vsel %vm547, %v684, %v685
        %v687 = vrot.slane %v685, 4
        %v688 = vrot.slane %v524, 5
        %v689 = vsel %vm547, %v687, %v688
        %v690 = vrot.slane %v688, 4
        %v691 = vrot.slane %v467, 5
        %v692 = vsel %vm547, %v690, %v691
        %v693 = vrot.slane %v691, 4
        %v694 = vrot.slane %v525, 5
        %v695 = vsel %vm547, %v693, %v694
        %v696 = vrot.slane %v694, 4
        %v697 = vrot.slane %v468, 5
        %v698 = vsel %vm547, %v696, %v697
        %v699 = vrot.slane %v697, 4
        %v700 = vrot.slane %v543, 5
        %v701 = vsel %vm547, %v699, %v700
        %v702 = vrot.slane %v469, 5
        %v703 = vrot.slane %v702, 4
        %v704 = vrot.slane %v526, 5
        %v705 = vsel %vm547, %v703, %v704
        %v706 = vrot.slane %v704, 4
        %v707 = vrot.slane %v470, 5
        %v708 = vsel %vm547, %v706, %v707
        %v709 = vrot.slane %v707, 4
        %v710 = vrot.slane %v527, 5
        %v711 = vsel %vm547, %v709, %v710
        %v712 = vrot.slane %v710, 4
        %v713 = vrot.slane %v471, 5
        %v714 = vsel %vm547, %v712, %v713
        %v715 = vrot.slane %v713, 4
        %v716 = vrot.slane %v528, 5
        %v717 = vsel %vm547, %v715, %v716
        %v718 = vrot.slane %v716, 4
        %v719 = vrot.slane %v472, 5
        %v720 = vsel %vm547, %v718, %v719
        %v721 = vrot.slane %v719, 4
        %v722 = vrot.slane %v544, 5
        %v723 = vsel %vm547, %v721, %v722
        %s724 = scalar_lea.vmem %s1, 64
        %v725 = vld [vmem:[%s724] sm:$0xff]
        %v726 = vld [vmem:[%s724 + $0x8] sm:$0xff]
        %v727 = vld [vmem:[%s724 + $0x10] sm:$0xff]
        %v728 = vld [vmem:[%s724 + $0x18] sm:$0xff]
        %v729 = vld [vmem:[%s724 + $0x20] sm:$0xff]
        %v730 = vld [vmem:[%s724 + $0x28] sm:$0xff]
        %v731 = vld [vmem:[%s724 + $0x30] sm:$0xff]
        %v732 = vld [vmem:[%s724 + $0x38] sm:$0xff]
        %v733 = vcombine.low %v551, %v554
        %v734 = vcombine.low %v557, %v560
        %v735 = vcombine.low %v563, %v566
        %v736 = vcombine.low %v569, %v573
        %v737 = vcombine.low %v576, %v579
        %v738 = vcombine.low %v582, %v585
        %v739 = vcombine.low %v588, %v591
        %v740 = vcombine.low %v595, %v598
        %v741 = vcombine.low %v601, %v604
        %v742 = vcombine.low %v607, %v610
        %v743 = vcombine.low %v613, %v617
        %v744 = vcombine.low %v620, %v623
        %v745 = vcombine.low %v626, %v629
        %v746 = vcombine.low %v632, %v635
        %v747 = vcombine.low %v639, %v642
        %v748 = vcombine.low %v645, %v648
        %v749 = vcombine.low %v651, %v654
        %v750 = vcombine.low %v657, %v661
        %v751 = vcombine.low %v664, %v667
        %v752 = vcombine.low %v670, %v673
        %v753 = vcombine.low %v676, %v679
        %v754 = vcombine.low %v683, %v686
        %v755 = vcombine.low %v689, %v692
        %v756 = vcombine.low %v695, %v698
        %v757 = vcombine.low %v701, %v705
        %v758 = vcombine.low %v708, %v711
        %v759 = vcombine.low %v714, %v717
        %v760 = vcombine.low %v720, %v723
        %vm761 = vcmask 261120
        %v762 = vsel %vm761, %v733, 0
        %v764 = vsel %vm761, %v734, 0
        %v766 = vsel %vm761, %v735, 0
        %v768 = vsel %vm761, %v736, 0
        %v770 = vsel %vm761, %v737, 0
        %v772 = vsel %vm761, %v738, 0
        %v774 = vsel %vm761, %v739, 0
        %v776 = vsel %vm761, %v740, 0
        %v778 = vsel %vm761, %v741, 0
        %v780 = vsel %vm761, %v742, 0
        %v782 = vsel %vm761, %v743, 0
        %v784 = vsel %vm761, %v744, 0
        %v786 = vsel %vm761, %v745, 0
        %v788 = vsel %vm761, %v746, 0
        %v790 = vsel %vm761, %v747, 0
        %v792 = vsel %vm761, %v748, 0
        %v794 = vsel %vm761, %v749, 0
        %v796 = vsel %vm761, %v750, 0
        %v798 = vsel %vm761, %v751, 0
        %v800 = vsel %vm761, %v752, 0
        %v802 = vsel %vm761, %v753, 0
        %v804 = vsel %vm761, %v754, 0
        %v806 = vsel %vm761, %v755, 0
        %v808 = vsel %vm761, %v756, 0
        %v810 = vsel %vm761, %v757, 0
        %v812 = vsel %vm761, %v758, 0
        %v814 = vsel %vm761, %v759, 0
        %v816 = vsel %vm761, %v760, 0
        %818 = vmatprep.subr.mxu0 0.0
        %819 = vmatpush1.msra.mxu0 0.0
        %820 = vmatprep.subr.mxu0 0.0
        %821 = vmatpush1.msra.mxu0 0.0
        %822 = vmatprep.subr.mxu0 0.0
        %823 = vmatpush1.msra.mxu0 0.0
        %824 = vmatprep.subr.mxu0 0.0
        %825 = vmatpush1.msra.mxu0 0.0
        %826 = vmatprep.subr.mxu0 0.0
        %827 = vmatpush1.msra.mxu0 0.0
        %828 = vmatprep.subr.mxu0 0.0
        %829 = vmatpush1.msra.mxu0 0.0
        %830 = vmatprep.subr.mxu0 0.0
        %831 = vmatpush1.msra.mxu0 0.0
        %832 = vmatprep.subr.mxu0 0.0
        %833 = vmatpush1.msra.mxu0 0.0
        %834 = vmatprep.subr.mxu0 0.0
        %835 = vmatpush1.msra.mxu0 0.0
        %836 = vmatprep.subr.mxu0 0.0
        %837 = vmatpush1.msra.mxu0 0.0
        %838 = vmatprep.subr.mxu0 0.0
        %839 = vmatpush1.msra.mxu0 0.0
        %840 = vmatprep.subr.mxu0 0.0
        %841 = vmatpush1.msra.mxu0 0.0
        %842 = vmatprep.subr.mxu0 %v732
        %843 = vmatpush1.msra.mxu0 %v731
        %844 = vmatprep.subr.mxu0 %v730
        %845 = vmatpush1.msra.mxu0 %v729
        %846 = vmatprep.subr.mxu0 %v728
        %847 = vmatpush1.msra.mxu0 %v727
        %848 = vmatprep.subr.mxu0 %v726
        %849 = vmatpush1.msra.mxu0 %v725
        %850 = vmatprep.subr.mxu0 0.0
        %851 = vmatpush2.msra.mxu0 0.0
        %852 = vmatprep.subr.mxu0 0.0
        %853 = vmatpush2.msra.mxu0 0.0
        %854 = vmatprep.subr.mxu0 0.0
        %855 = vmatpush2.msra.mxu0 0.0
        %856 = vmatprep.subr.mxu0 0.0
        %857 = vmatpush2.msra.mxu0 0.0
        %858 = vmatprep.subr.mxu0 0.0
        %859 = vmatpush2.msra.mxu0 0.0
        %860 = vmatprep.subr.mxu0 0.0
        %861 = vmatpush2.msra.mxu0 0.0
        %862 = vmatprep.subr.mxu0 0.0
        %863 = vmatpush2.msra.mxu0 0.0
        %864 = vmatprep.subr.mxu0 0.0
        %865 = vmatpush2.msra.mxu0 0.0
        %866 = vmatprep.subr.mxu0 0.0
        %867 = vmatpush2.msra.mxu0 0.0
        %868 = vmatprep.subr.mxu0 0.0
        %869 = vmatpush2.msra.mxu0 0.0
        %870 = vmatprep.subr.mxu0 0.0
        %871 = vmatpush2.msra.mxu0 0.0
        %872 = vmatprep.subr.mxu0 0.0
        %873 = vmatpush2.msra.mxu0 0.0
        %874 = vmatprep.subr.mxu0 0.0
        %875 = vmatpush2.msra.mxu0 0.0
        %876 = vmatprep.subr.mxu0 0.0
        %877 = vmatpush2.msra.mxu0 0.0
        %878 = vmatprep.subr.mxu0 0.0
        %879 = vmatpush2.msra.mxu0 0.0
        %880 = vmatprep.subr.mxu0 0.0
        %881 = vmatpush2.msra.mxu0 0.0
        %882 = vmatprep.mubr.f32.mxu0 0.0
        %883 = vmatmul.mubr.f32.gmra.mxu0 %v762
        %v884 = vpop.f32.mrf.mxu0
        %v885 = vadd.f32 0.0, %v884
        %v886 = vpop.f32.mrf.mxu0
        %v887 = vadd.f32 0.0, %v886
        %888 = vmatprep.mubr.f32.mxu0 0.0
        %889 = vmatmul.mubr.f32.gmra.mxu0 %v764
        %v890 = vpop.f32.mrf.mxu0
        %v891 = vadd.f32 0.0, %v890
        %v892 = vpop.f32.mrf.mxu0
        %v893 = vadd.f32 0.0, %v892
        %894 = vmatprep.mubr.f32.mxu0 0.0
        %895 = vmatmul.mubr.f32.gmra.mxu0 %v766
        %v896 = vpop.f32.mrf.mxu0
        %v897 = vadd.f32 0.0, %v896
        %v898 = vpop.f32.mrf.mxu0
        %v899 = vadd.f32 0.0, %v898
        %900 = vmatprep.mubr.f32.mxu0 0.0
        %901 = vmatmul.mubr.f32.gmra.mxu0 %v768
        %v902 = vpop.f32.mrf.mxu0
        %v903 = vadd.f32 0.0, %v902
        %v904 = vpop.f32.mrf.mxu0
        %v905 = vadd.f32 0.0, %v904
        %906 = vmatprep.mubr.f32.mxu0 0.0
        %907 = vmatmul.mubr.f32.gmra.mxu0 %v770
        %v908 = vpop.f32.mrf.mxu0
        %v909 = vadd.f32 0.0, %v908
        %v910 = vpop.f32.mrf.mxu0
        %v911 = vadd.f32 0.0, %v910
        %912 = vmatprep.mubr.f32.mxu0 0.0
        %913 = vmatmul.mubr.f32.gmra.mxu0 %v772
        %v914 = vpop.f32.mrf.mxu0
        %v915 = vadd.f32 0.0, %v914
        %v916 = vpop.f32.mrf.mxu0
        %v917 = vadd.f32 0.0, %v916
        %918 = vmatprep.mubr.f32.mxu0 0.0
        %919 = vmatmul.mubr.f32.gmra.mxu0 %v774
        %v920 = vpop.f32.mrf.mxu0
        %v921 = vadd.f32 0.0, %v920
        %v922 = vpop.f32.mrf.mxu0
        %v923 = vadd.f32 0.0, %v922
        %924 = vmatprep.mubr.f32.mxu0 0.0
        %925 = vmatmul.mubr.f32.gmra.mxu0 %v776
        %v926 = vpop.f32.mrf.mxu0
        %v927 = vadd.f32 0.0, %v926
        %v928 = vpop.f32.mrf.mxu0
        %v929 = vadd.f32 0.0, %v928
        %930 = vmatprep.mubr.f32.mxu0 0.0
        %931 = vmatmul.mubr.f32.gmra.mxu0 %v778
        %v932 = vpop.f32.mrf.mxu0
        %v933 = vadd.f32 0.0, %v932
        %v934 = vpop.f32.mrf.mxu0
        %v935 = vadd.f32 0.0, %v934
        %936 = vmatprep.mubr.f32.mxu0 0.0
        %937 = vmatmul.mubr.f32.gmra.mxu0 %v780
        %v938 = vpop.f32.mrf.mxu0
        %v939 = vadd.f32 0.0, %v938
        %v940 = vpop.f32.mrf.mxu0
        %v941 = vadd.f32 0.0, %v940
        %942 = vmatprep.mubr.f32.mxu0 0.0
        %943 = vmatmul.mubr.f32.gmra.mxu0 %v782
        %v944 = vpop.f32.mrf.mxu0
        %v945 = vadd.f32 0.0, %v944
        %v946 = vpop.f32.mrf.mxu0
        %v947 = vadd.f32 0.0, %v946
        %948 = vmatprep.mubr.f32.mxu0 0.0
        %949 = vmatmul.mubr.f32.gmra.mxu0 %v784
        %v950 = vpop.f32.mrf.mxu0
        %v951 = vadd.f32 0.0, %v950
        %v952 = vpop.f32.mrf.mxu0
        %v953 = vadd.f32 0.0, %v952
        %954 = vmatprep.mubr.f32.mxu0 0.0
        %955 = vmatmul.mubr.f32.gmra.mxu0 %v786
        %v956 = vpop.f32.mrf.mxu0
        %v957 = vadd.f32 0.0, %v956
        %v958 = vpop.f32.mrf.mxu0
        %v959 = vadd.f32 0.0, %v958
        %960 = vmatprep.mubr.f32.mxu0 0.0
        %961 = vmatmul.mubr.f32.gmra.mxu0 %v788
        %v962 = vpop.f32.mrf.mxu0
        %v963 = vadd.f32 0.0, %v962
        %v964 = vpop.f32.mrf.mxu0
        %v965 = vadd.f32 0.0, %v964
        %966 = vmatprep.mubr.f32.mxu0 0.0
        %967 = vmatmul.mubr.f32.gmra.mxu0 %v790
        %v968 = vpop.f32.mrf.mxu0
        %v969 = vadd.f32 0.0, %v968
        %v970 = vpop.f32.mrf.mxu0
        %v971 = vadd.f32 0.0, %v970
        %972 = vmatprep.mubr.f32.mxu0 0.0
        %973 = vmatmul.mubr.f32.gmra.mxu0 %v792
        %v974 = vpop.f32.mrf.mxu0
        %v975 = vadd.f32 0.0, %v974
        %v976 = vpop.f32.mrf.mxu0
        %v977 = vadd.f32 0.0, %v976
        %978 = vmatprep.mubr.f32.mxu0 0.0
        %979 = vmatmul.mubr.f32.gmra.mxu0 %v794
        %v980 = vpop.f32.mrf.mxu0
        %v981 = vadd.f32 0.0, %v980
        %v982 = vpop.f32.mrf.mxu0
        %v983 = vadd.f32 0.0, %v982
        %984 = vmatprep.mubr.f32.mxu0 0.0
        %985 = vmatmul.mubr.f32.gmra.mxu0 %v796
        %v986 = vpop.f32.mrf.mxu0
        %v987 = vadd.f32 0.0, %v986
        %v988 = vpop.f32.mrf.mxu0
        %v989 = vadd.f32 0.0, %v988
        %990 = vmatprep.mubr.f32.mxu0 0.0
        %991 = vmatmul.mubr.f32.gmra.mxu0 %v798
        %v992 = vpop.f32.mrf.mxu0
        %v993 = vadd.f32 0.0, %v992
        %v994 = vpop.f32.mrf.mxu0
        %v995 = vadd.f32 0.0, %v994
        %996 = vmatprep.mubr.f32.mxu0 0.0
        %997 = vmatmul.mubr.f32.gmra.mxu0 %v800
        %v998 = vpop.f32.mrf.mxu0
        %v999 = vadd.f32 0.0, %v998
        %v1000 = vpop.f32.mrf.mxu0
        %v1001 = vadd.f32 0.0, %v1000
        %1002 = vmatprep.mubr.f32.mxu0 0.0
        %1003 = vmatmul.mubr.f32.gmra.mxu0 %v802
        %v1004 = vpop.f32.mrf.mxu0
        %v1005 = vadd.f32 0.0, %v1004
        %v1006 = vpop.f32.mrf.mxu0
        %v1007 = vadd.f32 0.0, %v1006
        %1008 = vmatprep.mubr.f32.mxu0 0.0
        %1009 = vmatmul.mubr.f32.gmra.mxu0 %v804
        %v1010 = vpop.f32.mrf.mxu0
        %v1011 = vadd.f32 0.0, %v1010
        %v1012 = vpop.f32.mrf.mxu0
        %v1013 = vadd.f32 0.0, %v1012
        %1014 = vmatprep.mubr.f32.mxu0 0.0
        %1015 = vmatmul.mubr.f32.gmra.mxu0 %v806
        %v1016 = vpop.f32.mrf.mxu0
        %v1017 = vadd.f32 0.0, %v1016
        %v1018 = vpop.f32.mrf.mxu0
        %v1019 = vadd.f32 0.0, %v1018
        %1020 = vmatprep.mubr.f32.mxu0 0.0
        %1021 = vmatmul.mubr.f32.gmra.mxu0 %v808
        %v1022 = vpop.f32.mrf.mxu0
        %v1023 = vadd.f32 0.0, %v1022
        %v1024 = vpop.f32.mrf.mxu0
        %v1025 = vadd.f32 0.0, %v1024
        %1026 = vmatprep.mubr.f32.mxu0 0.0
        %1027 = vmatmul.mubr.f32.gmra.mxu0 %v810
        %v1028 = vpop.f32.mrf.mxu0
        %v1029 = vadd.f32 0.0, %v1028
        %v1030 = vpop.f32.mrf.mxu0
        %v1031 = vadd.f32 0.0, %v1030
        %1032 = vmatprep.mubr.f32.mxu0 0.0
        %1033 = vmatmul.mubr.f32.gmra.mxu0 %v812
        %v1034 = vpop.f32.mrf.mxu0
        %v1035 = vadd.f32 0.0, %v1034
        %v1036 = vpop.f32.mrf.mxu0
        %v1037 = vadd.f32 0.0, %v1036
        %1038 = vmatprep.mubr.f32.mxu0 0.0
        %1039 = vmatmul.mubr.f32.gmra.mxu0 %v814
        %v1040 = vpop.f32.mrf.mxu0
        %v1041 = vadd.f32 0.0, %v1040
        %v1042 = vpop.f32.mrf.mxu0
        %v1043 = vadd.f32 0.0, %v1042
        %1044 = vmatprep.mubr.f32.mxu0 0.0
        %1045 = vmatmul.mubr.f32.gmra.mxu0 %v816
        %v1046 = vpop.f32.mrf.mxu0
        %v1047 = vadd.f32 0.0, %v1046
        %v1048 = vpop.f32.mrf.mxu0
        %v1049 = vadd.f32 0.0, %v1048
        %1050 = vdwg.mxu0
        %v1051 = vcombine.low %v441, %v505
        %v1052 = vcombine.low %v442, %v506
        %v1053 = vcombine.low %v443, %v507
        %v1054 = vcombine.low %v444, %v445
        %v1055 = vcombine.low %v508, %v446
        %v1056 = vcombine.low %v509, %v447
        %v1057 = vcombine.low %v510, %v448
        %v1058 = vcombine.low %v449, %v511
        %v1059 = vcombine.low %v450, %v512
        %v1060 = vcombine.low %v451, %v513
        %v1061 = vcombine.low %v452, %v453
        %v1062 = vcombine.low %v514, %v454
        %v1063 = vcombine.low %v515, %v455
        %v1064 = vcombine.low %v516, %v456
        %v1065 = vcombine.low %v457, %v517
        %v1066 = vcombine.low %v458, %v518
        %v1067 = vcombine.low %v459, %v519
        %v1068 = vcombine.low %v460, %v461
        %v1069 = vcombine.low %v520, %v462
        %v1070 = vcombine.low %v521, %v463
        %v1071 = vcombine.low %v522, %v464
        %v1072 = vcombine.low %v465, %v523
        %v1073 = vcombine.low %v466, %v524
        %v1074 = vcombine.low %v467, %v525
        %v1075 = vcombine.low %v468, %v469
        %v1076 = vcombine.low %v526, %v470
        %v1077 = vcombine.low %v527, %v471
        %v1078 = vcombine.low %v528, %v472
        %v1079 = vsel %vm761, %v1051, 0
        %v1081 = vsel %vm761, %v1052, 0
        %v1083 = vsel %vm761, %v1053, 0
        %v1085 = vsel %vm761, %v1054, 0
        %v1087 = vsel %vm761, %v1055, 0
        %v1089 = vsel %vm761, %v1056, 0
        %v1091 = vsel %vm761, %v1057, 0
        %v1093 = vsel %vm761, %v1058, 0
        %v1095 = vsel %vm761, %v1059, 0
        %v1097 = vsel %vm761, %v1060, 0
        %v1099 = vsel %vm761, %v1061, 0
        %v1101 = vsel %vm761, %v1062, 0
        %v1103 = vsel %vm761, %v1063, 0
        %v1105 = vsel %vm761, %v1064, 0
        %v1107 = vsel %vm761, %v1065, 0
        %v1109 = vsel %vm761, %v1066, 0
        %v1111 = vsel %vm761, %v1067, 0
        %v1113 = vsel %vm761, %v1068, 0
        %v1115 = vsel %vm761, %v1069, 0
        %v1117 = vsel %vm761, %v1070, 0
        %v1119 = vsel %vm761, %v1071, 0
        %v1121 = vsel %vm761, %v1072, 0
        %v1123 = vsel %vm761, %v1073, 0
        %v1125 = vsel %vm761, %v1074, 0
        %v1127 = vsel %vm761, %v1075, 0
        %v1129 = vsel %vm761, %v1076, 0
        %v1131 = vsel %vm761, %v1077, 0
        %v1133 = vsel %vm761, %v1078, 0
        %1135 = vmatprep.subr.mxu0 0.0
        %1136 = vmatpush1.msra.mxu0 0.0
        %1137 = vmatprep.subr.mxu0 0.0
        %1138 = vmatpush1.msra.mxu0 0.0
        %1139 = vmatprep.subr.mxu0 0.0
        %1140 = vmatpush1.msra.mxu0 0.0
        %1141 = vmatprep.subr.mxu0 0.0
        %1142 = vmatpush1.msra.mxu0 0.0
        %1143 = vmatprep.subr.mxu0 0.0
        %1144 = vmatpush1.msra.mxu0 0.0
        %1145 = vmatprep.subr.mxu0 0.0
        %1146 = vmatpush1.msra.mxu0 0.0
        %1147 = vmatprep.subr.mxu0 0.0
        %1148 = vmatpush1.msra.mxu0 0.0
        %1149 = vmatprep.subr.mxu0 0.0
        %1150 = vmatpush1.msra.mxu0 0.0
        %1151 = vmatprep.subr.mxu0 0.0
        %1152 = vmatpush1.msra.mxu0 0.0
        %1153 = vmatprep.subr.mxu0 0.0
        %1154 = vmatpush1.msra.mxu0 0.0
        %1155 = vmatprep.subr.mxu0 0.0
        %1156 = vmatpush1.msra.mxu0 0.0
        %1157 = vmatprep.subr.mxu0 0.0
        %1158 = vmatpush1.msra.mxu0 0.0
        %1159 = vmatprep.subr.mxu0 %v536
        %1160 = vmatpush1.msra.mxu0 %v535
        %1161 = vmatprep.subr.mxu0 %v534
        %1162 = vmatpush1.msra.mxu0 %v533
        %1163 = vmatprep.subr.mxu0 %v532
        %1164 = vmatpush1.msra.mxu0 %v531
        %1165 = vmatprep.subr.mxu0 %v530
        %1166 = vmatpush1.msra.mxu0 %v529
        %1167 = vmatprep.subr.mxu0 0.0
        %1168 = vmatpush2.msra.mxu0 0.0
        %1169 = vmatprep.subr.mxu0 0.0
        %1170 = vmatpush2.msra.mxu0 0.0
        %1171 = vmatprep.subr.mxu0 0.0
        %1172 = vmatpush2.msra.mxu0 0.0
        %1173 = vmatprep.subr.mxu0 0.0
        %1174 = vmatpush2.msra.mxu0 0.0
        %1175 = vmatprep.subr.mxu0 0.0
        %1176 = vmatpush2.msra.mxu0 0.0
        %1177 = vmatprep.subr.mxu0 0.0
        %1178 = vmatpush2.msra.mxu0 0.0
        %1179 = vmatprep.subr.mxu0 0.0
        %1180 = vmatpush2.msra.mxu0 0.0
        %1181 = vmatprep.subr.mxu0 0.0
        %1182 = vmatpush2.msra.mxu0 0.0
        %1183 = vmatprep.subr.mxu0 0.0
        %1184 = vmatpush2.msra.mxu0 0.0
        %1185 = vmatprep.subr.mxu0 0.0
        %1186 = vmatpush2.msra.mxu0 0.0
        %1187 = vmatprep.subr.mxu0 0.0
        %1188 = vmatpush2.msra.mxu0 0.0
        %1189 = vmatprep.subr.mxu0 0.0
        %1190 = vmatpush2.msra.mxu0 0.0
        %1191 = vmatprep.subr.mxu0 0.0
        %1192 = vmatpush2.msra.mxu0 0.0
        %1193 = vmatprep.subr.mxu0 0.0
        %1194 = vmatpush2.msra.mxu0 0.0
        %1195 = vmatprep.subr.mxu0 0.0
        %1196 = vmatpush2.msra.mxu0 0.0
        %1197 = vmatprep.subr.mxu0 0.0
        %1198 = vmatpush2.msra.mxu0 0.0
        %1199 = vmatprep.mubr.f32.mxu0 0.0
        %1200 = vmatmul.mubr.f32.gmra.mxu0 %v1079
        %v1201 = vpop.f32.mrf.mxu0
        %v1202 = vadd.f32 %v885, %v1201
        %v1203 = vpop.f32.mrf.mxu0
        %v1204 = vadd.f32 %v887, %v1203
        %1205 = vmatprep.mubr.f32.mxu0 0.0
        %1206 = vmatmul.mubr.f32.gmra.mxu0 %v1081
        %v1207 = vpop.f32.mrf.mxu0
        %v1208 = vadd.f32 %v891, %v1207
        %v1209 = vpop.f32.mrf.mxu0
        %v1210 = vadd.f32 %v893, %v1209
        %1211 = vmatprep.mubr.f32.mxu0 0.0
        %1212 = vmatmul.mubr.f32.gmra.mxu0 %v1083
        %v1213 = vpop.f32.mrf.mxu0
        %v1214 = vadd.f32 %v897, %v1213
        %v1215 = vpop.f32.mrf.mxu0
        %v1216 = vadd.f32 %v899, %v1215
        %1217 = vmatprep.mubr.f32.mxu0 0.0
        %1218 = vmatmul.mubr.f32.gmra.mxu0 %v1085
        %v1219 = vpop.f32.mrf.mxu0
        %v1220 = vadd.f32 %v903, %v1219
        %v1221 = vpop.f32.mrf.mxu0
        %v1222 = vadd.f32 %v905, %v1221
        %1223 = vmatprep.mubr.f32.mxu0 0.0
        %1224 = vmatmul.mubr.f32.gmra.mxu0 %v1087
        %v1225 = vpop.f32.mrf.mxu0
        %v1226 = vadd.f32 %v909, %v1225
        %v1227 = vpop.f32.mrf.mxu0
        %v1228 = vadd.f32 %v911, %v1227
        %1229 = vmatprep.mubr.f32.mxu0 0.0
        %1230 = vmatmul.mubr.f32.gmra.mxu0 %v1089
        %v1231 = vpop.f32.mrf.mxu0
        %v1232 = vadd.f32 %v915, %v1231
        %v1233 = vpop.f32.mrf.mxu0
        %v1234 = vadd.f32 %v917, %v1233
        %1235 = vmatprep.mubr.f32.mxu0 0.0
        %1236 = vmatmul.mubr.f32.gmra.mxu0 %v1091
        %v1237 = vpop.f32.mrf.mxu0
        %v1238 = vadd.f32 %v921, %v1237
        %v1239 = vpop.f32.mrf.mxu0
        %v1240 = vadd.f32 %v923, %v1239
        %1241 = vmatprep.mubr.f32.mxu0 0.0
        %1242 = vmatmul.mubr.f32.gmra.mxu0 %v1093
        %v1243 = vpop.f32.mrf.mxu0
        %v1244 = vadd.f32 %v927, %v1243
        %v1245 = vpop.f32.mrf.mxu0
        %v1246 = vadd.f32 %v929, %v1245
        %1247 = vmatprep.mubr.f32.mxu0 0.0
        %1248 = vmatmul.mubr.f32.gmra.mxu0 %v1095
        %v1249 = vpop.f32.mrf.mxu0
        %v1250 = vadd.f32 %v933, %v1249
        %v1251 = vpop.f32.mrf.mxu0
        %v1252 = vadd.f32 %v935, %v1251
        %1253 = vmatprep.mubr.f32.mxu0 0.0
        %1254 = vmatmul.mubr.f32.gmra.mxu0 %v1097
        %v1255 = vpop.f32.mrf.mxu0
        %v1256 = vadd.f32 %v939, %v1255
        %v1257 = vpop.f32.mrf.mxu0
        %v1258 = vadd.f32 %v941, %v1257
        %1259 = vmatprep.mubr.f32.mxu0 0.0
        %1260 = vmatmul.mubr.f32.gmra.mxu0 %v1099
        %v1261 = vpop.f32.mrf.mxu0
        %v1262 = vadd.f32 %v945, %v1261
        %v1263 = vpop.f32.mrf.mxu0
        %v1264 = vadd.f32 %v947, %v1263
        %1265 = vmatprep.mubr.f32.mxu0 0.0
        %1266 = vmatmul.mubr.f32.gmra.mxu0 %v1101
        %v1267 = vpop.f32.mrf.mxu0
        %v1268 = vadd.f32 %v951, %v1267
        %v1269 = vpop.f32.mrf.mxu0
        %v1270 = vadd.f32 %v953, %v1269
        %1271 = vmatprep.mubr.f32.mxu0 0.0
        %1272 = vmatmul.mubr.f32.gmra.mxu0 %v1103
        %v1273 = vpop.f32.mrf.mxu0
        %v1274 = vadd.f32 %v957, %v1273
        %v1275 = vpop.f32.mrf.mxu0
        %v1276 = vadd.f32 %v959, %v1275
        %1277 = vmatprep.mubr.f32.mxu0 0.0
        %1278 = vmatmul.mubr.f32.gmra.mxu0 %v1105
        %v1279 = vpop.f32.mrf.mxu0
        %v1280 = vadd.f32 %v963, %v1279
        %v1281 = vpop.f32.mrf.mxu0
        %v1282 = vadd.f32 %v965, %v1281
        %1283 = vmatprep.mubr.f32.mxu0 0.0
        %1284 = vmatmul.mubr.f32.gmra.mxu0 %v1107
        %v1285 = vpop.f32.mrf.mxu0
        %v1286 = vadd.f32 %v969, %v1285
        %v1287 = vpop.f32.mrf.mxu0
        %v1288 = vadd.f32 %v971, %v1287
        %1289 = vmatprep.mubr.f32.mxu0 0.0
        %1290 = vmatmul.mubr.f32.gmra.mxu0 %v1109
        %v1291 = vpop.f32.mrf.mxu0
        %v1292 = vadd.f32 %v975, %v1291
        %v1293 = vpop.f32.mrf.mxu0
        %v1294 = vadd.f32 %v977, %v1293
        %1295 = vmatprep.mubr.f32.mxu0 0.0
        %1296 = vmatmul.mubr.f32.gmra.mxu0 %v1111
        %v1297 = vpop.f32.mrf.mxu0
        %v1298 = vadd.f32 %v981, %v1297
        %v1299 = vpop.f32.mrf.mxu0
        %v1300 = vadd.f32 %v983, %v1299
        %1301 = vmatprep.mubr.f32.mxu0 0.0
        %1302 = vmatmul.mubr.f32.gmra.mxu0 %v1113
        %v1303 = vpop.f32.mrf.mxu0
        %v1304 = vadd.f32 %v987, %v1303
        %v1305 = vpop.f32.mrf.mxu0
        %v1306 = vadd.f32 %v989, %v1305
        %1307 = vmatprep.mubr.f32.mxu0 0.0
        %1308 = vmatmul.mubr.f32.gmra.mxu0 %v1115
        %v1309 = vpop.f32.mrf.mxu0
        %v1310 = vadd.f32 %v993, %v1309
        %v1311 = vpop.f32.mrf.mxu0
        %v1312 = vadd.f32 %v995, %v1311
        %1313 = vmatprep.mubr.f32.mxu0 0.0
        %1314 = vmatmul.mubr.f32.gmra.mxu0 %v1117
        %v1315 = vpop.f32.mrf.mxu0
        %v1316 = vadd.f32 %v999, %v1315
        %v1317 = vpop.f32.mrf.mxu0
        %v1318 = vadd.f32 %v1001, %v1317
        %1319 = vmatprep.mubr.f32.mxu0 0.0
        %1320 = vmatmul.mubr.f32.gmra.mxu0 %v1119
        %v1321 = vpop.f32.mrf.mxu0
        %v1322 = vadd.f32 %v1005, %v1321
        %v1323 = vpop.f32.mrf.mxu0
        %v1324 = vadd.f32 %v1007, %v1323
        %1325 = vmatprep.mubr.f32.mxu0 0.0
        %1326 = vmatmul.mubr.f32.gmra.mxu0 %v1121
        %v1327 = vpop.f32.mrf.mxu0
        %v1328 = vadd.f32 %v1011, %v1327
        %v1329 = vpop.f32.mrf.mxu0
        %v1330 = vadd.f32 %v1013, %v1329
        %1331 = vmatprep.mubr.f32.mxu0 0.0
        %1332 = vmatmul.mubr.f32.gmra.mxu0 %v1123
        %v1333 = vpop.f32.mrf.mxu0
        %v1334 = vadd.f32 %v1017, %v1333
        %v1335 = vpop.f32.mrf.mxu0
        %v1336 = vadd.f32 %v1019, %v1335
        %1337 = vmatprep.mubr.f32.mxu0 0.0
        %1338 = vmatmul.mubr.f32.gmra.mxu0 %v1125
        %v1339 = vpop.f32.mrf.mxu0
        %v1340 = vadd.f32 %v1023, %v1339
        %v1341 = vpop.f32.mrf.mxu0
        %v1342 = vadd.f32 %v1025, %v1341
        %1343 = vmatprep.mubr.f32.mxu0 0.0
        %1344 = vmatmul.mubr.f32.gmra.mxu0 %v1127
        %v1345 = vpop.f32.mrf.mxu0
        %v1346 = vadd.f32 %v1029, %v1345
        %v1347 = vpop.f32.mrf.mxu0
        %v1348 = vadd.f32 %v1031, %v1347
        %1349 = vmatprep.mubr.f32.mxu0 0.0
        %1350 = vmatmul.mubr.f32.gmra.mxu0 %v1129
        %v1351 = vpop.f32.mrf.mxu0
        %v1352 = vadd.f32 %v1035, %v1351
        %v1353 = vpop.f32.mrf.mxu0
        %v1354 = vadd.f32 %v1037, %v1353
        %1355 = vmatprep.mubr.f32.mxu0 0.0
        %1356 = vmatmul.mubr.f32.gmra.mxu0 %v1131
        %v1357 = vpop.f32.mrf.mxu0
        %v1358 = vadd.f32 %v1041, %v1357
        %v1359 = vpop.f32.mrf.mxu0
        %v1360 = vadd.f32 %v1043, %v1359
        %1361 = vmatprep.mubr.f32.mxu0 0.0
        %1362 = vmatmul.mubr.f32.gmra.mxu0 %v1133
        %v1363 = vpop.f32.mrf.mxu0
        %v1364 = vadd.f32 %v1047, %v1363
        %v1365 = vpop.f32.mrf.mxu0
        %v1366 = vadd.f32 %v1049, %v1365
        %1367 = vdwg.mxu0
        %vm1368 = vcmask 1041408
        %vm1369 = vcmask 1045508
        %vm1370 = vmor %vm1368, %vm1369
        %v1371 = vrot.slane %v441, 6
        %v1372 = vrot.slane %v1371, 4
        %v1373 = vrot.slane %v505, 6
        %v1374 = vsel %vm1370, %v1372, %v1373
        %v1375 = vrot.slane %v1373, 4
        %v1376 = vrot.slane %v442, 6
        %v1377 = vsel %vm1370, %v1375, %v1376
        %v1378 = vrot.slane %v1376, 4
        %v1379 = vrot.slane %v506, 6
        %v1380 = vsel %vm1370, %v1378, %v1379
        %v1381 = vrot.slane %v1379, 4
        %v1382 = vrot.slane %v443, 6
        %v1383 = vsel %vm1370, %v1381, %v1382
        %v1384 = vrot.slane %v1382, 4
        %v1385 = vrot.slane %v507, 6
        %v1386 = vsel %vm1370, %v1384, %v1385
        %v1387 = vrot.slane %v1385, 4
        %v1388 = vrot.slane %v444, 6
        %v1389 = vsel %vm1370, %v1387, %v1388
        %v1390 = vrot.slane %v1388, 4
        %v1391 = vrot.slane %v537, 6
        %v1392 = vsel %vm1370, %v1390, %v1391
        %v1393 = vrot.slane %v445, 6
        %v1394 = vrot.slane %v1393, 4
        %v1395 = vrot.slane %v508, 6
        %v1396 = vsel %vm1370, %v1394, %v1395
        %v1397 = vrot.slane %v1395, 4
        %v1398 = vrot.slane %v446, 6
        %v1399 = vsel %vm1370, %v1397, %v1398
        %v1400 = vrot.slane %v1398, 4
        %v1401 = vrot.slane %v509, 6
        %v1402 = vsel %vm1370, %v1400, %v1401
        %v1403 = vrot.slane %v1401, 4
        %v1404 = vrot.slane %v447, 6
        %v1405 = vsel %vm1370, %v1403, %v1404
        %v1406 = vrot.slane %v1404, 4
        %v1407 = vrot.slane %v510, 6
        %v1408 = vsel %vm1370, %v1406, %v1407
        %v1409 = vrot.slane %v1407, 4
        %v1410 = vrot.slane %v448, 6
        %v1411 = vsel %vm1370, %v1409, %v1410
        %v1412 = vrot.slane %v1410, 4
        %v1413 = vrot.slane %v538, 6
        %v1414 = vsel %vm1370, %v1412, %v1413
        %v1415 = vrot.slane %v449, 6
        %v1416 = vrot.slane %v1415, 4
        %v1417 = vrot.slane %v511, 6
        %v1418 = vsel %vm1370, %v1416, %v1417
        %v1419 = vrot.slane %v1417, 4
        %v1420 = vrot.slane %v450, 6
        %v1421 = vsel %vm1370, %v1419, %v1420
        %v1422 = vrot.slane %v1420, 4
        %v1423 = vrot.slane %v512, 6
        %v1424 = vsel %vm1370, %v1422, %v1423
        %v1425 = vrot.slane %v1423, 4
        %v1426 = vrot.slane %v451, 6
        %v1427 = vsel %vm1370, %v1425, %v1426
        %v1428 = vrot.slane %v1426, 4
        %v1429 = vrot.slane %v513, 6
        %v1430 = vsel %vm1370, %v1428, %v1429
        %v1431 = vrot.slane %v1429, 4
        %v1432 = vrot.slane %v452, 6
        %v1433 = vsel %vm1370, %v1431, %v1432
        %v1434 = vrot.slane %v1432, 4
        %v1435 = vrot.slane %v539, 6
        %v1436 = vsel %vm1370, %v1434, %v1435
        %v1437 = vrot.slane %v453, 6
        %v1438 = vrot.slane %v1437, 4
        %v1439 = vrot.slane %v514, 6
        %v1440 = vsel %vm1370, %v1438, %v1439
        %v1441 = vrot.slane %v1439, 4
        %v1442 = vrot.slane %v454, 6
        %v1443 = vsel %vm1370, %v1441, %v1442
        %v1444 = vrot.slane %v1442, 4
        %v1445 = vrot.slane %v515, 6
        %v1446 = vsel %vm1370, %v1444, %v1445
        %v1447 = vrot.slane %v1445, 4
        %v1448 = vrot.slane %v455, 6
        %v1449 = vsel %vm1370, %v1447, %v1448
        %v1450 = vrot.slane %v1448, 4
        %v1451 = vrot.slane %v516, 6
        %v1452 = vsel %vm1370, %v1450, %v1451
        %v1453 = vrot.slane %v1451, 4
        %v1454 = vrot.slane %v456, 6
        %v1455 = vsel %vm1370, %v1453, %v1454
        %v1456 = vrot.slane %v1454, 4
        %v1457 = vrot.slane %v540, 6
        %v1458 = vsel %vm1370, %v1456, %v1457
        %v1459 = vrot.slane %v457, 6
        %v1460 = vrot.slane %v1459, 4
        %v1461 = vrot.slane %v517, 6
        %v1462 = vsel %vm1370, %v1460, %v1461
        %v1463 = vrot.slane %v1461, 4
        %v1464 = vrot.slane %v458, 6
        %v1465 = vsel %vm1370, %v1463, %v1464
        %v1466 = vrot.slane %v1464, 4
        %v1467 = vrot.slane %v518, 6
        %v1468 = vsel %vm1370, %v1466, %v1467
        %v1469 = vrot.slane %v1467, 4
        %v1470 = vrot.slane %v459, 6
        %v1471 = vsel %vm1370, %v1469, %v1470
        %v1472 = vrot.slane %v1470, 4
        %v1473 = vrot.slane %v519, 6
        %v1474 = vsel %vm1370, %v1472, %v1473
        %v1475 = vrot.slane %v1473, 4
        %v1476 = vrot.slane %v460, 6
        %v1477 = vsel %vm1370, %v1475, %v1476
        %v1478 = vrot.slane %v1476, 4
        %v1479 = vrot.slane %v541, 6
        %v1480 = vsel %vm1370, %v1478, %v1479
        %v1481 = vrot.slane %v461, 6
        %v1482 = vrot.slane %v1481, 4
        %v1483 = vrot.slane %v520, 6
        %v1484 = vsel %vm1370, %v1482, %v1483
        %v1485 = vrot.slane %v1483, 4
        %v1486 = vrot.slane %v462, 6
        %v1487 = vsel %vm1370, %v1485, %v1486
        %v1488 = vrot.slane %v1486, 4
        %v1489 = vrot.slane %v521, 6
        %v1490 = vsel %vm1370, %v1488, %v1489
        %v1491 = vrot.slane %v1489, 4
        %v1492 = vrot.slane %v463, 6
        %v1493 = vsel %vm1370, %v1491, %v1492
        %v1494 = vrot.slane %v1492, 4
        %v1495 = vrot.slane %v522, 6
        %v1496 = vsel %vm1370, %v1494, %v1495
        %v1497 = vrot.slane %v1495, 4
        %v1498 = vrot.slane %v464, 6
        %v1499 = vsel %vm1370, %v1497, %v1498
        %v1500 = vrot.slane %v1498, 4
        %v1501 = vrot.slane %v542, 6
        %v1502 = vsel %vm1370, %v1500, %v1501
        %v1503 = vrot.slane %v465, 6
        %v1504 = vrot.slane %v1503, 4
        %v1505 = vrot.slane %v523, 6
        %v1506 = vsel %vm1370, %v1504, %v1505
        %v1507 = vrot.slane %v1505, 4
        %v1508 = vrot.slane %v466, 6
        %v1509 = vsel %vm1370, %v1507, %v1508
        %v1510 = vrot.slane %v1508, 4
        %v1511 = vrot.slane %v524, 6
        %v1512 = vsel %vm1370, %v1510, %v1511
        %v1513 = vrot.slane %v1511, 4
        %v1514 = vrot.slane %v467, 6
        %v1515 = vsel %vm1370, %v1513, %v1514
        %v1516 = vrot.slane %v1514, 4
        %v1517 = vrot.slane %v525, 6
        %v1518 = vsel %vm1370, %v1516, %v1517
        %v1519 = vrot.slane %v1517, 4
        %v1520 = vrot.slane %v468, 6
        %v1521 = vsel %vm1370, %v1519, %v1520
        %v1522 = vrot.slane %v1520, 4
        %v1523 = vrot.slane %v543, 6
        %v1524 = vsel %vm1370, %v1522, %v1523
        %v1525 = vrot.slane %v469, 6
        %v1526 = vrot.slane %v1525, 4
        %v1527 = vrot.slane %v526, 6
        %v1528 = vsel %vm1370, %v1526, %v1527
        %v1529 = vrot.slane %v1527, 4
        %v1530 = vrot.slane %v470, 6
        %v1531 = vsel %vm1370, %v1529, %v1530
        %v1532 = vrot.slane %v1530, 4
        %v1533 = vrot.slane %v527, 6
        %v1534 = vsel %vm1370, %v1532, %v1533
        %v1535 = vrot.slane %v1533, 4
        %v1536 = vrot.slane %v471, 6
        %v1537 = vsel %vm1370, %v1535, %v1536
        %v1538 = vrot.slane %v1536, 4
        %v1539 = vrot.slane %v528, 6
        %v1540 = vsel %vm1370, %v1538, %v1539
        %v1541 = vrot.slane %v1539, 4
        %v1542 = vrot.slane %v472, 6
        %v1543 = vsel %vm1370, %v1541, %v1542
        %v1544 = vrot.slane %v1542, 4
        %v1545 = vrot.slane %v544, 6
        %v1546 = vsel %vm1370, %v1544, %v1545
        %s1547 = scalar_lea.vmem %s1, 128
        %v1548 = vld [vmem:[%s1547] sm:$0xff]
        %v1549 = vld [vmem:[%s1547 + $0x8] sm:$0xff]
        %v1550 = vld [vmem:[%s1547 + $0x10] sm:$0xff]
        %v1551 = vld [vmem:[%s1547 + $0x18] sm:$0xff]
        %v1552 = vld [vmem:[%s1547 + $0x20] sm:$0xff]
        %v1553 = vld [vmem:[%s1547 + $0x28] sm:$0xff]
        %v1554 = vld [vmem:[%s1547 + $0x30] sm:$0xff]
        %v1555 = vld [vmem:[%s1547 + $0x38] sm:$0xff]
        %v1556 = vcombine.low %v1374, %v1377
        %v1557 = vcombine.low %v1380, %v1383
        %v1558 = vcombine.low %v1386, %v1389
        %v1559 = vcombine.low %v1392, %v1396
        %v1560 = vcombine.low %v1399, %v1402
        %v1561 = vcombine.low %v1405, %v1408
        %v1562 = vcombine.low %v1411, %v1414
        %v1563 = vcombine.low %v1418, %v1421
        %v1564 = vcombine.low %v1424, %v1427
        %v1565 = vcombine.low %v1430, %v1433
        %v1566 = vcombine.low %v1436, %v1440
        %v1567 = vcombine.low %v1443, %v1446
        %v1568 = vcombine.low %v1449, %v1452
        %v1569 = vcombine.low %v1455, %v1458
        %v1570 = vcombine.low %v1462, %v1465
        %v1571 = vcombine.low %v1468, %v1471
        %v1572 = vcombine.low %v1474, %v1477
        %v1573 = vcombine.low %v1480, %v1484
        %v1574 = vcombine.low %v1487, %v1490
        %v1575 = vcombine.low %v1493, %v1496
        %v1576 = vcombine.low %v1499, %v1502
        %v1577 = vcombine.low %v1506, %v1509
        %v1578 = vcombine.low %v1512, %v1515
        %v1579 = vcombine.low %v1518, %v1521
        %v1580 = vcombine.low %v1524, %v1528
        %v1581 = vcombine.low %v1531, %v1534
        %v1582 = vcombine.low %v1537, %v1540
        %v1583 = vcombine.low %v1543, %v1546
        %v1584 = vsel %vm761, %v1556, 0
        %v1586 = vsel %vm761, %v1557, 0
        %v1588 = vsel %vm761, %v1558, 0
        %v1590 = vsel %vm761, %v1559, 0
        %v1592 = vsel %vm761, %v1560, 0
        %v1594 = vsel %vm761, %v1561, 0
        %v1596 = vsel %vm761, %v1562, 0
        %v1598 = vsel %vm761, %v1563, 0
        %v1600 = vsel %vm761, %v1564, 0
        %v1602 = vsel %vm761, %v1565, 0
        %v1604 = vsel %vm761, %v1566, 0
        %v1606 = vsel %vm761, %v1567, 0
        %v1608 = vsel %vm761, %v1568, 0
        %v1610 = vsel %vm761, %v1569, 0
        %v1612 = vsel %vm761, %v1570, 0
        %v1614 = vsel %vm761, %v1571, 0
        %v1616 = vsel %vm761, %v1572, 0
        %v1618 = vsel %vm761, %v1573, 0
        %v1620 = vsel %vm761, %v1574, 0
        %v1622 = vsel %vm761, %v1575, 0
        %v1624 = vsel %vm761, %v1576, 0
        %v1626 = vsel %vm761, %v1577, 0
        %v1628 = vsel %vm761, %v1578, 0
        %v1630 = vsel %vm761, %v1579, 0
        %v1632 = vsel %vm761, %v1580, 0
        %v1634 = vsel %vm761, %v1581, 0
        %v1636 = vsel %vm761, %v1582, 0
        %v1638 = vsel %vm761, %v1583, 0
        %1640 = vmatprep.subr.mxu0 0.0
        %1641 = vmatpush1.msra.mxu0 0.0
        %1642 = vmatprep.subr.mxu0 0.0
        %1643 = vmatpush1.msra.mxu0 0.0
        %1644 = vmatprep.subr.mxu0 0.0
        %1645 = vmatpush1.msra.mxu0 0.0
        %1646 = vmatprep.subr.mxu0 0.0
        %1647 = vmatpush1.msra.mxu0 0.0
        %1648 = vmatprep.subr.mxu0 0.0
        %1649 = vmatpush1.msra.mxu0 0.0
        %1650 = vmatprep.subr.mxu0 0.0
        %1651 = vmatpush1.msra.mxu0 0.0
        %1652 = vmatprep.subr.mxu0 0.0
        %1653 = vmatpush1.msra.mxu0 0.0
        %1654 = vmatprep.subr.mxu0 0.0
        %1655 = vmatpush1.msra.mxu0 0.0
        %1656 = vmatprep.subr.mxu0 0.0
        %1657 = vmatpush1.msra.mxu0 0.0
        %1658 = vmatprep.subr.mxu0 0.0
        %1659 = vmatpush1.msra.mxu0 0.0
        %1660 = vmatprep.subr.mxu0 0.0
        %1661 = vmatpush1.msra.mxu0 0.0
        %1662 = vmatprep.subr.mxu0 0.0
        %1663 = vmatpush1.msra.mxu0 0.0
        %1664 = vmatprep.subr.mxu0 %v1555
        %1665 = vmatpush1.msra.mxu0 %v1554
        %1666 = vmatprep.subr.mxu0 %v1553
        %1667 = vmatpush1.msra.mxu0 %v1552
        %1668 = vmatprep.subr.mxu0 %v1551
        %1669 = vmatpush1.msra.mxu0 %v1550
        %1670 = vmatprep.subr.mxu0 %v1549
        %1671 = vmatpush1.msra.mxu0 %v1548
        %1672 = vmatprep.subr.mxu0 0.0
        %1673 = vmatpush2.msra.mxu0 0.0
        %1674 = vmatprep.subr.mxu0 0.0
        %1675 = vmatpush2.msra.mxu0 0.0
        %1676 = vmatprep.subr.mxu0 0.0
        %1677 = vmatpush2.msra.mxu0 0.0
        %1678 = vmatprep.subr.mxu0 0.0
        %1679 = vmatpush2.msra.mxu0 0.0
        %1680 = vmatprep.subr.mxu0 0.0
        %1681 = vmatpush2.msra.mxu0 0.0
        %1682 = vmatprep.subr.mxu0 0.0
        %1683 = vmatpush2.msra.mxu0 0.0
        %1684 = vmatprep.subr.mxu0 0.0
        %1685 = vmatpush2.msra.mxu0 0.0
        %1686 = vmatprep.subr.mxu0 0.0
        %1687 = vmatpush2.msra.mxu0 0.0
        %1688 = vmatprep.subr.mxu0 0.0
        %1689 = vmatpush2.msra.mxu0 0.0
        %1690 = vmatprep.subr.mxu0 0.0
        %1691 = vmatpush2.msra.mxu0 0.0
        %1692 = vmatprep.subr.mxu0 0.0
        %1693 = vmatpush2.msra.mxu0 0.0
        %1694 = vmatprep.subr.mxu0 0.0
        %1695 = vmatpush2.msra.mxu0 0.0
        %1696 = vmatprep.subr.mxu0 0.0
        %1697 = vmatpush2.msra.mxu0 0.0
        %1698 = vmatprep.subr.mxu0 0.0
        %1699 = vmatpush2.msra.mxu0 0.0
        %1700 = vmatprep.subr.mxu0 0.0
        %1701 = vmatpush2.msra.mxu0 0.0
        %1702 = vmatprep.subr.mxu0 0.0
        %1703 = vmatpush2.msra.mxu0 0.0
        %1704 = vmatprep.mubr.f32.mxu0 0.0
        %1705 = vmatmul.mubr.f32.gmra.mxu0 %v1584
        %v1706 = vpop.f32.mrf.mxu0
        %v1707 = vadd.f32 0.0, %v1706
        %v1708 = vpop.f32.mrf.mxu0
        %v1709 = vadd.f32 0.0, %v1708
        %1710 = vmatprep.mubr.f32.mxu0 0.0
        %1711 = vmatmul.mubr.f32.gmra.mxu0 %v1586
        %v1712 = vpop.f32.mrf.mxu0
        %v1713 = vadd.f32 0.0, %v1712
        %v1714 = vpop.f32.mrf.mxu0
        %v1715 = vadd.f32 0.0, %v1714
        %1716 = vmatprep.mubr.f32.mxu0 0.0
        %1717 = vmatmul.mubr.f32.gmra.mxu0 %v1588
        %v1718 = vpop.f32.mrf.mxu0
        %v1719 = vadd.f32 0.0, %v1718
        %v1720 = vpop.f32.mrf.mxu0
        %v1721 = vadd.f32 0.0, %v1720
        %1722 = vmatprep.mubr.f32.mxu0 0.0
        %1723 = vmatmul.mubr.f32.gmra.mxu0 %v1590
        %v1724 = vpop.f32.mrf.mxu0
        %v1725 = vadd.f32 0.0, %v1724
        %v1726 = vpop.f32.mrf.mxu0
        %v1727 = vadd.f32 0.0, %v1726
        %1728 = vmatprep.mubr.f32.mxu0 0.0
        %1729 = vmatmul.mubr.f32.gmra.mxu0 %v1592
        %v1730 = vpop.f32.mrf.mxu0
        %v1731 = vadd.f32 0.0, %v1730
        %v1732 = vpop.f32.mrf.mxu0
        %v1733 = vadd.f32 0.0, %v1732
        %1734 = vmatprep.mubr.f32.mxu0 0.0
        %1735 = vmatmul.mubr.f32.gmra.mxu0 %v1594
        %v1736 = vpop.f32.mrf.mxu0
        %v1737 = vadd.f32 0.0, %v1736
        %v1738 = vpop.f32.mrf.mxu0
        %v1739 = vadd.f32 0.0, %v1738
        %1740 = vmatprep.mubr.f32.mxu0 0.0
        %1741 = vmatmul.mubr.f32.gmra.mxu0 %v1596
        %v1742 = vpop.f32.mrf.mxu0
        %v1743 = vadd.f32 0.0, %v1742
        %v1744 = vpop.f32.mrf.mxu0
        %v1745 = vadd.f32 0.0, %v1744
        %1746 = vmatprep.mubr.f32.mxu0 0.0
        %1747 = vmatmul.mubr.f32.gmra.mxu0 %v1598
        %v1748 = vpop.f32.mrf.mxu0
        %v1749 = vadd.f32 0.0, %v1748
        %v1750 = vpop.f32.mrf.mxu0
        %v1751 = vadd.f32 0.0, %v1750
        %1752 = vmatprep.mubr.f32.mxu0 0.0
        %1753 = vmatmul.mubr.f32.gmra.mxu0 %v1600
        %v1754 = vpop.f32.mrf.mxu0
        %v1755 = vadd.f32 0.0, %v1754
        %v1756 = vpop.f32.mrf.mxu0
        %v1757 = vadd.f32 0.0, %v1756
        %1758 = vmatprep.mubr.f32.mxu0 0.0
        %1759 = vmatmul.mubr.f32.gmra.mxu0 %v1602
        %v1760 = vpop.f32.mrf.mxu0
        %v1761 = vadd.f32 0.0, %v1760
        %v1762 = vpop.f32.mrf.mxu0
        %v1763 = vadd.f32 0.0, %v1762
        %1764 = vmatprep.mubr.f32.mxu0 0.0
        %1765 = vmatmul.mubr.f32.gmra.mxu0 %v1604
        %v1766 = vpop.f32.mrf.mxu0
        %v1767 = vadd.f32 0.0, %v1766
        %v1768 = vpop.f32.mrf.mxu0
        %v1769 = vadd.f32 0.0, %v1768
        %1770 = vmatprep.mubr.f32.mxu0 0.0
        %1771 = vmatmul.mubr.f32.gmra.mxu0 %v1606
        %v1772 = vpop.f32.mrf.mxu0
        %v1773 = vadd.f32 0.0, %v1772
        %v1774 = vpop.f32.mrf.mxu0
        %v1775 = vadd.f32 0.0, %v1774
        %1776 = vmatprep.mubr.f32.mxu0 0.0
        %1777 = vmatmul.mubr.f32.gmra.mxu0 %v1608
        %v1778 = vpop.f32.mrf.mxu0
        %v1779 = vadd.f32 0.0, %v1778
        %v1780 = vpop.f32.mrf.mxu0
        %v1781 = vadd.f32 0.0, %v1780
        %1782 = vmatprep.mubr.f32.mxu0 0.0
        %1783 = vmatmul.mubr.f32.gmra.mxu0 %v1610
        %v1784 = vpop.f32.mrf.mxu0
        %v1785 = vadd.f32 0.0, %v1784
        %v1786 = vpop.f32.mrf.mxu0
        %v1787 = vadd.f32 0.0, %v1786
        %1788 = vmatprep.mubr.f32.mxu0 0.0
        %1789 = vmatmul.mubr.f32.gmra.mxu0 %v1612
        %v1790 = vpop.f32.mrf.mxu0
        %v1791 = vadd.f32 0.0, %v1790
        %v1792 = vpop.f32.mrf.mxu0
        %v1793 = vadd.f32 0.0, %v1792
        %1794 = vmatprep.mubr.f32.mxu0 0.0
        %1795 = vmatmul.mubr.f32.gmra.mxu0 %v1614
        %v1796 = vpop.f32.mrf.mxu0
        %v1797 = vadd.f32 0.0, %v1796
        %v1798 = vpop.f32.mrf.mxu0
        %v1799 = vadd.f32 0.0, %v1798
        %1800 = vmatprep.mubr.f32.mxu0 0.0
        %1801 = vmatmul.mubr.f32.gmra.mxu0 %v1616
        %v1802 = vpop.f32.mrf.mxu0
        %v1803 = vadd.f32 0.0, %v1802
        %v1804 = vpop.f32.mrf.mxu0
        %v1805 = vadd.f32 0.0, %v1804
        %1806 = vmatprep.mubr.f32.mxu0 0.0
        %1807 = vmatmul.mubr.f32.gmra.mxu0 %v1618
        %v1808 = vpop.f32.mrf.mxu0
        %v1809 = vadd.f32 0.0, %v1808
        %v1810 = vpop.f32.mrf.mxu0
        %v1811 = vadd.f32 0.0, %v1810
        %1812 = vmatprep.mubr.f32.mxu0 0.0
        %1813 = vmatmul.mubr.f32.gmra.mxu0 %v1620
        %v1814 = vpop.f32.mrf.mxu0
        %v1815 = vadd.f32 0.0, %v1814
        %v1816 = vpop.f32.mrf.mxu0
        %v1817 = vadd.f32 0.0, %v1816
        %1818 = vmatprep.mubr.f32.mxu0 0.0
        %1819 = vmatmul.mubr.f32.gmra.mxu0 %v1622
        %v1820 = vpop.f32.mrf.mxu0
        %v1821 = vadd.f32 0.0, %v1820
        %v1822 = vpop.f32.mrf.mxu0
        %v1823 = vadd.f32 0.0, %v1822
        %1824 = vmatprep.mubr.f32.mxu0 0.0
        %1825 = vmatmul.mubr.f32.gmra.mxu0 %v1624
        %v1826 = vpop.f32.mrf.mxu0
        %v1827 = vadd.f32 0.0, %v1826
        %v1828 = vpop.f32.mrf.mxu0
        %v1829 = vadd.f32 0.0, %v1828
        %1830 = vmatprep.mubr.f32.mxu0 0.0
        %1831 = vmatmul.mubr.f32.gmra.mxu0 %v1626
        %v1832 = vpop.f32.mrf.mxu0
        %v1833 = vadd.f32 0.0, %v1832
        %v1834 = vpop.f32.mrf.mxu0
        %v1835 = vadd.f32 0.0, %v1834
        %1836 = vmatprep.mubr.f32.mxu0 0.0
        %1837 = vmatmul.mubr.f32.gmra.mxu0 %v1628
        %v1838 = vpop.f32.mrf.mxu0
        %v1839 = vadd.f32 0.0, %v1838
        %v1840 = vpop.f32.mrf.mxu0
        %v1841 = vadd.f32 0.0, %v1840
        %1842 = vmatprep.mubr.f32.mxu0 0.0
        %1843 = vmatmul.mubr.f32.gmra.mxu0 %v1630
        %v1844 = vpop.f32.mrf.mxu0
        %v1845 = vadd.f32 0.0, %v1844
        %v1846 = vpop.f32.mrf.mxu0
        %v1847 = vadd.f32 0.0, %v1846
        %1848 = vmatprep.mubr.f32.mxu0 0.0
        %1849 = vmatmul.mubr.f32.gmra.mxu0 %v1632
        %v1850 = vpop.f32.mrf.mxu0
        %v1851 = vadd.f32 0.0, %v1850
        %v1852 = vpop.f32.mrf.mxu0
        %v1853 = vadd.f32 0.0, %v1852
        %1854 = vmatprep.mubr.f32.mxu0 0.0
        %1855 = vmatmul.mubr.f32.gmra.mxu0 %v1634
        %v1856 = vpop.f32.mrf.mxu0
        %v1857 = vadd.f32 0.0, %v1856
        %v1858 = vpop.f32.mrf.mxu0
        %v1859 = vadd.f32 0.0, %v1858
        %1860 = vmatprep.mubr.f32.mxu0 0.0
        %1861 = vmatmul.mubr.f32.gmra.mxu0 %v1636
        %v1862 = vpop.f32.mrf.mxu0
        %v1863 = vadd.f32 0.0, %v1862
        %v1864 = vpop.f32.mrf.mxu0
        %v1865 = vadd.f32 0.0, %v1864
        %1866 = vmatprep.mubr.f32.mxu0 0.0
        %1867 = vmatmul.mubr.f32.gmra.mxu0 %v1638
        %v1868 = vpop.f32.mrf.mxu0
        %v1869 = vadd.f32 0.0, %v1868
        %v1870 = vpop.f32.mrf.mxu0
        %v1871 = vadd.f32 0.0, %v1870
        %1872 = vdwg.mxu0
        %v1873 = vadd.f32 %v1202, %v1707
        %v1874 = vadd.f32 %v1204, %v1709
        %v1875 = vadd.f32 %v1208, %v1713
        %v1876 = vadd.f32 %v1210, %v1715
        %v1877 = vadd.f32 %v1214, %v1719
        %v1878 = vadd.f32 %v1216, %v1721
        %v1879 = vadd.f32 %v1220, %v1725
        %v1880 = vadd.f32 %v1222, %v1727
        %v1881 = vadd.f32 %v1226, %v1731
        %v1882 = vadd.f32 %v1228, %v1733
        %v1883 = vadd.f32 %v1232, %v1737
        %v1884 = vadd.f32 %v1234, %v1739
        %v1885 = vadd.f32 %v1238, %v1743
        %v1886 = vadd.f32 %v1240, %v1745
        %v1887 = vadd.f32 %v1244, %v1749
        %v1888 = vadd.f32 %v1246, %v1751
        %v1889 = vadd.f32 %v1250, %v1755
        %v1890 = vadd.f32 %v1252, %v1757
        %v1891 = vadd.f32 %v1256, %v1761
        %v1892 = vadd.f32 %v1258, %v1763
        %v1893 = vadd.f32 %v1262, %v1767
        %v1894 = vadd.f32 %v1264, %v1769
        %v1895 = vadd.f32 %v1268, %v1773
        %v1896 = vadd.f32 %v1270, %v1775
        %v1897 = vadd.f32 %v1274, %v1779
        %v1898 = vadd.f32 %v1276, %v1781
        %v1899 = vadd.f32 %v1280, %v1785
        %v1900 = vadd.f32 %v1282, %v1787
        %v1901 = vadd.f32 %v1286, %v1791
        %v1902 = vadd.f32 %v1288, %v1793
        %v1903 = vadd.f32 %v1292, %v1797
        %v1904 = vadd.f32 %v1294, %v1799
        %v1905 = vadd.f32 %v1298, %v1803
        %v1906 = vadd.f32 %v1300, %v1805
        %v1907 = vadd.f32 %v1304, %v1809
        %v1908 = vadd.f32 %v1306, %v1811
        %v1909 = vadd.f32 %v1310, %v1815
        %v1910 = vadd.f32 %v1312, %v1817
        %v1911 = vadd.f32 %v1316, %v1821
        %v1912 = vadd.f32 %v1318, %v1823
        %v1913 = vadd.f32 %v1322, %v1827
        %v1914 = vadd.f32 %v1324, %v1829
        %v1915 = vadd.f32 %v1328, %v1833
        %v1916 = vadd.f32 %v1330, %v1835
        %v1917 = vadd.f32 %v1334, %v1839
        %v1918 = vadd.f32 %v1336, %v1841
        %v1919 = vadd.f32 %v1340, %v1845
        %v1920 = vadd.f32 %v1342, %v1847
        %v1921 = vadd.f32 %v1346, %v1851
        %v1922 = vadd.f32 %v1348, %v1853
        %v1923 = vadd.f32 %v1352, %v1857
        %v1924 = vadd.f32 %v1354, %v1859
        %v1925 = vadd.f32 %v1358, %v1863
        %v1926 = vadd.f32 %v1360, %v1865
        %v1927 = vadd.f32 %v1364, %v1869
        %v1928 = vadd.f32 %v1366, %v1871
        %vm1929 = vcmask 1040384
        %vm1930 = vcmask 1044484
        %vm1931 = vmor %vm1929, %vm1930
        %v1932 = vrot.slane %v441, 7
        %v1933 = vrot.slane %v1932, 4
        %v1934 = vrot.slane %v505, 7
        %v1935 = vsel %vm1931, %v1933, %v1934
        %v1936 = vrot.slane %v1934, 4
        %v1937 = vrot.slane %v442, 7
        %v1938 = vsel %vm1931, %v1936, %v1937
        %v1939 = vrot.slane %v1937, 4
        %v1940 = vrot.slane %v506, 7
        %v1941 = vsel %vm1931, %v1939, %v1940
        %v1942 = vrot.slane %v1940, 4
        %v1943 = vrot.slane %v443, 7
        %v1944 = vsel %vm1931, %v1942, %v1943
        %v1945 = vrot.slane %v1943, 4
        %v1946 = vrot.slane %v507, 7
        %v1947 = vsel %vm1931, %v1945, %v1946
        %v1948 = vrot.slane %v1946, 4
        %v1949 = vrot.slane %v444, 7
        %v1950 = vsel %vm1931, %v1948, %v1949
        %v1951 = vrot.slane %v1949, 4
        %v1952 = vrot.slane %v537, 7
        %v1953 = vsel %vm1931, %v1951, %v1952
        %v1954 = vrot.slane %v445, 7
        %v1955 = vrot.slane %v1954, 4
        %v1956 = vrot.slane %v508, 7
        %v1957 = vsel %vm1931, %v1955, %v1956
        %v1958 = vrot.slane %v1956, 4
        %v1959 = vrot.slane %v446, 7
        %v1960 = vsel %vm1931, %v1958, %v1959
        %v1961 = vrot.slane %v1959, 4
        %v1962 = vrot.slane %v509, 7
        %v1963 = vsel %vm1931, %v1961, %v1962
        %v1964 = vrot.slane %v1962, 4
        %v1965 = vrot.slane %v447, 7
        %v1966 = vsel %vm1931, %v1964, %v1965
        %v1967 = vrot.slane %v1965, 4
        %v1968 = vrot.slane %v510, 7
        %v1969 = vsel %vm1931, %v1967, %v1968
        %v1970 = vrot.slane %v1968, 4
        %v1971 = vrot.slane %v448, 7
        %v1972 = vsel %vm1931, %v1970, %v1971
        %v1973 = vrot.slane %v1971, 4
        %v1974 = vrot.slane %v538, 7
        %v1975 = vsel %vm1931, %v1973, %v1974
        %v1976 = vrot.slane %v449, 7
        %v1977 = vrot.slane %v1976, 4
        %v1978 = vrot.slane %v511, 7
        %v1979 = vsel %vm1931, %v1977, %v1978
        %v1980 = vrot.slane %v1978, 4
        %v1981 = vrot.slane %v450, 7
        %v1982 = vsel %vm1931, %v1980, %v1981
        %v1983 = vrot.slane %v1981, 4
        %v1984 = vrot.slane %v512, 7
        %v1985 = vsel %vm1931, %v1983, %v1984
        %v1986 = vrot.slane %v1984, 4
        %v1987 = vrot.slane %v451, 7
        %v1988 = vsel %vm1931, %v1986, %v1987
        %v1989 = vrot.slane %v1987, 4
        %v1990 = vrot.slane %v513, 7
        %v1991 = vsel %vm1931, %v1989, %v1990
        %v1992 = vrot.slane %v1990, 4
        %v1993 = vrot.slane %v452, 7
        %v1994 = vsel %vm1931, %v1992, %v1993
        %v1995 = vrot.slane %v1993, 4
        %v1996 = vrot.slane %v539, 7
        %v1997 = vsel %vm1931, %v1995, %v1996
        %v1998 = vrot.slane %v453, 7
        %v1999 = vrot.slane %v1998, 4
        %v2000 = vrot.slane %v514, 7
        %v2001 = vsel %vm1931, %v1999, %v2000
        %v2002 = vrot.slane %v2000, 4
        %v2003 = vrot.slane %v454, 7
        %v2004 = vsel %vm1931, %v2002, %v2003
        %v2005 = vrot.slane %v2003, 4
        %v2006 = vrot.slane %v515, 7
        %v2007 = vsel %vm1931, %v2005, %v2006
        %v2008 = vrot.slane %v2006, 4
        %v2009 = vrot.slane %v455, 7
        %v2010 = vsel %vm1931, %v2008, %v2009
        %v2011 = vrot.slane %v2009, 4
        %v2012 = vrot.slane %v516, 7
        %v2013 = vsel %vm1931, %v2011, %v2012
        %v2014 = vrot.slane %v2012, 4
        %v2015 = vrot.slane %v456, 7
        %v2016 = vsel %vm1931, %v2014, %v2015
        %v2017 = vrot.slane %v2015, 4
        %v2018 = vrot.slane %v540, 7
        %v2019 = vsel %vm1931, %v2017, %v2018
        %v2020 = vrot.slane %v457, 7
        %v2021 = vrot.slane %v2020, 4
        %v2022 = vrot.slane %v517, 7
        %v2023 = vsel %vm1931, %v2021, %v2022
        %v2024 = vrot.slane %v2022, 4
        %v2025 = vrot.slane %v458, 7
        %v2026 = vsel %vm1931, %v2024, %v2025
        %v2027 = vrot.slane %v2025, 4
        %v2028 = vrot.slane %v518, 7
        %v2029 = vsel %vm1931, %v2027, %v2028
        %v2030 = vrot.slane %v2028, 4
        %v2031 = vrot.slane %v459, 7
        %v2032 = vsel %vm1931, %v2030, %v2031
        %v2033 = vrot.slane %v2031, 4
        %v2034 = vrot.slane %v519, 7
        %v2035 = vsel %vm1931, %v2033, %v2034
        %v2036 = vrot.slane %v2034, 4
        %v2037 = vrot.slane %v460, 7
        %v2038 = vsel %vm1931, %v2036, %v2037
        %v2039 = vrot.slane %v2037, 4
        %v2040 = vrot.slane %v541, 7
        %v2041 = vsel %vm1931, %v2039, %v2040
        %v2042 = vrot.slane %v461, 7
        %v2043 = vrot.slane %v2042, 4
        %v2044 = vrot.slane %v520, 7
        %v2045 = vsel %vm1931, %v2043, %v2044
        %v2046 = vrot.slane %v2044, 4
        %v2047 = vrot.slane %v462, 7
        %v2048 = vsel %vm1931, %v2046, %v2047
        %v2049 = vrot.slane %v2047, 4
        %v2050 = vrot.slane %v521, 7
        %v2051 = vsel %vm1931, %v2049, %v2050
        %v2052 = vrot.slane %v2050, 4
        %v2053 = vrot.slane %v463, 7
        %v2054 = vsel %vm1931, %v2052, %v2053
        %v2055 = vrot.slane %v2053, 4
        %v2056 = vrot.slane %v522, 7
        %v2057 = vsel %vm1931, %v2055, %v2056
        %v2058 = vrot.slane %v2056, 4
        %v2059 = vrot.slane %v464, 7
        %v2060 = vsel %vm1931, %v2058, %v2059
        %v2061 = vrot.slane %v2059, 4
        %v2062 = vrot.slane %v542, 7
        %v2063 = vsel %vm1931, %v2061, %v2062
        %v2064 = vrot.slane %v465, 7
        %v2065 = vrot.slane %v2064, 4
        %v2066 = vrot.slane %v523, 7
        %v2067 = vsel %vm1931, %v2065, %v2066
        %v2068 = vrot.slane %v2066, 4
        %v2069 = vrot.slane %v466, 7
        %v2070 = vsel %vm1931, %v2068, %v2069
        %v2071 = vrot.slane %v2069, 4
        %v2072 = vrot.slane %v524, 7
        %v2073 = vsel %vm1931, %v2071, %v2072
        %v2074 = vrot.slane %v2072, 4
        %v2075 = vrot.slane %v467, 7
        %v2076 = vsel %vm1931, %v2074, %v2075
        %v2077 = vrot.slane %v2075, 4
        %v2078 = vrot.slane %v525, 7
        %v2079 = vsel %vm1931, %v2077, %v2078
        %v2080 = vrot.slane %v2078, 4
        %v2081 = vrot.slane %v468, 7
        %v2082 = vsel %vm1931, %v2080, %v2081
        %v2083 = vrot.slane %v2081, 4
        %v2084 = vrot.slane %v543, 7
        %v2085 = vsel %vm1931, %v2083, %v2084
        %v2086 = vrot.slane %v469, 7
        %v2087 = vrot.slane %v2086, 4
        %v2088 = vrot.slane %v526, 7
        %v2089 = vsel %vm1931, %v2087, %v2088
        %v2090 = vrot.slane %v2088, 4
        %v2091 = vrot.slane %v470, 7
        %v2092 = vsel %vm1931, %v2090, %v2091
        %v2093 = vrot.slane %v2091, 4
        %v2094 = vrot.slane %v527, 7
        %v2095 = vsel %vm1931, %v2093, %v2094
        %v2096 = vrot.slane %v2094, 4
        %v2097 = vrot.slane %v471, 7
        %v2098 = vsel %vm1931, %v2096, %v2097
        %v2099 = vrot.slane %v2097, 4
        %v2100 = vrot.slane %v528, 7
        %v2101 = vsel %vm1931, %v2099, %v2100
        %v2102 = vrot.slane %v2100, 4
        %v2103 = vrot.slane %v472, 7
        %v2104 = vsel %vm1931, %v2102, %v2103
        %v2105 = vrot.slane %v2103, 4
        %v2106 = vrot.slane %v544, 7
        %v2107 = vsel %vm1931, %v2105, %v2106
        %s2108 = scalar_lea.vmem %s1, 192
        %v2109 = vld [vmem:[%s2108] sm:$0xff]
        %v2110 = vld [vmem:[%s2108 + $0x8] sm:$0xff]
        %v2111 = vld [vmem:[%s2108 + $0x10] sm:$0xff]
        %v2112 = vld [vmem:[%s2108 + $0x18] sm:$0xff]
        %v2113 = vld [vmem:[%s2108 + $0x20] sm:$0xff]
        %v2114 = vld [vmem:[%s2108 + $0x28] sm:$0xff]
        %v2115 = vld [vmem:[%s2108 + $0x30] sm:$0xff]
        %v2116 = vld [vmem:[%s2108 + $0x38] sm:$0xff]
        %v2117 = vcombine.low %v1935, %v1938
        %v2118 = vcombine.low %v1941, %v1944
        %v2119 = vcombine.low %v1947, %v1950
        %v2120 = vcombine.low %v1953, %v1957
        %v2121 = vcombine.low %v1960, %v1963
        %v2122 = vcombine.low %v1966, %v1969
        %v2123 = vcombine.low %v1972, %v1975
        %v2124 = vcombine.low %v1979, %v1982
        %v2125 = vcombine.low %v1985, %v1988
        %v2126 = vcombine.low %v1991, %v1994
        %v2127 = vcombine.low %v1997, %v2001
        %v2128 = vcombine.low %v2004, %v2007
        %v2129 = vcombine.low %v2010, %v2013
        %v2130 = vcombine.low %v2016, %v2019
        %v2131 = vcombine.low %v2023, %v2026
        %v2132 = vcombine.low %v2029, %v2032
        %v2133 = vcombine.low %v2035, %v2038
        %v2134 = vcombine.low %v2041, %v2045
        %v2135 = vcombine.low %v2048, %v2051
        %v2136 = vcombine.low %v2054, %v2057
        %v2137 = vcombine.low %v2060, %v2063
        %v2138 = vcombine.low %v2067, %v2070
        %v2139 = vcombine.low %v2073, %v2076
        %v2140 = vcombine.low %v2079, %v2082
        %v2141 = vcombine.low %v2085, %v2089
        %v2142 = vcombine.low %v2092, %v2095
        %v2143 = vcombine.low %v2098, %v2101
        %v2144 = vcombine.low %v2104, %v2107
        %v2145 = vsel %vm761, %v2117, 0
        %v2147 = vsel %vm761, %v2118, 0
        %v2149 = vsel %vm761, %v2119, 0
        %v2151 = vsel %vm761, %v2120, 0
        %v2153 = vsel %vm761, %v2121, 0
        %v2155 = vsel %vm761, %v2122, 0
        %v2157 = vsel %vm761, %v2123, 0
        %v2159 = vsel %vm761, %v2124, 0
        %v2161 = vsel %vm761, %v2125, 0
        %v2163 = vsel %vm761, %v2126, 0
        %v2165 = vsel %vm761, %v2127, 0
        %v2167 = vsel %vm761, %v2128, 0
        %v2169 = vsel %vm761, %v2129, 0
        %v2171 = vsel %vm761, %v2130, 0
        %v2173 = vsel %vm761, %v2131, 0
        %v2175 = vsel %vm761, %v2132, 0
        %v2177 = vsel %vm761, %v2133, 0
        %v2179 = vsel %vm761, %v2134, 0
        %v2181 = vsel %vm761, %v2135, 0
        %v2183 = vsel %vm761, %v2136, 0
        %v2185 = vsel %vm761, %v2137, 0
        %v2187 = vsel %vm761, %v2138, 0
        %v2189 = vsel %vm761, %v2139, 0
        %v2191 = vsel %vm761, %v2140, 0
        %v2193 = vsel %vm761, %v2141, 0
        %v2195 = vsel %vm761, %v2142, 0
        %v2197 = vsel %vm761, %v2143, 0
        %v2199 = vsel %vm761, %v2144, 0
        %2201 = vmatprep.subr.mxu0 0.0
        %2202 = vmatpush1.msra.mxu0 0.0
        %2203 = vmatprep.subr.mxu0 0.0
        %2204 = vmatpush1.msra.mxu0 0.0
        %2205 = vmatprep.subr.mxu0 0.0
        %2206 = vmatpush1.msra.mxu0 0.0
        %2207 = vmatprep.subr.mxu0 0.0
        %2208 = vmatpush1.msra.mxu0 0.0
        %2209 = vmatprep.subr.mxu0 0.0
        %2210 = vmatpush1.msra.mxu0 0.0
        %2211 = vmatprep.subr.mxu0 0.0
        %2212 = vmatpush1.msra.mxu0 0.0
        %2213 = vmatprep.subr.mxu0 0.0
        %2214 = vmatpush1.msra.mxu0 0.0
        %2215 = vmatprep.subr.mxu0 0.0
        %2216 = vmatpush1.msra.mxu0 0.0
        %2217 = vmatprep.subr.mxu0 0.0
        %2218 = vmatpush1.msra.mxu0 0.0
        %2219 = vmatprep.subr.mxu0 0.0
        %2220 = vmatpush1.msra.mxu0 0.0
        %2221 = vmatprep.subr.mxu0 0.0
        %2222 = vmatpush1.msra.mxu0 0.0
        %2223 = vmatprep.subr.mxu0 0.0
        %2224 = vmatpush1.msra.mxu0 0.0
        %2225 = vmatprep.subr.mxu0 %v2116
        %2226 = vmatpush1.msra.mxu0 %v2115
        %2227 = vmatprep.subr.mxu0 %v2114
        %2228 = vmatpush1.msra.mxu0 %v2113
        %2229 = vmatprep.subr.mxu0 %v2112
        %2230 = vmatpush1.msra.mxu0 %v2111
        %2231 = vmatprep.subr.mxu0 %v2110
        %2232 = vmatpush1.msra.mxu0 %v2109
        %2233 = vmatprep.subr.mxu0 0.0
        %2234 = vmatpush2.msra.mxu0 0.0
        %2235 = vmatprep.subr.mxu0 0.0
        %2236 = vmatpush2.msra.mxu0 0.0
        %2237 = vmatprep.subr.mxu0 0.0
        %2238 = vmatpush2.msra.mxu0 0.0
        %2239 = vmatprep.subr.mxu0 0.0
        %2240 = vmatpush2.msra.mxu0 0.0
        %2241 = vmatprep.subr.mxu0 0.0
        %2242 = vmatpush2.msra.mxu0 0.0
        %2243 = vmatprep.subr.mxu0 0.0
        %2244 = vmatpush2.msra.mxu0 0.0
        %2245 = vmatprep.subr.mxu0 0.0
        %2246 = vmatpush2.msra.mxu0 0.0
        %2247 = vmatprep.subr.mxu0 0.0
        %2248 = vmatpush2.msra.mxu0 0.0
        %2249 = vmatprep.subr.mxu0 0.0
        %2250 = vmatpush2.msra.mxu0 0.0
        %2251 = vmatprep.subr.mxu0 0.0
        %2252 = vmatpush2.msra.mxu0 0.0
        %2253 = vmatprep.subr.mxu0 0.0
        %2254 = vmatpush2.msra.mxu0 0.0
        %2255 = vmatprep.subr.mxu0 0.0
        %2256 = vmatpush2.msra.mxu0 0.0
        %2257 = vmatprep.subr.mxu0 0.0
        %2258 = vmatpush2.msra.mxu0 0.0
        %2259 = vmatprep.subr.mxu0 0.0
        %2260 = vmatpush2.msra.mxu0 0.0
        %2261 = vmatprep.subr.mxu0 0.0
        %2262 = vmatpush2.msra.mxu0 0.0
        %2263 = vmatprep.subr.mxu0 0.0
        %2264 = vmatpush2.msra.mxu0 0.0
        %2265 = vmatprep.mubr.f32.mxu0 0.0
        %2266 = vmatmul.mubr.f32.gmra.mxu0 %v2145
        %v2267 = vpop.f32.mrf.mxu0
        %v2268 = vadd.f32 0.0, %v2267
        %v2269 = vpop.f32.mrf.mxu0
        %v2270 = vadd.f32 0.0, %v2269
        %2271 = vmatprep.mubr.f32.mxu0 0.0
        %2272 = vmatmul.mubr.f32.gmra.mxu0 %v2147
        %v2273 = vpop.f32.mrf.mxu0
        %v2274 = vadd.f32 0.0, %v2273
        %v2275 = vpop.f32.mrf.mxu0
        %v2276 = vadd.f32 0.0, %v2275
        %2277 = vmatprep.mubr.f32.mxu0 0.0
        %2278 = vmatmul.mubr.f32.gmra.mxu0 %v2149
        %v2279 = vpop.f32.mrf.mxu0
        %v2280 = vadd.f32 0.0, %v2279
        %v2281 = vpop.f32.mrf.mxu0
        %v2282 = vadd.f32 0.0, %v2281
        %2283 = vmatprep.mubr.f32.mxu0 0.0
        %2284 = vmatmul.mubr.f32.gmra.mxu0 %v2151
        %v2285 = vpop.f32.mrf.mxu0
        %v2286 = vadd.f32 0.0, %v2285
        %v2287 = vpop.f32.mrf.mxu0
        %v2288 = vadd.f32 0.0, %v2287
        %2289 = vmatprep.mubr.f32.mxu0 0.0
        %2290 = vmatmul.mubr.f32.gmra.mxu0 %v2153
        %v2291 = vpop.f32.mrf.mxu0
        %v2292 = vadd.f32 0.0, %v2291
        %v2293 = vpop.f32.mrf.mxu0
        %v2294 = vadd.f32 0.0, %v2293
        %2295 = vmatprep.mubr.f32.mxu0 0.0
        %2296 = vmatmul.mubr.f32.gmra.mxu0 %v2155
        %v2297 = vpop.f32.mrf.mxu0
        %v2298 = vadd.f32 0.0, %v2297
        %v2299 = vpop.f32.mrf.mxu0
        %v2300 = vadd.f32 0.0, %v2299
        %2301 = vmatprep.mubr.f32.mxu0 0.0
        %2302 = vmatmul.mubr.f32.gmra.mxu0 %v2157
        %v2303 = vpop.f32.mrf.mxu0
        %v2304 = vadd.f32 0.0, %v2303
        %v2305 = vpop.f32.mrf.mxu0
        %v2306 = vadd.f32 0.0, %v2305
        %2307 = vmatprep.mubr.f32.mxu0 0.0
        %2308 = vmatmul.mubr.f32.gmra.mxu0 %v2159
        %v2309 = vpop.f32.mrf.mxu0
        %v2310 = vadd.f32 0.0, %v2309
        %v2311 = vpop.f32.mrf.mxu0
        %v2312 = vadd.f32 0.0, %v2311
        %2313 = vmatprep.mubr.f32.mxu0 0.0
        %2314 = vmatmul.mubr.f32.gmra.mxu0 %v2161
        %v2315 = vpop.f32.mrf.mxu0
        %v2316 = vadd.f32 0.0, %v2315
        %v2317 = vpop.f32.mrf.mxu0
        %v2318 = vadd.f32 0.0, %v2317
        %2319 = vmatprep.mubr.f32.mxu0 0.0
        %2320 = vmatmul.mubr.f32.gmra.mxu0 %v2163
        %v2321 = vpop.f32.mrf.mxu0
        %v2322 = vadd.f32 0.0, %v2321
        %v2323 = vpop.f32.mrf.mxu0
        %v2324 = vadd.f32 0.0, %v2323
        %2325 = vmatprep.mubr.f32.mxu0 0.0
        %2326 = vmatmul.mubr.f32.gmra.mxu0 %v2165
        %v2327 = vpop.f32.mrf.mxu0
        %v2328 = vadd.f32 0.0, %v2327
        %v2329 = vpop.f32.mrf.mxu0
        %v2330 = vadd.f32 0.0, %v2329
        %2331 = vmatprep.mubr.f32.mxu0 0.0
        %2332 = vmatmul.mubr.f32.gmra.mxu0 %v2167
        %v2333 = vpop.f32.mrf.mxu0
        %v2334 = vadd.f32 0.0, %v2333
        %v2335 = vpop.f32.mrf.mxu0
        %v2336 = vadd.f32 0.0, %v2335
        %2337 = vmatprep.mubr.f32.mxu0 0.0
        %2338 = vmatmul.mubr.f32.gmra.mxu0 %v2169
        %v2339 = vpop.f32.mrf.mxu0
        %v2340 = vadd.f32 0.0, %v2339
        %v2341 = vpop.f32.mrf.mxu0
        %v2342 = vadd.f32 0.0, %v2341
        %2343 = vmatprep.mubr.f32.mxu0 0.0
        %2344 = vmatmul.mubr.f32.gmra.mxu0 %v2171
        %v2345 = vpop.f32.mrf.mxu0
        %v2346 = vadd.f32 0.0, %v2345
        %v2347 = vpop.f32.mrf.mxu0
        %v2348 = vadd.f32 0.0, %v2347
        %2349 = vmatprep.mubr.f32.mxu0 0.0
        %2350 = vmatmul.mubr.f32.gmra.mxu0 %v2173
        %v2351 = vpop.f32.mrf.mxu0
        %v2352 = vadd.f32 0.0, %v2351
        %v2353 = vpop.f32.mrf.mxu0
        %v2354 = vadd.f32 0.0, %v2353
        %2355 = vmatprep.mubr.f32.mxu0 0.0
        %2356 = vmatmul.mubr.f32.gmra.mxu0 %v2175
        %v2357 = vpop.f32.mrf.mxu0
        %v2358 = vadd.f32 0.0, %v2357
        %v2359 = vpop.f32.mrf.mxu0
        %v2360 = vadd.f32 0.0, %v2359
        %2361 = vmatprep.mubr.f32.mxu0 0.0
        %2362 = vmatmul.mubr.f32.gmra.mxu0 %v2177
        %v2363 = vpop.f32.mrf.mxu0
        %v2364 = vadd.f32 0.0, %v2363
        %v2365 = vpop.f32.mrf.mxu0
        %v2366 = vadd.f32 0.0, %v2365
        %2367 = vmatprep.mubr.f32.mxu0 0.0
        %2368 = vmatmul.mubr.f32.gmra.mxu0 %v2179
        %v2369 = vpop.f32.mrf.mxu0
        %v2370 = vadd.f32 0.0, %v2369
        %v2371 = vpop.f32.mrf.mxu0
        %v2372 = vadd.f32 0.0, %v2371
        %2373 = vmatprep.mubr.f32.mxu0 0.0
        %2374 = vmatmul.mubr.f32.gmra.mxu0 %v2181
        %v2375 = vpop.f32.mrf.mxu0
        %v2376 = vadd.f32 0.0, %v2375
        %v2377 = vpop.f32.mrf.mxu0
        %v2378 = vadd.f32 0.0, %v2377
        %2379 = vmatprep.mubr.f32.mxu0 0.0
        %2380 = vmatmul.mubr.f32.gmra.mxu0 %v2183
        %v2381 = vpop.f32.mrf.mxu0
        %v2382 = vadd.f32 0.0, %v2381
        %v2383 = vpop.f32.mrf.mxu0
        %v2384 = vadd.f32 0.0, %v2383
        %2385 = vmatprep.mubr.f32.mxu0 0.0
        %2386 = vmatmul.mubr.f32.gmra.mxu0 %v2185
        %v2387 = vpop.f32.mrf.mxu0
        %v2388 = vadd.f32 0.0, %v2387
        %v2389 = vpop.f32.mrf.mxu0
        %v2390 = vadd.f32 0.0, %v2389
        %2391 = vmatprep.mubr.f32.mxu0 0.0
        %2392 = vmatmul.mubr.f32.gmra.mxu0 %v2187
        %v2393 = vpop.f32.mrf.mxu0
        %v2394 = vadd.f32 0.0, %v2393
        %v2395 = vpop.f32.mrf.mxu0
        %v2396 = vadd.f32 0.0, %v2395
        %2397 = vmatprep.mubr.f32.mxu0 0.0
        %2398 = vmatmul.mubr.f32.gmra.mxu0 %v2189
        %v2399 = vpop.f32.mrf.mxu0
        %v2400 = vadd.f32 0.0, %v2399
        %v2401 = vpop.f32.mrf.mxu0
        %v2402 = vadd.f32 0.0, %v2401
        %2403 = vmatprep.mubr.f32.mxu0 0.0
        %2404 = vmatmul.mubr.f32.gmra.mxu0 %v2191
        %v2405 = vpop.f32.mrf.mxu0
        %v2406 = vadd.f32 0.0, %v2405
        %v2407 = vpop.f32.mrf.mxu0
        %v2408 = vadd.f32 0.0, %v2407
        %2409 = vmatprep.mubr.f32.mxu0 0.0
        %2410 = vmatmul.mubr.f32.gmra.mxu0 %v2193
        %v2411 = vpop.f32.mrf.mxu0
        %v2412 = vadd.f32 0.0, %v2411
        %v2413 = vpop.f32.mrf.mxu0
        %v2414 = vadd.f32 0.0, %v2413
        %2415 = vmatprep.mubr.f32.mxu0 0.0
        %2416 = vmatmul.mubr.f32.gmra.mxu0 %v2195
        %v2417 = vpop.f32.mrf.mxu0
        %v2418 = vadd.f32 0.0, %v2417
        %v2419 = vpop.f32.mrf.mxu0
        %v2420 = vadd.f32 0.0, %v2419
        %2421 = vmatprep.mubr.f32.mxu0 0.0
        %2422 = vmatmul.mubr.f32.gmra.mxu0 %v2197
        %v2423 = vpop.f32.mrf.mxu0
        %v2424 = vadd.f32 0.0, %v2423
        %v2425 = vpop.f32.mrf.mxu0
        %v2426 = vadd.f32 0.0, %v2425
        %2427 = vmatprep.mubr.f32.mxu0 0.0
        %2428 = vmatmul.mubr.f32.gmra.mxu0 %v2199
        %v2429 = vpop.f32.mrf.mxu0
        %v2430 = vadd.f32 0.0, %v2429
        %v2431 = vpop.f32.mrf.mxu0
        %v2432 = vadd.f32 0.0, %v2431
        %2433 = vdwg.mxu0
        %v2434 = vadd.f32 %v1873, %v2268
        %v2435 = vadd.f32 %v1874, %v2270
        %v2436 = vadd.f32 %v1875, %v2274
        %v2437 = vadd.f32 %v1876, %v2276
        %v2438 = vadd.f32 %v1877, %v2280
        %v2439 = vadd.f32 %v1878, %v2282
        %v2440 = vadd.f32 %v1879, %v2286
        %v2441 = vadd.f32 %v1880, %v2288
        %v2442 = vadd.f32 %v1881, %v2292
        %v2443 = vadd.f32 %v1882, %v2294
        %v2444 = vadd.f32 %v1883, %v2298
        %v2445 = vadd.f32 %v1884, %v2300
        %v2446 = vadd.f32 %v1885, %v2304
        %v2447 = vadd.f32 %v1886, %v2306
        %v2448 = vadd.f32 %v1887, %v2310
        %v2449 = vadd.f32 %v1888, %v2312
        %v2450 = vadd.f32 %v1889, %v2316
        %v2451 = vadd.f32 %v1890, %v2318
        %v2452 = vadd.f32 %v1891, %v2322
        %v2453 = vadd.f32 %v1892, %v2324
        %v2454 = vadd.f32 %v1893, %v2328
        %v2455 = vadd.f32 %v1894, %v2330
        %v2456 = vadd.f32 %v1895, %v2334
        %v2457 = vadd.f32 %v1896, %v2336
        %v2458 = vadd.f32 %v1897, %v2340
        %v2459 = vadd.f32 %v1898, %v2342
        %v2460 = vadd.f32 %v1899, %v2346
        %v2461 = vadd.f32 %v1900, %v2348
        %v2462 = vadd.f32 %v1901, %v2352
        %v2463 = vadd.f32 %v1902, %v2354
        %v2464 = vadd.f32 %v1903, %v2358
        %v2465 = vadd.f32 %v1904, %v2360
        %v2466 = vadd.f32 %v1905, %v2364
        %v2467 = vadd.f32 %v1906, %v2366
        %v2468 = vadd.f32 %v1907, %v2370
        %v2469 = vadd.f32 %v1908, %v2372
        %v2470 = vadd.f32 %v1909, %v2376
        %v2471 = vadd.f32 %v1910, %v2378
        %v2472 = vadd.f32 %v1911, %v2382
        %v2473 = vadd.f32 %v1912, %v2384
        %v2474 = vadd.f32 %v1913, %v2388
        %v2475 = vadd.f32 %v1914, %v2390
        %v2476 = vadd.f32 %v1915, %v2394
        %v2477 = vadd.f32 %v1916, %v2396
        %v2478 = vadd.f32 %v1917, %v2400
        %v2479 = vadd.f32 %v1918, %v2402
        %v2480 = vadd.f32 %v1919, %v2406
        %v2481 = vadd.f32 %v1920, %v2408
        %v2482 = vadd.f32 %v1921, %v2412
        %v2483 = vadd.f32 %v1922, %v2414
        %v2484 = vadd.f32 %v1923, %v2418
        %v2485 = vadd.f32 %v1924, %v2420
        %v2486 = vadd.f32 %v1925, %v2424
        %v2487 = vadd.f32 %v1926, %v2426
        %v2488 = vadd.f32 %v1927, %v2430
        %v2489 = vadd.f32 %v1928, %v2432
        %s2490 = scalar_lea.vmem %s1, 256
        %v2491 = vld [vmem:[%s2490] sm:$0xff]
        %v2492 = vld [vmem:[%s2490 + $0x8] sm:$0xff]
        %v2493 = vld [vmem:[%s2490 + $0x10] sm:$0xff]
        %v2494 = vld [vmem:[%s2490 + $0x18] sm:$0xff]
        %v2495 = vld [vmem:[%s2490 + $0x20] sm:$0xff]
        %v2496 = vld [vmem:[%s2490 + $0x28] sm:$0xff]
        %v2497 = vld [vmem:[%s2490 + $0x30] sm:$0xff]
        %v2498 = vld [vmem:[%s2490 + $0x38] sm:$0xff]
        %v2499 = vcombine.low %v505, %v442
        %v2500 = vcombine.low %v506, %v443
        %v2501 = vcombine.low %v507, %v444
        %v2502 = vcombine.low %v537, %v508
        %v2503 = vcombine.low %v446, %v509
        %v2504 = vcombine.low %v447, %v510
        %v2505 = vcombine.low %v448, %v538
        %v2506 = vcombine.low %v511, %v450
        %v2507 = vcombine.low %v512, %v451
        %v2508 = vcombine.low %v513, %v452
        %v2509 = vcombine.low %v539, %v514
        %v2510 = vcombine.low %v454, %v515
        %v2511 = vcombine.low %v455, %v516
        %v2512 = vcombine.low %v456, %v540
        %v2513 = vcombine.low %v517, %v458
        %v2514 = vcombine.low %v518, %v459
        %v2515 = vcombine.low %v519, %v460
        %v2516 = vcombine.low %v541, %v520
        %v2517 = vcombine.low %v462, %v521
        %v2518 = vcombine.low %v463, %v522
        %v2519 = vcombine.low %v464, %v542
        %v2520 = vcombine.low %v523, %v466
        %v2521 = vcombine.low %v524, %v467
        %v2522 = vcombine.low %v525, %v468
        %v2523 = vcombine.low %v543, %v526
        %v2524 = vcombine.low %v470, %v527
        %v2525 = vcombine.low %v471, %v528
        %v2526 = vcombine.low %v472, %v544
        %v2527 = vsel %vm761, %v2499, 0
        %v2529 = vsel %vm761, %v2500, 0
        %v2531 = vsel %vm761, %v2501, 0
        %v2533 = vsel %vm761, %v2502, 0
        %v2535 = vsel %vm761, %v2503, 0
        %v2537 = vsel %vm761, %v2504, 0
        %v2539 = vsel %vm761, %v2505, 0
        %v2541 = vsel %vm761, %v2506, 0
        %v2543 = vsel %vm761, %v2507, 0
        %v2545 = vsel %vm761, %v2508, 0
        %v2547 = vsel %vm761, %v2509, 0
        %v2549 = vsel %vm761, %v2510, 0
        %v2551 = vsel %vm761, %v2511, 0
        %v2553 = vsel %vm761, %v2512, 0
        %v2555 = vsel %vm761, %v2513, 0
        %v2557 = vsel %vm761, %v2514, 0
        %v2559 = vsel %vm761, %v2515, 0
        %v2561 = vsel %vm761, %v2516, 0
        %v2563 = vsel %vm761, %v2517, 0
        %v2565 = vsel %vm761, %v2518, 0
        %v2567 = vsel %vm761, %v2519, 0
        %v2569 = vsel %vm761, %v2520, 0
        %v2571 = vsel %vm761, %v2521, 0
        %v2573 = vsel %vm761, %v2522, 0
        %v2575 = vsel %vm761, %v2523, 0
        %v2577 = vsel %vm761, %v2524, 0
        %v2579 = vsel %vm761, %v2525, 0
        %v2581 = vsel %vm761, %v2526, 0
        %2583 = vmatprep.subr.mxu0 0.0
        %2584 = vmatpush1.msra.mxu0 0.0
        %2585 = vmatprep.subr.mxu0 0.0
        %2586 = vmatpush1.msra.mxu0 0.0
        %2587 = vmatprep.subr.mxu0 0.0
        %2588 = vmatpush1.msra.mxu0 0.0
        %2589 = vmatprep.subr.mxu0 0.0
        %2590 = vmatpush1.msra.mxu0 0.0
        %2591 = vmatprep.subr.mxu0 0.0
        %2592 = vmatpush1.msra.mxu0 0.0
        %2593 = vmatprep.subr.mxu0 0.0
        %2594 = vmatpush1.msra.mxu0 0.0
        %2595 = vmatprep.subr.mxu0 0.0
        %2596 = vmatpush1.msra.mxu0 0.0
        %2597 = vmatprep.subr.mxu0 0.0
        %2598 = vmatpush1.msra.mxu0 0.0
        %2599 = vmatprep.subr.mxu0 0.0
        %2600 = vmatpush1.msra.mxu0 0.0
        %2601 = vmatprep.subr.mxu0 0.0
        %2602 = vmatpush1.msra.mxu0 0.0
        %2603 = vmatprep.subr.mxu0 0.0
        %2604 = vmatpush1.msra.mxu0 0.0
        %2605 = vmatprep.subr.mxu0 0.0
        %2606 = vmatpush1.msra.mxu0 0.0
        %2607 = vmatprep.subr.mxu0 %v2498
        %2608 = vmatpush1.msra.mxu0 %v2497
        %2609 = vmatprep.subr.mxu0 %v2496
        %2610 = vmatpush1.msra.mxu0 %v2495
        %2611 = vmatprep.subr.mxu0 %v2494
        %2612 = vmatpush1.msra.mxu0 %v2493
        %2613 = vmatprep.subr.mxu0 %v2492
        %2614 = vmatpush1.msra.mxu0 %v2491
        %2615 = vmatprep.subr.mxu0 0.0
        %2616 = vmatpush2.msra.mxu0 0.0
        %2617 = vmatprep.subr.mxu0 0.0
        %2618 = vmatpush2.msra.mxu0 0.0
        %2619 = vmatprep.subr.mxu0 0.0
        %2620 = vmatpush2.msra.mxu0 0.0
        %2621 = vmatprep.subr.mxu0 0.0
        %2622 = vmatpush2.msra.mxu0 0.0
        %2623 = vmatprep.subr.mxu0 0.0
        %2624 = vmatpush2.msra.mxu0 0.0
        %2625 = vmatprep.subr.mxu0 0.0
        %2626 = vmatpush2.msra.mxu0 0.0
        %2627 = vmatprep.subr.mxu0 0.0
        %2628 = vmatpush2.msra.mxu0 0.0
        %2629 = vmatprep.subr.mxu0 0.0
        %2630 = vmatpush2.msra.mxu0 0.0
        %2631 = vmatprep.subr.mxu0 0.0
        %2632 = vmatpush2.msra.mxu0 0.0
        %2633 = vmatprep.subr.mxu0 0.0
        %2634 = vmatpush2.msra.mxu0 0.0
        %2635 = vmatprep.subr.mxu0 0.0
        %2636 = vmatpush2.msra.mxu0 0.0
        %2637 = vmatprep.subr.mxu0 0.0
        %2638 = vmatpush2.msra.mxu0 0.0
        %2639 = vmatprep.subr.mxu0 0.0
        %2640 = vmatpush2.msra.mxu0 0.0
        %2641 = vmatprep.subr.mxu0 0.0
        %2642 = vmatpush2.msra.mxu0 0.0
        %2643 = vmatprep.subr.mxu0 0.0
        %2644 = vmatpush2.msra.mxu0 0.0
        %2645 = vmatprep.subr.mxu0 0.0
        %2646 = vmatpush2.msra.mxu0 0.0
        %2647 = vmatprep.mubr.f32.mxu0 0.0
        %2648 = vmatmul.mubr.f32.gmra.mxu0 %v2527
        %v2649 = vpop.f32.mrf.mxu0
        %v2650 = vadd.f32 0.0, %v2649
        %v2651 = vpop.f32.mrf.mxu0
        %v2652 = vadd.f32 0.0, %v2651
        %2653 = vmatprep.mubr.f32.mxu0 0.0
        %2654 = vmatmul.mubr.f32.gmra.mxu0 %v2529
        %v2655 = vpop.f32.mrf.mxu0
        %v2656 = vadd.f32 0.0, %v2655
        %v2657 = vpop.f32.mrf.mxu0
        %v2658 = vadd.f32 0.0, %v2657
        %2659 = vmatprep.mubr.f32.mxu0 0.0
        %2660 = vmatmul.mubr.f32.gmra.mxu0 %v2531
        %v2661 = vpop.f32.mrf.mxu0
        %v2662 = vadd.f32 0.0, %v2661
        %v2663 = vpop.f32.mrf.mxu0
        %v2664 = vadd.f32 0.0, %v2663
        %2665 = vmatprep.mubr.f32.mxu0 0.0
        %2666 = vmatmul.mubr.f32.gmra.mxu0 %v2533
        %v2667 = vpop.f32.mrf.mxu0
        %v2668 = vadd.f32 0.0, %v2667
        %v2669 = vpop.f32.mrf.mxu0
        %v2670 = vadd.f32 0.0, %v2669
        %2671 = vmatprep.mubr.f32.mxu0 0.0
        %2672 = vmatmul.mubr.f32.gmra.mxu0 %v2535
        %v2673 = vpop.f32.mrf.mxu0
        %v2674 = vadd.f32 0.0, %v2673
        %v2675 = vpop.f32.mrf.mxu0
        %v2676 = vadd.f32 0.0, %v2675
        %2677 = vmatprep.mubr.f32.mxu0 0.0
        %2678 = vmatmul.mubr.f32.gmra.mxu0 %v2537
        %v2679 = vpop.f32.mrf.mxu0
        %v2680 = vadd.f32 0.0, %v2679
        %v2681 = vpop.f32.mrf.mxu0
        %v2682 = vadd.f32 0.0, %v2681
        %2683 = vmatprep.mubr.f32.mxu0 0.0
        %2684 = vmatmul.mubr.f32.gmra.mxu0 %v2539
        %v2685 = vpop.f32.mrf.mxu0
        %v2686 = vadd.f32 0.0, %v2685
        %v2687 = vpop.f32.mrf.mxu0
        %v2688 = vadd.f32 0.0, %v2687
        %2689 = vmatprep.mubr.f32.mxu0 0.0
        %2690 = vmatmul.mubr.f32.gmra.mxu0 %v2541
        %v2691 = vpop.f32.mrf.mxu0
        %v2692 = vadd.f32 0.0, %v2691
        %v2693 = vpop.f32.mrf.mxu0
        %v2694 = vadd.f32 0.0, %v2693
        %2695 = vmatprep.mubr.f32.mxu0 0.0
        %2696 = vmatmul.mubr.f32.gmra.mxu0 %v2543
        %v2697 = vpop.f32.mrf.mxu0
        %v2698 = vadd.f32 0.0, %v2697
        %v2699 = vpop.f32.mrf.mxu0
        %v2700 = vadd.f32 0.0, %v2699
        %2701 = vmatprep.mubr.f32.mxu0 0.0
        %2702 = vmatmul.mubr.f32.gmra.mxu0 %v2545
        %v2703 = vpop.f32.mrf.mxu0
        %v2704 = vadd.f32 0.0, %v2703
        %v2705 = vpop.f32.mrf.mxu0
        %v2706 = vadd.f32 0.0, %v2705
        %2707 = vmatprep.mubr.f32.mxu0 0.0
        %2708 = vmatmul.mubr.f32.gmra.mxu0 %v2547
        %v2709 = vpop.f32.mrf.mxu0
        %v2710 = vadd.f32 0.0, %v2709
        %v2711 = vpop.f32.mrf.mxu0
        %v2712 = vadd.f32 0.0, %v2711
        %2713 = vmatprep.mubr.f32.mxu0 0.0
        %2714 = vmatmul.mubr.f32.gmra.mxu0 %v2549
        %v2715 = vpop.f32.mrf.mxu0
        %v2716 = vadd.f32 0.0, %v2715
        %v2717 = vpop.f32.mrf.mxu0
        %v2718 = vadd.f32 0.0, %v2717
        %2719 = vmatprep.mubr.f32.mxu0 0.0
        %2720 = vmatmul.mubr.f32.gmra.mxu0 %v2551
        %v2721 = vpop.f32.mrf.mxu0
        %v2722 = vadd.f32 0.0, %v2721
        %v2723 = vpop.f32.mrf.mxu0
        %v2724 = vadd.f32 0.0, %v2723
        %2725 = vmatprep.mubr.f32.mxu0 0.0
        %2726 = vmatmul.mubr.f32.gmra.mxu0 %v2553
        %v2727 = vpop.f32.mrf.mxu0
        %v2728 = vadd.f32 0.0, %v2727
        %v2729 = vpop.f32.mrf.mxu0
        %v2730 = vadd.f32 0.0, %v2729
        %2731 = vmatprep.mubr.f32.mxu0 0.0
        %2732 = vmatmul.mubr.f32.gmra.mxu0 %v2555
        %v2733 = vpop.f32.mrf.mxu0
        %v2734 = vadd.f32 0.0, %v2733
        %v2735 = vpop.f32.mrf.mxu0
        %v2736 = vadd.f32 0.0, %v2735
        %2737 = vmatprep.mubr.f32.mxu0 0.0
        %2738 = vmatmul.mubr.f32.gmra.mxu0 %v2557
        %v2739 = vpop.f32.mrf.mxu0
        %v2740 = vadd.f32 0.0, %v2739
        %v2741 = vpop.f32.mrf.mxu0
        %v2742 = vadd.f32 0.0, %v2741
        %2743 = vmatprep.mubr.f32.mxu0 0.0
        %2744 = vmatmul.mubr.f32.gmra.mxu0 %v2559
        %v2745 = vpop.f32.mrf.mxu0
        %v2746 = vadd.f32 0.0, %v2745
        %v2747 = vpop.f32.mrf.mxu0
        %v2748 = vadd.f32 0.0, %v2747
        %2749 = vmatprep.mubr.f32.mxu0 0.0
        %2750 = vmatmul.mubr.f32.gmra.mxu0 %v2561
        %v2751 = vpop.f32.mrf.mxu0
        %v2752 = vadd.f32 0.0, %v2751
        %v2753 = vpop.f32.mrf.mxu0
        %v2754 = vadd.f32 0.0, %v2753
        %2755 = vmatprep.mubr.f32.mxu0 0.0
        %2756 = vmatmul.mubr.f32.gmra.mxu0 %v2563
        %v2757 = vpop.f32.mrf.mxu0
        %v2758 = vadd.f32 0.0, %v2757
        %v2759 = vpop.f32.mrf.mxu0
        %v2760 = vadd.f32 0.0, %v2759
        %2761 = vmatprep.mubr.f32.mxu0 0.0
        %2762 = vmatmul.mubr.f32.gmra.mxu0 %v2565
        %v2763 = vpop.f32.mrf.mxu0
        %v2764 = vadd.f32 0.0, %v2763
        %v2765 = vpop.f32.mrf.mxu0
        %v2766 = vadd.f32 0.0, %v2765
        %2767 = vmatprep.mubr.f32.mxu0 0.0
        %2768 = vmatmul.mubr.f32.gmra.mxu0 %v2567
        %v2769 = vpop.f32.mrf.mxu0
        %v2770 = vadd.f32 0.0, %v2769
        %v2771 = vpop.f32.mrf.mxu0
        %v2772 = vadd.f32 0.0, %v2771
        %2773 = vmatprep.mubr.f32.mxu0 0.0
        %2774 = vmatmul.mubr.f32.gmra.mxu0 %v2569
        %v2775 = vpop.f32.mrf.mxu0
        %v2776 = vadd.f32 0.0, %v2775
        %v2777 = vpop.f32.mrf.mxu0
        %v2778 = vadd.f32 0.0, %v2777
        %2779 = vmatprep.mubr.f32.mxu0 0.0
        %2780 = vmatmul.mubr.f32.gmra.mxu0 %v2571
        %v2781 = vpop.f32.mrf.mxu0
        %v2782 = vadd.f32 0.0, %v2781
        %v2783 = vpop.f32.mrf.mxu0
        %v2784 = vadd.f32 0.0, %v2783
        %2785 = vmatprep.mubr.f32.mxu0 0.0
        %2786 = vmatmul.mubr.f32.gmra.mxu0 %v2573
        %v2787 = vpop.f32.mrf.mxu0
        %v2788 = vadd.f32 0.0, %v2787
        %v2789 = vpop.f32.mrf.mxu0
        %v2790 = vadd.f32 0.0, %v2789
        %2791 = vmatprep.mubr.f32.mxu0 0.0
        %2792 = vmatmul.mubr.f32.gmra.mxu0 %v2575
        %v2793 = vpop.f32.mrf.mxu0
        %v2794 = vadd.f32 0.0, %v2793
        %v2795 = vpop.f32.mrf.mxu0
        %v2796 = vadd.f32 0.0, %v2795
        %2797 = vmatprep.mubr.f32.mxu0 0.0
        %2798 = vmatmul.mubr.f32.gmra.mxu0 %v2577
        %v2799 = vpop.f32.mrf.mxu0
        %v2800 = vadd.f32 0.0, %v2799
        %v2801 = vpop.f32.mrf.mxu0
        %v2802 = vadd.f32 0.0, %v2801
        %2803 = vmatprep.mubr.f32.mxu0 0.0
        %2804 = vmatmul.mubr.f32.gmra.mxu0 %v2579
        %v2805 = vpop.f32.mrf.mxu0
        %v2806 = vadd.f32 0.0, %v2805
        %v2807 = vpop.f32.mrf.mxu0
        %v2808 = vadd.f32 0.0, %v2807
        %2809 = vmatprep.mubr.f32.mxu0 0.0
        %2810 = vmatmul.mubr.f32.gmra.mxu0 %v2581
        %v2811 = vpop.f32.mrf.mxu0
        %v2812 = vadd.f32 0.0, %v2811
        %v2813 = vpop.f32.mrf.mxu0
        %v2814 = vadd.f32 0.0, %v2813
        %2815 = vdwg.mxu0
        %v2816 = vadd.f32 %v2434, %v2650
        %v2817 = vadd.f32 %v2435, %v2652
        %v2818 = vadd.f32 %v2436, %v2656
        %v2819 = vadd.f32 %v2437, %v2658
        %v2820 = vadd.f32 %v2438, %v2662
        %v2821 = vadd.f32 %v2439, %v2664
        %v2822 = vadd.f32 %v2440, %v2668
        %v2823 = vadd.f32 %v2441, %v2670
        %v2824 = vadd.f32 %v2442, %v2674
        %v2825 = vadd.f32 %v2443, %v2676
        %v2826 = vadd.f32 %v2444, %v2680
        %v2827 = vadd.f32 %v2445, %v2682
        %v2828 = vadd.f32 %v2446, %v2686
        %v2829 = vadd.f32 %v2447, %v2688
        %v2830 = vadd.f32 %v2448, %v2692
        %v2831 = vadd.f32 %v2449, %v2694
        %v2832 = vadd.f32 %v2450, %v2698
        %v2833 = vadd.f32 %v2451, %v2700
        %v2834 = vadd.f32 %v2452, %v2704
        %v2835 = vadd.f32 %v2453, %v2706
        %v2836 = vadd.f32 %v2454, %v2710
        %v2837 = vadd.f32 %v2455, %v2712
        %v2838 = vadd.f32 %v2456, %v2716
        %v2839 = vadd.f32 %v2457, %v2718
        %v2840 = vadd.f32 %v2458, %v2722
        %v2841 = vadd.f32 %v2459, %v2724
        %v2842 = vadd.f32 %v2460, %v2728
        %v2843 = vadd.f32 %v2461, %v2730
        %v2844 = vadd.f32 %v2462, %v2734
        %v2845 = vadd.f32 %v2463, %v2736
        %v2846 = vadd.f32 %v2464, %v2740
        %v2847 = vadd.f32 %v2465, %v2742
        %v2848 = vadd.f32 %v2466, %v2746
        %v2849 = vadd.f32 %v2467, %v2748
        %v2850 = vadd.f32 %v2468, %v2752
        %v2851 = vadd.f32 %v2469, %v2754
        %v2852 = vadd.f32 %v2470, %v2758
        %v2853 = vadd.f32 %v2471, %v2760
        %v2854 = vadd.f32 %v2472, %v2764
        %v2855 = vadd.f32 %v2473, %v2766
        %v2856 = vadd.f32 %v2474, %v2770
        %v2857 = vadd.f32 %v2475, %v2772
        %v2858 = vadd.f32 %v2476, %v2776
        %v2859 = vadd.f32 %v2477, %v2778
        %v2860 = vadd.f32 %v2478, %v2782
        %v2861 = vadd.f32 %v2479, %v2784
        %v2862 = vadd.f32 %v2480, %v2788
        %v2863 = vadd.f32 %v2481, %v2790
        %v2864 = vadd.f32 %v2482, %v2794
        %v2865 = vadd.f32 %v2483, %v2796
        %v2866 = vadd.f32 %v2484, %v2800
        %v2867 = vadd.f32 %v2485, %v2802
        %v2868 = vadd.f32 %v2486, %v2806
        %v2869 = vadd.f32 %v2487, %v2808
        %v2870 = vadd.f32 %v2488, %v2812
        %v2871 = vadd.f32 %v2489, %v2814
        %v2872 = vld [vmem:[%s2] sm:$0x3]
        %v2874 = vlaneseq
        %v2875 = vshrl.u32 %v2874, 7
        %v2876 = vsub.s32 0, %v2875
        %v2877 = vrot.slane %v2872, %v2876
        %v2878 = vlaneseq
        %v2879 = vshrl.u32 %v2878, 7
        %v2880 = vsub.s32 1, %v2879
        %v2881 = vrot.slane %v2872, %v2880
        %v2884 = vadd.f32 %v2816, %v2877
        %v2885 = vadd.f32 %v2817, %v2881
        %v2886 = vadd.f32 %v2818, %v2877
        %v2887 = vadd.f32 %v2819, %v2881
        %v2888 = vadd.f32 %v2820, %v2877
        %v2889 = vadd.f32 %v2821, %v2881
        %v2890 = vadd.f32 %v2822, %v2877
        %v2891 = vadd.f32 %v2823, %v2881
        %v2892 = vadd.f32 %v2824, %v2877
        %v2893 = vadd.f32 %v2825, %v2881
        %v2894 = vadd.f32 %v2826, %v2877
        %v2895 = vadd.f32 %v2827, %v2881
        %v2896 = vadd.f32 %v2828, %v2877
        %v2897 = vadd.f32 %v2829, %v2881
        %v2898 = vadd.f32 %v2830, %v2877
        %v2899 = vadd.f32 %v2831, %v2881
        %v2900 = vadd.f32 %v2832, %v2877
        %v2901 = vadd.f32 %v2833, %v2881
        %v2902 = vadd.f32 %v2834, %v2877
        %v2903 = vadd.f32 %v2835, %v2881
        %v2904 = vadd.f32 %v2836, %v2877
        %v2905 = vadd.f32 %v2837, %v2881
        %v2906 = vadd.f32 %v2838, %v2877
        %v2907 = vadd.f32 %v2839, %v2881
        %v2908 = vadd.f32 %v2840, %v2877
        %v2909 = vadd.f32 %v2841, %v2881
        %v2910 = vadd.f32 %v2842, %v2877
        %v2911 = vadd.f32 %v2843, %v2881
        %v2912 = vadd.f32 %v2844, %v2877
        %v2913 = vadd.f32 %v2845, %v2881
        %v2914 = vadd.f32 %v2846, %v2877
        %v2915 = vadd.f32 %v2847, %v2881
        %v2916 = vadd.f32 %v2848, %v2877
        %v2917 = vadd.f32 %v2849, %v2881
        %v2918 = vadd.f32 %v2850, %v2877
        %v2919 = vadd.f32 %v2851, %v2881
        %v2920 = vadd.f32 %v2852, %v2877
        %v2921 = vadd.f32 %v2853, %v2881
        %v2922 = vadd.f32 %v2854, %v2877
        %v2923 = vadd.f32 %v2855, %v2881
        %v2924 = vadd.f32 %v2856, %v2877
        %v2925 = vadd.f32 %v2857, %v2881
        %v2926 = vadd.f32 %v2858, %v2877
        %v2927 = vadd.f32 %v2859, %v2881
        %v2928 = vadd.f32 %v2860, %v2877
        %v2929 = vadd.f32 %v2861, %v2881
        %v2930 = vadd.f32 %v2862, %v2877
        %v2931 = vadd.f32 %v2863, %v2881
        %v2932 = vadd.f32 %v2864, %v2877
        %v2933 = vadd.f32 %v2865, %v2881
        %v2934 = vadd.f32 %v2866, %v2877
        %v2935 = vadd.f32 %v2867, %v2881
        %v2936 = vadd.f32 %v2868, %v2877
        %v2937 = vadd.f32 %v2869, %v2881
        %v2938 = vadd.f32 %v2870, %v2877
        %v2939 = vadd.f32 %v2871, %v2881
        %v2940 = vmax.f32 %v2884, 0.0
        %v2941 = vmax.f32 %v2885, 0.0
        %v2942 = vmax.f32 %v2886, 0.0
        %v2943 = vmax.f32 %v2887, 0.0
        %v2944 = vmax.f32 %v2888, 0.0
        %v2945 = vmax.f32 %v2889, 0.0
        %v2946 = vmax.f32 %v2890, 0.0
        %v2947 = vmax.f32 %v2891, 0.0
        %v2948 = vmax.f32 %v2892, 0.0
        %v2949 = vmax.f32 %v2893, 0.0
        %v2950 = vmax.f32 %v2894, 0.0
        %v2951 = vmax.f32 %v2895, 0.0
        %v2952 = vmax.f32 %v2896, 0.0
        %v2953 = vmax.f32 %v2897, 0.0
        %v2954 = vmax.f32 %v2898, 0.0
        %v2955 = vmax.f32 %v2899, 0.0
        %v2956 = vmax.f32 %v2900, 0.0
        %v2957 = vmax.f32 %v2901, 0.0
        %v2958 = vmax.f32 %v2902, 0.0
        %v2959 = vmax.f32 %v2903, 0.0
        %v2960 = vmax.f32 %v2904, 0.0
        %v2961 = vmax.f32 %v2905, 0.0
        %v2962 = vmax.f32 %v2906, 0.0
        %v2963 = vmax.f32 %v2907, 0.0
        %v2964 = vmax.f32 %v2908, 0.0
        %v2965 = vmax.f32 %v2909, 0.0
        %v2966 = vmax.f32 %v2910, 0.0
        %v2967 = vmax.f32 %v2911, 0.0
        %v2968 = vmax.f32 %v2912, 0.0
        %v2969 = vmax.f32 %v2913, 0.0
        %v2970 = vmax.f32 %v2914, 0.0
        %v2971 = vmax.f32 %v2915, 0.0
        %v2972 = vmax.f32 %v2916, 0.0
        %v2973 = vmax.f32 %v2917, 0.0
        %v2974 = vmax.f32 %v2918, 0.0
        %v2975 = vmax.f32 %v2919, 0.0
        %v2976 = vmax.f32 %v2920, 0.0
        %v2977 = vmax.f32 %v2921, 0.0
        %v2978 = vmax.f32 %v2922, 0.0
        %v2979 = vmax.f32 %v2923, 0.0
        %v2980 = vmax.f32 %v2924, 0.0
        %v2981 = vmax.f32 %v2925, 0.0
        %v2982 = vmax.f32 %v2926, 0.0
        %v2983 = vmax.f32 %v2927, 0.0
        %v2984 = vmax.f32 %v2928, 0.0
        %v2985 = vmax.f32 %v2929, 0.0
        %v2986 = vmax.f32 %v2930, 0.0
        %v2987 = vmax.f32 %v2931, 0.0
        %v2988 = vmax.f32 %v2932, 0.0
        %v2989 = vmax.f32 %v2933, 0.0
        %v2990 = vmax.f32 %v2934, 0.0
        %v2991 = vmax.f32 %v2935, 0.0
        %v2992 = vmax.f32 %v2936, 0.0
        %v2993 = vmax.f32 %v2937, 0.0
        %v2994 = vmax.f32 %v2938, 0.0
        %v2995 = vmax.f32 %v2939, 0.0
        %v3052 = vcombine.low %v2940, %v2941
        %v3053 = vcombine.high %v2940, %v2941
        %v3055 = vunpack.c.l.s4 1983009808
        %v3056 = vunpack.c.0.s8 %v3055
        %v3057 = vlaneseq
        %v3058 = vshrl.u32 %v3057, 7
        %v3059 = vsub.s32 %v3056, %v3058
        %v3060 = vrot.slane %v3052, %v3059
        %v3062 = vunpack.c.l.s4 1983009808
        %v3063 = vunpack.c.0.s8 %v3062
        %v3064 = vlaneseq
        %v3065 = vshrl.u32 %v3064, 7
        %v3066 = vsub.s32 %v3063, %v3065
        %v3067 = vrot.slane %v3053, %v3066
        %v3068 = vcombine.high %v3060, %v3060
        %v3069 = vcombine.high %v3067, %v3067
        %v3070 = vcombine.low %v2942, %v2943
        %v3071 = vcombine.high %v2942, %v2943
        %v3073 = vunpack.c.l.s4 1983009808
        %v3074 = vunpack.c.0.s8 %v3073
        %v3075 = vlaneseq
        %v3076 = vshrl.u32 %v3075, 7
        %v3077 = vsub.s32 %v3074, %v3076
        %v3078 = vrot.slane %v3070, %v3077
        %v3080 = vunpack.c.l.s4 1983009808
        %v3081 = vunpack.c.0.s8 %v3080
        %v3082 = vlaneseq
        %v3083 = vshrl.u32 %v3082, 7
        %v3084 = vsub.s32 %v3081, %v3083
        %v3085 = vrot.slane %v3071, %v3084
        %v3086 = vcombine.high %v3078, %v3078
        %v3087 = vcombine.high %v3085, %v3085
        %v3088 = vcombine.low %v2944, %v2945
        %v3089 = vcombine.high %v2944, %v2945
        %v3091 = vunpack.c.l.s4 1983009808
        %v3092 = vunpack.c.0.s8 %v3091
        %v3093 = vlaneseq
        %v3094 = vshrl.u32 %v3093, 7
        %v3095 = vsub.s32 %v3092, %v3094
        %v3096 = vrot.slane %v3088, %v3095
        %v3098 = vunpack.c.l.s4 1983009808
        %v3099 = vunpack.c.0.s8 %v3098
        %v3100 = vlaneseq
        %v3101 = vshrl.u32 %v3100, 7
        %v3102 = vsub.s32 %v3099, %v3101
        %v3103 = vrot.slane %v3089, %v3102
        %v3104 = vcombine.high %v3096, %v3096
        %v3105 = vcombine.high %v3103, %v3103
        %v3106 = vcombine.low %v2946, %v2947
        %v3107 = vcombine.high %v2946, %v2947
        %v3109 = vunpack.c.l.s4 1983009808
        %v3110 = vunpack.c.0.s8 %v3109
        %v3111 = vlaneseq
        %v3112 = vshrl.u32 %v3111, 7
        %v3113 = vsub.s32 %v3110, %v3112
        %v3114 = vrot.slane %v3106, %v3113
        %v3116 = vunpack.c.l.s4 1983009808
        %v3117 = vunpack.c.0.s8 %v3116
        %v3118 = vlaneseq
        %v3119 = vshrl.u32 %v3118, 7
        %v3120 = vsub.s32 %v3117, %v3119
        %v3121 = vrot.slane %v3107, %v3120
        %v3122 = vcombine.high %v3114, %v3114
        %v3123 = vcombine.high %v3121, %v3121
        %v3124 = vcombine.low %v2948, %v2949
        %v3125 = vcombine.high %v2948, %v2949
        %v3127 = vunpack.c.l.s4 1983009808
        %v3128 = vunpack.c.0.s8 %v3127
        %v3129 = vlaneseq
        %v3130 = vshrl.u32 %v3129, 7
        %v3131 = vsub.s32 %v3128, %v3130
        %v3132 = vrot.slane %v3124, %v3131
        %v3134 = vunpack.c.l.s4 1983009808
        %v3135 = vunpack.c.0.s8 %v3134
        %v3136 = vlaneseq
        %v3137 = vshrl.u32 %v3136, 7
        %v3138 = vsub.s32 %v3135, %v3137
        %v3139 = vrot.slane %v3125, %v3138
        %v3140 = vcombine.high %v3132, %v3132
        %v3141 = vcombine.high %v3139, %v3139
        %v3142 = vcombine.low %v2950, %v2951
        %v3143 = vcombine.high %v2950, %v2951
        %v3145 = vunpack.c.l.s4 1983009808
        %v3146 = vunpack.c.0.s8 %v3145
        %v3147 = vlaneseq
        %v3148 = vshrl.u32 %v3147, 7
        %v3149 = vsub.s32 %v3146, %v3148
        %v3150 = vrot.slane %v3142, %v3149
        %v3152 = vunpack.c.l.s4 1983009808
        %v3153 = vunpack.c.0.s8 %v3152
        %v3154 = vlaneseq
        %v3155 = vshrl.u32 %v3154, 7
        %v3156 = vsub.s32 %v3153, %v3155
        %v3157 = vrot.slane %v3143, %v3156
        %v3158 = vcombine.high %v3150, %v3150
        %v3159 = vcombine.high %v3157, %v3157
        %v3160 = vcombine.low %v2952, %v2953
        %v3161 = vcombine.high %v2952, %v2953
        %v3163 = vunpack.c.l.s4 1983009808
        %v3164 = vunpack.c.0.s8 %v3163
        %v3165 = vlaneseq
        %v3166 = vshrl.u32 %v3165, 7
        %v3167 = vsub.s32 %v3164, %v3166
        %v3168 = vrot.slane %v3160, %v3167
        %v3170 = vunpack.c.l.s4 1983009808
        %v3171 = vunpack.c.0.s8 %v3170
        %v3172 = vlaneseq
        %v3173 = vshrl.u32 %v3172, 7
        %v3174 = vsub.s32 %v3171, %v3173
        %v3175 = vrot.slane %v3161, %v3174
        %v3176 = vcombine.high %v3168, %v3168
        %v3177 = vcombine.high %v3175, %v3175
        %v3178 = vcombine.low %v2954, %v2955
        %v3179 = vcombine.high %v2954, %v2955
        %v3181 = vunpack.c.l.s4 1983009808
        %v3182 = vunpack.c.0.s8 %v3181
        %v3183 = vlaneseq
        %v3184 = vshrl.u32 %v3183, 7
        %v3185 = vsub.s32 %v3182, %v3184
        %v3186 = vrot.slane %v3178, %v3185
        %v3188 = vunpack.c.l.s4 1983009808
        %v3189 = vunpack.c.0.s8 %v3188
        %v3190 = vlaneseq
        %v3191 = vshrl.u32 %v3190, 7
        %v3192 = vsub.s32 %v3189, %v3191
        %v3193 = vrot.slane %v3179, %v3192
        %v3194 = vcombine.high %v3186, %v3186
        %v3195 = vcombine.high %v3193, %v3193
        %v3196 = vcombine.low %v2956, %v2957
        %v3197 = vcombine.high %v2956, %v2957
        %v3199 = vunpack.c.l.s4 1983009808
        %v3200 = vunpack.c.0.s8 %v3199
        %v3201 = vlaneseq
        %v3202 = vshrl.u32 %v3201, 7
        %v3203 = vsub.s32 %v3200, %v3202
        %v3204 = vrot.slane %v3196, %v3203
        %v3206 = vunpack.c.l.s4 1983009808
        %v3207 = vunpack.c.0.s8 %v3206
        %v3208 = vlaneseq
        %v3209 = vshrl.u32 %v3208, 7
        %v3210 = vsub.s32 %v3207, %v3209
        %v3211 = vrot.slane %v3197, %v3210
        %v3212 = vcombine.high %v3204, %v3204
        %v3213 = vcombine.high %v3211, %v3211
        %v3214 = vcombine.low %v2958, %v2959
        %v3215 = vcombine.high %v2958, %v2959
        %v3217 = vunpack.c.l.s4 1983009808
        %v3218 = vunpack.c.0.s8 %v3217
        %v3219 = vlaneseq
        %v3220 = vshrl.u32 %v3219, 7
        %v3221 = vsub.s32 %v3218, %v3220
        %v3222 = vrot.slane %v3214, %v3221
        %v3224 = vunpack.c.l.s4 1983009808
        %v3225 = vunpack.c.0.s8 %v3224
        %v3226 = vlaneseq
        %v3227 = vshrl.u32 %v3226, 7
        %v3228 = vsub.s32 %v3225, %v3227
        %v3229 = vrot.slane %v3215, %v3228
        %v3230 = vcombine.high %v3222, %v3222
        %v3231 = vcombine.high %v3229, %v3229
        %v3232 = vcombine.low %v2960, %v2961
        %v3233 = vcombine.high %v2960, %v2961
        %v3235 = vunpack.c.l.s4 1983009808
        %v3236 = vunpack.c.0.s8 %v3235
        %v3237 = vlaneseq
        %v3238 = vshrl.u32 %v3237, 7
        %v3239 = vsub.s32 %v3236, %v3238
        %v3240 = vrot.slane %v3232, %v3239
        %v3242 = vunpack.c.l.s4 1983009808
        %v3243 = vunpack.c.0.s8 %v3242
        %v3244 = vlaneseq
        %v3245 = vshrl.u32 %v3244, 7
        %v3246 = vsub.s32 %v3243, %v3245
        %v3247 = vrot.slane %v3233, %v3246
        %v3248 = vcombine.high %v3240, %v3240
        %v3249 = vcombine.high %v3247, %v3247
        %v3250 = vcombine.low %v2962, %v2963
        %v3251 = vcombine.high %v2962, %v2963
        %v3253 = vunpack.c.l.s4 1983009808
        %v3254 = vunpack.c.0.s8 %v3253
        %v3255 = vlaneseq
        %v3256 = vshrl.u32 %v3255, 7
        %v3257 = vsub.s32 %v3254, %v3256
        %v3258 = vrot.slane %v3250, %v3257
        %v3260 = vunpack.c.l.s4 1983009808
        %v3261 = vunpack.c.0.s8 %v3260
        %v3262 = vlaneseq
        %v3263 = vshrl.u32 %v3262, 7
        %v3264 = vsub.s32 %v3261, %v3263
        %v3265 = vrot.slane %v3251, %v3264
        %v3266 = vcombine.high %v3258, %v3258
        %v3267 = vcombine.high %v3265, %v3265
        %v3268 = vcombine.low %v2964, %v2965
        %v3269 = vcombine.high %v2964, %v2965
        %v3271 = vunpack.c.l.s4 1983009808
        %v3272 = vunpack.c.0.s8 %v3271
        %v3273 = vlaneseq
        %v3274 = vshrl.u32 %v3273, 7
        %v3275 = vsub.s32 %v3272, %v3274
        %v3276 = vrot.slane %v3268, %v3275
        %v3278 = vunpack.c.l.s4 1983009808
        %v3279 = vunpack.c.0.s8 %v3278
        %v3280 = vlaneseq
        %v3281 = vshrl.u32 %v3280, 7
        %v3282 = vsub.s32 %v3279, %v3281
        %v3283 = vrot.slane %v3269, %v3282
        %v3284 = vcombine.high %v3276, %v3276
        %v3285 = vcombine.high %v3283, %v3283
        %v3286 = vcombine.low %v2966, %v2967
        %v3287 = vcombine.high %v2966, %v2967
        %v3289 = vunpack.c.l.s4 1983009808
        %v3290 = vunpack.c.0.s8 %v3289
        %v3291 = vlaneseq
        %v3292 = vshrl.u32 %v3291, 7
        %v3293 = vsub.s32 %v3290, %v3292
        %v3294 = vrot.slane %v3286, %v3293
        %v3296 = vunpack.c.l.s4 1983009808
        %v3297 = vunpack.c.0.s8 %v3296
        %v3298 = vlaneseq
        %v3299 = vshrl.u32 %v3298, 7
        %v3300 = vsub.s32 %v3297, %v3299
        %v3301 = vrot.slane %v3287, %v3300
        %v3302 = vcombine.high %v3294, %v3294
        %v3303 = vcombine.high %v3301, %v3301
        %v3304 = vcombine.low %v2968, %v2969
        %v3305 = vcombine.high %v2968, %v2969
        %v3307 = vunpack.c.l.s4 1983009808
        %v3308 = vunpack.c.0.s8 %v3307
        %v3309 = vlaneseq
        %v3310 = vshrl.u32 %v3309, 7
        %v3311 = vsub.s32 %v3308, %v3310
        %v3312 = vrot.slane %v3304, %v3311
        %v3314 = vunpack.c.l.s4 1983009808
        %v3315 = vunpack.c.0.s8 %v3314
        %v3316 = vlaneseq
        %v3317 = vshrl.u32 %v3316, 7
        %v3318 = vsub.s32 %v3315, %v3317
        %v3319 = vrot.slane %v3305, %v3318
        %v3320 = vcombine.high %v3312, %v3312
        %v3321 = vcombine.high %v3319, %v3319
        %v3322 = vcombine.low %v2970, %v2971
        %v3323 = vcombine.high %v2970, %v2971
        %v3325 = vunpack.c.l.s4 1983009808
        %v3326 = vunpack.c.0.s8 %v3325
        %v3327 = vlaneseq
        %v3328 = vshrl.u32 %v3327, 7
        %v3329 = vsub.s32 %v3326, %v3328
        %v3330 = vrot.slane %v3322, %v3329
        %v3332 = vunpack.c.l.s4 1983009808
        %v3333 = vunpack.c.0.s8 %v3332
        %v3334 = vlaneseq
        %v3335 = vshrl.u32 %v3334, 7
        %v3336 = vsub.s32 %v3333, %v3335
        %v3337 = vrot.slane %v3323, %v3336
        %v3338 = vcombine.high %v3330, %v3330
        %v3339 = vcombine.high %v3337, %v3337
        %v3340 = vcombine.low %v2972, %v2973
        %v3341 = vcombine.high %v2972, %v2973
        %v3343 = vunpack.c.l.s4 1983009808
        %v3344 = vunpack.c.0.s8 %v3343
        %v3345 = vlaneseq
        %v3346 = vshrl.u32 %v3345, 7
        %v3347 = vsub.s32 %v3344, %v3346
        %v3348 = vrot.slane %v3340, %v3347
        %v3350 = vunpack.c.l.s4 1983009808
        %v3351 = vunpack.c.0.s8 %v3350
        %v3352 = vlaneseq
        %v3353 = vshrl.u32 %v3352, 7
        %v3354 = vsub.s32 %v3351, %v3353
        %v3355 = vrot.slane %v3341, %v3354
        %v3356 = vcombine.high %v3348, %v3348
        %v3357 = vcombine.high %v3355, %v3355
        %v3358 = vcombine.low %v2974, %v2975
        %v3359 = vcombine.high %v2974, %v2975
        %v3361 = vunpack.c.l.s4 1983009808
        %v3362 = vunpack.c.0.s8 %v3361
        %v3363 = vlaneseq
        %v3364 = vshrl.u32 %v3363, 7
        %v3365 = vsub.s32 %v3362, %v3364
        %v3366 = vrot.slane %v3358, %v3365
        %v3368 = vunpack.c.l.s4 1983009808
        %v3369 = vunpack.c.0.s8 %v3368
        %v3370 = vlaneseq
        %v3371 = vshrl.u32 %v3370, 7
        %v3372 = vsub.s32 %v3369, %v3371
        %v3373 = vrot.slane %v3359, %v3372
        %v3374 = vcombine.high %v3366, %v3366
        %v3375 = vcombine.high %v3373, %v3373
        %v3376 = vcombine.low %v2976, %v2977
        %v3377 = vcombine.high %v2976, %v2977
        %v3379 = vunpack.c.l.s4 1983009808
        %v3380 = vunpack.c.0.s8 %v3379
        %v3381 = vlaneseq
        %v3382 = vshrl.u32 %v3381, 7
        %v3383 = vsub.s32 %v3380, %v3382
        %v3384 = vrot.slane %v3376, %v3383
        %v3386 = vunpack.c.l.s4 1983009808
        %v3387 = vunpack.c.0.s8 %v3386
        %v3388 = vlaneseq
        %v3389 = vshrl.u32 %v3388, 7
        %v3390 = vsub.s32 %v3387, %v3389
        %v3391 = vrot.slane %v3377, %v3390
        %v3392 = vcombine.high %v3384, %v3384
        %v3393 = vcombine.high %v3391, %v3391
        %v3394 = vcombine.low %v2978, %v2979
        %v3395 = vcombine.high %v2978, %v2979
        %v3397 = vunpack.c.l.s4 1983009808
        %v3398 = vunpack.c.0.s8 %v3397
        %v3399 = vlaneseq
        %v3400 = vshrl.u32 %v3399, 7
        %v3401 = vsub.s32 %v3398, %v3400
        %v3402 = vrot.slane %v3394, %v3401
        %v3404 = vunpack.c.l.s4 1983009808
        %v3405 = vunpack.c.0.s8 %v3404
        %v3406 = vlaneseq
        %v3407 = vshrl.u32 %v3406, 7
        %v3408 = vsub.s32 %v3405, %v3407
        %v3409 = vrot.slane %v3395, %v3408
        %v3410 = vcombine.high %v3402, %v3402
        %v3411 = vcombine.high %v3409, %v3409
        %v3412 = vcombine.low %v2980, %v2981
        %v3413 = vcombine.high %v2980, %v2981
        %v3415 = vunpack.c.l.s4 1983009808
        %v3416 = vunpack.c.0.s8 %v3415
        %v3417 = vlaneseq
        %v3418 = vshrl.u32 %v3417, 7
        %v3419 = vsub.s32 %v3416, %v3418
        %v3420 = vrot.slane %v3412, %v3419
        %v3422 = vunpack.c.l.s4 1983009808
        %v3423 = vunpack.c.0.s8 %v3422
        %v3424 = vlaneseq
        %v3425 = vshrl.u32 %v3424, 7
        %v3426 = vsub.s32 %v3423, %v3425
        %v3427 = vrot.slane %v3413, %v3426
        %v3428 = vcombine.high %v3420, %v3420
        %v3429 = vcombine.high %v3427, %v3427
        %v3430 = vcombine.low %v2982, %v2983
        %v3431 = vcombine.high %v2982, %v2983
        %v3433 = vunpack.c.l.s4 1983009808
        %v3434 = vunpack.c.0.s8 %v3433
        %v3435 = vlaneseq
        %v3436 = vshrl.u32 %v3435, 7
        %v3437 = vsub.s32 %v3434, %v3436
        %v3438 = vrot.slane %v3430, %v3437
        %v3440 = vunpack.c.l.s4 1983009808
        %v3441 = vunpack.c.0.s8 %v3440
        %v3442 = vlaneseq
        %v3443 = vshrl.u32 %v3442, 7
        %v3444 = vsub.s32 %v3441, %v3443
        %v3445 = vrot.slane %v3431, %v3444
        %v3446 = vcombine.high %v3438, %v3438
        %v3447 = vcombine.high %v3445, %v3445
        %v3448 = vcombine.low %v2984, %v2985
        %v3449 = vcombine.high %v2984, %v2985
        %v3451 = vunpack.c.l.s4 1983009808
        %v3452 = vunpack.c.0.s8 %v3451
        %v3453 = vlaneseq
        %v3454 = vshrl.u32 %v3453, 7
        %v3455 = vsub.s32 %v3452, %v3454
        %v3456 = vrot.slane %v3448, %v3455
        %v3458 = vunpack.c.l.s4 1983009808
        %v3459 = vunpack.c.0.s8 %v3458
        %v3460 = vlaneseq
        %v3461 = vshrl.u32 %v3460, 7
        %v3462 = vsub.s32 %v3459, %v3461
        %v3463 = vrot.slane %v3449, %v3462
        %v3464 = vcombine.high %v3456, %v3456
        %v3465 = vcombine.high %v3463, %v3463
        %v3466 = vcombine.low %v2986, %v2987
        %v3467 = vcombine.high %v2986, %v2987
        %v3469 = vunpack.c.l.s4 1983009808
        %v3470 = vunpack.c.0.s8 %v3469
        %v3471 = vlaneseq
        %v3472 = vshrl.u32 %v3471, 7
        %v3473 = vsub.s32 %v3470, %v3472
        %v3474 = vrot.slane %v3466, %v3473
        %v3476 = vunpack.c.l.s4 1983009808
        %v3477 = vunpack.c.0.s8 %v3476
        %v3478 = vlaneseq
        %v3479 = vshrl.u32 %v3478, 7
        %v3480 = vsub.s32 %v3477, %v3479
        %v3481 = vrot.slane %v3467, %v3480
        %v3482 = vcombine.high %v3474, %v3474
        %v3483 = vcombine.high %v3481, %v3481
        %v3484 = vcombine.low %v2988, %v2989
        %v3485 = vcombine.high %v2988, %v2989
        %v3487 = vunpack.c.l.s4 1983009808
        %v3488 = vunpack.c.0.s8 %v3487
        %v3489 = vlaneseq
        %v3490 = vshrl.u32 %v3489, 7
        %v3491 = vsub.s32 %v3488, %v3490
        %v3492 = vrot.slane %v3484, %v3491
        %v3494 = vunpack.c.l.s4 1983009808
        %v3495 = vunpack.c.0.s8 %v3494
        %v3496 = vlaneseq
        %v3497 = vshrl.u32 %v3496, 7
        %v3498 = vsub.s32 %v3495, %v3497
        %v3499 = vrot.slane %v3485, %v3498
        %v3500 = vcombine.high %v3492, %v3492
        %v3501 = vcombine.high %v3499, %v3499
        %v3502 = vcombine.low %v2990, %v2991
        %v3503 = vcombine.high %v2990, %v2991
        %v3505 = vunpack.c.l.s4 1983009808
        %v3506 = vunpack.c.0.s8 %v3505
        %v3507 = vlaneseq
        %v3508 = vshrl.u32 %v3507, 7
        %v3509 = vsub.s32 %v3506, %v3508
        %v3510 = vrot.slane %v3502, %v3509
        %v3512 = vunpack.c.l.s4 1983009808
        %v3513 = vunpack.c.0.s8 %v3512
        %v3514 = vlaneseq
        %v3515 = vshrl.u32 %v3514, 7
        %v3516 = vsub.s32 %v3513, %v3515
        %v3517 = vrot.slane %v3503, %v3516
        %v3518 = vcombine.high %v3510, %v3510
        %v3519 = vcombine.high %v3517, %v3517
        %v3520 = vcombine.low %v2992, %v2993
        %v3521 = vcombine.high %v2992, %v2993
        %v3523 = vunpack.c.l.s4 1983009808
        %v3524 = vunpack.c.0.s8 %v3523
        %v3525 = vlaneseq
        %v3526 = vshrl.u32 %v3525, 7
        %v3527 = vsub.s32 %v3524, %v3526
        %v3528 = vrot.slane %v3520, %v3527
        %v3530 = vunpack.c.l.s4 1983009808
        %v3531 = vunpack.c.0.s8 %v3530
        %v3532 = vlaneseq
        %v3533 = vshrl.u32 %v3532, 7
        %v3534 = vsub.s32 %v3531, %v3533
        %v3535 = vrot.slane %v3521, %v3534
        %v3536 = vcombine.high %v3528, %v3528
        %v3537 = vcombine.high %v3535, %v3535
        %v3538 = vcombine.low %v2994, %v2995
        %v3539 = vcombine.high %v2994, %v2995
        %v3541 = vunpack.c.l.s4 1983009808
        %v3542 = vunpack.c.0.s8 %v3541
        %v3543 = vlaneseq
        %v3544 = vshrl.u32 %v3543, 7
        %v3545 = vsub.s32 %v3542, %v3544
        %v3546 = vrot.slane %v3538, %v3545
        %v3548 = vunpack.c.l.s4 1983009808
        %v3549 = vunpack.c.0.s8 %v3548
        %v3550 = vlaneseq
        %v3551 = vshrl.u32 %v3550, 7
        %v3552 = vsub.s32 %v3549, %v3551
        %v3553 = vrot.slane %v3539, %v3552
        %v3554 = vcombine.high %v3546, %v3546
        %v3555 = vcombine.high %v3553, %v3553
        %v3668 = vrot.slane %v3060, 7
        %v3669 = vrot.slane %v3668, 2
        %v3670 = vrot.slane %v3068, 7
        %v3671 = vrot.slane %v3670, 2
        %v3672 = vrot.slane %v3067, 7
        %v3673 = vrot.slane %v3672, 2
        %v3674 = vrot.slane %v3069, 7
        %v3675 = vrot.slane %v3674, 2
        %v3676 = vrot.slane %v3078, 7
        %v3677 = vrot.slane %v3676, 2
        %v3678 = vrot.slane %v3086, 7
        %v3679 = vrot.slane %v3678, 2
        %v3680 = vrot.slane %v3085, 7
        %v3681 = vrot.slane %v3680, 2
        %v3682 = vrot.slane %v3087, 7
        %v3683 = vrot.slane %v3682, 2
        %v3684 = vrot.slane %v3096, 7
        %v3685 = vrot.slane %v3684, 2
        %v3686 = vrot.slane %v3104, 7
        %v3687 = vrot.slane %v3686, 2
        %v3688 = vrot.slane %v3103, 7
        %v3689 = vrot.slane %v3688, 2
        %v3690 = vrot.slane %v3105, 7
        %v3691 = vrot.slane %v3690, 2
        %v3692 = vrot.slane %v3114, 7
        %v3693 = vrot.slane %v3692, 2
        %v3694 = vrot.slane %v3122, 7
        %v3695 = vrot.slane %v3694, 2
        %v3696 = vrot.slane %v3121, 7
        %v3697 = vrot.slane %v3696, 2
        %v3698 = vrot.slane %v3123, 7
        %v3699 = vrot.slane %v3698, 2
        %v3700 = vrot.slane %v3132, 7
        %v3701 = vrot.slane %v3700, 2
        %v3702 = vrot.slane %v3140, 7
        %v3703 = vrot.slane %v3702, 2
        %v3704 = vrot.slane %v3139, 7
        %v3705 = vrot.slane %v3704, 2
        %v3706 = vrot.slane %v3141, 7
        %v3707 = vrot.slane %v3706, 2
        %v3708 = vrot.slane %v3150, 7
        %v3709 = vrot.slane %v3708, 2
        %v3710 = vrot.slane %v3158, 7
        %v3711 = vrot.slane %v3710, 2
        %v3712 = vrot.slane %v3157, 7
        %v3713 = vrot.slane %v3712, 2
        %v3714 = vrot.slane %v3159, 7
        %v3715 = vrot.slane %v3714, 2
        %v3716 = vrot.slane %v3168, 7
        %v3717 = vrot.slane %v3716, 2
        %v3718 = vrot.slane %v3176, 7
        %v3719 = vrot.slane %v3718, 2
        %v3720 = vrot.slane %v3175, 7
        %v3721 = vrot.slane %v3720, 2
        %v3722 = vrot.slane %v3177, 7
        %v3723 = vrot.slane %v3722, 2
        %v3724 = vrot.slane %v3186, 7
        %v3725 = vrot.slane %v3724, 2
        %v3726 = vrot.slane %v3194, 7
        %v3727 = vrot.slane %v3726, 2
        %v3728 = vrot.slane %v3193, 7
        %v3729 = vrot.slane %v3728, 2
        %v3730 = vrot.slane %v3195, 7
        %v3731 = vrot.slane %v3730, 2
        %v3732 = vrot.slane %v3204, 7
        %v3733 = vrot.slane %v3732, 2
        %v3734 = vrot.slane %v3212, 7
        %v3735 = vrot.slane %v3734, 2
        %v3736 = vrot.slane %v3211, 7
        %v3737 = vrot.slane %v3736, 2
        %v3738 = vrot.slane %v3213, 7
        %v3739 = vrot.slane %v3738, 2
        %v3740 = vrot.slane %v3222, 7
        %v3741 = vrot.slane %v3740, 2
        %v3742 = vrot.slane %v3230, 7
        %v3743 = vrot.slane %v3742, 2
        %v3744 = vrot.slane %v3229, 7
        %v3745 = vrot.slane %v3744, 2
        %v3746 = vrot.slane %v3231, 7
        %v3747 = vrot.slane %v3746, 2
        %v3748 = vrot.slane %v3240, 7
        %v3749 = vrot.slane %v3748, 2
        %v3750 = vrot.slane %v3248, 7
        %v3751 = vrot.slane %v3750, 2
        %v3752 = vrot.slane %v3247, 7
        %v3753 = vrot.slane %v3752, 2
        %v3754 = vrot.slane %v3249, 7
        %v3755 = vrot.slane %v3754, 2
        %v3756 = vrot.slane %v3258, 7
        %v3757 = vrot.slane %v3756, 2
        %v3758 = vrot.slane %v3266, 7
        %v3759 = vrot.slane %v3758, 2
        %v3760 = vrot.slane %v3265, 7
        %v3761 = vrot.slane %v3760, 2
        %v3762 = vrot.slane %v3267, 7
        %v3763 = vrot.slane %v3762, 2
        %v3764 = vrot.slane %v3276, 7
        %v3765 = vrot.slane %v3764, 2
        %v3766 = vrot.slane %v3284, 7
        %v3767 = vrot.slane %v3766, 2
        %v3768 = vrot.slane %v3283, 7
        %v3769 = vrot.slane %v3768, 2
        %v3770 = vrot.slane %v3285, 7
        %v3771 = vrot.slane %v3770, 2
        %v3772 = vrot.slane %v3294, 7
        %v3773 = vrot.slane %v3772, 2
        %v3774 = vrot.slane %v3302, 7
        %v3775 = vrot.slane %v3774, 2
        %v3776 = vrot.slane %v3301, 7
        %v3777 = vrot.slane %v3776, 2
        %v3778 = vrot.slane %v3303, 7
        %v3779 = vrot.slane %v3778, 2
        %v3780 = vrot.slane %v3312, 7
        %v3781 = vrot.slane %v3780, 2
        %v3782 = vrot.slane %v3320, 7
        %v3783 = vrot.slane %v3782, 2
        %v3784 = vrot.slane %v3319, 7
        %v3785 = vrot.slane %v3784, 2
        %v3786 = vrot.slane %v3321, 7
        %v3787 = vrot.slane %v3786, 2
        %v3788 = vrot.slane %v3330, 7
        %v3789 = vrot.slane %v3788, 2
        %v3790 = vrot.slane %v3338, 7
        %v3791 = vrot.slane %v3790, 2
        %v3792 = vrot.slane %v3337, 7
        %v3793 = vrot.slane %v3792, 2
        %v3794 = vrot.slane %v3339, 7
        %v3795 = vrot.slane %v3794, 2
        %v3796 = vrot.slane %v3348, 7
        %v3797 = vrot.slane %v3796, 2
        %v3798 = vrot.slane %v3356, 7
        %v3799 = vrot.slane %v3798, 2
        %v3800 = vrot.slane %v3355, 7
        %v3801 = vrot.slane %v3800, 2
        %v3802 = vrot.slane %v3357, 7
        %v3803 = vrot.slane %v3802, 2
        %v3804 = vrot.slane %v3366, 7
        %v3805 = vrot.slane %v3804, 2
        %v3806 = vrot.slane %v3374, 7
        %v3807 = vrot.slane %v3806, 2
        %v3808 = vrot.slane %v3373, 7
        %v3809 = vrot.slane %v3808, 2
        %v3810 = vrot.slane %v3375, 7
        %v3811 = vrot.slane %v3810, 2
        %v3812 = vrot.slane %v3384, 7
        %v3813 = vrot.slane %v3812, 2
        %v3814 = vrot.slane %v3392, 7
        %v3815 = vrot.slane %v3814, 2
        %v3816 = vrot.slane %v3391, 7
        %v3817 = vrot.slane %v3816, 2
        %v3818 = vrot.slane %v3393, 7
        %v3819 = vrot.slane %v3818, 2
        %v3820 = vrot.slane %v3402, 7
        %v3821 = vrot.slane %v3820, 2
        %v3822 = vrot.slane %v3410, 7
        %v3823 = vrot.slane %v3822, 2
        %v3824 = vrot.slane %v3409, 7
        %v3825 = vrot.slane %v3824, 2
        %v3826 = vrot.slane %v3411, 7
        %v3827 = vrot.slane %v3826, 2
        %v3828 = vrot.slane %v3420, 7
        %v3829 = vrot.slane %v3828, 2
        %v3830 = vrot.slane %v3428, 7
        %v3831 = vrot.slane %v3830, 2
        %v3832 = vrot.slane %v3427, 7
        %v3833 = vrot.slane %v3832, 2
        %v3834 = vrot.slane %v3429, 7
        %v3835 = vrot.slane %v3834, 2
        %v3836 = vrot.slane %v3438, 7
        %v3837 = vrot.slane %v3836, 2
        %v3838 = vrot.slane %v3446, 7
        %v3839 = vrot.slane %v3838, 2
        %v3840 = vrot.slane %v3445, 7
        %v3841 = vrot.slane %v3840, 2
        %v3842 = vrot.slane %v3447, 7
        %v3843 = vrot.slane %v3842, 2
        %v3844 = vrot.slane %v3456, 7
        %v3845 = vrot.slane %v3844, 2
        %v3846 = vrot.slane %v3464, 7
        %v3847 = vrot.slane %v3846, 2
        %v3848 = vrot.slane %v3463, 7
        %v3849 = vrot.slane %v3848, 2
        %v3850 = vrot.slane %v3465, 7
        %v3851 = vrot.slane %v3850, 2
        %v3852 = vrot.slane %v3474, 7
        %v3853 = vrot.slane %v3852, 2
        %v3854 = vrot.slane %v3482, 7
        %v3855 = vrot.slane %v3854, 2
        %v3856 = vrot.slane %v3481, 7
        %v3857 = vrot.slane %v3856, 2
        %v3858 = vrot.slane %v3483, 7
        %v3859 = vrot.slane %v3858, 2
        %v3860 = vrot.slane %v3492, 7
        %v3861 = vrot.slane %v3860, 2
        %v3862 = vrot.slane %v3500, 7
        %v3863 = vrot.slane %v3862, 2
        %v3864 = vrot.slane %v3499, 7
        %v3865 = vrot.slane %v3864, 2
        %v3866 = vrot.slane %v3501, 7
        %v3867 = vrot.slane %v3866, 2
        %v3868 = vrot.slane %v3510, 7
        %v3869 = vrot.slane %v3868, 2
        %v3870 = vrot.slane %v3518, 7
        %v3871 = vrot.slane %v3870, 2
        %v3872 = vrot.slane %v3517, 7
        %v3873 = vrot.slane %v3872, 2
        %v3874 = vrot.slane %v3519, 7
        %v3875 = vrot.slane %v3874, 2
        %v3876 = vrot.slane %v3528, 7
        %v3877 = vrot.slane %v3876, 2
        %v3878 = vrot.slane %v3536, 7
        %v3879 = vrot.slane %v3878, 2
        %v3880 = vrot.slane %v3535, 7
        %v3881 = vrot.slane %v3880, 2
        %v3882 = vrot.slane %v3537, 7
        %v3883 = vrot.slane %v3882, 2
        %v3884 = vrot.slane %v3546, 7
        %v3885 = vrot.slane %v3884, 2
        %v3886 = vrot.slane %v3554, 7
        %v3887 = vrot.slane %v3886, 2
        %v3888 = vrot.slane %v3553, 7
        %v3889 = vrot.slane %v3888, 2
        %v3890 = vrot.slane %v3555, 7
        %v3891 = vrot.slane %v3890, 2
        %v4004 = vadd.f32 %v3060, %v3669
        %v4005 = vadd.f32 %v3068, %v3671
        %v4006 = vadd.f32 %v3067, %v3673
        %v4007 = vadd.f32 %v3069, %v3675
        %v4008 = vadd.f32 %v3078, %v3677
        %v4009 = vadd.f32 %v3086, %v3679
        %v4010 = vadd.f32 %v3085, %v3681
        %v4011 = vadd.f32 %v3087, %v3683
        %v4012 = vadd.f32 %v3096, %v3685
        %v4013 = vadd.f32 %v3104, %v3687
        %v4014 = vadd.f32 %v3103, %v3689
        %v4015 = vadd.f32 %v3105, %v3691
        %v4016 = vadd.f32 %v3114, %v3693
        %v4017 = vadd.f32 %v3122, %v3695
        %v4018 = vadd.f32 %v3121, %v3697
        %v4019 = vadd.f32 %v3123, %v3699
        %v4020 = vadd.f32 %v3132, %v3701
        %v4021 = vadd.f32 %v3140, %v3703
        %v4022 = vadd.f32 %v3139, %v3705
        %v4023 = vadd.f32 %v3141, %v3707
        %v4024 = vadd.f32 %v3150, %v3709
        %v4025 = vadd.f32 %v3158, %v3711
        %v4026 = vadd.f32 %v3157, %v3713
        %v4027 = vadd.f32 %v3159, %v3715
        %v4028 = vadd.f32 %v3168, %v3717
        %v4029 = vadd.f32 %v3176, %v3719
        %v4030 = vadd.f32 %v3175, %v3721
        %v4031 = vadd.f32 %v3177, %v3723
        %v4032 = vadd.f32 %v3186, %v3725
        %v4033 = vadd.f32 %v3194, %v3727
        %v4034 = vadd.f32 %v3193, %v3729
        %v4035 = vadd.f32 %v3195, %v3731
        %v4036 = vadd.f32 %v3204, %v3733
        %v4037 = vadd.f32 %v3212, %v3735
        %v4038 = vadd.f32 %v3211, %v3737
        %v4039 = vadd.f32 %v3213, %v3739
        %v4040 = vadd.f32 %v3222, %v3741
        %v4041 = vadd.f32 %v3230, %v3743
        %v4042 = vadd.f32 %v3229, %v3745
        %v4043 = vadd.f32 %v3231, %v3747
        %v4044 = vadd.f32 %v3240, %v3749
        %v4045 = vadd.f32 %v3248, %v3751
        %v4046 = vadd.f32 %v3247, %v3753
        %v4047 = vadd.f32 %v3249, %v3755
        %v4048 = vadd.f32 %v3258, %v3757
        %v4049 = vadd.f32 %v3266, %v3759
        %v4050 = vadd.f32 %v3265, %v3761
        %v4051 = vadd.f32 %v3267, %v3763
        %v4052 = vadd.f32 %v3276, %v3765
        %v4053 = vadd.f32 %v3284, %v3767
        %v4054 = vadd.f32 %v3283, %v3769
        %v4055 = vadd.f32 %v3285, %v3771
        %v4056 = vadd.f32 %v3294, %v3773
        %v4057 = vadd.f32 %v3302, %v3775
        %v4058 = vadd.f32 %v3301, %v3777
        %v4059 = vadd.f32 %v3303, %v3779
        %v4060 = vadd.f32 %v3312, %v3781
        %v4061 = vadd.f32 %v3320, %v3783
        %v4062 = vadd.f32 %v3319, %v3785
        %v4063 = vadd.f32 %v3321, %v3787
        %v4064 = vadd.f32 %v3330, %v3789
        %v4065 = vadd.f32 %v3338, %v3791
        %v4066 = vadd.f32 %v3337, %v3793
        %v4067 = vadd.f32 %v3339, %v3795
        %v4068 = vadd.f32 %v3348, %v3797
        %v4069 = vadd.f32 %v3356, %v3799
        %v4070 = vadd.f32 %v3355, %v3801
        %v4071 = vadd.f32 %v3357, %v3803
        %v4072 = vadd.f32 %v3366, %v3805
        %v4073 = vadd.f32 %v3374, %v3807
        %v4074 = vadd.f32 %v3373, %v3809
        %v4075 = vadd.f32 %v3375, %v3811
        %v4076 = vadd.f32 %v3384, %v3813
        %v4077 = vadd.f32 %v3392, %v3815
        %v4078 = vadd.f32 %v3391, %v3817
        %v4079 = vadd.f32 %v3393, %v3819
        %v4080 = vadd.f32 %v3402, %v3821
        %v4081 = vadd.f32 %v3410, %v3823
        %v4082 = vadd.f32 %v3409, %v3825
        %v4083 = vadd.f32 %v3411, %v3827
        %v4084 = vadd.f32 %v3420, %v3829
        %v4085 = vadd.f32 %v3428, %v3831
        %v4086 = vadd.f32 %v3427, %v3833
        %v4087 = vadd.f32 %v3429, %v3835
        %v4088 = vadd.f32 %v3438, %v3837
        %v4089 = vadd.f32 %v3446, %v3839
        %v4090 = vadd.f32 %v3445, %v3841
        %v4091 = vadd.f32 %v3447, %v3843
        %v4092 = vadd.f32 %v3456, %v3845
        %v4093 = vadd.f32 %v3464, %v3847
        %v4094 = vadd.f32 %v3463, %v3849
        %v4095 = vadd.f32 %v3465, %v3851
        %v4096 = vadd.f32 %v3474, %v3853
        %v4097 = vadd.f32 %v3482, %v3855
        %v4098 = vadd.f32 %v3481, %v3857
        %v4099 = vadd.f32 %v3483, %v3859
        %v4100 = vadd.f32 %v3492, %v3861
        %v4101 = vadd.f32 %v3500, %v3863
        %v4102 = vadd.f32 %v3499, %v3865
        %v4103 = vadd.f32 %v3501, %v3867
        %v4104 = vadd.f32 %v3510, %v3869
        %v4105 = vadd.f32 %v3518, %v3871
        %v4106 = vadd.f32 %v3517, %v3873
        %v4107 = vadd.f32 %v3519, %v3875
        %v4108 = vadd.f32 %v3528, %v3877
        %v4109 = vadd.f32 %v3536, %v3879
        %v4110 = vadd.f32 %v3535, %v3881
        %v4111 = vadd.f32 %v3537, %v3883
        %v4112 = vadd.f32 %v3546, %v3885
        %v4113 = vadd.f32 %v3554, %v3887
        %v4114 = vadd.f32 %v3553, %v3889
        %v4115 = vadd.f32 %v3555, %v3891
        %v4116 = vld [vmem:[%s3] sm:$0xff]
        %v4117 = vld [vmem:[%s3 + $0x8] sm:$0xff]
        %v4118 = vld [vmem:[%s3 + $0x10] sm:$0xff]
        %v4119 = vld [vmem:[%s3 + $0x18] sm:$0xff]
        %v4120 = vld [vmem:[%s3 + $0x20] sm:$0xff]
        %v4121 = vld [vmem:[%s3 + $0x28] sm:$0xff]
        %v4122 = vld [vmem:[%s3 + $0x30] sm:$0xff]
        %v4123 = vld [vmem:[%s3 + $0x38] sm:$0xff]
        %v4124 = vld [vmem:[%s3 + $0x40] sm:$0xff]
        %v4125 = vld [vmem:[%s3 + $0x48] sm:$0xff]
        %v4126 = vld [vmem:[%s3 + $0x50] sm:$0xff]
        %v4127 = vld [vmem:[%s3 + $0x58] sm:$0xff]
        %v4128 = vld [vmem:[%s3 + $0x60] sm:$0xff]
        %v4129 = vld [vmem:[%s3 + $0x68] sm:$0xff]
        %v4130 = vld [vmem:[%s3 + $0x70] sm:$0xff]
        %v4131 = vld [vmem:[%s3 + $0x78] sm:$0xff]
        %v4132 = vld [vmem:[%s3 + $0x80] sm:$0xff]
        %v4133 = vld [vmem:[%s3 + $0x88] sm:$0xff]
        %v4134 = vld [vmem:[%s3 + $0x90] sm:$0xff]
        %v4135 = vld [vmem:[%s3 + $0x98] sm:$0xff]
        %v4136 = vld [vmem:[%s3 + $0xa0] sm:$0xff]
        %v4249 = vlaneseq
        %v4250 = vshrl.u32 %v4249, 7
        %v4251 = vsub.s32 0, %v4250
        %v4252 = vrot.slane %v4004, %v4251
        %v4253 = vlaneseq
        %v4254 = vshrl.u32 %v4253, 7
        %v4255 = vsub.s32 2, %v4254
        %v4256 = vrot.slane %v4004, %v4255
        %v4257 = vlaneseq
        %v4258 = vshrl.u32 %v4257, 7
        %v4259 = vsub.s32 0, %v4258
        %v4260 = vrot.slane %v4005, %v4259
        %v4261 = vlaneseq
        %v4262 = vshrl.u32 %v4261, 7
        %v4263 = vsub.s32 2, %v4262
        %v4264 = vrot.slane %v4005, %v4263
        %v4265 = vlaneseq
        %v4266 = vshrl.u32 %v4265, 7
        %v4267 = vsub.s32 0, %v4266
        %v4268 = vrot.slane %v4006, %v4267
        %v4269 = vlaneseq
        %v4270 = vshrl.u32 %v4269, 7
        %v4271 = vsub.s32 2, %v4270
        %v4272 = vrot.slane %v4006, %v4271
        %v4273 = vlaneseq
        %v4274 = vshrl.u32 %v4273, 7
        %v4275 = vsub.s32 0, %v4274
        %v4276 = vrot.slane %v4007, %v4275
        %v4277 = vlaneseq
        %v4278 = vshrl.u32 %v4277, 7
        %v4279 = vsub.s32 2, %v4278
        %v4280 = vrot.slane %v4007, %v4279
        %v4281 = vlaneseq
        %v4282 = vshrl.u32 %v4281, 7
        %v4283 = vsub.s32 0, %v4282
        %v4284 = vrot.slane %v4008, %v4283
        %v4285 = vlaneseq
        %v4286 = vshrl.u32 %v4285, 7
        %v4287 = vsub.s32 2, %v4286
        %v4288 = vrot.slane %v4008, %v4287
        %v4289 = vlaneseq
        %v4290 = vshrl.u32 %v4289, 7
        %v4291 = vsub.s32 0, %v4290
        %v4292 = vrot.slane %v4009, %v4291
        %v4293 = vlaneseq
        %v4294 = vshrl.u32 %v4293, 7
        %v4295 = vsub.s32 2, %v4294
        %v4296 = vrot.slane %v4009, %v4295
        %v4297 = vlaneseq
        %v4298 = vshrl.u32 %v4297, 7
        %v4299 = vsub.s32 0, %v4298
        %v4300 = vrot.slane %v4010, %v4299
        %v4301 = vlaneseq
        %v4302 = vshrl.u32 %v4301, 7
        %v4303 = vsub.s32 2, %v4302
        %v4304 = vrot.slane %v4010, %v4303
        %v4305 = vlaneseq
        %v4306 = vshrl.u32 %v4305, 7
        %v4307 = vsub.s32 0, %v4306
        %v4308 = vrot.slane %v4011, %v4307
        %v4309 = vlaneseq
        %v4310 = vshrl.u32 %v4309, 7
        %v4311 = vsub.s32 2, %v4310
        %v4312 = vrot.slane %v4011, %v4311
        %v4313 = vlaneseq
        %v4314 = vshrl.u32 %v4313, 7
        %v4315 = vsub.s32 0, %v4314
        %v4316 = vrot.slane %v4012, %v4315
        %v4317 = vlaneseq
        %v4318 = vshrl.u32 %v4317, 7
        %v4319 = vsub.s32 2, %v4318
        %v4320 = vrot.slane %v4012, %v4319
        %v4321 = vlaneseq
        %v4322 = vshrl.u32 %v4321, 7
        %v4323 = vsub.s32 0, %v4322
        %v4324 = vrot.slane %v4013, %v4323
        %v4325 = vlaneseq
        %v4326 = vshrl.u32 %v4325, 7
        %v4327 = vsub.s32 2, %v4326
        %v4328 = vrot.slane %v4013, %v4327
        %v4329 = vlaneseq
        %v4330 = vshrl.u32 %v4329, 7
        %v4331 = vsub.s32 0, %v4330
        %v4332 = vrot.slane %v4014, %v4331
        %v4333 = vlaneseq
        %v4334 = vshrl.u32 %v4333, 7
        %v4335 = vsub.s32 2, %v4334
        %v4336 = vrot.slane %v4014, %v4335
        %v4337 = vlaneseq
        %v4338 = vshrl.u32 %v4337, 7
        %v4339 = vsub.s32 0, %v4338
        %v4340 = vrot.slane %v4015, %v4339
        %v4341 = vlaneseq
        %v4342 = vshrl.u32 %v4341, 7
        %v4343 = vsub.s32 2, %v4342
        %v4344 = vrot.slane %v4015, %v4343
        %v4345 = vlaneseq
        %v4346 = vshrl.u32 %v4345, 7
        %v4347 = vsub.s32 0, %v4346
        %v4348 = vrot.slane %v4016, %v4347
        %v4349 = vlaneseq
        %v4350 = vshrl.u32 %v4349, 7
        %v4351 = vsub.s32 2, %v4350
        %v4352 = vrot.slane %v4016, %v4351
        %v4353 = vlaneseq
        %v4354 = vshrl.u32 %v4353, 7
        %v4355 = vsub.s32 0, %v4354
        %v4356 = vrot.slane %v4017, %v4355
        %v4357 = vlaneseq
        %v4358 = vshrl.u32 %v4357, 7
        %v4359 = vsub.s32 2, %v4358
        %v4360 = vrot.slane %v4017, %v4359
        %v4361 = vlaneseq
        %v4362 = vshrl.u32 %v4361, 7
        %v4363 = vsub.s32 0, %v4362
        %v4364 = vrot.slane %v4018, %v4363
        %v4365 = vlaneseq
        %v4366 = vshrl.u32 %v4365, 7
        %v4367 = vsub.s32 2, %v4366
        %v4368 = vrot.slane %v4018, %v4367
        %v4369 = vlaneseq
        %v4370 = vshrl.u32 %v4369, 7
        %v4371 = vsub.s32 0, %v4370
        %v4372 = vrot.slane %v4019, %v4371
        %v4373 = vlaneseq
        %v4374 = vshrl.u32 %v4373, 7
        %v4375 = vsub.s32 2, %v4374
        %v4376 = vrot.slane %v4019, %v4375
        %v4377 = vlaneseq
        %v4378 = vshrl.u32 %v4377, 7
        %v4379 = vsub.s32 0, %v4378
        %v4380 = vrot.slane %v4020, %v4379
        %v4381 = vlaneseq
        %v4382 = vshrl.u32 %v4381, 7
        %v4383 = vsub.s32 2, %v4382
        %v4384 = vrot.slane %v4020, %v4383
        %v4385 = vlaneseq
        %v4386 = vshrl.u32 %v4385, 7
        %v4387 = vsub.s32 0, %v4386
        %v4388 = vrot.slane %v4021, %v4387
        %v4389 = vlaneseq
        %v4390 = vshrl.u32 %v4389, 7
        %v4391 = vsub.s32 2, %v4390
        %v4392 = vrot.slane %v4021, %v4391
        %v4393 = vlaneseq
        %v4394 = vshrl.u32 %v4393, 7
        %v4395 = vsub.s32 0, %v4394
        %v4396 = vrot.slane %v4022, %v4395
        %v4397 = vlaneseq
        %v4398 = vshrl.u32 %v4397, 7
        %v4399 = vsub.s32 2, %v4398
        %v4400 = vrot.slane %v4022, %v4399
        %v4401 = vlaneseq
        %v4402 = vshrl.u32 %v4401, 7
        %v4403 = vsub.s32 0, %v4402
        %v4404 = vrot.slane %v4023, %v4403
        %v4405 = vlaneseq
        %v4406 = vshrl.u32 %v4405, 7
        %v4407 = vsub.s32 2, %v4406
        %v4408 = vrot.slane %v4023, %v4407
        %v4409 = vlaneseq
        %v4410 = vshrl.u32 %v4409, 7
        %v4411 = vsub.s32 0, %v4410
        %v4412 = vrot.slane %v4024, %v4411
        %v4413 = vlaneseq
        %v4414 = vshrl.u32 %v4413, 7
        %v4415 = vsub.s32 2, %v4414
        %v4416 = vrot.slane %v4024, %v4415
        %v4417 = vlaneseq
        %v4418 = vshrl.u32 %v4417, 7
        %v4419 = vsub.s32 0, %v4418
        %v4420 = vrot.slane %v4025, %v4419
        %v4421 = vlaneseq
        %v4422 = vshrl.u32 %v4421, 7
        %v4423 = vsub.s32 2, %v4422
        %v4424 = vrot.slane %v4025, %v4423
        %v4425 = vlaneseq
        %v4426 = vshrl.u32 %v4425, 7
        %v4427 = vsub.s32 0, %v4426
        %v4428 = vrot.slane %v4026, %v4427
        %v4429 = vlaneseq
        %v4430 = vshrl.u32 %v4429, 7
        %v4431 = vsub.s32 2, %v4430
        %v4432 = vrot.slane %v4026, %v4431
        %v4433 = vlaneseq
        %v4434 = vshrl.u32 %v4433, 7
        %v4435 = vsub.s32 0, %v4434
        %v4436 = vrot.slane %v4027, %v4435
        %v4437 = vlaneseq
        %v4438 = vshrl.u32 %v4437, 7
        %v4439 = vsub.s32 2, %v4438
        %v4440 = vrot.slane %v4027, %v4439
        %v4441 = vlaneseq
        %v4442 = vshrl.u32 %v4441, 7
        %v4443 = vsub.s32 0, %v4442
        %v4444 = vrot.slane %v4028, %v4443
        %v4445 = vlaneseq
        %v4446 = vshrl.u32 %v4445, 7
        %v4447 = vsub.s32 2, %v4446
        %v4448 = vrot.slane %v4028, %v4447
        %v4449 = vlaneseq
        %v4450 = vshrl.u32 %v4449, 7
        %v4451 = vsub.s32 0, %v4450
        %v4452 = vrot.slane %v4029, %v4451
        %v4453 = vlaneseq
        %v4454 = vshrl.u32 %v4453, 7
        %v4455 = vsub.s32 2, %v4454
        %v4456 = vrot.slane %v4029, %v4455
        %v4457 = vlaneseq
        %v4458 = vshrl.u32 %v4457, 7
        %v4459 = vsub.s32 0, %v4458
        %v4460 = vrot.slane %v4030, %v4459
        %v4461 = vlaneseq
        %v4462 = vshrl.u32 %v4461, 7
        %v4463 = vsub.s32 2, %v4462
        %v4464 = vrot.slane %v4030, %v4463
        %v4465 = vlaneseq
        %v4466 = vshrl.u32 %v4465, 7
        %v4467 = vsub.s32 0, %v4466
        %v4468 = vrot.slane %v4031, %v4467
        %v4469 = vlaneseq
        %v4470 = vshrl.u32 %v4469, 7
        %v4471 = vsub.s32 2, %v4470
        %v4472 = vrot.slane %v4031, %v4471
        %v4473 = vlaneseq
        %v4474 = vshrl.u32 %v4473, 7
        %v4475 = vsub.s32 0, %v4474
        %v4476 = vrot.slane %v4032, %v4475
        %v4477 = vlaneseq
        %v4478 = vshrl.u32 %v4477, 7
        %v4479 = vsub.s32 2, %v4478
        %v4480 = vrot.slane %v4032, %v4479
        %v4481 = vlaneseq
        %v4482 = vshrl.u32 %v4481, 7
        %v4483 = vsub.s32 0, %v4482
        %v4484 = vrot.slane %v4033, %v4483
        %v4485 = vlaneseq
        %v4486 = vshrl.u32 %v4485, 7
        %v4487 = vsub.s32 2, %v4486
        %v4488 = vrot.slane %v4033, %v4487
        %v4489 = vlaneseq
        %v4490 = vshrl.u32 %v4489, 7
        %v4491 = vsub.s32 0, %v4490
        %v4492 = vrot.slane %v4034, %v4491
        %v4493 = vlaneseq
        %v4494 = vshrl.u32 %v4493, 7
        %v4495 = vsub.s32 2, %v4494
        %v4496 = vrot.slane %v4034, %v4495
        %v4497 = vlaneseq
        %v4498 = vshrl.u32 %v4497, 7
        %v4499 = vsub.s32 0, %v4498
        %v4500 = vrot.slane %v4035, %v4499
        %v4501 = vlaneseq
        %v4502 = vshrl.u32 %v4501, 7
        %v4503 = vsub.s32 2, %v4502
        %v4504 = vrot.slane %v4035, %v4503
        %v4505 = vlaneseq
        %v4506 = vshrl.u32 %v4505, 7
        %v4507 = vsub.s32 0, %v4506
        %v4508 = vrot.slane %v4036, %v4507
        %v4509 = vlaneseq
        %v4510 = vshrl.u32 %v4509, 7
        %v4511 = vsub.s32 2, %v4510
        %v4512 = vrot.slane %v4036, %v4511
        %v4513 = vlaneseq
        %v4514 = vshrl.u32 %v4513, 7
        %v4515 = vsub.s32 0, %v4514
        %v4516 = vrot.slane %v4037, %v4515
        %v4517 = vlaneseq
        %v4518 = vshrl.u32 %v4517, 7
        %v4519 = vsub.s32 2, %v4518
        %v4520 = vrot.slane %v4037, %v4519
        %v4521 = vlaneseq
        %v4522 = vshrl.u32 %v4521, 7
        %v4523 = vsub.s32 0, %v4522
        %v4524 = vrot.slane %v4038, %v4523
        %v4525 = vlaneseq
        %v4526 = vshrl.u32 %v4525, 7
        %v4527 = vsub.s32 2, %v4526
        %v4528 = vrot.slane %v4038, %v4527
        %v4529 = vlaneseq
        %v4530 = vshrl.u32 %v4529, 7
        %v4531 = vsub.s32 0, %v4530
        %v4532 = vrot.slane %v4039, %v4531
        %v4533 = vlaneseq
        %v4534 = vshrl.u32 %v4533, 7
        %v4535 = vsub.s32 2, %v4534
        %v4536 = vrot.slane %v4039, %v4535
        %v4537 = vlaneseq
        %v4538 = vshrl.u32 %v4537, 7
        %v4539 = vsub.s32 0, %v4538
        %v4540 = vrot.slane %v4040, %v4539
        %v4541 = vlaneseq
        %v4542 = vshrl.u32 %v4541, 7
        %v4543 = vsub.s32 2, %v4542
        %v4544 = vrot.slane %v4040, %v4543
        %v4545 = vlaneseq
        %v4546 = vshrl.u32 %v4545, 7
        %v4547 = vsub.s32 0, %v4546
        %v4548 = vrot.slane %v4041, %v4547
        %v4549 = vlaneseq
        %v4550 = vshrl.u32 %v4549, 7
        %v4551 = vsub.s32 2, %v4550
        %v4552 = vrot.slane %v4041, %v4551
        %v4553 = vlaneseq
        %v4554 = vshrl.u32 %v4553, 7
        %v4555 = vsub.s32 0, %v4554
        %v4556 = vrot.slane %v4042, %v4555
        %v4557 = vlaneseq
        %v4558 = vshrl.u32 %v4557, 7
        %v4559 = vsub.s32 2, %v4558
        %v4560 = vrot.slane %v4042, %v4559
        %v4561 = vlaneseq
        %v4562 = vshrl.u32 %v4561, 7
        %v4563 = vsub.s32 0, %v4562
        %v4564 = vrot.slane %v4043, %v4563
        %v4565 = vlaneseq
        %v4566 = vshrl.u32 %v4565, 7
        %v4567 = vsub.s32 2, %v4566
        %v4568 = vrot.slane %v4043, %v4567
        %v4569 = vlaneseq
        %v4570 = vshrl.u32 %v4569, 7
        %v4571 = vsub.s32 0, %v4570
        %v4572 = vrot.slane %v4044, %v4571
        %v4573 = vlaneseq
        %v4574 = vshrl.u32 %v4573, 7
        %v4575 = vsub.s32 2, %v4574
        %v4576 = vrot.slane %v4044, %v4575
        %v4577 = vlaneseq
        %v4578 = vshrl.u32 %v4577, 7
        %v4579 = vsub.s32 0, %v4578
        %v4580 = vrot.slane %v4045, %v4579
        %v4581 = vlaneseq
        %v4582 = vshrl.u32 %v4581, 7
        %v4583 = vsub.s32 2, %v4582
        %v4584 = vrot.slane %v4045, %v4583
        %v4585 = vlaneseq
        %v4586 = vshrl.u32 %v4585, 7
        %v4587 = vsub.s32 0, %v4586
        %v4588 = vrot.slane %v4046, %v4587
        %v4589 = vlaneseq
        %v4590 = vshrl.u32 %v4589, 7
        %v4591 = vsub.s32 2, %v4590
        %v4592 = vrot.slane %v4046, %v4591
        %v4593 = vlaneseq
        %v4594 = vshrl.u32 %v4593, 7
        %v4595 = vsub.s32 0, %v4594
        %v4596 = vrot.slane %v4047, %v4595
        %v4597 = vlaneseq
        %v4598 = vshrl.u32 %v4597, 7
        %v4599 = vsub.s32 2, %v4598
        %v4600 = vrot.slane %v4047, %v4599
        %v4601 = vlaneseq
        %v4602 = vshrl.u32 %v4601, 7
        %v4603 = vsub.s32 0, %v4602
        %v4604 = vrot.slane %v4048, %v4603
        %v4605 = vlaneseq
        %v4606 = vshrl.u32 %v4605, 7
        %v4607 = vsub.s32 2, %v4606
        %v4608 = vrot.slane %v4048, %v4607
        %v4609 = vlaneseq
        %v4610 = vshrl.u32 %v4609, 7
        %v4611 = vsub.s32 0, %v4610
        %v4612 = vrot.slane %v4049, %v4611
        %v4613 = vlaneseq
        %v4614 = vshrl.u32 %v4613, 7
        %v4615 = vsub.s32 2, %v4614
        %v4616 = vrot.slane %v4049, %v4615
        %v4617 = vlaneseq
        %v4618 = vshrl.u32 %v4617, 7
        %v4619 = vsub.s32 0, %v4618
        %v4620 = vrot.slane %v4050, %v4619
        %v4621 = vlaneseq
        %v4622 = vshrl.u32 %v4621, 7
        %v4623 = vsub.s32 2, %v4622
        %v4624 = vrot.slane %v4050, %v4623
        %v4625 = vlaneseq
        %v4626 = vshrl.u32 %v4625, 7
        %v4627 = vsub.s32 0, %v4626
        %v4628 = vrot.slane %v4051, %v4627
        %v4629 = vlaneseq
        %v4630 = vshrl.u32 %v4629, 7
        %v4631 = vsub.s32 2, %v4630
        %v4632 = vrot.slane %v4051, %v4631
        %v4633 = vlaneseq
        %v4634 = vshrl.u32 %v4633, 7
        %v4635 = vsub.s32 0, %v4634
        %v4636 = vrot.slane %v4052, %v4635
        %v4637 = vlaneseq
        %v4638 = vshrl.u32 %v4637, 7
        %v4639 = vsub.s32 2, %v4638
        %v4640 = vrot.slane %v4052, %v4639
        %v4641 = vlaneseq
        %v4642 = vshrl.u32 %v4641, 7
        %v4643 = vsub.s32 0, %v4642
        %v4644 = vrot.slane %v4053, %v4643
        %v4645 = vlaneseq
        %v4646 = vshrl.u32 %v4645, 7
        %v4647 = vsub.s32 2, %v4646
        %v4648 = vrot.slane %v4053, %v4647
        %v4649 = vlaneseq
        %v4650 = vshrl.u32 %v4649, 7
        %v4651 = vsub.s32 0, %v4650
        %v4652 = vrot.slane %v4054, %v4651
        %v4653 = vlaneseq
        %v4654 = vshrl.u32 %v4653, 7
        %v4655 = vsub.s32 2, %v4654
        %v4656 = vrot.slane %v4054, %v4655
        %v4657 = vlaneseq
        %v4658 = vshrl.u32 %v4657, 7
        %v4659 = vsub.s32 0, %v4658
        %v4660 = vrot.slane %v4055, %v4659
        %v4661 = vlaneseq
        %v4662 = vshrl.u32 %v4661, 7
        %v4663 = vsub.s32 2, %v4662
        %v4664 = vrot.slane %v4055, %v4663
        %v4665 = vlaneseq
        %v4666 = vshrl.u32 %v4665, 7
        %v4667 = vsub.s32 0, %v4666
        %v4668 = vrot.slane %v4056, %v4667
        %v4669 = vlaneseq
        %v4670 = vshrl.u32 %v4669, 7
        %v4671 = vsub.s32 2, %v4670
        %v4672 = vrot.slane %v4056, %v4671
        %v4673 = vlaneseq
        %v4674 = vshrl.u32 %v4673, 7
        %v4675 = vsub.s32 0, %v4674
        %v4676 = vrot.slane %v4057, %v4675
        %v4677 = vlaneseq
        %v4678 = vshrl.u32 %v4677, 7
        %v4679 = vsub.s32 2, %v4678
        %v4680 = vrot.slane %v4057, %v4679
        %v4681 = vlaneseq
        %v4682 = vshrl.u32 %v4681, 7
        %v4683 = vsub.s32 0, %v4682
        %v4684 = vrot.slane %v4058, %v4683
        %v4685 = vlaneseq
        %v4686 = vshrl.u32 %v4685, 7
        %v4687 = vsub.s32 2, %v4686
        %v4688 = vrot.slane %v4058, %v4687
        %v4689 = vlaneseq
        %v4690 = vshrl.u32 %v4689, 7
        %v4691 = vsub.s32 0, %v4690
        %v4692 = vrot.slane %v4059, %v4691
        %v4693 = vlaneseq
        %v4694 = vshrl.u32 %v4693, 7
        %v4695 = vsub.s32 2, %v4694
        %v4696 = vrot.slane %v4059, %v4695
        %v4697 = vlaneseq
        %v4698 = vshrl.u32 %v4697, 7
        %v4699 = vsub.s32 0, %v4698
        %v4700 = vrot.slane %v4060, %v4699
        %v4701 = vlaneseq
        %v4702 = vshrl.u32 %v4701, 7
        %v4703 = vsub.s32 2, %v4702
        %v4704 = vrot.slane %v4060, %v4703
        %v4705 = vlaneseq
        %v4706 = vshrl.u32 %v4705, 7
        %v4707 = vsub.s32 0, %v4706
        %v4708 = vrot.slane %v4061, %v4707
        %v4709 = vlaneseq
        %v4710 = vshrl.u32 %v4709, 7
        %v4711 = vsub.s32 2, %v4710
        %v4712 = vrot.slane %v4061, %v4711
        %v4713 = vlaneseq
        %v4714 = vshrl.u32 %v4713, 7
        %v4715 = vsub.s32 0, %v4714
        %v4716 = vrot.slane %v4062, %v4715
        %v4717 = vlaneseq
        %v4718 = vshrl.u32 %v4717, 7
        %v4719 = vsub.s32 2, %v4718
        %v4720 = vrot.slane %v4062, %v4719
        %v4721 = vlaneseq
        %v4722 = vshrl.u32 %v4721, 7
        %v4723 = vsub.s32 0, %v4722
        %v4724 = vrot.slane %v4063, %v4723
        %v4725 = vlaneseq
        %v4726 = vshrl.u32 %v4725, 7
        %v4727 = vsub.s32 2, %v4726
        %v4728 = vrot.slane %v4063, %v4727
        %v4729 = vlaneseq
        %v4730 = vshrl.u32 %v4729, 7
        %v4731 = vsub.s32 0, %v4730
        %v4732 = vrot.slane %v4064, %v4731
        %v4733 = vlaneseq
        %v4734 = vshrl.u32 %v4733, 7
        %v4735 = vsub.s32 2, %v4734
        %v4736 = vrot.slane %v4064, %v4735
        %v4737 = vlaneseq
        %v4738 = vshrl.u32 %v4737, 7
        %v4739 = vsub.s32 0, %v4738
        %v4740 = vrot.slane %v4065, %v4739
        %v4741 = vlaneseq
        %v4742 = vshrl.u32 %v4741, 7
        %v4743 = vsub.s32 2, %v4742
        %v4744 = vrot.slane %v4065, %v4743
        %v4745 = vlaneseq
        %v4746 = vshrl.u32 %v4745, 7
        %v4747 = vsub.s32 0, %v4746
        %v4748 = vrot.slane %v4066, %v4747
        %v4749 = vlaneseq
        %v4750 = vshrl.u32 %v4749, 7
        %v4751 = vsub.s32 2, %v4750
        %v4752 = vrot.slane %v4066, %v4751
        %v4753 = vlaneseq
        %v4754 = vshrl.u32 %v4753, 7
        %v4755 = vsub.s32 0, %v4754
        %v4756 = vrot.slane %v4067, %v4755
        %v4757 = vlaneseq
        %v4758 = vshrl.u32 %v4757, 7
        %v4759 = vsub.s32 2, %v4758
        %v4760 = vrot.slane %v4067, %v4759
        %v4761 = vlaneseq
        %v4762 = vshrl.u32 %v4761, 7
        %v4763 = vsub.s32 0, %v4762
        %v4764 = vrot.slane %v4068, %v4763
        %v4765 = vlaneseq
        %v4766 = vshrl.u32 %v4765, 7
        %v4767 = vsub.s32 2, %v4766
        %v4768 = vrot.slane %v4068, %v4767
        %v4769 = vlaneseq
        %v4770 = vshrl.u32 %v4769, 7
        %v4771 = vsub.s32 0, %v4770
        %v4772 = vrot.slane %v4069, %v4771
        %v4773 = vlaneseq
        %v4774 = vshrl.u32 %v4773, 7
        %v4775 = vsub.s32 2, %v4774
        %v4776 = vrot.slane %v4069, %v4775
        %v4777 = vlaneseq
        %v4778 = vshrl.u32 %v4777, 7
        %v4779 = vsub.s32 0, %v4778
        %v4780 = vrot.slane %v4070, %v4779
        %v4781 = vlaneseq
        %v4782 = vshrl.u32 %v4781, 7
        %v4783 = vsub.s32 2, %v4782
        %v4784 = vrot.slane %v4070, %v4783
        %v4785 = vlaneseq
        %v4786 = vshrl.u32 %v4785, 7
        %v4787 = vsub.s32 0, %v4786
        %v4788 = vrot.slane %v4071, %v4787
        %v4789 = vlaneseq
        %v4790 = vshrl.u32 %v4789, 7
        %v4791 = vsub.s32 2, %v4790
        %v4792 = vrot.slane %v4071, %v4791
        %v4793 = vlaneseq
        %v4794 = vshrl.u32 %v4793, 7
        %v4795 = vsub.s32 0, %v4794
        %v4796 = vrot.slane %v4072, %v4795
        %v4797 = vlaneseq
        %v4798 = vshrl.u32 %v4797, 7
        %v4799 = vsub.s32 2, %v4798
        %v4800 = vrot.slane %v4072, %v4799
        %v4801 = vlaneseq
        %v4802 = vshrl.u32 %v4801, 7
        %v4803 = vsub.s32 0, %v4802
        %v4804 = vrot.slane %v4073, %v4803
        %v4805 = vlaneseq
        %v4806 = vshrl.u32 %v4805, 7
        %v4807 = vsub.s32 2, %v4806
        %v4808 = vrot.slane %v4073, %v4807
        %v4809 = vlaneseq
        %v4810 = vshrl.u32 %v4809, 7
        %v4811 = vsub.s32 0, %v4810
        %v4812 = vrot.slane %v4074, %v4811
        %v4813 = vlaneseq
        %v4814 = vshrl.u32 %v4813, 7
        %v4815 = vsub.s32 2, %v4814
        %v4816 = vrot.slane %v4074, %v4815
        %v4817 = vlaneseq
        %v4818 = vshrl.u32 %v4817, 7
        %v4819 = vsub.s32 0, %v4818
        %v4820 = vrot.slane %v4075, %v4819
        %v4821 = vlaneseq
        %v4822 = vshrl.u32 %v4821, 7
        %v4823 = vsub.s32 2, %v4822
        %v4824 = vrot.slane %v4075, %v4823
        %v4825 = vlaneseq
        %v4826 = vshrl.u32 %v4825, 7
        %v4827 = vsub.s32 0, %v4826
        %v4828 = vrot.slane %v4076, %v4827
        %v4829 = vlaneseq
        %v4830 = vshrl.u32 %v4829, 7
        %v4831 = vsub.s32 2, %v4830
        %v4832 = vrot.slane %v4076, %v4831
        %v4833 = vlaneseq
        %v4834 = vshrl.u32 %v4833, 7
        %v4835 = vsub.s32 0, %v4834
        %v4836 = vrot.slane %v4077, %v4835
        %v4837 = vlaneseq
        %v4838 = vshrl.u32 %v4837, 7
        %v4839 = vsub.s32 2, %v4838
        %v4840 = vrot.slane %v4077, %v4839
        %v4841 = vlaneseq
        %v4842 = vshrl.u32 %v4841, 7
        %v4843 = vsub.s32 0, %v4842
        %v4844 = vrot.slane %v4078, %v4843
        %v4845 = vlaneseq
        %v4846 = vshrl.u32 %v4845, 7
        %v4847 = vsub.s32 2, %v4846
        %v4848 = vrot.slane %v4078, %v4847
        %v4849 = vlaneseq
        %v4850 = vshrl.u32 %v4849, 7
        %v4851 = vsub.s32 0, %v4850
        %v4852 = vrot.slane %v4079, %v4851
        %v4853 = vlaneseq
        %v4854 = vshrl.u32 %v4853, 7
        %v4855 = vsub.s32 2, %v4854
        %v4856 = vrot.slane %v4079, %v4855
        %v4857 = vlaneseq
        %v4858 = vshrl.u32 %v4857, 7
        %v4859 = vsub.s32 0, %v4858
        %v4860 = vrot.slane %v4080, %v4859
        %v4861 = vlaneseq
        %v4862 = vshrl.u32 %v4861, 7
        %v4863 = vsub.s32 2, %v4862
        %v4864 = vrot.slane %v4080, %v4863
        %v4865 = vlaneseq
        %v4866 = vshrl.u32 %v4865, 7
        %v4867 = vsub.s32 0, %v4866
        %v4868 = vrot.slane %v4081, %v4867
        %v4869 = vlaneseq
        %v4870 = vshrl.u32 %v4869, 7
        %v4871 = vsub.s32 2, %v4870
        %v4872 = vrot.slane %v4081, %v4871
        %v4873 = vlaneseq
        %v4874 = vshrl.u32 %v4873, 7
        %v4875 = vsub.s32 0, %v4874
        %v4876 = vrot.slane %v4082, %v4875
        %v4877 = vlaneseq
        %v4878 = vshrl.u32 %v4877, 7
        %v4879 = vsub.s32 2, %v4878
        %v4880 = vrot.slane %v4082, %v4879
        %v4881 = vlaneseq
        %v4882 = vshrl.u32 %v4881, 7
        %v4883 = vsub.s32 0, %v4882
        %v4884 = vrot.slane %v4083, %v4883
        %v4885 = vlaneseq
        %v4886 = vshrl.u32 %v4885, 7
        %v4887 = vsub.s32 2, %v4886
        %v4888 = vrot.slane %v4083, %v4887
        %v4889 = vlaneseq
        %v4890 = vshrl.u32 %v4889, 7
        %v4891 = vsub.s32 0, %v4890
        %v4892 = vrot.slane %v4084, %v4891
        %v4893 = vlaneseq
        %v4894 = vshrl.u32 %v4893, 7
        %v4895 = vsub.s32 2, %v4894
        %v4896 = vrot.slane %v4084, %v4895
        %v4897 = vlaneseq
        %v4898 = vshrl.u32 %v4897, 7
        %v4899 = vsub.s32 0, %v4898
        %v4900 = vrot.slane %v4085, %v4899
        %v4901 = vlaneseq
        %v4902 = vshrl.u32 %v4901, 7
        %v4903 = vsub.s32 2, %v4902
        %v4904 = vrot.slane %v4085, %v4903
        %v4905 = vlaneseq
        %v4906 = vshrl.u32 %v4905, 7
        %v4907 = vsub.s32 0, %v4906
        %v4908 = vrot.slane %v4086, %v4907
        %v4909 = vlaneseq
        %v4910 = vshrl.u32 %v4909, 7
        %v4911 = vsub.s32 2, %v4910
        %v4912 = vrot.slane %v4086, %v4911
        %v4913 = vlaneseq
        %v4914 = vshrl.u32 %v4913, 7
        %v4915 = vsub.s32 0, %v4914
        %v4916 = vrot.slane %v4087, %v4915
        %v4917 = vlaneseq
        %v4918 = vshrl.u32 %v4917, 7
        %v4919 = vsub.s32 2, %v4918
        %v4920 = vrot.slane %v4087, %v4919
        %v4921 = vlaneseq
        %v4922 = vshrl.u32 %v4921, 7
        %v4923 = vsub.s32 0, %v4922
        %v4924 = vrot.slane %v4088, %v4923
        %v4925 = vlaneseq
        %v4926 = vshrl.u32 %v4925, 7
        %v4927 = vsub.s32 2, %v4926
        %v4928 = vrot.slane %v4088, %v4927
        %v4929 = vlaneseq
        %v4930 = vshrl.u32 %v4929, 7
        %v4931 = vsub.s32 0, %v4930
        %v4932 = vrot.slane %v4089, %v4931
        %v4933 = vlaneseq
        %v4934 = vshrl.u32 %v4933, 7
        %v4935 = vsub.s32 2, %v4934
        %v4936 = vrot.slane %v4089, %v4935
        %v4937 = vlaneseq
        %v4938 = vshrl.u32 %v4937, 7
        %v4939 = vsub.s32 0, %v4938
        %v4940 = vrot.slane %v4090, %v4939
        %v4941 = vlaneseq
        %v4942 = vshrl.u32 %v4941, 7
        %v4943 = vsub.s32 2, %v4942
        %v4944 = vrot.slane %v4090, %v4943
        %v4945 = vlaneseq
        %v4946 = vshrl.u32 %v4945, 7
        %v4947 = vsub.s32 0, %v4946
        %v4948 = vrot.slane %v4091, %v4947
        %v4949 = vlaneseq
        %v4950 = vshrl.u32 %v4949, 7
        %v4951 = vsub.s32 2, %v4950
        %v4952 = vrot.slane %v4091, %v4951
        %v4953 = vlaneseq
        %v4954 = vshrl.u32 %v4953, 7
        %v4955 = vsub.s32 0, %v4954
        %v4956 = vrot.slane %v4092, %v4955
        %v4957 = vlaneseq
        %v4958 = vshrl.u32 %v4957, 7
        %v4959 = vsub.s32 2, %v4958
        %v4960 = vrot.slane %v4092, %v4959
        %v4961 = vlaneseq
        %v4962 = vshrl.u32 %v4961, 7
        %v4963 = vsub.s32 0, %v4962
        %v4964 = vrot.slane %v4093, %v4963
        %v4965 = vlaneseq
        %v4966 = vshrl.u32 %v4965, 7
        %v4967 = vsub.s32 2, %v4966
        %v4968 = vrot.slane %v4093, %v4967
        %v4969 = vlaneseq
        %v4970 = vshrl.u32 %v4969, 7
        %v4971 = vsub.s32 0, %v4970
        %v4972 = vrot.slane %v4094, %v4971
        %v4973 = vlaneseq
        %v4974 = vshrl.u32 %v4973, 7
        %v4975 = vsub.s32 2, %v4974
        %v4976 = vrot.slane %v4094, %v4975
        %v4977 = vlaneseq
        %v4978 = vshrl.u32 %v4977, 7
        %v4979 = vsub.s32 0, %v4978
        %v4980 = vrot.slane %v4095, %v4979
        %v4981 = vlaneseq
        %v4982 = vshrl.u32 %v4981, 7
        %v4983 = vsub.s32 2, %v4982
        %v4984 = vrot.slane %v4095, %v4983
        %v4985 = vlaneseq
        %v4986 = vshrl.u32 %v4985, 7
        %v4987 = vsub.s32 0, %v4986
        %v4988 = vrot.slane %v4096, %v4987
        %v4989 = vlaneseq
        %v4990 = vshrl.u32 %v4989, 7
        %v4991 = vsub.s32 2, %v4990
        %v4992 = vrot.slane %v4096, %v4991
        %v4993 = vlaneseq
        %v4994 = vshrl.u32 %v4993, 7
        %v4995 = vsub.s32 0, %v4994
        %v4996 = vrot.slane %v4097, %v4995
        %v4997 = vlaneseq
        %v4998 = vshrl.u32 %v4997, 7
        %v4999 = vsub.s32 2, %v4998
        %v5000 = vrot.slane %v4097, %v4999
        %v5001 = vlaneseq
        %v5002 = vshrl.u32 %v5001, 7
        %v5003 = vsub.s32 0, %v5002
        %v5004 = vrot.slane %v4098, %v5003
        %v5005 = vlaneseq
        %v5006 = vshrl.u32 %v5005, 7
        %v5007 = vsub.s32 2, %v5006
        %v5008 = vrot.slane %v4098, %v5007
        %v5009 = vlaneseq
        %v5010 = vshrl.u32 %v5009, 7
        %v5011 = vsub.s32 0, %v5010
        %v5012 = vrot.slane %v4099, %v5011
        %v5013 = vlaneseq
        %v5014 = vshrl.u32 %v5013, 7
        %v5015 = vsub.s32 2, %v5014
        %v5016 = vrot.slane %v4099, %v5015
        %v5017 = vlaneseq
        %v5018 = vshrl.u32 %v5017, 7
        %v5019 = vsub.s32 0, %v5018
        %v5020 = vrot.slane %v4100, %v5019
        %v5021 = vlaneseq
        %v5022 = vshrl.u32 %v5021, 7
        %v5023 = vsub.s32 2, %v5022
        %v5024 = vrot.slane %v4100, %v5023
        %v5025 = vlaneseq
        %v5026 = vshrl.u32 %v5025, 7
        %v5027 = vsub.s32 0, %v5026
        %v5028 = vrot.slane %v4101, %v5027
        %v5029 = vlaneseq
        %v5030 = vshrl.u32 %v5029, 7
        %v5031 = vsub.s32 2, %v5030
        %v5032 = vrot.slane %v4101, %v5031
        %v5033 = vlaneseq
        %v5034 = vshrl.u32 %v5033, 7
        %v5035 = vsub.s32 0, %v5034
        %v5036 = vrot.slane %v4102, %v5035
        %v5037 = vlaneseq
        %v5038 = vshrl.u32 %v5037, 7
        %v5039 = vsub.s32 2, %v5038
        %v5040 = vrot.slane %v4102, %v5039
        %v5041 = vlaneseq
        %v5042 = vshrl.u32 %v5041, 7
        %v5043 = vsub.s32 0, %v5042
        %v5044 = vrot.slane %v4103, %v5043
        %v5045 = vlaneseq
        %v5046 = vshrl.u32 %v5045, 7
        %v5047 = vsub.s32 2, %v5046
        %v5048 = vrot.slane %v4103, %v5047
        %v5049 = vlaneseq
        %v5050 = vshrl.u32 %v5049, 7
        %v5051 = vsub.s32 0, %v5050
        %v5052 = vrot.slane %v4104, %v5051
        %v5053 = vlaneseq
        %v5054 = vshrl.u32 %v5053, 7
        %v5055 = vsub.s32 2, %v5054
        %v5056 = vrot.slane %v4104, %v5055
        %v5057 = vlaneseq
        %v5058 = vshrl.u32 %v5057, 7
        %v5059 = vsub.s32 0, %v5058
        %v5060 = vrot.slane %v4105, %v5059
        %v5061 = vlaneseq
        %v5062 = vshrl.u32 %v5061, 7
        %v5063 = vsub.s32 2, %v5062
        %v5064 = vrot.slane %v4105, %v5063
        %v5065 = vlaneseq
        %v5066 = vshrl.u32 %v5065, 7
        %v5067 = vsub.s32 0, %v5066
        %v5068 = vrot.slane %v4106, %v5067
        %v5069 = vlaneseq
        %v5070 = vshrl.u32 %v5069, 7
        %v5071 = vsub.s32 2, %v5070
        %v5072 = vrot.slane %v4106, %v5071
        %v5073 = vlaneseq
        %v5074 = vshrl.u32 %v5073, 7
        %v5075 = vsub.s32 0, %v5074
        %v5076 = vrot.slane %v4107, %v5075
        %v5077 = vlaneseq
        %v5078 = vshrl.u32 %v5077, 7
        %v5079 = vsub.s32 2, %v5078
        %v5080 = vrot.slane %v4107, %v5079
        %v5081 = vlaneseq
        %v5082 = vshrl.u32 %v5081, 7
        %v5083 = vsub.s32 0, %v5082
        %v5084 = vrot.slane %v4108, %v5083
        %v5085 = vlaneseq
        %v5086 = vshrl.u32 %v5085, 7
        %v5087 = vsub.s32 2, %v5086
        %v5088 = vrot.slane %v4108, %v5087
        %v5089 = vlaneseq
        %v5090 = vshrl.u32 %v5089, 7
        %v5091 = vsub.s32 0, %v5090
        %v5092 = vrot.slane %v4109, %v5091
        %v5093 = vlaneseq
        %v5094 = vshrl.u32 %v5093, 7
        %v5095 = vsub.s32 2, %v5094
        %v5096 = vrot.slane %v4109, %v5095
        %v5097 = vlaneseq
        %v5098 = vshrl.u32 %v5097, 7
        %v5099 = vsub.s32 0, %v5098
        %v5100 = vrot.slane %v4110, %v5099
        %v5101 = vlaneseq
        %v5102 = vshrl.u32 %v5101, 7
        %v5103 = vsub.s32 2, %v5102
        %v5104 = vrot.slane %v4110, %v5103
        %v5105 = vlaneseq
        %v5106 = vshrl.u32 %v5105, 7
        %v5107 = vsub.s32 0, %v5106
        %v5108 = vrot.slane %v4111, %v5107
        %v5109 = vlaneseq
        %v5110 = vshrl.u32 %v5109, 7
        %v5111 = vsub.s32 2, %v5110
        %v5112 = vrot.slane %v4111, %v5111
        %v5113 = vlaneseq
        %v5114 = vshrl.u32 %v5113, 7
        %v5115 = vsub.s32 0, %v5114
        %v5116 = vrot.slane %v4112, %v5115
        %v5117 = vlaneseq
        %v5118 = vshrl.u32 %v5117, 7
        %v5119 = vsub.s32 2, %v5118
        %v5120 = vrot.slane %v4112, %v5119
        %v5121 = vlaneseq
        %v5122 = vshrl.u32 %v5121, 7
        %v5123 = vsub.s32 0, %v5122
        %v5124 = vrot.slane %v4113, %v5123
        %v5125 = vlaneseq
        %v5126 = vshrl.u32 %v5125, 7
        %v5127 = vsub.s32 2, %v5126
        %v5128 = vrot.slane %v4113, %v5127
        %v5129 = vlaneseq
        %v5130 = vshrl.u32 %v5129, 7
        %v5131 = vsub.s32 0, %v5130
        %v5132 = vrot.slane %v4114, %v5131
        %v5133 = vlaneseq
        %v5134 = vshrl.u32 %v5133, 7
        %v5135 = vsub.s32 2, %v5134
        %v5136 = vrot.slane %v4114, %v5135
        %v5137 = vlaneseq
        %v5138 = vshrl.u32 %v5137, 7
        %v5139 = vsub.s32 0, %v5138
        %v5140 = vrot.slane %v4115, %v5139
        %v5141 = vlaneseq
        %v5142 = vshrl.u32 %v5141, 7
        %v5143 = vsub.s32 2, %v5142
        %v5144 = vrot.slane %v4115, %v5143
        %vm5145 = vcmask 1041409
        %v5146 = vsel %vm5145, %v4260, %v4252
        %vm5147 = vcmask 1042434
        %v5148 = vsel %vm5147, %v4268, %v5146
        %vm5149 = vcmask 1043459
        %v5150 = vsel %vm5149, %v4276, %v5148
        %v5151 = vsel %vm1930, %v4284, %v5150
        %vm5152 = vcmask 1045509
        %v5153 = vsel %vm5152, %v4292, %v5151
        %vm5154 = vcmask 1046534
        %v5155 = vsel %vm5154, %v4300, %v5153
        %vm5156 = vcmask 1047559
        %v5157 = vsel %vm5156, %v4308, %v5155
        %v5158 = vsel %vm5145, %v4264, %v4256
        %v5159 = vsel %vm5147, %v4272, %v5158
        %v5160 = vsel %vm5149, %v4280, %v5159
        %v5161 = vsel %vm1930, %v4288, %v5160
        %v5162 = vsel %vm5152, %v4296, %v5161
        %v5163 = vsel %vm5154, %v4304, %v5162
        %v5164 = vsel %vm5156, %v4312, %v5163
        %v5165 = vsel %vm5145, %v4324, %v4316
        %v5166 = vsel %vm5147, %v4332, %v5165
        %v5167 = vsel %vm5149, %v4340, %v5166
        %v5168 = vsel %vm1930, %v4348, %v5167
        %v5169 = vsel %vm5152, %v4356, %v5168
        %v5170 = vsel %vm5154, %v4364, %v5169
        %v5171 = vsel %vm5156, %v4372, %v5170
        %v5172 = vsel %vm5145, %v4328, %v4320
        %v5173 = vsel %vm5147, %v4336, %v5172
        %v5174 = vsel %vm5149, %v4344, %v5173
        %v5175 = vsel %vm1930, %v4352, %v5174
        %v5176 = vsel %vm5152, %v4360, %v5175
        %v5177 = vsel %vm5154, %v4368, %v5176
        %v5178 = vsel %vm5156, %v4376, %v5177
        %v5179 = vsel %vm5145, %v4388, %v4380
        %v5180 = vsel %vm5147, %v4396, %v5179
        %v5181 = vsel %vm5149, %v4404, %v5180
        %v5182 = vsel %vm1930, %v4412, %v5181
        %v5183 = vsel %vm5152, %v4420, %v5182
        %v5184 = vsel %vm5154, %v4428, %v5183
        %v5185 = vsel %vm5156, %v4436, %v5184
        %v5186 = vsel %vm5145, %v4392, %v4384
        %v5187 = vsel %vm5147, %v4400, %v5186
        %v5188 = vsel %vm5149, %v4408, %v5187
        %v5189 = vsel %vm1930, %v4416, %v5188
        %v5190 = vsel %vm5152, %v4424, %v5189
        %v5191 = vsel %vm5154, %v4432, %v5190
        %v5192 = vsel %vm5156, %v4440, %v5191
        %v5193 = vsel %vm5145, %v4452, %v4444
        %v5194 = vsel %vm5147, %v4460, %v5193
        %v5195 = vsel %vm5149, %v4468, %v5194
        %v5196 = vsel %vm1930, %v4476, %v5195
        %v5197 = vsel %vm5152, %v4484, %v5196
        %v5198 = vsel %vm5154, %v4492, %v5197
        %v5199 = vsel %vm5156, %v4500, %v5198
        %v5200 = vsel %vm5145, %v4456, %v4448
        %v5201 = vsel %vm5147, %v4464, %v5200
        %v5202 = vsel %vm5149, %v4472, %v5201
        %v5203 = vsel %vm1930, %v4480, %v5202
        %v5204 = vsel %vm5152, %v4488, %v5203
        %v5205 = vsel %vm5154, %v4496, %v5204
        %v5206 = vsel %vm5156, %v4504, %v5205
        %v5207 = vsel %vm5145, %v4516, %v4508
        %v5208 = vsel %vm5147, %v4524, %v5207
        %v5209 = vsel %vm5149, %v4532, %v5208
        %v5210 = vsel %vm1930, %v4540, %v5209
        %v5211 = vsel %vm5152, %v4548, %v5210
        %v5212 = vsel %vm5154, %v4556, %v5211
        %v5213 = vsel %vm5156, %v4564, %v5212
        %v5214 = vsel %vm5145, %v4520, %v4512
        %v5215 = vsel %vm5147, %v4528, %v5214
        %v5216 = vsel %vm5149, %v4536, %v5215
        %v5217 = vsel %vm1930, %v4544, %v5216
        %v5218 = vsel %vm5152, %v4552, %v5217
        %v5219 = vsel %vm5154, %v4560, %v5218
        %v5220 = vsel %vm5156, %v4568, %v5219
        %v5221 = vsel %vm5145, %v4580, %v4572
        %v5222 = vsel %vm5147, %v4588, %v5221
        %v5223 = vsel %vm5149, %v4596, %v5222
        %v5224 = vsel %vm1930, %v4604, %v5223
        %v5225 = vsel %vm5152, %v4612, %v5224
        %v5226 = vsel %vm5154, %v4620, %v5225
        %v5227 = vsel %vm5156, %v4628, %v5226
        %v5228 = vsel %vm5145, %v4584, %v4576
        %v5229 = vsel %vm5147, %v4592, %v5228
        %v5230 = vsel %vm5149, %v4600, %v5229
        %v5231 = vsel %vm1930, %v4608, %v5230
        %v5232 = vsel %vm5152, %v4616, %v5231
        %v5233 = vsel %vm5154, %v4624, %v5232
        %v5234 = vsel %vm5156, %v4632, %v5233
        %v5235 = vsel %vm5145, %v4644, %v4636
        %v5236 = vsel %vm5147, %v4652, %v5235
        %v5237 = vsel %vm5149, %v4660, %v5236
        %v5238 = vsel %vm1930, %v4668, %v5237
        %v5239 = vsel %vm5152, %v4676, %v5238
        %v5240 = vsel %vm5154, %v4684, %v5239
        %v5241 = vsel %vm5156, %v4692, %v5240
        %v5242 = vsel %vm5145, %v4648, %v4640
        %v5243 = vsel %vm5147, %v4656, %v5242
        %v5244 = vsel %vm5149, %v4664, %v5243
        %v5245 = vsel %vm1930, %v4672, %v5244
        %v5246 = vsel %vm5152, %v4680, %v5245
        %v5247 = vsel %vm5154, %v4688, %v5246
        %v5248 = vsel %vm5156, %v4696, %v5247
        %v5249 = vsel %vm5145, %v4708, %v4700
        %v5250 = vsel %vm5147, %v4716, %v5249
        %v5251 = vsel %vm5149, %v4724, %v5250
        %v5252 = vsel %vm1930, %v4732, %v5251
        %v5253 = vsel %vm5152, %v4740, %v5252
        %v5254 = vsel %vm5154, %v4748, %v5253
        %v5255 = vsel %vm5156, %v4756, %v5254
        %v5256 = vsel %vm5145, %v4712, %v4704
        %v5257 = vsel %vm5147, %v4720, %v5256
        %v5258 = vsel %vm5149, %v4728, %v5257
        %v5259 = vsel %vm1930, %v4736, %v5258
        %v5260 = vsel %vm5152, %v4744, %v5259
        %v5261 = vsel %vm5154, %v4752, %v5260
        %v5262 = vsel %vm5156, %v4760, %v5261
        %v5263 = vsel %vm5145, %v4772, %v4764
        %v5264 = vsel %vm5147, %v4780, %v5263
        %v5265 = vsel %vm5149, %v4788, %v5264
        %v5266 = vsel %vm1930, %v4796, %v5265
        %v5267 = vsel %vm5152, %v4804, %v5266
        %v5268 = vsel %vm5154, %v4812, %v5267
        %v5269 = vsel %vm5156, %v4820, %v5268
        %v5270 = vsel %vm5145, %v4776, %v4768
        %v5271 = vsel %vm5147, %v4784, %v5270
        %v5272 = vsel %vm5149, %v4792, %v5271
        %v5273 = vsel %vm1930, %v4800, %v5272
        %v5274 = vsel %vm5152, %v4808, %v5273
        %v5275 = vsel %vm5154, %v4816, %v5274
        %v5276 = vsel %vm5156, %v4824, %v5275
        %v5277 = vsel %vm5145, %v4836, %v4828
        %v5278 = vsel %vm5147, %v4844, %v5277
        %v5279 = vsel %vm5149, %v4852, %v5278
        %v5280 = vsel %vm1930, %v4860, %v5279
        %v5281 = vsel %vm5152, %v4868, %v5280
        %v5282 = vsel %vm5154, %v4876, %v5281
        %v5283 = vsel %vm5156, %v4884, %v5282
        %v5284 = vsel %vm5145, %v4840, %v4832
        %v5285 = vsel %vm5147, %v4848, %v5284
        %v5286 = vsel %vm5149, %v4856, %v5285
        %v5287 = vsel %vm1930, %v4864, %v5286
        %v5288 = vsel %vm5152, %v4872, %v5287
        %v5289 = vsel %vm5154, %v4880, %v5288
        %v5290 = vsel %vm5156, %v4888, %v5289
        %v5291 = vsel %vm5145, %v4900, %v4892
        %v5292 = vsel %vm5147, %v4908, %v5291
        %v5293 = vsel %vm5149, %v4916, %v5292
        %v5294 = vsel %vm1930, %v4924, %v5293
        %v5295 = vsel %vm5152, %v4932, %v5294
        %v5296 = vsel %vm5154, %v4940, %v5295
        %v5297 = vsel %vm5156, %v4948, %v5296
        %v5298 = vsel %vm5145, %v4904, %v4896
        %v5299 = vsel %vm5147, %v4912, %v5298
        %v5300 = vsel %vm5149, %v4920, %v5299
        %v5301 = vsel %vm1930, %v4928, %v5300
        %v5302 = vsel %vm5152, %v4936, %v5301
        %v5303 = vsel %vm5154, %v4944, %v5302
        %v5304 = vsel %vm5156, %v4952, %v5303
        %v5305 = vsel %vm5145, %v4964, %v4956
        %v5306 = vsel %vm5147, %v4972, %v5305
        %v5307 = vsel %vm5149, %v4980, %v5306
        %v5308 = vsel %vm1930, %v4988, %v5307
        %v5309 = vsel %vm5152, %v4996, %v5308
        %v5310 = vsel %vm5154, %v5004, %v5309
        %v5311 = vsel %vm5156, %v5012, %v5310
        %v5312 = vsel %vm5145, %v4968, %v4960
        %v5313 = vsel %vm5147, %v4976, %v5312
        %v5314 = vsel %vm5149, %v4984, %v5313
        %v5315 = vsel %vm1930, %v4992, %v5314
        %v5316 = vsel %vm5152, %v5000, %v5315
        %v5317 = vsel %vm5154, %v5008, %v5316
        %v5318 = vsel %vm5156, %v5016, %v5317
        %v5319 = vsel %vm5145, %v5028, %v5020
        %v5320 = vsel %vm5147, %v5036, %v5319
        %v5321 = vsel %vm5149, %v5044, %v5320
        %v5322 = vsel %vm1930, %v5052, %v5321
        %v5323 = vsel %vm5152, %v5060, %v5322
        %v5324 = vsel %vm5154, %v5068, %v5323
        %v5325 = vsel %vm5156, %v5076, %v5324
        %v5326 = vsel %vm5145, %v5032, %v5024
        %v5327 = vsel %vm5147, %v5040, %v5326
        %v5328 = vsel %vm5149, %v5048, %v5327
        %v5329 = vsel %vm1930, %v5056, %v5328
        %v5330 = vsel %vm5152, %v5064, %v5329
        %v5331 = vsel %vm5154, %v5072, %v5330
        %v5332 = vsel %vm5156, %v5080, %v5331
        %v5333 = vsel %vm5145, %v5092, %v5084
        %v5334 = vsel %vm5147, %v5100, %v5333
        %v5335 = vsel %vm5149, %v5108, %v5334
        %v5336 = vsel %vm1930, %v5116, %v5335
        %v5337 = vsel %vm5152, %v5124, %v5336
        %v5338 = vsel %vm5154, %v5132, %v5337
        %v5339 = vsel %vm5156, %v5140, %v5338
        %v5340 = vsel %vm5145, %v5096, %v5088
        %v5341 = vsel %vm5147, %v5104, %v5340
        %v5342 = vsel %vm5149, %v5112, %v5341
        %v5343 = vsel %vm1930, %v5120, %v5342
        %v5344 = vsel %vm5152, %v5128, %v5343
        %v5345 = vsel %vm5154, %v5136, %v5344
        %v5346 = vsel %vm5156, %v5144, %v5345
        %vm5361 = vcmask 326656
        %v5362 = vsel %vm5361, %v5164, 0
        %v5364 = vsel %vm5361, %v5178, 0
        %v5366 = vsel %vm5361, %v5192, 0
        %v5368 = vsel %vm5361, %v5206, 0
        %v5370 = vsel %vm5361, %v5220, 0
        %v5372 = vsel %vm5361, %v5234, 0
        %v5374 = vsel %vm5361, %v5248, 0
        %v5376 = vsel %vm5361, %v5262, 0
        %v5378 = vsel %vm5361, %v5276, 0
        %v5380 = vsel %vm5361, %v5290, 0
        %v5382 = vsel %vm5361, %v5304, 0
        %v5384 = vsel %vm5361, %v5318, 0
        %v5386 = vsel %vm5361, %v5332, 0
        %v5388 = vsel %vm5361, %v5346, 0
        %5390 = vmatprep.subr.mxu0 0.0
        %5391 = vmatpush1.msra.mxu0 %v4131
        %5392 = vmatprep.subr.mxu0 0.0
        %5393 = vmatpush1.msra.mxu0 %v4130
        %5394 = vmatprep.subr.mxu0 0.0
        %5395 = vmatpush1.msra.mxu0 %v4129
        %5396 = vmatprep.subr.mxu0 0.0
        %5397 = vmatpush1.msra.mxu0 %v4128
        %5398 = vmatprep.subr.mxu0 0.0
        %5399 = vmatpush1.msra.mxu0 %v4127
        %5400 = vmatprep.subr.mxu0 0.0
        %5401 = vmatpush1.msra.mxu0 %v4126
        %5402 = vmatprep.subr.mxu0 0.0
        %5403 = vmatpush1.msra.mxu0 %v4125
        %5404 = vmatprep.subr.mxu0 0.0
        %5405 = vmatpush1.msra.mxu0 %v4124
        %5406 = vmatprep.subr.mxu0 0.0
        %5407 = vmatpush1.msra.mxu0 %v4123
        %5408 = vmatprep.subr.mxu0 0.0
        %5409 = vmatpush1.msra.mxu0 %v4122
        %5410 = vmatprep.subr.mxu0 0.0
        %5411 = vmatpush1.msra.mxu0 %v4121
        %5412 = vmatprep.subr.mxu0 0.0
        %5413 = vmatpush1.msra.mxu0 %v4120
        %5414 = vmatprep.subr.mxu0 0.0
        %5415 = vmatpush1.msra.mxu0 %v4119
        %5416 = vmatprep.subr.mxu0 0.0
        %5417 = vmatpush1.msra.mxu0 %v4118
        %5418 = vmatprep.subr.mxu0 0.0
        %5419 = vmatpush1.msra.mxu0 %v4117
        %5420 = vmatprep.subr.mxu0 0.0
        %5421 = vmatpush1.msra.mxu0 %v4116
        %5422 = vmatprep.subr.mxu0 0.0
        %5423 = vmatpush2.msra.mxu0 0.0
        %5424 = vmatprep.subr.mxu0 0.0
        %5425 = vmatpush2.msra.mxu0 0.0
        %5426 = vmatprep.subr.mxu0 0.0
        %5427 = vmatpush2.msra.mxu0 0.0
        %5428 = vmatprep.subr.mxu0 0.0
        %5429 = vmatpush2.msra.mxu0 0.0
        %5430 = vmatprep.subr.mxu0 0.0
        %5431 = vmatpush2.msra.mxu0 0.0
        %5432 = vmatprep.subr.mxu0 0.0
        %5433 = vmatpush2.msra.mxu0 0.0
        %5434 = vmatprep.subr.mxu0 0.0
        %5435 = vmatpush2.msra.mxu0 0.0
        %5436 = vmatprep.subr.mxu0 0.0
        %5437 = vmatpush2.msra.mxu0 0.0
        %5438 = vmatprep.subr.mxu0 0.0
        %5439 = vmatpush2.msra.mxu0 0.0
        %5440 = vmatprep.subr.mxu0 0.0
        %5441 = vmatpush2.msra.mxu0 0.0
        %5442 = vmatprep.subr.mxu0 0.0
        %5443 = vmatpush2.msra.mxu0 0.0
        %5444 = vmatprep.subr.mxu0 0.0
        %5445 = vmatpush2.msra.mxu0 %v4136
        %5446 = vmatprep.subr.mxu0 0.0
        %5447 = vmatpush2.msra.mxu0 %v4135
        %5448 = vmatprep.subr.mxu0 0.0
        %5449 = vmatpush2.msra.mxu0 %v4134
        %5450 = vmatprep.subr.mxu0 0.0
        %5451 = vmatpush2.msra.mxu0 %v4133
        %5452 = vmatprep.subr.mxu0 0.0
        %5453 = vmatpush2.msra.mxu0 %v4132
        %5454 = vmatprep.mubr.f32.mxu0 %v5362
        %5455 = vmatmul.mubr.f32.gmra.mxu0 %v5157
        %v5456 = vpop.f32.mrf.mxu0
        %v5457 = vadd.f32 0.0, %v5456
        %v5458 = vpop.f32.mrf.mxu0
        %5459 = vmatprep.mubr.f32.mxu0 %v5364
        %5460 = vmatmul.mubr.f32.gmra.mxu0 %v5171
        %v5461 = vpop.f32.mrf.mxu0
        %v5462 = vadd.f32 0.0, %v5461
        %v5463 = vpop.f32.mrf.mxu0
        %5464 = vmatprep.mubr.f32.mxu0 %v5366
        %5465 = vmatmul.mubr.f32.gmra.mxu0 %v5185
        %v5466 = vpop.f32.mrf.mxu0
        %v5467 = vadd.f32 0.0, %v5466
        %v5468 = vpop.f32.mrf.mxu0
        %5469 = vmatprep.mubr.f32.mxu0 %v5368
        %5470 = vmatmul.mubr.f32.gmra.mxu0 %v5199
        %v5471 = vpop.f32.mrf.mxu0
        %v5472 = vadd.f32 0.0, %v5471
        %v5473 = vpop.f32.mrf.mxu0
        %5474 = vmatprep.mubr.f32.mxu0 %v5370
        %5475 = vmatmul.mubr.f32.gmra.mxu0 %v5213
        %v5476 = vpop.f32.mrf.mxu0
        %v5477 = vadd.f32 0.0, %v5476
        %v5478 = vpop.f32.mrf.mxu0
        %5479 = vmatprep.mubr.f32.mxu0 %v5372
        %5480 = vmatmul.mubr.f32.gmra.mxu0 %v5227
        %v5481 = vpop.f32.mrf.mxu0
        %v5482 = vadd.f32 0.0, %v5481
        %v5483 = vpop.f32.mrf.mxu0
        %5484 = vmatprep.mubr.f32.mxu0 %v5374
        %5485 = vmatmul.mubr.f32.gmra.mxu0 %v5241
        %v5486 = vpop.f32.mrf.mxu0
        %v5487 = vadd.f32 0.0, %v5486
        %v5488 = vpop.f32.mrf.mxu0
        %5489 = vmatprep.mubr.f32.mxu0 %v5376
        %5490 = vmatmul.mubr.f32.gmra.mxu0 %v5255
        %v5491 = vpop.f32.mrf.mxu0
        %v5492 = vadd.f32 0.0, %v5491
        %v5493 = vpop.f32.mrf.mxu0
        %5494 = vmatprep.mubr.f32.mxu0 %v5378
        %5495 = vmatmul.mubr.f32.gmra.mxu0 %v5269
        %v5496 = vpop.f32.mrf.mxu0
        %v5497 = vadd.f32 0.0, %v5496
        %v5498 = vpop.f32.mrf.mxu0
        %5499 = vmatprep.mubr.f32.mxu0 %v5380
        %5500 = vmatmul.mubr.f32.gmra.mxu0 %v5283
        %v5501 = vpop.f32.mrf.mxu0
        %v5502 = vadd.f32 0.0, %v5501
        %v5503 = vpop.f32.mrf.mxu0
        %5504 = vmatprep.mubr.f32.mxu0 %v5382
        %5505 = vmatmul.mubr.f32.gmra.mxu0 %v5297
        %v5506 = vpop.f32.mrf.mxu0
        %v5507 = vadd.f32 0.0, %v5506
        %v5508 = vpop.f32.mrf.mxu0
        %5509 = vmatprep.mubr.f32.mxu0 %v5384
        %5510 = vmatmul.mubr.f32.gmra.mxu0 %v5311
        %v5511 = vpop.f32.mrf.mxu0
        %v5512 = vadd.f32 0.0, %v5511
        %v5513 = vpop.f32.mrf.mxu0
        %5514 = vmatprep.mubr.f32.mxu0 %v5386
        %5515 = vmatmul.mubr.f32.gmra.mxu0 %v5325
        %v5516 = vpop.f32.mrf.mxu0
        %v5517 = vadd.f32 0.0, %v5516
        %v5518 = vpop.f32.mrf.mxu0
        %5519 = vmatprep.mubr.f32.mxu0 %v5388
        %5520 = vmatmul.mubr.f32.gmra.mxu0 %v5339
        %v5521 = vpop.f32.mrf.mxu0
        %v5522 = vadd.f32 0.0, %v5521
        %v5523 = vpop.f32.mrf.mxu0
        %5524 = vdwg.mxu0
        %v5539 = vcombine.high %v5457, %v5457
        %v5541 = vunpack.c.l.s4 1983009808
        %v5542 = vunpack.c.0.s8 %v5541
        %v5543 = vlaneseq
        %v5544 = vshrl.u32 %v5543, 7
        %v5545 = vsub.s32 %v5542, %v5544
        %v5546 = vrot.slane %v5457, %v5545
        %v5548 = vunpack.c.l.s4 1983009808
        %v5549 = vunpack.c.0.s8 %v5548
        %v5550 = vlaneseq
        %v5551 = vshrl.u32 %v5550, 7
        %v5552 = vsub.s32 %v5549, %v5551
        %v5553 = vrot.slane %v5539, %v5552
        %v5554 = vcombine.high %v5546, %v5546
        %v5555 = vcombine.high %v5553, %v5553
        %v5556 = vcombine.high %v5462, %v5462
        %v5558 = vunpack.c.l.s4 1983009808
        %v5559 = vunpack.c.0.s8 %v5558
        %v5560 = vlaneseq
        %v5561 = vshrl.u32 %v5560, 7
        %v5562 = vsub.s32 %v5559, %v5561
        %v5563 = vrot.slane %v5462, %v5562
        %v5565 = vunpack.c.l.s4 1983009808
        %v5566 = vunpack.c.0.s8 %v5565
        %v5567 = vlaneseq
        %v5568 = vshrl.u32 %v5567, 7
        %v5569 = vsub.s32 %v5566, %v5568
        %v5570 = vrot.slane %v5556, %v5569
        %v5571 = vcombine.high %v5563, %v5563
        %v5572 = vcombine.high %v5570, %v5570
        %v5573 = vcombine.high %v5467, %v5467
        %v5575 = vunpack.c.l.s4 1983009808
        %v5576 = vunpack.c.0.s8 %v5575
        %v5577 = vlaneseq
        %v5578 = vshrl.u32 %v5577, 7
        %v5579 = vsub.s32 %v5576, %v5578
        %v5580 = vrot.slane %v5467, %v5579
        %v5582 = vunpack.c.l.s4 1983009808
        %v5583 = vunpack.c.0.s8 %v5582
        %v5584 = vlaneseq
        %v5585 = vshrl.u32 %v5584, 7
        %v5586 = vsub.s32 %v5583, %v5585
        %v5587 = vrot.slane %v5573, %v5586
        %v5588 = vcombine.high %v5580, %v5580
        %v5589 = vcombine.high %v5587, %v5587
        %v5590 = vcombine.high %v5472, %v5472
        %v5592 = vunpack.c.l.s4 1983009808
        %v5593 = vunpack.c.0.s8 %v5592
        %v5594 = vlaneseq
        %v5595 = vshrl.u32 %v5594, 7
        %v5596 = vsub.s32 %v5593, %v5595
        %v5597 = vrot.slane %v5472, %v5596
        %v5599 = vunpack.c.l.s4 1983009808
        %v5600 = vunpack.c.0.s8 %v5599
        %v5601 = vlaneseq
        %v5602 = vshrl.u32 %v5601, 7
        %v5603 = vsub.s32 %v5600, %v5602
        %v5604 = vrot.slane %v5590, %v5603
        %v5605 = vcombine.high %v5597, %v5597
        %v5606 = vcombine.high %v5604, %v5604
        %v5607 = vcombine.high %v5477, %v5477
        %v5609 = vunpack.c.l.s4 1983009808
        %v5610 = vunpack.c.0.s8 %v5609
        %v5611 = vlaneseq
        %v5612 = vshrl.u32 %v5611, 7
        %v5613 = vsub.s32 %v5610, %v5612
        %v5614 = vrot.slane %v5477, %v5613
        %v5616 = vunpack.c.l.s4 1983009808
        %v5617 = vunpack.c.0.s8 %v5616
        %v5618 = vlaneseq
        %v5619 = vshrl.u32 %v5618, 7
        %v5620 = vsub.s32 %v5617, %v5619
        %v5621 = vrot.slane %v5607, %v5620
        %v5622 = vcombine.high %v5614, %v5614
        %v5623 = vcombine.high %v5621, %v5621
        %v5624 = vcombine.high %v5482, %v5482
        %v5626 = vunpack.c.l.s4 1983009808
        %v5627 = vunpack.c.0.s8 %v5626
        %v5628 = vlaneseq
        %v5629 = vshrl.u32 %v5628, 7
        %v5630 = vsub.s32 %v5627, %v5629
        %v5631 = vrot.slane %v5482, %v5630
        %v5633 = vunpack.c.l.s4 1983009808
        %v5634 = vunpack.c.0.s8 %v5633
        %v5635 = vlaneseq
        %v5636 = vshrl.u32 %v5635, 7
        %v5637 = vsub.s32 %v5634, %v5636
        %v5638 = vrot.slane %v5624, %v5637
        %v5639 = vcombine.high %v5631, %v5631
        %v5640 = vcombine.high %v5638, %v5638
        %v5641 = vcombine.high %v5487, %v5487
        %v5643 = vunpack.c.l.s4 1983009808
        %v5644 = vunpack.c.0.s8 %v5643
        %v5645 = vlaneseq
        %v5646 = vshrl.u32 %v5645, 7
        %v5647 = vsub.s32 %v5644, %v5646
        %v5648 = vrot.slane %v5487, %v5647
        %v5650 = vunpack.c.l.s4 1983009808
        %v5651 = vunpack.c.0.s8 %v5650
        %v5652 = vlaneseq
        %v5653 = vshrl.u32 %v5652, 7
        %v5654 = vsub.s32 %v5651, %v5653
        %v5655 = vrot.slane %v5641, %v5654
        %v5656 = vcombine.high %v5648, %v5648
        %v5657 = vcombine.high %v5655, %v5655
        %v5658 = vcombine.high %v5492, %v5492
        %v5660 = vunpack.c.l.s4 1983009808
        %v5661 = vunpack.c.0.s8 %v5660
        %v5662 = vlaneseq
        %v5663 = vshrl.u32 %v5662, 7
        %v5664 = vsub.s32 %v5661, %v5663
        %v5665 = vrot.slane %v5492, %v5664
        %v5667 = vunpack.c.l.s4 1983009808
        %v5668 = vunpack.c.0.s8 %v5667
        %v5669 = vlaneseq
        %v5670 = vshrl.u32 %v5669, 7
        %v5671 = vsub.s32 %v5668, %v5670
        %v5672 = vrot.slane %v5658, %v5671
        %v5673 = vcombine.high %v5665, %v5665
        %v5674 = vcombine.high %v5672, %v5672
        %v5675 = vcombine.high %v5497, %v5497
        %v5677 = vunpack.c.l.s4 1983009808
        %v5678 = vunpack.c.0.s8 %v5677
        %v5679 = vlaneseq
        %v5680 = vshrl.u32 %v5679, 7
        %v5681 = vsub.s32 %v5678, %v5680
        %v5682 = vrot.slane %v5497, %v5681
        %v5684 = vunpack.c.l.s4 1983009808
        %v5685 = vunpack.c.0.s8 %v5684
        %v5686 = vlaneseq
        %v5687 = vshrl.u32 %v5686, 7
        %v5688 = vsub.s32 %v5685, %v5687
        %v5689 = vrot.slane %v5675, %v5688
        %v5690 = vcombine.high %v5682, %v5682
        %v5691 = vcombine.high %v5689, %v5689
        %v5692 = vcombine.high %v5502, %v5502
        %v5694 = vunpack.c.l.s4 1983009808
        %v5695 = vunpack.c.0.s8 %v5694
        %v5696 = vlaneseq
        %v5697 = vshrl.u32 %v5696, 7
        %v5698 = vsub.s32 %v5695, %v5697
        %v5699 = vrot.slane %v5502, %v5698
        %v5701 = vunpack.c.l.s4 1983009808
        %v5702 = vunpack.c.0.s8 %v5701
        %v5703 = vlaneseq
        %v5704 = vshrl.u32 %v5703, 7
        %v5705 = vsub.s32 %v5702, %v5704
        %v5706 = vrot.slane %v5692, %v5705
        %v5707 = vcombine.high %v5699, %v5699
        %v5708 = vcombine.high %v5706, %v5706
        %v5709 = vcombine.high %v5507, %v5507
        %v5711 = vunpack.c.l.s4 1983009808
        %v5712 = vunpack.c.0.s8 %v5711
        %v5713 = vlaneseq
        %v5714 = vshrl.u32 %v5713, 7
        %v5715 = vsub.s32 %v5712, %v5714
        %v5716 = vrot.slane %v5507, %v5715
        %v5718 = vunpack.c.l.s4 1983009808
        %v5719 = vunpack.c.0.s8 %v5718
        %v5720 = vlaneseq
        %v5721 = vshrl.u32 %v5720, 7
        %v5722 = vsub.s32 %v5719, %v5721
        %v5723 = vrot.slane %v5709, %v5722
        %v5724 = vcombine.high %v5716, %v5716
        %v5725 = vcombine.high %v5723, %v5723
        %v5726 = vcombine.high %v5512, %v5512
        %v5728 = vunpack.c.l.s4 1983009808
        %v5729 = vunpack.c.0.s8 %v5728
        %v5730 = vlaneseq
        %v5731 = vshrl.u32 %v5730, 7
        %v5732 = vsub.s32 %v5729, %v5731
        %v5733 = vrot.slane %v5512, %v5732
        %v5735 = vunpack.c.l.s4 1983009808
        %v5736 = vunpack.c.0.s8 %v5735
        %v5737 = vlaneseq
        %v5738 = vshrl.u32 %v5737, 7
        %v5739 = vsub.s32 %v5736, %v5738
        %v5740 = vrot.slane %v5726, %v5739
        %v5741 = vcombine.high %v5733, %v5733
        %v5742 = vcombine.high %v5740, %v5740
        %v5743 = vcombine.high %v5517, %v5517
        %v5745 = vunpack.c.l.s4 1983009808
        %v5746 = vunpack.c.0.s8 %v5745
        %v5747 = vlaneseq
        %v5748 = vshrl.u32 %v5747, 7
        %v5749 = vsub.s32 %v5746, %v5748
        %v5750 = vrot.slane %v5517, %v5749
        %v5752 = vunpack.c.l.s4 1983009808
        %v5753 = vunpack.c.0.s8 %v5752
        %v5754 = vlaneseq
        %v5755 = vshrl.u32 %v5754, 7
        %v5756 = vsub.s32 %v5753, %v5755
        %v5757 = vrot.slane %v5743, %v5756
        %v5758 = vcombine.high %v5750, %v5750
        %v5759 = vcombine.high %v5757, %v5757
        %v5760 = vcombine.high %v5522, %v5522
        %v5762 = vunpack.c.l.s4 1983009808
        %v5763 = vunpack.c.0.s8 %v5762
        %v5764 = vlaneseq
        %v5765 = vshrl.u32 %v5764, 7
        %v5766 = vsub.s32 %v5763, %v5765
        %v5767 = vrot.slane %v5522, %v5766
        %v5769 = vunpack.c.l.s4 1983009808
        %v5770 = vunpack.c.0.s8 %v5769
        %v5771 = vlaneseq
        %v5772 = vshrl.u32 %v5771, 7
        %v5773 = vsub.s32 %v5770, %v5772
        %v5774 = vrot.slane %v5760, %v5773
        %v5775 = vcombine.high %v5767, %v5767
        %v5776 = vcombine.high %v5774, %v5774
        %v5777 = vld [vmem:[%s4] sm:$0xff]
        %v5778 = vld [vmem:[%s4 + $0x8] sm:$0xff]
        %v5779 = vld [vmem:[%s4 + $0x10] sm:$0xff]
        %v5780 = vld [vmem:[%s4 + $0x18] sm:$0xff]
        %v5781 = vld [vmem:[%s4 + $0x20] sm:$0xff]
        %v5782 = vld [vmem:[%s4 + $0x28] sm:$0xff]
        %v5783 = vld [vmem:[%s4 + $0x30] sm:$0xff]
        %v5784 = vld [vmem:[%s4 + $0x38] sm:$0xff]
        %v5785 = vld [vmem:[%s4 + $0x40] sm:$0xff]
        %v5786 = vld [vmem:[%s4 + $0x48] sm:$0xff]
        %v5787 = vld [vmem:[%s4 + $0x50] sm:$0xff]
        %v5788 = vld [vmem:[%s4 + $0x58] sm:$0xff]
        %v5789 = vld [vmem:[%s4 + $0x60] sm:$0xff]
        %v5790 = vld [vmem:[%s4 + $0x68] sm:$0xff]
        %v5791 = vld [vmem:[%s4 + $0x70] sm:$0xff]
        %v5792 = vld [vmem:[%s4 + $0x78] sm:$0xff]
        %v5793 = vld [vmem:[%s4 + $0x80] sm:$0xff]
        %v5794 = vld [vmem:[%s4 + $0x88] sm:$0xff]
        %v5795 = vld [vmem:[%s4 + $0x90] sm:$0xff]
        %v5796 = vld [vmem:[%s4 + $0x98] sm:$0xff]
        %v5797 = vld [vmem:[%s4 + $0xa0] sm:$0xf]
        %v5798 = vld [vmem:[%s4 + $0xa8] sm:$0xf]
        %vm5799 = vmor %vm1929, %vm5147
        %vm5800 = vmor %vm5799, %vm1930
        %vm5801 = vmor %vm5800, %vm5154
        %v5802 = vrot.slane %v5546, 7
        %v5803 = vrot.slane %v5802, 2
        %v5804 = vrot.slane %v5554, 7
        %v5805 = vsel %vm5801, %v5803, %v5804
        %v5806 = vrot.slane %v5804, 2
        %v5807 = vrot.slane %v5553, 7
        %v5808 = vsel %vm5801, %v5806, %v5807
        %v5809 = vrot.slane %v5807, 2
        %v5810 = vrot.slane %v5555, 7
        %v5811 = vsel %vm5801, %v5809, %v5810
        %v5812 = vrot.slane %v5810, 2
        %v5813 = vrot.slane %v5563, 7
        %v5814 = vsel %vm5801, %v5812, %v5813
        %v5815 = vrot.slane %v5813, 2
        %v5816 = vrot.slane %v5571, 7
        %v5817 = vsel %vm5801, %v5815, %v5816
        %v5818 = vrot.slane %v5572, 7
        %v5819 = vrot.slane %v5818, 2
        %v5820 = vrot.slane %v5580, 7
        %v5821 = vsel %vm5801, %v5819, %v5820
        %v5822 = vrot.slane %v5820, 2
        %v5823 = vrot.slane %v5588, 7
        %v5824 = vsel %vm5801, %v5822, %v5823
        %v5825 = vrot.slane %v5823, 2
        %v5826 = vrot.slane %v5587, 7
        %v5827 = vsel %vm5801, %v5825, %v5826
        %v5828 = vrot.slane %v5826, 2
        %v5829 = vrot.slane %v5589, 7
        %v5830 = vsel %vm5801, %v5828, %v5829
        %v5831 = vrot.slane %v5829, 2
        %v5832 = vrot.slane %v5597, 7
        %v5833 = vsel %vm5801, %v5831, %v5832
        %v5834 = vrot.slane %v5604, 7
        %v5835 = vrot.slane %v5834, 2
        %v5836 = vrot.slane %v5606, 7
        %v5837 = vsel %vm5801, %v5835, %v5836
        %v5838 = vrot.slane %v5836, 2
        %v5839 = vrot.slane %v5614, 7
        %v5840 = vsel %vm5801, %v5838, %v5839
        %v5841 = vrot.slane %v5839, 2
        %v5842 = vrot.slane %v5622, 7
        %v5843 = vsel %vm5801, %v5841, %v5842
        %v5844 = vrot.slane %v5842, 2
        %v5845 = vrot.slane %v5621, 7
        %v5846 = vsel %vm5801, %v5844, %v5845
        %v5847 = vrot.slane %v5845, 2
        %v5848 = vrot.slane %v5623, 7
        %v5849 = vsel %vm5801, %v5847, %v5848
        %v5850 = vrot.slane %v5639, 7
        %v5851 = vrot.slane %v5850, 2
        %v5852 = vrot.slane %v5638, 7
        %v5853 = vsel %vm5801, %v5851, %v5852
        %v5854 = vrot.slane %v5852, 2
        %v5855 = vrot.slane %v5640, 7
        %v5856 = vsel %vm5801, %v5854, %v5855
        %v5857 = vrot.slane %v5855, 2
        %v5858 = vrot.slane %v5648, 7
        %v5859 = vsel %vm5801, %v5857, %v5858
        %v5860 = vrot.slane %v5858, 2
        %v5861 = vrot.slane %v5656, 7
        %v5862 = vsel %vm5801, %v5860, %v5861
        %v5863 = vrot.slane %v5861, 2
        %v5864 = vrot.slane %v5655, 7
        %v5865 = vsel %vm5801, %v5863, %v5864
        %v5866 = vrot.slane %v5665, 7
        %v5867 = vrot.slane %v5866, 2
        %v5868 = vrot.slane %v5673, 7
        %v5869 = vsel %vm5801, %v5867, %v5868
        %v5870 = vrot.slane %v5868, 2
        %v5871 = vrot.slane %v5672, 7
        %v5872 = vsel %vm5801, %v5870, %v5871
        %v5873 = vrot.slane %v5871, 2
        %v5874 = vrot.slane %v5674, 7
        %v5875 = vsel %vm5801, %v5873, %v5874
        %v5876 = vrot.slane %v5874, 2
        %v5877 = vrot.slane %v5682, 7
        %v5878 = vsel %vm5801, %v5876, %v5877
        %v5879 = vrot.slane %v5877, 2
        %v5880 = vrot.slane %v5690, 7
        %v5881 = vsel %vm5801, %v5879, %v5880
        %v5882 = vrot.slane %v5691, 7
        %v5883 = vrot.slane %v5882, 2
        %v5884 = vrot.slane %v5699, 7
        %v5885 = vsel %vm5801, %v5883, %v5884
        %v5886 = vrot.slane %v5884, 2
        %v5887 = vrot.slane %v5707, 7
        %v5888 = vsel %vm5801, %v5886, %v5887
        %v5889 = vrot.slane %v5887, 2
        %v5890 = vrot.slane %v5706, 7
        %v5891 = vsel %vm5801, %v5889, %v5890
        %v5892 = vrot.slane %v5890, 2
        %v5893 = vrot.slane %v5708, 7
        %v5894 = vsel %vm5801, %v5892, %v5893
        %v5895 = vrot.slane %v5893, 2
        %v5896 = vrot.slane %v5716, 7
        %v5897 = vsel %vm5801, %v5895, %v5896
        %v5898 = vrot.slane %v5723, 7
        %v5899 = vrot.slane %v5898, 2
        %v5900 = vrot.slane %v5725, 7
        %v5901 = vsel %vm5801, %v5899, %v5900
        %v5902 = vrot.slane %v5900, 2
        %v5903 = vrot.slane %v5733, 7
        %v5904 = vsel %vm5801, %v5902, %v5903
        %v5905 = vrot.slane %v5903, 2
        %v5906 = vrot.slane %v5741, 7
        %v5907 = vsel %vm5801, %v5905, %v5906
        %v5908 = vrot.slane %v5906, 2
        %v5909 = vrot.slane %v5740, 7
        %v5910 = vsel %vm5801, %v5908, %v5909
        %v5911 = vrot.slane %v5909, 2
        %v5912 = vrot.slane %v5742, 7
        %v5913 = vsel %vm5801, %v5911, %v5912
        %v5914 = vrot.slane %v5758, 7
        %v5915 = vrot.slane %v5914, 2
        %v5916 = vrot.slane %v5757, 7
        %v5917 = vsel %vm5801, %v5915, %v5916
        %v5918 = vrot.slane %v5916, 2
        %v5919 = vrot.slane %v5759, 7
        %v5920 = vsel %vm5801, %v5918, %v5919
        %v5921 = vrot.slane %v5919, 2
        %v5922 = vrot.slane %v5767, 7
        %v5923 = vsel %vm5801, %v5921, %v5922
        %v5924 = vrot.slane %v5922, 2
        %v5925 = vrot.slane %v5775, 7
        %v5926 = vsel %vm5801, %v5924, %v5925
        %v5927 = vrot.slane %v5925, 2
        %v5928 = vrot.slane %v5774, 7
        %v5929 = vsel %vm5801, %v5927, %v5928
        %s5930 = scalar_lea.vmem %s4, 176
        %v5931 = vld [vmem:[%s5930] sm:$0xff]
        %v5932 = vld [vmem:[%s5930 + $0x8] sm:$0xff]
        %v5933 = vld [vmem:[%s5930 + $0x10] sm:$0xff]
        %v5934 = vld [vmem:[%s5930 + $0x18] sm:$0xff]
        %v5935 = vld [vmem:[%s5930 + $0x20] sm:$0xff]
        %v5936 = vld [vmem:[%s5930 + $0x28] sm:$0xff]
        %v5937 = vld [vmem:[%s5930 + $0x30] sm:$0xff]
        %v5938 = vld [vmem:[%s5930 + $0x38] sm:$0xff]
        %v5939 = vld [vmem:[%s5930 + $0x40] sm:$0xff]
        %v5940 = vld [vmem:[%s5930 + $0x48] sm:$0xff]
        %v5941 = vld [vmem:[%s5930 + $0x50] sm:$0xff]
        %v5942 = vld [vmem:[%s5930 + $0x58] sm:$0xff]
        %v5943 = vld [vmem:[%s5930 + $0x60] sm:$0xff]
        %v5944 = vld [vmem:[%s5930 + $0x68] sm:$0xff]
        %v5945 = vld [vmem:[%s5930 + $0x70] sm:$0xff]
        %v5946 = vld [vmem:[%s5930 + $0x78] sm:$0xff]
        %v5947 = vld [vmem:[%s5930 + $0x80] sm:$0xff]
        %v5948 = vld [vmem:[%s5930 + $0x88] sm:$0xff]
        %v5949 = vld [vmem:[%s5930 + $0x90] sm:$0xff]
        %v5950 = vld [vmem:[%s5930 + $0x98] sm:$0xff]
        %v5951 = vld [vmem:[%s5930 + $0xa0] sm:$0xf]
        %v5952 = vld [vmem:[%s5930 + $0xa8] sm:$0xf]
        %v5953 = vcombine.low %v5805, %v5808
        %v5954 = vcombine.low %v5811, %v5814
        %v5956 = vunpack.c.l.s4 1983009808
        %v5957 = vunpack.c.0.s8 %v5956
        %v5958 = vlaneseq
        %v5959 = vshrl.u32 %v5958, 7
        %v5960 = vsub.s32 %v5957, %v5959
        %v5961 = vrot.slane %v5953, %v5960
        %v5963 = vunpack.c.l.s4 1983009808
        %v5964 = vunpack.c.0.s8 %v5963
        %v5965 = vlaneseq
        %v5966 = vshrl.u32 %v5965, 7
        %v5967 = vsub.s32 %v5964, %v5966
        %v5968 = vrot.slane %v5954, %v5967
        %v5969 = vcombine.low %v5961, %v5968
        %v5970 = vcombine.low %v5817, %v5821
        %v5971 = vcombine.low %v5824, %v5827
        %v5973 = vunpack.c.l.s4 1983009808
        %v5974 = vunpack.c.0.s8 %v5973
        %v5975 = vlaneseq
        %v5976 = vshrl.u32 %v5975, 7
        %v5977 = vsub.s32 %v5974, %v5976
        %v5978 = vrot.slane %v5970, %v5977
        %v5980 = vunpack.c.l.s4 1983009808
        %v5981 = vunpack.c.0.s8 %v5980
        %v5982 = vlaneseq
        %v5983 = vshrl.u32 %v5982, 7
        %v5984 = vsub.s32 %v5981, %v5983
        %v5985 = vrot.slane %v5971, %v5984
        %v5986 = vcombine.low %v5978, %v5985
        %v5987 = vcombine.low %v5830, %v5833
        %v5988 = vcombine.low %v5837, %v5840
        %v5990 = vunpack.c.l.s4 1983009808
        %v5991 = vunpack.c.0.s8 %v5990
        %v5992 = vlaneseq
        %v5993 = vshrl.u32 %v5992, 7
        %v5994 = vsub.s32 %v5991, %v5993
        %v5995 = vrot.slane %v5987, %v5994
        %v5997 = vunpack.c.l.s4 1983009808
        %v5998 = vunpack.c.0.s8 %v5997
        %v5999 = vlaneseq
        %v6000 = vshrl.u32 %v5999, 7
        %v6001 = vsub.s32 %v5998, %v6000
        %v6002 = vrot.slane %v5988, %v6001
        %v6003 = vcombine.low %v5995, %v6002
        %v6004 = vcombine.low %v5843, %v5846
        %v6005 = vcombine.low %v5849, %v5853
        %v6007 = vunpack.c.l.s4 1983009808
        %v6008 = vunpack.c.0.s8 %v6007
        %v6009 = vlaneseq
        %v6010 = vshrl.u32 %v6009, 7
        %v6011 = vsub.s32 %v6008, %v6010
        %v6012 = vrot.slane %v6004, %v6011
        %v6014 = vunpack.c.l.s4 1983009808
        %v6015 = vunpack.c.0.s8 %v6014
        %v6016 = vlaneseq
        %v6017 = vshrl.u32 %v6016, 7
        %v6018 = vsub.s32 %v6015, %v6017
        %v6019 = vrot.slane %v6005, %v6018
        %v6020 = vcombine.low %v6012, %v6019
        %v6021 = vcombine.low %v5856, %v5859
        %v6022 = vcombine.low %v5862, %v5865
        %v6024 = vunpack.c.l.s4 1983009808
        %v6025 = vunpack.c.0.s8 %v6024
        %v6026 = vlaneseq
        %v6027 = vshrl.u32 %v6026, 7
        %v6028 = vsub.s32 %v6025, %v6027
        %v6029 = vrot.slane %v6021, %v6028
        %v6031 = vunpack.c.l.s4 1983009808
        %v6032 = vunpack.c.0.s8 %v6031
        %v6033 = vlaneseq
        %v6034 = vshrl.u32 %v6033, 7
        %v6035 = vsub.s32 %v6032, %v6034
        %v6036 = vrot.slane %v6022, %v6035
        %v6037 = vcombine.low %v6029, %v6036
        %v6038 = vcombine.low %v5869, %v5872
        %v6039 = vcombine.low %v5875, %v5878
        %v6041 = vunpack.c.l.s4 1983009808
        %v6042 = vunpack.c.0.s8 %v6041
        %v6043 = vlaneseq
        %v6044 = vshrl.u32 %v6043, 7
        %v6045 = vsub.s32 %v6042, %v6044
        %v6046 = vrot.slane %v6038, %v6045
        %v6048 = vunpack.c.l.s4 1983009808
        %v6049 = vunpack.c.0.s8 %v6048
        %v6050 = vlaneseq
        %v6051 = vshrl.u32 %v6050, 7
        %v6052 = vsub.s32 %v6049, %v6051
        %v6053 = vrot.slane %v6039, %v6052
        %v6054 = vcombine.low %v6046, %v6053
        %v6055 = vcombine.low %v5881, %v5885
        %v6056 = vcombine.low %v5888, %v5891
        %v6058 = vunpack.c.l.s4 1983009808
        %v6059 = vunpack.c.0.s8 %v6058
        %v6060 = vlaneseq
        %v6061 = vshrl.u32 %v6060, 7
        %v6062 = vsub.s32 %v6059, %v6061
        %v6063 = vrot.slane %v6055, %v6062
        %v6065 = vunpack.c.l.s4 1983009808
        %v6066 = vunpack.c.0.s8 %v6065
        %v6067 = vlaneseq
        %v6068 = vshrl.u32 %v6067, 7
        %v6069 = vsub.s32 %v6066, %v6068
        %v6070 = vrot.slane %v6056, %v6069
        %v6071 = vcombine.low %v6063, %v6070
        %v6072 = vcombine.low %v5894, %v5897
        %v6073 = vcombine.low %v5901, %v5904
        %v6075 = vunpack.c.l.s4 1983009808
        %v6076 = vunpack.c.0.s8 %v6075
        %v6077 = vlaneseq
        %v6078 = vshrl.u32 %v6077, 7
        %v6079 = vsub.s32 %v6076, %v6078
        %v6080 = vrot.slane %v6072, %v6079
        %v6082 = vunpack.c.l.s4 1983009808
        %v6083 = vunpack.c.0.s8 %v6082
        %v6084 = vlaneseq
        %v6085 = vshrl.u32 %v6084, 7
        %v6086 = vsub.s32 %v6083, %v6085
        %v6087 = vrot.slane %v6073, %v6086
        %v6088 = vcombine.low %v6080, %v6087
        %v6089 = vcombine.low %v5907, %v5910
        %v6090 = vcombine.low %v5913, %v5917
        %v6092 = vunpack.c.l.s4 1983009808
        %v6093 = vunpack.c.0.s8 %v6092
        %v6094 = vlaneseq
        %v6095 = vshrl.u32 %v6094, 7
        %v6096 = vsub.s32 %v6093, %v6095
        %v6097 = vrot.slane %v6089, %v6096
        %v6099 = vunpack.c.l.s4 1983009808
        %v6100 = vunpack.c.0.s8 %v6099
        %v6101 = vlaneseq
        %v6102 = vshrl.u32 %v6101, 7
        %v6103 = vsub.s32 %v6100, %v6102
        %v6104 = vrot.slane %v6090, %v6103
        %v6105 = vcombine.low %v6097, %v6104
        %v6106 = vcombine.low %v5920, %v5923
        %v6107 = vcombine.low %v5926, %v5929
        %v6109 = vunpack.c.l.s4 1983009808
        %v6110 = vunpack.c.0.s8 %v6109
        %v6111 = vlaneseq
        %v6112 = vshrl.u32 %v6111, 7
        %v6113 = vsub.s32 %v6110, %v6112
        %v6114 = vrot.slane %v6106, %v6113
        %v6116 = vunpack.c.l.s4 1983009808
        %v6117 = vunpack.c.0.s8 %v6116
        %v6118 = vlaneseq
        %v6119 = vshrl.u32 %v6118, 7
        %v6120 = vsub.s32 %v6117, %v6119
        %v6121 = vrot.slane %v6107, %v6120
        %v6122 = vcombine.low %v6114, %v6121
        %vm6123 = vcmask 687104
        %v6124 = vsel %vm6123, %v5969, 0
        %v6126 = vsel %vm6123, %v5986, 0
        %v6128 = vsel %vm6123, %v6003, 0
        %v6130 = vsel %vm6123, %v6020, 0
        %v6132 = vsel %vm6123, %v6037, 0
        %v6134 = vsel %vm6123, %v6054, 0
        %v6136 = vsel %vm6123, %v6071, 0
        %v6138 = vsel %vm6123, %v6088, 0
        %v6140 = vsel %vm6123, %v6105, 0
        %v6142 = vsel %vm6123, %v6122, 0
        %vm6144 = vcmask 1043456
        %v6146 = vsel %vm6144, %v5951, 0
        %v6149 = vsel %vm6144, %v5952, 0
        %6151 = vmatprep.subr.mxu0 0.0
        %6152 = vmatpush1.msra.mxu0 0.0
        %6153 = vmatprep.subr.mxu0 0.0
        %6154 = vmatpush1.msra.mxu0 0.0
        %6155 = vmatprep.subr.mxu0 0.0
        %6156 = vmatpush1.msra.mxu0 0.0
        %6157 = vmatprep.subr.mxu0 0.0
        %6158 = vmatpush1.msra.mxu0 0.0
        %6159 = vmatprep.subr.mxu0 0.0
        %6160 = vmatpush1.msra.mxu0 0.0
        %6161 = vmatprep.subr.mxu0 %v6149
        %6162 = vmatpush1.msra.mxu0 %v6146
        %6163 = vmatprep.subr.mxu0 %v5950
        %6164 = vmatpush1.msra.mxu0 %v5949
        %6165 = vmatprep.subr.mxu0 %v5948
        %6166 = vmatpush1.msra.mxu0 %v5947
        %6167 = vmatprep.subr.mxu0 %v5946
        %6168 = vmatpush1.msra.mxu0 %v5945
        %6169 = vmatprep.subr.mxu0 %v5944
        %6170 = vmatpush1.msra.mxu0 %v5943
        %6171 = vmatprep.subr.mxu0 %v5942
        %6172 = vmatpush1.msra.mxu0 %v5941
        %6173 = vmatprep.subr.mxu0 %v5940
        %6174 = vmatpush1.msra.mxu0 %v5939
        %6175 = vmatprep.subr.mxu0 %v5938
        %6176 = vmatpush1.msra.mxu0 %v5937
        %6177 = vmatprep.subr.mxu0 %v5936
        %6178 = vmatpush1.msra.mxu0 %v5935
        %6179 = vmatprep.subr.mxu0 %v5934
        %6180 = vmatpush1.msra.mxu0 %v5933
        %6181 = vmatprep.subr.mxu0 %v5932
        %6182 = vmatpush1.msra.mxu0 %v5931
        %6183 = vmatprep.subr.mxu0 0.0
        %6184 = vmatpush2.msra.mxu0 0.0
        %6185 = vmatprep.subr.mxu0 0.0
        %6186 = vmatpush2.msra.mxu0 0.0
        %6187 = vmatprep.subr.mxu0 0.0
        %6188 = vmatpush2.msra.mxu0 0.0
        %6189 = vmatprep.subr.mxu0 0.0
        %6190 = vmatpush2.msra.mxu0 0.0
        %6191 = vmatprep.subr.mxu0 0.0
        %6192 = vmatpush2.msra.mxu0 0.0
        %6193 = vmatprep.subr.mxu0 0.0
        %6194 = vmatpush2.msra.mxu0 0.0
        %6195 = vmatprep.subr.mxu0 0.0
        %6196 = vmatpush2.msra.mxu0 0.0
        %6197 = vmatprep.subr.mxu0 0.0
        %6198 = vmatpush2.msra.mxu0 0.0
        %6199 = vmatprep.subr.mxu0 0.0
        %6200 = vmatpush2.msra.mxu0 0.0
        %6201 = vmatprep.subr.mxu0 0.0
        %6202 = vmatpush2.msra.mxu0 0.0
        %6203 = vmatprep.subr.mxu0 0.0
        %6204 = vmatpush2.msra.mxu0 0.0
        %6205 = vmatprep.subr.mxu0 0.0
        %6206 = vmatpush2.msra.mxu0 0.0
        %6207 = vmatprep.subr.mxu0 0.0
        %6208 = vmatpush2.msra.mxu0 0.0
        %6209 = vmatprep.subr.mxu0 0.0
        %6210 = vmatpush2.msra.mxu0 0.0
        %6211 = vmatprep.subr.mxu0 0.0
        %6212 = vmatpush2.msra.mxu0 0.0
        %6213 = vmatprep.subr.mxu0 0.0
        %6214 = vmatpush2.msra.mxu0 0.0
        %6215 = vmatprep.mubr.f32.mxu0 0.0
        %6216 = vmatmul.mubr.f32.gmra.mxu0 %v6124
        %v6217 = vpop.f32.mrf.mxu0
        %v6218 = vadd.f32 0.0, %v6217
        %v6219 = vpop.f32.mrf.mxu0
        %v6220 = vadd.f32 0.0, %v6219
        %6221 = vmatprep.mubr.f32.mxu0 0.0
        %6222 = vmatmul.mubr.f32.gmra.mxu0 %v6126
        %v6223 = vpop.f32.mrf.mxu0
        %v6224 = vadd.f32 0.0, %v6223
        %v6225 = vpop.f32.mrf.mxu0
        %v6226 = vadd.f32 0.0, %v6225
        %6227 = vmatprep.mubr.f32.mxu0 0.0
        %6228 = vmatmul.mubr.f32.gmra.mxu0 %v6128
        %v6229 = vpop.f32.mrf.mxu0
        %v6230 = vadd.f32 0.0, %v6229
        %v6231 = vpop.f32.mrf.mxu0
        %v6232 = vadd.f32 0.0, %v6231
        %6233 = vmatprep.mubr.f32.mxu0 0.0
        %6234 = vmatmul.mubr.f32.gmra.mxu0 %v6130
        %v6235 = vpop.f32.mrf.mxu0
        %v6236 = vadd.f32 0.0, %v6235
        %v6237 = vpop.f32.mrf.mxu0
        %v6238 = vadd.f32 0.0, %v6237
        %6239 = vmatprep.mubr.f32.mxu0 0.0
        %6240 = vmatmul.mubr.f32.gmra.mxu0 %v6132
        %v6241 = vpop.f32.mrf.mxu0
        %v6242 = vadd.f32 0.0, %v6241
        %v6243 = vpop.f32.mrf.mxu0
        %v6244 = vadd.f32 0.0, %v6243
        %6245 = vmatprep.mubr.f32.mxu0 0.0
        %6246 = vmatmul.mubr.f32.gmra.mxu0 %v6134
        %v6247 = vpop.f32.mrf.mxu0
        %v6248 = vadd.f32 0.0, %v6247
        %v6249 = vpop.f32.mrf.mxu0
        %v6250 = vadd.f32 0.0, %v6249
        %6251 = vmatprep.mubr.f32.mxu0 0.0
        %6252 = vmatmul.mubr.f32.gmra.mxu0 %v6136
        %v6253 = vpop.f32.mrf.mxu0
        %v6254 = vadd.f32 0.0, %v6253
        %v6255 = vpop.f32.mrf.mxu0
        %v6256 = vadd.f32 0.0, %v6255
        %6257 = vmatprep.mubr.f32.mxu0 0.0
        %6258 = vmatmul.mubr.f32.gmra.mxu0 %v6138
        %v6259 = vpop.f32.mrf.mxu0
        %v6260 = vadd.f32 0.0, %v6259
        %v6261 = vpop.f32.mrf.mxu0
        %v6262 = vadd.f32 0.0, %v6261
        %6263 = vmatprep.mubr.f32.mxu0 0.0
        %6264 = vmatmul.mubr.f32.gmra.mxu0 %v6140
        %v6265 = vpop.f32.mrf.mxu0
        %v6266 = vadd.f32 0.0, %v6265
        %v6267 = vpop.f32.mrf.mxu0
        %v6268 = vadd.f32 0.0, %v6267
        %6269 = vmatprep.mubr.f32.mxu0 0.0
        %6270 = vmatmul.mubr.f32.gmra.mxu0 %v6142
        %v6271 = vpop.f32.mrf.mxu0
        %v6272 = vadd.f32 0.0, %v6271
        %v6273 = vpop.f32.mrf.mxu0
        %v6274 = vadd.f32 0.0, %v6273
        %6275 = vdwg.mxu0
        %v6276 = vcombine.low %v5546, %v5554
        %v6277 = vcombine.low %v5553, %v5555
        %v6279 = vunpack.c.l.s4 1983009808
        %v6280 = vunpack.c.0.s8 %v6279
        %v6281 = vlaneseq
        %v6282 = vshrl.u32 %v6281, 7
        %v6283 = vsub.s32 %v6280, %v6282
        %v6284 = vrot.slane %v6276, %v6283
        %v6286 = vunpack.c.l.s4 1983009808
        %v6287 = vunpack.c.0.s8 %v6286
        %v6288 = vlaneseq
        %v6289 = vshrl.u32 %v6288, 7
        %v6290 = vsub.s32 %v6287, %v6289
        %v6291 = vrot.slane %v6277, %v6290
        %v6292 = vcombine.low %v6284, %v6291
        %v6293 = vcombine.low %v5563, %v5572
        %v6294 = vcombine.low %v5580, %v5588
        %v6296 = vunpack.c.l.s4 1983009808
        %v6297 = vunpack.c.0.s8 %v6296
        %v6298 = vlaneseq
        %v6299 = vshrl.u32 %v6298, 7
        %v6300 = vsub.s32 %v6297, %v6299
        %v6301 = vrot.slane %v6293, %v6300
        %v6303 = vunpack.c.l.s4 1983009808
        %v6304 = vunpack.c.0.s8 %v6303
        %v6305 = vlaneseq
        %v6306 = vshrl.u32 %v6305, 7
        %v6307 = vsub.s32 %v6304, %v6306
        %v6308 = vrot.slane %v6294, %v6307
        %v6309 = vcombine.low %v6301, %v6308
        %v6310 = vcombine.low %v5587, %v5589
        %v6311 = vcombine.low %v5604, %v5606
        %v6313 = vunpack.c.l.s4 1983009808
        %v6314 = vunpack.c.0.s8 %v6313
        %v6315 = vlaneseq
        %v6316 = vshrl.u32 %v6315, 7
        %v6317 = vsub.s32 %v6314, %v6316
        %v6318 = vrot.slane %v6310, %v6317
        %v6320 = vunpack.c.l.s4 1983009808
        %v6321 = vunpack.c.0.s8 %v6320
        %v6322 = vlaneseq
        %v6323 = vshrl.u32 %v6322, 7
        %v6324 = vsub.s32 %v6321, %v6323
        %v6325 = vrot.slane %v6311, %v6324
        %v6326 = vcombine.low %v6318, %v6325
        %v6327 = vcombine.low %v5614, %v5622
        %v6328 = vcombine.low %v5621, %v5639
        %v6330 = vunpack.c.l.s4 1983009808
        %v6331 = vunpack.c.0.s8 %v6330
        %v6332 = vlaneseq
        %v6333 = vshrl.u32 %v6332, 7
        %v6334 = vsub.s32 %v6331, %v6333
        %v6335 = vrot.slane %v6327, %v6334
        %v6337 = vunpack.c.l.s4 1983009808
        %v6338 = vunpack.c.0.s8 %v6337
        %v6339 = vlaneseq
        %v6340 = vshrl.u32 %v6339, 7
        %v6341 = vsub.s32 %v6338, %v6340
        %v6342 = vrot.slane %v6328, %v6341
        %v6343 = vcombine.low %v6335, %v6342
        %v6344 = vcombine.low %v5638, %v5640
        %v6345 = vcombine.low %v5648, %v5656
        %v6347 = vunpack.c.l.s4 1983009808
        %v6348 = vunpack.c.0.s8 %v6347
        %v6349 = vlaneseq
        %v6350 = vshrl.u32 %v6349, 7
        %v6351 = vsub.s32 %v6348, %v6350
        %v6352 = vrot.slane %v6344, %v6351
        %v6354 = vunpack.c.l.s4 1983009808
        %v6355 = vunpack.c.0.s8 %v6354
        %v6356 = vlaneseq
        %v6357 = vshrl.u32 %v6356, 7
        %v6358 = vsub.s32 %v6355, %v6357
        %v6359 = vrot.slane %v6345, %v6358
        %v6360 = vcombine.low %v6352, %v6359
        %v6361 = vcombine.low %v5665, %v5673
        %v6362 = vcombine.low %v5672, %v5674
        %v6364 = vunpack.c.l.s4 1983009808
        %v6365 = vunpack.c.0.s8 %v6364
        %v6366 = vlaneseq
        %v6367 = vshrl.u32 %v6366, 7
        %v6368 = vsub.s32 %v6365, %v6367
        %v6369 = vrot.slane %v6361, %v6368
        %v6371 = vunpack.c.l.s4 1983009808
        %v6372 = vunpack.c.0.s8 %v6371
        %v6373 = vlaneseq
        %v6374 = vshrl.u32 %v6373, 7
        %v6375 = vsub.s32 %v6372, %v6374
        %v6376 = vrot.slane %v6362, %v6375
        %v6377 = vcombine.low %v6369, %v6376
        %v6378 = vcombine.low %v5682, %v5691
        %v6379 = vcombine.low %v5699, %v5707
        %v6381 = vunpack.c.l.s4 1983009808
        %v6382 = vunpack.c.0.s8 %v6381
        %v6383 = vlaneseq
        %v6384 = vshrl.u32 %v6383, 7
        %v6385 = vsub.s32 %v6382, %v6384
        %v6386 = vrot.slane %v6378, %v6385
        %v6388 = vunpack.c.l.s4 1983009808
        %v6389 = vunpack.c.0.s8 %v6388
        %v6390 = vlaneseq
        %v6391 = vshrl.u32 %v6390, 7
        %v6392 = vsub.s32 %v6389, %v6391
        %v6393 = vrot.slane %v6379, %v6392
        %v6394 = vcombine.low %v6386, %v6393
        %v6395 = vcombine.low %v5706, %v5708
        %v6396 = vcombine.low %v5723, %v5725
        %v6398 = vunpack.c.l.s4 1983009808
        %v6399 = vunpack.c.0.s8 %v6398
        %v6400 = vlaneseq
        %v6401 = vshrl.u32 %v6400, 7
        %v6402 = vsub.s32 %v6399, %v6401
        %v6403 = vrot.slane %v6395, %v6402
        %v6405 = vunpack.c.l.s4 1983009808
        %v6406 = vunpack.c.0.s8 %v6405
        %v6407 = vlaneseq
        %v6408 = vshrl.u32 %v6407, 7
        %v6409 = vsub.s32 %v6406, %v6408
        %v6410 = vrot.slane %v6396, %v6409
        %v6411 = vcombine.low %v6403, %v6410
        %v6412 = vcombine.low %v5733, %v5741
        %v6413 = vcombine.low %v5740, %v5758
        %v6415 = vunpack.c.l.s4 1983009808
        %v6416 = vunpack.c.0.s8 %v6415
        %v6417 = vlaneseq
        %v6418 = vshrl.u32 %v6417, 7
        %v6419 = vsub.s32 %v6416, %v6418
        %v6420 = vrot.slane %v6412, %v6419
        %v6422 = vunpack.c.l.s4 1983009808
        %v6423 = vunpack.c.0.s8 %v6422
        %v6424 = vlaneseq
        %v6425 = vshrl.u32 %v6424, 7
        %v6426 = vsub.s32 %v6423, %v6425
        %v6427 = vrot.slane %v6413, %v6426
        %v6428 = vcombine.low %v6420, %v6427
        %v6429 = vcombine.low %v5757, %v5759
        %v6430 = vcombine.low %v5767, %v5775
        %v6432 = vunpack.c.l.s4 1983009808
        %v6433 = vunpack.c.0.s8 %v6432
        %v6434 = vlaneseq
        %v6435 = vshrl.u32 %v6434, 7
        %v6436 = vsub.s32 %v6433, %v6435
        %v6437 = vrot.slane %v6429, %v6436
        %v6439 = vunpack.c.l.s4 1983009808
        %v6440 = vunpack.c.0.s8 %v6439
        %v6441 = vlaneseq
        %v6442 = vshrl.u32 %v6441, 7
        %v6443 = vsub.s32 %v6440, %v6442
        %v6444 = vrot.slane %v6430, %v6443
        %v6445 = vcombine.low %v6437, %v6444
        %v6446 = vsel %vm6123, %v6292, 0
        %v6448 = vsel %vm6123, %v6309, 0
        %v6450 = vsel %vm6123, %v6326, 0
        %v6452 = vsel %vm6123, %v6343, 0
        %v6454 = vsel %vm6123, %v6360, 0
        %v6456 = vsel %vm6123, %v6377, 0
        %v6458 = vsel %vm6123, %v6394, 0
        %v6460 = vsel %vm6123, %v6411, 0
        %v6462 = vsel %vm6123, %v6428, 0
        %v6464 = vsel %vm6123, %v6445, 0
        %v6467 = vsel %vm6144, %v5797, 0
        %v6470 = vsel %vm6144, %v5798, 0
        %6472 = vmatprep.subr.mxu0 0.0
        %6473 = vmatpush1.msra.mxu0 0.0
        %6474 = vmatprep.subr.mxu0 0.0
        %6475 = vmatpush1.msra.mxu0 0.0
        %6476 = vmatprep.subr.mxu0 0.0
        %6477 = vmatpush1.msra.mxu0 0.0
        %6478 = vmatprep.subr.mxu0 0.0
        %6479 = vmatpush1.msra.mxu0 0.0
        %6480 = vmatprep.subr.mxu0 0.0
        %6481 = vmatpush1.msra.mxu0 0.0
        %6482 = vmatprep.subr.mxu0 %v6470
        %6483 = vmatpush1.msra.mxu0 %v6467
        %6484 = vmatprep.subr.mxu0 %v5796
        %6485 = vmatpush1.msra.mxu0 %v5795
        %6486 = vmatprep.subr.mxu0 %v5794
        %6487 = vmatpush1.msra.mxu0 %v5793
        %6488 = vmatprep.subr.mxu0 %v5792
        %6489 = vmatpush1.msra.mxu0 %v5791
        %6490 = vmatprep.subr.mxu0 %v5790
        %6491 = vmatpush1.msra.mxu0 %v5789
        %6492 = vmatprep.subr.mxu0 %v5788
        %6493 = vmatpush1.msra.mxu0 %v5787
        %6494 = vmatprep.subr.mxu0 %v5786
        %6495 = vmatpush1.msra.mxu0 %v5785
        %6496 = vmatprep.subr.mxu0 %v5784
        %6497 = vmatpush1.msra.mxu0 %v5783
        %6498 = vmatprep.subr.mxu0 %v5782
        %6499 = vmatpush1.msra.mxu0 %v5781
        %6500 = vmatprep.subr.mxu0 %v5780
        %6501 = vmatpush1.msra.mxu0 %v5779
        %6502 = vmatprep.subr.mxu0 %v5778
        %6503 = vmatpush1.msra.mxu0 %v5777
        %6504 = vmatprep.subr.mxu0 0.0
        %6505 = vmatpush2.msra.mxu0 0.0
        %6506 = vmatprep.subr.mxu0 0.0
        %6507 = vmatpush2.msra.mxu0 0.0
        %6508 = vmatprep.subr.mxu0 0.0
        %6509 = vmatpush2.msra.mxu0 0.0
        %6510 = vmatprep.subr.mxu0 0.0
        %6511 = vmatpush2.msra.mxu0 0.0
        %6512 = vmatprep.subr.mxu0 0.0
        %6513 = vmatpush2.msra.mxu0 0.0
        %6514 = vmatprep.subr.mxu0 0.0
        %6515 = vmatpush2.msra.mxu0 0.0
        %6516 = vmatprep.subr.mxu0 0.0
        %6517 = vmatpush2.msra.mxu0 0.0
        %6518 = vmatprep.subr.mxu0 0.0
        %6519 = vmatpush2.msra.mxu0 0.0
        %6520 = vmatprep.subr.mxu0 0.0
        %6521 = vmatpush2.msra.mxu0 0.0
        %6522 = vmatprep.subr.mxu0 0.0
        %6523 = vmatpush2.msra.mxu0 0.0
        %6524 = vmatprep.subr.mxu0 0.0
        %6525 = vmatpush2.msra.mxu0 0.0
        %6526 = vmatprep.subr.mxu0 0.0
        %6527 = vmatpush2.msra.mxu0 0.0
        %6528 = vmatprep.subr.mxu0 0.0
        %6529 = vmatpush2.msra.mxu0 0.0
        %6530 = vmatprep.subr.mxu0 0.0
        %6531 = vmatpush2.msra.mxu0 0.0
        %6532 = vmatprep.subr.mxu0 0.0
        %6533 = vmatpush2.msra.mxu0 0.0
        %6534 = vmatprep.subr.mxu0 0.0
        %6535 = vmatpush2.msra.mxu0 0.0
        %6536 = vmatprep.mubr.f32.mxu0 0.0
        %6537 = vmatmul.mubr.f32.gmra.mxu0 %v6446
        %v6538 = vpop.f32.mrf.mxu0
        %v6539 = vadd.f32 %v6218, %v6538
        %v6540 = vpop.f32.mrf.mxu0
        %v6541 = vadd.f32 %v6220, %v6540
        %6542 = vmatprep.mubr.f32.mxu0 0.0
        %6543 = vmatmul.mubr.f32.gmra.mxu0 %v6448
        %v6544 = vpop.f32.mrf.mxu0
        %v6545 = vadd.f32 %v6224, %v6544
        %v6546 = vpop.f32.mrf.mxu0
        %v6547 = vadd.f32 %v6226, %v6546
        %6548 = vmatprep.mubr.f32.mxu0 0.0
        %6549 = vmatmul.mubr.f32.gmra.mxu0 %v6450
        %v6550 = vpop.f32.mrf.mxu0
        %v6551 = vadd.f32 %v6230, %v6550
        %v6552 = vpop.f32.mrf.mxu0
        %v6553 = vadd.f32 %v6232, %v6552
        %6554 = vmatprep.mubr.f32.mxu0 0.0
        %6555 = vmatmul.mubr.f32.gmra.mxu0 %v6452
        %v6556 = vpop.f32.mrf.mxu0
        %v6557 = vadd.f32 %v6236, %v6556
        %v6558 = vpop.f32.mrf.mxu0
        %v6559 = vadd.f32 %v6238, %v6558
        %6560 = vmatprep.mubr.f32.mxu0 0.0
        %6561 = vmatmul.mubr.f32.gmra.mxu0 %v6454
        %v6562 = vpop.f32.mrf.mxu0
        %v6563 = vadd.f32 %v6242, %v6562
        %v6564 = vpop.f32.mrf.mxu0
        %v6565 = vadd.f32 %v6244, %v6564
        %6566 = vmatprep.mubr.f32.mxu0 0.0
        %6567 = vmatmul.mubr.f32.gmra.mxu0 %v6456
        %v6568 = vpop.f32.mrf.mxu0
        %v6569 = vadd.f32 %v6248, %v6568
        %v6570 = vpop.f32.mrf.mxu0
        %v6571 = vadd.f32 %v6250, %v6570
        %6572 = vmatprep.mubr.f32.mxu0 0.0
        %6573 = vmatmul.mubr.f32.gmra.mxu0 %v6458
        %v6574 = vpop.f32.mrf.mxu0
        %v6575 = vadd.f32 %v6254, %v6574
        %v6576 = vpop.f32.mrf.mxu0
        %v6577 = vadd.f32 %v6256, %v6576
        %6578 = vmatprep.mubr.f32.mxu0 0.0
        %6579 = vmatmul.mubr.f32.gmra.mxu0 %v6460
        %v6580 = vpop.f32.mrf.mxu0
        %v6581 = vadd.f32 %v6260, %v6580
        %v6582 = vpop.f32.mrf.mxu0
        %v6583 = vadd.f32 %v6262, %v6582
        %6584 = vmatprep.mubr.f32.mxu0 0.0
        %6585 = vmatmul.mubr.f32.gmra.mxu0 %v6462
        %v6586 = vpop.f32.mrf.mxu0
        %v6587 = vadd.f32 %v6266, %v6586
        %v6588 = vpop.f32.mrf.mxu0
        %v6589 = vadd.f32 %v6268, %v6588
        %6590 = vmatprep.mubr.f32.mxu0 0.0
        %6591 = vmatmul.mubr.f32.gmra.mxu0 %v6464
        %v6592 = vpop.f32.mrf.mxu0
        %v6593 = vadd.f32 %v6272, %v6592
        %v6594 = vpop.f32.mrf.mxu0
        %v6595 = vadd.f32 %v6274, %v6594
        %6596 = vdwg.mxu0
        %s6597 = scalar_lea.vmem %s4, 352
        %v6598 = vld [vmem:[%s6597] sm:$0xff]
        %v6599 = vld [vmem:[%s6597 + $0x8] sm:$0xff]
        %v6600 = vld [vmem:[%s6597 + $0x10] sm:$0xff]
        %v6601 = vld [vmem:[%s6597 + $0x18] sm:$0xff]
        %v6602 = vld [vmem:[%s6597 + $0x20] sm:$0xff]
        %v6603 = vld [vmem:[%s6597 + $0x28] sm:$0xff]
        %v6604 = vld [vmem:[%s6597 + $0x30] sm:$0xff]
        %v6605 = vld [vmem:[%s6597 + $0x38] sm:$0xff]
        %v6606 = vld [vmem:[%s6597 + $0x40] sm:$0xff]
        %v6607 = vld [vmem:[%s6597 + $0x48] sm:$0xff]
        %v6608 = vld [vmem:[%s6597 + $0x50] sm:$0xff]
        %v6609 = vld [vmem:[%s6597 + $0x58] sm:$0xff]
        %v6610 = vld [vmem:[%s6597 + $0x60] sm:$0xff]
        %v6611 = vld [vmem:[%s6597 + $0x68] sm:$0xff]
        %v6612 = vld [vmem:[%s6597 + $0x70] sm:$0xff]
        %v6613 = vld [vmem:[%s6597 + $0x78] sm:$0xff]
        %v6614 = vld [vmem:[%s6597 + $0x80] sm:$0xff]
        %v6615 = vld [vmem:[%s6597 + $0x88] sm:$0xff]
        %v6616 = vld [vmem:[%s6597 + $0x90] sm:$0xff]
        %v6617 = vld [vmem:[%s6597 + $0x98] sm:$0xff]
        %v6618 = vld [vmem:[%s6597 + $0xa0] sm:$0xf]
        %v6619 = vld [vmem:[%s6597 + $0xa8] sm:$0xf]
        %v6620 = vcombine.low %v5554, %v5553
        %v6621 = vcombine.low %v5555, %v5563
        %v6623 = vunpack.c.l.s4 1983009808
        %v6624 = vunpack.c.0.s8 %v6623
        %v6625 = vlaneseq
        %v6626 = vshrl.u32 %v6625, 7
        %v6627 = vsub.s32 %v6624, %v6626
        %v6628 = vrot.slane %v6620, %v6627
        %v6630 = vunpack.c.l.s4 1983009808
        %v6631 = vunpack.c.0.s8 %v6630
        %v6632 = vlaneseq
        %v6633 = vshrl.u32 %v6632, 7
        %v6634 = vsub.s32 %v6631, %v6633
        %v6635 = vrot.slane %v6621, %v6634
        %v6636 = vcombine.low %v6628, %v6635
        %v6637 = vcombine.low %v5571, %v5580
        %v6638 = vcombine.low %v5588, %v5587
        %v6640 = vunpack.c.l.s4 1983009808
        %v6641 = vunpack.c.0.s8 %v6640
        %v6642 = vlaneseq
        %v6643 = vshrl.u32 %v6642, 7
        %v6644 = vsub.s32 %v6641, %v6643
        %v6645 = vrot.slane %v6637, %v6644
        %v6647 = vunpack.c.l.s4 1983009808
        %v6648 = vunpack.c.0.s8 %v6647
        %v6649 = vlaneseq
        %v6650 = vshrl.u32 %v6649, 7
        %v6651 = vsub.s32 %v6648, %v6650
        %v6652 = vrot.slane %v6638, %v6651
        %v6653 = vcombine.low %v6645, %v6652
        %v6654 = vcombine.low %v5589, %v5597
        %v6655 = vcombine.low %v5606, %v5614
        %v6657 = vunpack.c.l.s4 1983009808
        %v6658 = vunpack.c.0.s8 %v6657
        %v6659 = vlaneseq
        %v6660 = vshrl.u32 %v6659, 7
        %v6661 = vsub.s32 %v6658, %v6660
        %v6662 = vrot.slane %v6654, %v6661
        %v6664 = vunpack.c.l.s4 1983009808
        %v6665 = vunpack.c.0.s8 %v6664
        %v6666 = vlaneseq
        %v6667 = vshrl.u32 %v6666, 7
        %v6668 = vsub.s32 %v6665, %v6667
        %v6669 = vrot.slane %v6655, %v6668
        %v6670 = vcombine.low %v6662, %v6669
        %v6671 = vcombine.low %v5622, %v5621
        %v6672 = vcombine.low %v5623, %v5638
        %v6674 = vunpack.c.l.s4 1983009808
        %v6675 = vunpack.c.0.s8 %v6674
        %v6676 = vlaneseq
        %v6677 = vshrl.u32 %v6676, 7
        %v6678 = vsub.s32 %v6675, %v6677
        %v6679 = vrot.slane %v6671, %v6678
        %v6681 = vunpack.c.l.s4 1983009808
        %v6682 = vunpack.c.0.s8 %v6681
        %v6683 = vlaneseq
        %v6684 = vshrl.u32 %v6683, 7
        %v6685 = vsub.s32 %v6682, %v6684
        %v6686 = vrot.slane %v6672, %v6685
        %v6687 = vcombine.low %v6679, %v6686
        %v6688 = vcombine.low %v5640, %v5648
        %v6689 = vcombine.low %v5656, %v5655
        %v6691 = vunpack.c.l.s4 1983009808
        %v6692 = vunpack.c.0.s8 %v6691
        %v6693 = vlaneseq
        %v6694 = vshrl.u32 %v6693, 7
        %v6695 = vsub.s32 %v6692, %v6694
        %v6696 = vrot.slane %v6688, %v6695
        %v6698 = vunpack.c.l.s4 1983009808
        %v6699 = vunpack.c.0.s8 %v6698
        %v6700 = vlaneseq
        %v6701 = vshrl.u32 %v6700, 7
        %v6702 = vsub.s32 %v6699, %v6701
        %v6703 = vrot.slane %v6689, %v6702
        %v6704 = vcombine.low %v6696, %v6703
        %v6705 = vcombine.low %v5673, %v5672
        %v6706 = vcombine.low %v5674, %v5682
        %v6708 = vunpack.c.l.s4 1983009808
        %v6709 = vunpack.c.0.s8 %v6708
        %v6710 = vlaneseq
        %v6711 = vshrl.u32 %v6710, 7
        %v6712 = vsub.s32 %v6709, %v6711
        %v6713 = vrot.slane %v6705, %v6712
        %v6715 = vunpack.c.l.s4 1983009808
        %v6716 = vunpack.c.0.s8 %v6715
        %v6717 = vlaneseq
        %v6718 = vshrl.u32 %v6717, 7
        %v6719 = vsub.s32 %v6716, %v6718
        %v6720 = vrot.slane %v6706, %v6719
        %v6721 = vcombine.low %v6713, %v6720
        %v6722 = vcombine.low %v5690, %v5699
        %v6723 = vcombine.low %v5707, %v5706
        %v6725 = vunpack.c.l.s4 1983009808
        %v6726 = vunpack.c.0.s8 %v6725
        %v6727 = vlaneseq
        %v6728 = vshrl.u32 %v6727, 7
        %v6729 = vsub.s32 %v6726, %v6728
        %v6730 = vrot.slane %v6722, %v6729
        %v6732 = vunpack.c.l.s4 1983009808
        %v6733 = vunpack.c.0.s8 %v6732
        %v6734 = vlaneseq
        %v6735 = vshrl.u32 %v6734, 7
        %v6736 = vsub.s32 %v6733, %v6735
        %v6737 = vrot.slane %v6723, %v6736
        %v6738 = vcombine.low %v6730, %v6737
        %v6739 = vcombine.low %v5708, %v5716
        %v6740 = vcombine.low %v5725, %v5733
        %v6742 = vunpack.c.l.s4 1983009808
        %v6743 = vunpack.c.0.s8 %v6742
        %v6744 = vlaneseq
        %v6745 = vshrl.u32 %v6744, 7
        %v6746 = vsub.s32 %v6743, %v6745
        %v6747 = vrot.slane %v6739, %v6746
        %v6749 = vunpack.c.l.s4 1983009808
        %v6750 = vunpack.c.0.s8 %v6749
        %v6751 = vlaneseq
        %v6752 = vshrl.u32 %v6751, 7
        %v6753 = vsub.s32 %v6750, %v6752
        %v6754 = vrot.slane %v6740, %v6753
        %v6755 = vcombine.low %v6747, %v6754
        %v6756 = vcombine.low %v5741, %v5740
        %v6757 = vcombine.low %v5742, %v5757
        %v6759 = vunpack.c.l.s4 1983009808
        %v6760 = vunpack.c.0.s8 %v6759
        %v6761 = vlaneseq
        %v6762 = vshrl.u32 %v6761, 7
        %v6763 = vsub.s32 %v6760, %v6762
        %v6764 = vrot.slane %v6756, %v6763
        %v6766 = vunpack.c.l.s4 1983009808
        %v6767 = vunpack.c.0.s8 %v6766
        %v6768 = vlaneseq
        %v6769 = vshrl.u32 %v6768, 7
        %v6770 = vsub.s32 %v6767, %v6769
        %v6771 = vrot.slane %v6757, %v6770
        %v6772 = vcombine.low %v6764, %v6771
        %v6773 = vcombine.low %v5759, %v5767
        %v6774 = vcombine.low %v5775, %v5774
        %v6776 = vunpack.c.l.s4 1983009808
        %v6777 = vunpack.c.0.s8 %v6776
        %v6778 = vlaneseq
        %v6779 = vshrl.u32 %v6778, 7
        %v6780 = vsub.s32 %v6777, %v6779
        %v6781 = vrot.slane %v6773, %v6780
        %v6783 = vunpack.c.l.s4 1983009808
        %v6784 = vunpack.c.0.s8 %v6783
        %v6785 = vlaneseq
        %v6786 = vshrl.u32 %v6785, 7
        %v6787 = vsub.s32 %v6784, %v6786
        %v6788 = vrot.slane %v6774, %v6787
        %v6789 = vcombine.low %v6781, %v6788
        %v6790 = vsel %vm6123, %v6636, 0
        %v6792 = vsel %vm6123, %v6653, 0
        %v6794 = vsel %vm6123, %v6670, 0
        %v6796 = vsel %vm6123, %v6687, 0
        %v6798 = vsel %vm6123, %v6704, 0
        %v6800 = vsel %vm6123, %v6721, 0
        %v6802 = vsel %vm6123, %v6738, 0
        %v6804 = vsel %vm6123, %v6755, 0
        %v6806 = vsel %vm6123, %v6772, 0
        %v6808 = vsel %vm6123, %v6789, 0
        %v6811 = vsel %vm6144, %v6618, 0
        %v6814 = vsel %vm6144, %v6619, 0
        %6816 = vmatprep.subr.mxu0 0.0
        %6817 = vmatpush1.msra.mxu0 0.0
        %6818 = vmatprep.subr.mxu0 0.0
        %6819 = vmatpush1.msra.mxu0 0.0
        %6820 = vmatprep.subr.mxu0 0.0
        %6821 = vmatpush1.msra.mxu0 0.0
        %6822 = vmatprep.subr.mxu0 0.0
        %6823 = vmatpush1.msra.mxu0 0.0
        %6824 = vmatprep.subr.mxu0 0.0
        %6825 = vmatpush1.msra.mxu0 0.0
        %6826 = vmatprep.subr.mxu0 %v6814
        %6827 = vmatpush1.msra.mxu0 %v6811
        %6828 = vmatprep.subr.mxu0 %v6617
        %6829 = vmatpush1.msra.mxu0 %v6616
        %6830 = vmatprep.subr.mxu0 %v6615
        %6831 = vmatpush1.msra.mxu0 %v6614
        %6832 = vmatprep.subr.mxu0 %v6613
        %6833 = vmatpush1.msra.mxu0 %v6612
        %6834 = vmatprep.subr.mxu0 %v6611
        %6835 = vmatpush1.msra.mxu0 %v6610
        %6836 = vmatprep.subr.mxu0 %v6609
        %6837 = vmatpush1.msra.mxu0 %v6608
        %6838 = vmatprep.subr.mxu0 %v6607
        %6839 = vmatpush1.msra.mxu0 %v6606
        %6840 = vmatprep.subr.mxu0 %v6605
        %6841 = vmatpush1.msra.mxu0 %v6604
        %6842 = vmatprep.subr.mxu0 %v6603
        %6843 = vmatpush1.msra.mxu0 %v6602
        %6844 = vmatprep.subr.mxu0 %v6601
        %6845 = vmatpush1.msra.mxu0 %v6600
        %6846 = vmatprep.subr.mxu0 %v6599
        %6847 = vmatpush1.msra.mxu0 %v6598
        %6848 = vmatprep.subr.mxu0 0.0
        %6849 = vmatpush2.msra.mxu0 0.0
        %6850 = vmatprep.subr.mxu0 0.0
        %6851 = vmatpush2.msra.mxu0 0.0
        %6852 = vmatprep.subr.mxu0 0.0
        %6853 = vmatpush2.msra.mxu0 0.0
        %6854 = vmatprep.subr.mxu0 0.0
        %6855 = vmatpush2.msra.mxu0 0.0
        %6856 = vmatprep.subr.mxu0 0.0
        %6857 = vmatpush2.msra.mxu0 0.0
        %6858 = vmatprep.subr.mxu0 0.0
        %6859 = vmatpush2.msra.mxu0 0.0
        %6860 = vmatprep.subr.mxu0 0.0
        %6861 = vmatpush2.msra.mxu0 0.0
        %6862 = vmatprep.subr.mxu0 0.0
        %6863 = vmatpush2.msra.mxu0 0.0
        %6864 = vmatprep.subr.mxu0 0.0
        %6865 = vmatpush2.msra.mxu0 0.0
        %6866 = vmatprep.subr.mxu0 0.0
        %6867 = vmatpush2.msra.mxu0 0.0
        %6868 = vmatprep.subr.mxu0 0.0
        %6869 = vmatpush2.msra.mxu0 0.0
        %6870 = vmatprep.subr.mxu0 0.0
        %6871 = vmatpush2.msra.mxu0 0.0
        %6872 = vmatprep.subr.mxu0 0.0
        %6873 = vmatpush2.msra.mxu0 0.0
        %6874 = vmatprep.subr.mxu0 0.0
        %6875 = vmatpush2.msra.mxu0 0.0
        %6876 = vmatprep.subr.mxu0 0.0
        %6877 = vmatpush2.msra.mxu0 0.0
        %6878 = vmatprep.subr.mxu0 0.0
        %6879 = vmatpush2.msra.mxu0 0.0
        %6880 = vmatprep.mubr.f32.mxu0 0.0
        %6881 = vmatmul.mubr.f32.gmra.mxu0 %v6790
        %v6882 = vpop.f32.mrf.mxu0
        %v6883 = vadd.f32 0.0, %v6882
        %v6884 = vpop.f32.mrf.mxu0
        %v6885 = vadd.f32 0.0, %v6884
        %6886 = vmatprep.mubr.f32.mxu0 0.0
        %6887 = vmatmul.mubr.f32.gmra.mxu0 %v6792
        %v6888 = vpop.f32.mrf.mxu0
        %v6889 = vadd.f32 0.0, %v6888
        %v6890 = vpop.f32.mrf.mxu0
        %v6891 = vadd.f32 0.0, %v6890
        %6892 = vmatprep.mubr.f32.mxu0 0.0
        %6893 = vmatmul.mubr.f32.gmra.mxu0 %v6794
        %v6894 = vpop.f32.mrf.mxu0
        %v6895 = vadd.f32 0.0, %v6894
        %v6896 = vpop.f32.mrf.mxu0
        %v6897 = vadd.f32 0.0, %v6896
        %6898 = vmatprep.mubr.f32.mxu0 0.0
        %6899 = vmatmul.mubr.f32.gmra.mxu0 %v6796
        %v6900 = vpop.f32.mrf.mxu0
        %v6901 = vadd.f32 0.0, %v6900
        %v6902 = vpop.f32.mrf.mxu0
        %v6903 = vadd.f32 0.0, %v6902
        %6904 = vmatprep.mubr.f32.mxu0 0.0
        %6905 = vmatmul.mubr.f32.gmra.mxu0 %v6798
        %v6906 = vpop.f32.mrf.mxu0
        %v6907 = vadd.f32 0.0, %v6906
        %v6908 = vpop.f32.mrf.mxu0
        %v6909 = vadd.f32 0.0, %v6908
        %6910 = vmatprep.mubr.f32.mxu0 0.0
        %6911 = vmatmul.mubr.f32.gmra.mxu0 %v6800
        %v6912 = vpop.f32.mrf.mxu0
        %v6913 = vadd.f32 0.0, %v6912
        %v6914 = vpop.f32.mrf.mxu0
        %v6915 = vadd.f32 0.0, %v6914
        %6916 = vmatprep.mubr.f32.mxu0 0.0
        %6917 = vmatmul.mubr.f32.gmra.mxu0 %v6802
        %v6918 = vpop.f32.mrf.mxu0
        %v6919 = vadd.f32 0.0, %v6918
        %v6920 = vpop.f32.mrf.mxu0
        %v6921 = vadd.f32 0.0, %v6920
        %6922 = vmatprep.mubr.f32.mxu0 0.0
        %6923 = vmatmul.mubr.f32.gmra.mxu0 %v6804
        %v6924 = vpop.f32.mrf.mxu0
        %v6925 = vadd.f32 0.0, %v6924
        %v6926 = vpop.f32.mrf.mxu0
        %v6927 = vadd.f32 0.0, %v6926
        %6928 = vmatprep.mubr.f32.mxu0 0.0
        %6929 = vmatmul.mubr.f32.gmra.mxu0 %v6806
        %v6930 = vpop.f32.mrf.mxu0
        %v6931 = vadd.f32 0.0, %v6930
        %v6932 = vpop.f32.mrf.mxu0
        %v6933 = vadd.f32 0.0, %v6932
        %6934 = vmatprep.mubr.f32.mxu0 0.0
        %6935 = vmatmul.mubr.f32.gmra.mxu0 %v6808
        %v6936 = vpop.f32.mrf.mxu0
        %v6937 = vadd.f32 0.0, %v6936
        %v6938 = vpop.f32.mrf.mxu0
        %v6939 = vadd.f32 0.0, %v6938
        %6940 = vdwg.mxu0
        %v6941 = vadd.f32 %v6539, %v6883
        %v6942 = vadd.f32 %v6541, %v6885
        %v6943 = vadd.f32 %v6545, %v6889
        %v6944 = vadd.f32 %v6547, %v6891
        %v6945 = vadd.f32 %v6551, %v6895
        %v6946 = vadd.f32 %v6553, %v6897
        %v6947 = vadd.f32 %v6557, %v6901
        %v6948 = vadd.f32 %v6559, %v6903
        %v6949 = vadd.f32 %v6563, %v6907
        %v6950 = vadd.f32 %v6565, %v6909
        %v6951 = vadd.f32 %v6569, %v6913
        %v6952 = vadd.f32 %v6571, %v6915
        %v6953 = vadd.f32 %v6575, %v6919
        %v6954 = vadd.f32 %v6577, %v6921
        %v6955 = vadd.f32 %v6581, %v6925
        %v6956 = vadd.f32 %v6583, %v6927
        %v6957 = vadd.f32 %v6587, %v6931
        %v6958 = vadd.f32 %v6589, %v6933
        %v6959 = vadd.f32 %v6593, %v6937
        %v6960 = vadd.f32 %v6595, %v6939
        %v6961 = vrot.slane %v5816, 2
        %v6962 = vrot.slane %v5570, 7
        %v6963 = vsel %vm5801, %v6961, %v6962
        %v6964 = vrot.slane %v5832, 2
        %v6965 = vrot.slane %v5605, 7
        %v6966 = vsel %vm5801, %v6964, %v6965
        %v6967 = vrot.slane %v5848, 2
        %v6968 = vrot.slane %v5631, 7
        %v6969 = vsel %vm5801, %v6967, %v6968
        %v6970 = vrot.slane %v5864, 2
        %v6971 = vrot.slane %v5657, 7
        %v6972 = vsel %vm5801, %v6970, %v6971
        %v6973 = vrot.slane %v5880, 2
        %v6974 = vrot.slane %v5689, 7
        %v6975 = vsel %vm5801, %v6973, %v6974
        %v6976 = vrot.slane %v5896, 2
        %v6977 = vrot.slane %v5724, 7
        %v6978 = vsel %vm5801, %v6976, %v6977
        %v6979 = vrot.slane %v5912, 2
        %v6980 = vrot.slane %v5750, 7
        %v6981 = vsel %vm5801, %v6979, %v6980
        %v6982 = vrot.slane %v5928, 2
        %v6983 = vrot.slane %v5776, 7
        %v6984 = vsel %vm5801, %v6982, %v6983
        %s6985 = scalar_lea.vmem %s4, 528
        %v6986 = vld [vmem:[%s6985] sm:$0xff]
        %v6987 = vld [vmem:[%s6985 + $0x8] sm:$0xff]
        %v6988 = vld [vmem:[%s6985 + $0x10] sm:$0xff]
        %v6989 = vld [vmem:[%s6985 + $0x18] sm:$0xff]
        %v6990 = vld [vmem:[%s6985 + $0x20] sm:$0xff]
        %v6991 = vld [vmem:[%s6985 + $0x28] sm:$0xff]
        %v6992 = vld [vmem:[%s6985 + $0x30] sm:$0xff]
        %v6993 = vld [vmem:[%s6985 + $0x38] sm:$0xff]
        %v6994 = vld [vmem:[%s6985 + $0x40] sm:$0xff]
        %v6995 = vld [vmem:[%s6985 + $0x48] sm:$0xff]
        %v6996 = vld [vmem:[%s6985 + $0x50] sm:$0xff]
        %v6997 = vld [vmem:[%s6985 + $0x58] sm:$0xff]
        %v6998 = vld [vmem:[%s6985 + $0x60] sm:$0xff]
        %v6999 = vld [vmem:[%s6985 + $0x68] sm:$0xff]
        %v7000 = vld [vmem:[%s6985 + $0x70] sm:$0xff]
        %v7001 = vld [vmem:[%s6985 + $0x78] sm:$0xff]
        %v7002 = vld [vmem:[%s6985 + $0x80] sm:$0xff]
        %v7003 = vld [vmem:[%s6985 + $0x88] sm:$0xff]
        %v7004 = vld [vmem:[%s6985 + $0x90] sm:$0xff]
        %v7005 = vld [vmem:[%s6985 + $0x98] sm:$0xff]
        %v7006 = vld [vmem:[%s6985 + $0xa0] sm:$0xf]
        %v7007 = vld [vmem:[%s6985 + $0xa8] sm:$0xf]
        %v7008 = vcombine.low %v5808, %v5811
        %v7009 = vcombine.low %v5814, %v5817
        %v7011 = vunpack.c.l.s4 1983009808
        %v7012 = vunpack.c.0.s8 %v7011
        %v7013 = vlaneseq
        %v7014 = vshrl.u32 %v7013, 7
        %v7015 = vsub.s32 %v7012, %v7014
        %v7016 = vrot.slane %v7008, %v7015
        %v7018 = vunpack.c.l.s4 1983009808
        %v7019 = vunpack.c.0.s8 %v7018
        %v7020 = vlaneseq
        %v7021 = vshrl.u32 %v7020, 7
        %v7022 = vsub.s32 %v7019, %v7021
        %v7023 = vrot.slane %v7009, %v7022
        %v7024 = vcombine.low %v7016, %v7023
        %v7025 = vcombine.low %v6963, %v5824
        %v7026 = vcombine.low %v5827, %v5830
        %v7028 = vunpack.c.l.s4 1983009808
        %v7029 = vunpack.c.0.s8 %v7028
        %v7030 = vlaneseq
        %v7031 = vshrl.u32 %v7030, 7
        %v7032 = vsub.s32 %v7029, %v7031
        %v7033 = vrot.slane %v7025, %v7032
        %v7035 = vunpack.c.l.s4 1983009808
        %v7036 = vunpack.c.0.s8 %v7035
        %v7037 = vlaneseq
        %v7038 = vshrl.u32 %v7037, 7
        %v7039 = vsub.s32 %v7036, %v7038
        %v7040 = vrot.slane %v7026, %v7039
        %v7041 = vcombine.low %v7033, %v7040
        %v7042 = vcombine.low %v5833, %v6966
        %v7043 = vcombine.low %v5840, %v5843
        %v7045 = vunpack.c.l.s4 1983009808
        %v7046 = vunpack.c.0.s8 %v7045
        %v7047 = vlaneseq
        %v7048 = vshrl.u32 %v7047, 7
        %v7049 = vsub.s32 %v7046, %v7048
        %v7050 = vrot.slane %v7042, %v7049
        %v7052 = vunpack.c.l.s4 1983009808
        %v7053 = vunpack.c.0.s8 %v7052
        %v7054 = vlaneseq
        %v7055 = vshrl.u32 %v7054, 7
        %v7056 = vsub.s32 %v7053, %v7055
        %v7057 = vrot.slane %v7043, %v7056
        %v7058 = vcombine.low %v7050, %v7057
        %v7059 = vcombine.low %v5846, %v5849
        %v7060 = vcombine.low %v6969, %v5856
        %v7062 = vunpack.c.l.s4 1983009808
        %v7063 = vunpack.c.0.s8 %v7062
        %v7064 = vlaneseq
        %v7065 = vshrl.u32 %v7064, 7
        %v7066 = vsub.s32 %v7063, %v7065
        %v7067 = vrot.slane %v7059, %v7066
        %v7069 = vunpack.c.l.s4 1983009808
        %v7070 = vunpack.c.0.s8 %v7069
        %v7071 = vlaneseq
        %v7072 = vshrl.u32 %v7071, 7
        %v7073 = vsub.s32 %v7070, %v7072
        %v7074 = vrot.slane %v7060, %v7073
        %v7075 = vcombine.low %v7067, %v7074
        %v7076 = vcombine.low %v5859, %v5862
        %v7077 = vcombine.low %v5865, %v6972
        %v7079 = vunpack.c.l.s4 1983009808
        %v7080 = vunpack.c.0.s8 %v7079
        %v7081 = vlaneseq
        %v7082 = vshrl.u32 %v7081, 7
        %v7083 = vsub.s32 %v7080, %v7082
        %v7084 = vrot.slane %v7076, %v7083
        %v7086 = vunpack.c.l.s4 1983009808
        %v7087 = vunpack.c.0.s8 %v7086
        %v7088 = vlaneseq
        %v7089 = vshrl.u32 %v7088, 7
        %v7090 = vsub.s32 %v7087, %v7089
        %v7091 = vrot.slane %v7077, %v7090
        %v7092 = vcombine.low %v7084, %v7091
        %v7093 = vcombine.low %v5872, %v5875
        %v7094 = vcombine.low %v5878, %v5881
        %v7096 = vunpack.c.l.s4 1983009808
        %v7097 = vunpack.c.0.s8 %v7096
        %v7098 = vlaneseq
        %v7099 = vshrl.u32 %v7098, 7
        %v7100 = vsub.s32 %v7097, %v7099
        %v7101 = vrot.slane %v7093, %v7100
        %v7103 = vunpack.c.l.s4 1983009808
        %v7104 = vunpack.c.0.s8 %v7103
        %v7105 = vlaneseq
        %v7106 = vshrl.u32 %v7105, 7
        %v7107 = vsub.s32 %v7104, %v7106
        %v7108 = vrot.slane %v7094, %v7107
        %v7109 = vcombine.low %v7101, %v7108
        %v7110 = vcombine.low %v6975, %v5888
        %v7111 = vcombine.low %v5891, %v5894
        %v7113 = vunpack.c.l.s4 1983009808
        %v7114 = vunpack.c.0.s8 %v7113
        %v7115 = vlaneseq
        %v7116 = vshrl.u32 %v7115, 7
        %v7117 = vsub.s32 %v7114, %v7116
        %v7118 = vrot.slane %v7110, %v7117
        %v7120 = vunpack.c.l.s4 1983009808
        %v7121 = vunpack.c.0.s8 %v7120
        %v7122 = vlaneseq
        %v7123 = vshrl.u32 %v7122, 7
        %v7124 = vsub.s32 %v7121, %v7123
        %v7125 = vrot.slane %v7111, %v7124
        %v7126 = vcombine.low %v7118, %v7125
        %v7127 = vcombine.low %v5897, %v6978
        %v7128 = vcombine.low %v5904, %v5907
        %v7130 = vunpack.c.l.s4 1983009808
        %v7131 = vunpack.c.0.s8 %v7130
        %v7132 = vlaneseq
        %v7133 = vshrl.u32 %v7132, 7
        %v7134 = vsub.s32 %v7131, %v7133
        %v7135 = vrot.slane %v7127, %v7134
        %v7137 = vunpack.c.l.s4 1983009808
        %v7138 = vunpack.c.0.s8 %v7137
        %v7139 = vlaneseq
        %v7140 = vshrl.u32 %v7139, 7
        %v7141 = vsub.s32 %v7138, %v7140
        %v7142 = vrot.slane %v7128, %v7141
        %v7143 = vcombine.low %v7135, %v7142
        %v7144 = vcombine.low %v5910, %v5913
        %v7145 = vcombine.low %v6981, %v5920
        %v7147 = vunpack.c.l.s4 1983009808
        %v7148 = vunpack.c.0.s8 %v7147
        %v7149 = vlaneseq
        %v7150 = vshrl.u32 %v7149, 7
        %v7151 = vsub.s32 %v7148, %v7150
        %v7152 = vrot.slane %v7144, %v7151
        %v7154 = vunpack.c.l.s4 1983009808
        %v7155 = vunpack.c.0.s8 %v7154
        %v7156 = vlaneseq
        %v7157 = vshrl.u32 %v7156, 7
        %v7158 = vsub.s32 %v7155, %v7157
        %v7159 = vrot.slane %v7145, %v7158
        %v7160 = vcombine.low %v7152, %v7159
        %v7161 = vcombine.low %v5923, %v5926
        %v7162 = vcombine.low %v5929, %v6984
        %v7164 = vunpack.c.l.s4 1983009808
        %v7165 = vunpack.c.0.s8 %v7164
        %v7166 = vlaneseq
        %v7167 = vshrl.u32 %v7166, 7
        %v7168 = vsub.s32 %v7165, %v7167
        %v7169 = vrot.slane %v7161, %v7168
        %v7171 = vunpack.c.l.s4 1983009808
        %v7172 = vunpack.c.0.s8 %v7171
        %v7173 = vlaneseq
        %v7174 = vshrl.u32 %v7173, 7
        %v7175 = vsub.s32 %v7172, %v7174
        %v7176 = vrot.slane %v7162, %v7175
        %v7177 = vcombine.low %v7169, %v7176
        %v7178 = vsel %vm6123, %v7024, 0
        %v7180 = vsel %vm6123, %v7041, 0
        %v7182 = vsel %vm6123, %v7058, 0
        %v7184 = vsel %vm6123, %v7075, 0
        %v7186 = vsel %vm6123, %v7092, 0
        %v7188 = vsel %vm6123, %v7109, 0
        %v7190 = vsel %vm6123, %v7126, 0
        %v7192 = vsel %vm6123, %v7143, 0
        %v7194 = vsel %vm6123, %v7160, 0
        %v7196 = vsel %vm6123, %v7177, 0
        %v7199 = vsel %vm6144, %v7006, 0
        %v7202 = vsel %vm6144, %v7007, 0
        %7204 = vmatprep.subr.mxu0 0.0
        %7205 = vmatpush1.msra.mxu0 0.0
        %7206 = vmatprep.subr.mxu0 0.0
        %7207 = vmatpush1.msra.mxu0 0.0
        %7208 = vmatprep.subr.mxu0 0.0
        %7209 = vmatpush1.msra.mxu0 0.0
        %7210 = vmatprep.subr.mxu0 0.0
        %7211 = vmatpush1.msra.mxu0 0.0
        %7212 = vmatprep.subr.mxu0 0.0
        %7213 = vmatpush1.msra.mxu0 0.0
        %7214 = vmatprep.subr.mxu0 %v7202
        %7215 = vmatpush1.msra.mxu0 %v7199
        %7216 = vmatprep.subr.mxu0 %v7005
        %7217 = vmatpush1.msra.mxu0 %v7004
        %7218 = vmatprep.subr.mxu0 %v7003
        %7219 = vmatpush1.msra.mxu0 %v7002
        %7220 = vmatprep.subr.mxu0 %v7001
        %7221 = vmatpush1.msra.mxu0 %v7000
        %7222 = vmatprep.subr.mxu0 %v6999
        %7223 = vmatpush1.msra.mxu0 %v6998
        %7224 = vmatprep.subr.mxu0 %v6997
        %7225 = vmatpush1.msra.mxu0 %v6996
        %7226 = vmatprep.subr.mxu0 %v6995
        %7227 = vmatpush1.msra.mxu0 %v6994
        %7228 = vmatprep.subr.mxu0 %v6993
        %7229 = vmatpush1.msra.mxu0 %v6992
        %7230 = vmatprep.subr.mxu0 %v6991
        %7231 = vmatpush1.msra.mxu0 %v6990
        %7232 = vmatprep.subr.mxu0 %v6989
        %7233 = vmatpush1.msra.mxu0 %v6988
        %7234 = vmatprep.subr.mxu0 %v6987
        %7235 = vmatpush1.msra.mxu0 %v6986
        %7236 = vmatprep.subr.mxu0 0.0
        %7237 = vmatpush2.msra.mxu0 0.0
        %7238 = vmatprep.subr.mxu0 0.0
        %7239 = vmatpush2.msra.mxu0 0.0
        %7240 = vmatprep.subr.mxu0 0.0
        %7241 = vmatpush2.msra.mxu0 0.0
        %7242 = vmatprep.subr.mxu0 0.0
        %7243 = vmatpush2.msra.mxu0 0.0
        %7244 = vmatprep.subr.mxu0 0.0
        %7245 = vmatpush2.msra.mxu0 0.0
        %7246 = vmatprep.subr.mxu0 0.0
        %7247 = vmatpush2.msra.mxu0 0.0
        %7248 = vmatprep.subr.mxu0 0.0
        %7249 = vmatpush2.msra.mxu0 0.0
        %7250 = vmatprep.subr.mxu0 0.0
        %7251 = vmatpush2.msra.mxu0 0.0
        %7252 = vmatprep.subr.mxu0 0.0
        %7253 = vmatpush2.msra.mxu0 0.0
        %7254 = vmatprep.subr.mxu0 0.0
        %7255 = vmatpush2.msra.mxu0 0.0
        %7256 = vmatprep.subr.mxu0 0.0
        %7257 = vmatpush2.msra.mxu0 0.0
        %7258 = vmatprep.subr.mxu0 0.0
        %7259 = vmatpush2.msra.mxu0 0.0
        %7260 = vmatprep.subr.mxu0 0.0
        %7261 = vmatpush2.msra.mxu0 0.0
        %7262 = vmatprep.subr.mxu0 0.0
        %7263 = vmatpush2.msra.mxu0 0.0
        %7264 = vmatprep.subr.mxu0 0.0
        %7265 = vmatpush2.msra.mxu0 0.0
        %7266 = vmatprep.subr.mxu0 0.0
        %7267 = vmatpush2.msra.mxu0 0.0
        %7268 = vmatprep.mubr.f32.mxu0 0.0
        %7269 = vmatmul.mubr.f32.gmra.mxu0 %v7178
        %v7270 = vpop.f32.mrf.mxu0
        %v7271 = vadd.f32 0.0, %v7270
        %v7272 = vpop.f32.mrf.mxu0
        %v7273 = vadd.f32 0.0, %v7272
        %7274 = vmatprep.mubr.f32.mxu0 0.0
        %7275 = vmatmul.mubr.f32.gmra.mxu0 %v7180
        %v7276 = vpop.f32.mrf.mxu0
        %v7277 = vadd.f32 0.0, %v7276
        %v7278 = vpop.f32.mrf.mxu0
        %v7279 = vadd.f32 0.0, %v7278
        %7280 = vmatprep.mubr.f32.mxu0 0.0
        %7281 = vmatmul.mubr.f32.gmra.mxu0 %v7182
        %v7282 = vpop.f32.mrf.mxu0
        %v7283 = vadd.f32 0.0, %v7282
        %v7284 = vpop.f32.mrf.mxu0
        %v7285 = vadd.f32 0.0, %v7284
        %7286 = vmatprep.mubr.f32.mxu0 0.0
        %7287 = vmatmul.mubr.f32.gmra.mxu0 %v7184
        %v7288 = vpop.f32.mrf.mxu0
        %v7289 = vadd.f32 0.0, %v7288
        %v7290 = vpop.f32.mrf.mxu0
        %v7291 = vadd.f32 0.0, %v7290
        %7292 = vmatprep.mubr.f32.mxu0 0.0
        %7293 = vmatmul.mubr.f32.gmra.mxu0 %v7186
        %v7294 = vpop.f32.mrf.mxu0
        %v7295 = vadd.f32 0.0, %v7294
        %v7296 = vpop.f32.mrf.mxu0
        %v7297 = vadd.f32 0.0, %v7296
        %7298 = vmatprep.mubr.f32.mxu0 0.0
        %7299 = vmatmul.mubr.f32.gmra.mxu0 %v7188
        %v7300 = vpop.f32.mrf.mxu0
        %v7301 = vadd.f32 0.0, %v7300
        %v7302 = vpop.f32.mrf.mxu0
        %v7303 = vadd.f32 0.0, %v7302
        %7304 = vmatprep.mubr.f32.mxu0 0.0
        %7305 = vmatmul.mubr.f32.gmra.mxu0 %v7190
        %v7306 = vpop.f32.mrf.mxu0
        %v7307 = vadd.f32 0.0, %v7306
        %v7308 = vpop.f32.mrf.mxu0
        %v7309 = vadd.f32 0.0, %v7308
        %7310 = vmatprep.mubr.f32.mxu0 0.0
        %7311 = vmatmul.mubr.f32.gmra.mxu0 %v7192
        %v7312 = vpop.f32.mrf.mxu0
        %v7313 = vadd.f32 0.0, %v7312
        %v7314 = vpop.f32.mrf.mxu0
        %v7315 = vadd.f32 0.0, %v7314
        %7316 = vmatprep.mubr.f32.mxu0 0.0
        %7317 = vmatmul.mubr.f32.gmra.mxu0 %v7194
        %v7318 = vpop.f32.mrf.mxu0
        %v7319 = vadd.f32 0.0, %v7318
        %v7320 = vpop.f32.mrf.mxu0
        %v7321 = vadd.f32 0.0, %v7320
        %7322 = vmatprep.mubr.f32.mxu0 0.0
        %7323 = vmatmul.mubr.f32.gmra.mxu0 %v7196
        %v7324 = vpop.f32.mrf.mxu0
        %v7325 = vadd.f32 0.0, %v7324
        %v7326 = vpop.f32.mrf.mxu0
        %v7327 = vadd.f32 0.0, %v7326
        %7328 = vdwg.mxu0
        %v7329 = vadd.f32 %v6941, %v7271
        %v7330 = vadd.f32 %v6942, %v7273
        %v7331 = vadd.f32 %v6943, %v7277
        %v7332 = vadd.f32 %v6944, %v7279
        %v7333 = vadd.f32 %v6945, %v7283
        %v7334 = vadd.f32 %v6946, %v7285
        %v7335 = vadd.f32 %v6947, %v7289
        %v7336 = vadd.f32 %v6948, %v7291
        %v7337 = vadd.f32 %v6949, %v7295
        %v7338 = vadd.f32 %v6950, %v7297
        %v7339 = vadd.f32 %v6951, %v7301
        %v7340 = vadd.f32 %v6952, %v7303
        %v7341 = vadd.f32 %v6953, %v7307
        %v7342 = vadd.f32 %v6954, %v7309
        %v7343 = vadd.f32 %v6955, %v7313
        %v7344 = vadd.f32 %v6956, %v7315
        %v7345 = vadd.f32 %v6957, %v7319
        %v7346 = vadd.f32 %v6958, %v7321
        %v7347 = vadd.f32 %v6959, %v7325
        %v7348 = vadd.f32 %v6960, %v7327
        %s7349 = scalar_lea.vmem %s4, 704
        %v7350 = vld [vmem:[%s7349] sm:$0xff]
        %v7351 = vld [vmem:[%s7349 + $0x8] sm:$0xff]
        %v7352 = vld [vmem:[%s7349 + $0x10] sm:$0xff]
        %v7353 = vld [vmem:[%s7349 + $0x18] sm:$0xff]
        %v7354 = vld [vmem:[%s7349 + $0x20] sm:$0xff]
        %v7355 = vld [vmem:[%s7349 + $0x28] sm:$0xff]
        %v7356 = vld [vmem:[%s7349 + $0x30] sm:$0xff]
        %v7357 = vld [vmem:[%s7349 + $0x38] sm:$0xff]
        %v7358 = vld [vmem:[%s7349 + $0x40] sm:$0xff]
        %v7359 = vld [vmem:[%s7349 + $0x48] sm:$0xff]
        %v7360 = vld [vmem:[%s7349 + $0x50] sm:$0xff]
        %v7361 = vld [vmem:[%s7349 + $0x58] sm:$0xff]
        %v7362 = vld [vmem:[%s7349 + $0x60] sm:$0xff]
        %v7363 = vld [vmem:[%s7349 + $0x68] sm:$0xff]
        %v7364 = vld [vmem:[%s7349 + $0x70] sm:$0xff]
        %v7365 = vld [vmem:[%s7349 + $0x78] sm:$0xff]
        %v7366 = vld [vmem:[%s7349 + $0x80] sm:$0xff]
        %v7367 = vld [vmem:[%s7349 + $0x88] sm:$0xff]
        %v7368 = vld [vmem:[%s7349 + $0x90] sm:$0xff]
        %v7369 = vld [vmem:[%s7349 + $0x98] sm:$0xff]
        %v7370 = vld [vmem:[%s7349 + $0xa0] sm:$0xf]
        %v7371 = vld [vmem:[%s7349 + $0xa8] sm:$0xf]
        %v7372 = vcombine.low %v5563, %v5571
        %v7374 = vunpack.c.l.s4 1983009808
        %v7375 = vunpack.c.0.s8 %v7374
        %v7376 = vlaneseq
        %v7377 = vshrl.u32 %v7376, 7
        %v7378 = vsub.s32 %v7375, %v7377
        %v7379 = vrot.slane %v7372, %v7378
        %v7380 = vcombine.low %v6291, %v7379
        %v7381 = vcombine.low %v5570, %v5588
        %v7383 = vunpack.c.l.s4 1983009808
        %v7384 = vunpack.c.0.s8 %v7383
        %v7385 = vlaneseq
        %v7386 = vshrl.u32 %v7385, 7
        %v7387 = vsub.s32 %v7384, %v7386
        %v7388 = vrot.slane %v7381, %v7387
        %v7389 = vcombine.low %v7388, %v6318
        %v7390 = vcombine.low %v5597, %v5605
        %v7392 = vunpack.c.l.s4 1983009808
        %v7393 = vunpack.c.0.s8 %v7392
        %v7394 = vlaneseq
        %v7395 = vshrl.u32 %v7394, 7
        %v7396 = vsub.s32 %v7393, %v7395
        %v7397 = vrot.slane %v7390, %v7396
        %v7398 = vcombine.low %v7397, %v6335
        %v7399 = vcombine.low %v5621, %v5623
        %v7400 = vcombine.low %v5631, %v5640
        %v7402 = vunpack.c.l.s4 1983009808
        %v7403 = vunpack.c.0.s8 %v7402
        %v7404 = vlaneseq
        %v7405 = vshrl.u32 %v7404, 7
        %v7406 = vsub.s32 %v7403, %v7405
        %v7407 = vrot.slane %v7399, %v7406
        %v7409 = vunpack.c.l.s4 1983009808
        %v7410 = vunpack.c.0.s8 %v7409
        %v7411 = vlaneseq
        %v7412 = vshrl.u32 %v7411, 7
        %v7413 = vsub.s32 %v7410, %v7412
        %v7414 = vrot.slane %v7400, %v7413
        %v7415 = vcombine.low %v7407, %v7414
        %v7416 = vcombine.low %v5655, %v5657
        %v7418 = vunpack.c.l.s4 1983009808
        %v7419 = vunpack.c.0.s8 %v7418
        %v7420 = vlaneseq
        %v7421 = vshrl.u32 %v7420, 7
        %v7422 = vsub.s32 %v7419, %v7421
        %v7423 = vrot.slane %v7416, %v7422
        %v7424 = vcombine.low %v6359, %v7423
        %v7425 = vcombine.low %v5682, %v5690
        %v7427 = vunpack.c.l.s4 1983009808
        %v7428 = vunpack.c.0.s8 %v7427
        %v7429 = vlaneseq
        %v7430 = vshrl.u32 %v7429, 7
        %v7431 = vsub.s32 %v7428, %v7430
        %v7432 = vrot.slane %v7425, %v7431
        %v7433 = vcombine.low %v6376, %v7432
        %v7434 = vcombine.low %v5689, %v5707
        %v7436 = vunpack.c.l.s4 1983009808
        %v7437 = vunpack.c.0.s8 %v7436
        %v7438 = vlaneseq
        %v7439 = vshrl.u32 %v7438, 7
        %v7440 = vsub.s32 %v7437, %v7439
        %v7441 = vrot.slane %v7434, %v7440
        %v7442 = vcombine.low %v7441, %v6403
        %v7443 = vcombine.low %v5716, %v5724
        %v7445 = vunpack.c.l.s4 1983009808
        %v7446 = vunpack.c.0.s8 %v7445
        %v7447 = vlaneseq
        %v7448 = vshrl.u32 %v7447, 7
        %v7449 = vsub.s32 %v7446, %v7448
        %v7450 = vrot.slane %v7443, %v7449
        %v7451 = vcombine.low %v7450, %v6420
        %v7452 = vcombine.low %v5740, %v5742
        %v7453 = vcombine.low %v5750, %v5759
        %v7455 = vunpack.c.l.s4 1983009808
        %v7456 = vunpack.c.0.s8 %v7455
        %v7457 = vlaneseq
        %v7458 = vshrl.u32 %v7457, 7
        %v7459 = vsub.s32 %v7456, %v7458
        %v7460 = vrot.slane %v7452, %v7459
        %v7462 = vunpack.c.l.s4 1983009808
        %v7463 = vunpack.c.0.s8 %v7462
        %v7464 = vlaneseq
        %v7465 = vshrl.u32 %v7464, 7
        %v7466 = vsub.s32 %v7463, %v7465
        %v7467 = vrot.slane %v7453, %v7466
        %v7468 = vcombine.low %v7460, %v7467
        %v7469 = vcombine.low %v5774, %v5776
        %v7471 = vunpack.c.l.s4 1983009808
        %v7472 = vunpack.c.0.s8 %v7471
        %v7473 = vlaneseq
        %v7474 = vshrl.u32 %v7473, 7
        %v7475 = vsub.s32 %v7472, %v7474
        %v7476 = vrot.slane %v7469, %v7475
        %v7477 = vcombine.low %v6444, %v7476
        %v7478 = vsel %vm6123, %v7380, 0
        %v7480 = vsel %vm6123, %v7389, 0
        %v7482 = vsel %vm6123, %v7398, 0
        %v7484 = vsel %vm6123, %v7415, 0
        %v7486 = vsel %vm6123, %v7424, 0
        %v7488 = vsel %vm6123, %v7433, 0
        %v7490 = vsel %vm6123, %v7442, 0
        %v7492 = vsel %vm6123, %v7451, 0
        %v7494 = vsel %vm6123, %v7468, 0
        %v7496 = vsel %vm6123, %v7477, 0
        %v7499 = vsel %vm6144, %v7370, 0
        %v7502 = vsel %vm6144, %v7371, 0
        %7504 = vmatprep.subr.mxu0 0.0
        %7505 = vmatpush1.msra.mxu0 0.0
        %7506 = vmatprep.subr.mxu0 0.0
        %7507 = vmatpush1.msra.mxu0 0.0
        %7508 = vmatprep.subr.mxu0 0.0
        %7509 = vmatpush1.msra.mxu0 0.0
        %7510 = vmatprep.subr.mxu0 0.0
        %7511 = vmatpush1.msra.mxu0 0.0
        %7512 = vmatprep.subr.mxu0 0.0
        %7513 = vmatpush1.msra.mxu0 0.0
        %7514 = vmatprep.subr.mxu0 %v7502
        %7515 = vmatpush1.msra.mxu0 %v7499
        %7516 = vmatprep.subr.mxu0 %v7369
        %7517 = vmatpush1.msra.mxu0 %v7368
        %7518 = vmatprep.subr.mxu0 %v7367
        %7519 = vmatpush1.msra.mxu0 %v7366
        %7520 = vmatprep.subr.mxu0 %v7365
        %7521 = vmatpush1.msra.mxu0 %v7364
        %7522 = vmatprep.subr.mxu0 %v7363
        %7523 = vmatpush1.msra.mxu0 %v7362
        %7524 = vmatprep.subr.mxu0 %v7361
        %7525 = vmatpush1.msra.mxu0 %v7360
        %7526 = vmatprep.subr.mxu0 %v7359
        %7527 = vmatpush1.msra.mxu0 %v7358
        %7528 = vmatprep.subr.mxu0 %v7357
        %7529 = vmatpush1.msra.mxu0 %v7356
        %7530 = vmatprep.subr.mxu0 %v7355
        %7531 = vmatpush1.msra.mxu0 %v7354
        %7532 = vmatprep.subr.mxu0 %v7353
        %7533 = vmatpush1.msra.mxu0 %v7352
        %7534 = vmatprep.subr.mxu0 %v7351
        %7535 = vmatpush1.msra.mxu0 %v7350
        %7536 = vmatprep.subr.mxu0 0.0
        %7537 = vmatpush2.msra.mxu0 0.0
        %7538 = vmatprep.subr.mxu0 0.0
        %7539 = vmatpush2.msra.mxu0 0.0
        %7540 = vmatprep.subr.mxu0 0.0
        %7541 = vmatpush2.msra.mxu0 0.0
        %7542 = vmatprep.subr.mxu0 0.0
        %7543 = vmatpush2.msra.mxu0 0.0
        %7544 = vmatprep.subr.mxu0 0.0
        %7545 = vmatpush2.msra.mxu0 0.0
        %7546 = vmatprep.subr.mxu0 0.0
        %7547 = vmatpush2.msra.mxu0 0.0
        %7548 = vmatprep.subr.mxu0 0.0
        %7549 = vmatpush2.msra.mxu0 0.0
        %7550 = vmatprep.subr.mxu0 0.0
        %7551 = vmatpush2.msra.mxu0 0.0
        %7552 = vmatprep.subr.mxu0 0.0
        %7553 = vmatpush2.msra.mxu0 0.0
        %7554 = vmatprep.subr.mxu0 0.0
        %7555 = vmatpush2.msra.mxu0 0.0
        %7556 = vmatprep.subr.mxu0 0.0
        %7557 = vmatpush2.msra.mxu0 0.0
        %7558 = vmatprep.subr.mxu0 0.0
        %7559 = vmatpush2.msra.mxu0 0.0
        %7560 = vmatprep.subr.mxu0 0.0
        %7561 = vmatpush2.msra.mxu0 0.0
        %7562 = vmatprep.subr.mxu0 0.0
        %7563 = vmatpush2.msra.mxu0 0.0
        %7564 = vmatprep.subr.mxu0 0.0
        %7565 = vmatpush2.msra.mxu0 0.0
        %7566 = vmatprep.subr.mxu0 0.0
        %7567 = vmatpush2.msra.mxu0 0.0
        %7568 = vmatprep.mubr.f32.mxu0 0.0
        %7569 = vmatmul.mubr.f32.gmra.mxu0 %v7478
        %v7570 = vpop.f32.mrf.mxu0
        %v7571 = vadd.f32 0.0, %v7570
        %v7572 = vpop.f32.mrf.mxu0
        %v7573 = vadd.f32 0.0, %v7572
        %7574 = vmatprep.mubr.f32.mxu0 0.0
        %7575 = vmatmul.mubr.f32.gmra.mxu0 %v7480
        %v7576 = vpop.f32.mrf.mxu0
        %v7577 = vadd.f32 0.0, %v7576
        %v7578 = vpop.f32.mrf.mxu0
        %v7579 = vadd.f32 0.0, %v7578
        %7580 = vmatprep.mubr.f32.mxu0 0.0
        %7581 = vmatmul.mubr.f32.gmra.mxu0 %v7482
        %v7582 = vpop.f32.mrf.mxu0
        %v7583 = vadd.f32 0.0, %v7582
        %v7584 = vpop.f32.mrf.mxu0
        %v7585 = vadd.f32 0.0, %v7584
        %7586 = vmatprep.mubr.f32.mxu0 0.0
        %7587 = vmatmul.mubr.f32.gmra.mxu0 %v7484
        %v7588 = vpop.f32.mrf.mxu0
        %v7589 = vadd.f32 0.0, %v7588
        %v7590 = vpop.f32.mrf.mxu0
        %v7591 = vadd.f32 0.0, %v7590
        %7592 = vmatprep.mubr.f32.mxu0 0.0
        %7593 = vmatmul.mubr.f32.gmra.mxu0 %v7486
        %v7594 = vpop.f32.mrf.mxu0
        %v7595 = vadd.f32 0.0, %v7594
        %v7596 = vpop.f32.mrf.mxu0
        %v7597 = vadd.f32 0.0, %v7596
        %7598 = vmatprep.mubr.f32.mxu0 0.0
        %7599 = vmatmul.mubr.f32.gmra.mxu0 %v7488
        %v7600 = vpop.f32.mrf.mxu0
        %v7601 = vadd.f32 0.0, %v7600
        %v7602 = vpop.f32.mrf.mxu0
        %v7603 = vadd.f32 0.0, %v7602
        %7604 = vmatprep.mubr.f32.mxu0 0.0
        %7605 = vmatmul.mubr.f32.gmra.mxu0 %v7490
        %v7606 = vpop.f32.mrf.mxu0
        %v7607 = vadd.f32 0.0, %v7606
        %v7608 = vpop.f32.mrf.mxu0
        %v7609 = vadd.f32 0.0, %v7608
        %7610 = vmatprep.mubr.f32.mxu0 0.0
        %7611 = vmatmul.mubr.f32.gmra.mxu0 %v7492
        %v7612 = vpop.f32.mrf.mxu0
        %v7613 = vadd.f32 0.0, %v7612
        %v7614 = vpop.f32.mrf.mxu0
        %v7615 = vadd.f32 0.0, %v7614
        %7616 = vmatprep.mubr.f32.mxu0 0.0
        %7617 = vmatmul.mubr.f32.gmra.mxu0 %v7494
        %v7618 = vpop.f32.mrf.mxu0
        %v7619 = vadd.f32 0.0, %v7618
        %v7620 = vpop.f32.mrf.mxu0
        %v7621 = vadd.f32 0.0, %v7620
        %7622 = vmatprep.mubr.f32.mxu0 0.0
        %7623 = vmatmul.mubr.f32.gmra.mxu0 %v7496
        %v7624 = vpop.f32.mrf.mxu0
        %v7625 = vadd.f32 0.0, %v7624
        %v7626 = vpop.f32.mrf.mxu0
        %v7627 = vadd.f32 0.0, %v7626
        %7628 = vdwg.mxu0
        %v7629 = vadd.f32 %v7329, %v7571
        %v7630 = vadd.f32 %v7330, %v7573
        %v7631 = vadd.f32 %v7331, %v7577
        %v7632 = vadd.f32 %v7332, %v7579
        %v7633 = vadd.f32 %v7333, %v7583
        %v7634 = vadd.f32 %v7334, %v7585
        %v7635 = vadd.f32 %v7335, %v7589
        %v7636 = vadd.f32 %v7336, %v7591
        %v7637 = vadd.f32 %v7337, %v7595
        %v7638 = vadd.f32 %v7338, %v7597
        %v7639 = vadd.f32 %v7339, %v7601
        %v7640 = vadd.f32 %v7340, %v7603
        %v7641 = vadd.f32 %v7341, %v7607
        %v7642 = vadd.f32 %v7342, %v7609
        %v7643 = vadd.f32 %v7343, %v7613
        %v7644 = vadd.f32 %v7344, %v7615
        %v7645 = vadd.f32 %v7345, %v7619
        %v7646 = vadd.f32 %v7346, %v7621
        %v7647 = vadd.f32 %v7347, %v7625
        %v7648 = vadd.f32 %v7348, %v7627
        %v7649 = vld [vmem:[%s5] sm:$0x3]
        %v7651 = vlaneseq
        %v7652 = vshrl.u32 %v7651, 7
        %v7653 = vsub.s32 0, %v7652
        %v7654 = vrot.slane %v7649, %v7653
        %v7655 = vlaneseq
        %v7656 = vshrl.u32 %v7655, 7
        %v7657 = vsub.s32 1, %v7656
        %v7658 = vrot.slane %v7649, %v7657
        %v7661 = vadd.f32 %v7629, %v7654
        %v7662 = vadd.f32 %v7630, %v7658
        %v7663 = vadd.f32 %v7631, %v7654
        %v7664 = vadd.f32 %v7632, %v7658
        %v7665 = vadd.f32 %v7633, %v7654
        %v7666 = vadd.f32 %v7634, %v7658
        %v7667 = vadd.f32 %v7635, %v7654
        %v7668 = vadd.f32 %v7636, %v7658
        %v7669 = vadd.f32 %v7637, %v7654
        %v7670 = vadd.f32 %v7638, %v7658
        %v7671 = vadd.f32 %v7639, %v7654
        %v7672 = vadd.f32 %v7640, %v7658
        %v7673 = vadd.f32 %v7641, %v7654
        %v7674 = vadd.f32 %v7642, %v7658
        %v7675 = vadd.f32 %v7643, %v7654
        %v7676 = vadd.f32 %v7644, %v7658
        %v7677 = vadd.f32 %v7645, %v7654
        %v7678 = vadd.f32 %v7646, %v7658
        %v7679 = vadd.f32 %v7647, %v7654
        %v7680 = vadd.f32 %v7648, %v7658
        %v7681 = vmax.f32 %v7661, 0.0
        %v7682 = vmax.f32 %v7662, 0.0
        %v7683 = vmax.f32 %v7663, 0.0
        %v7684 = vmax.f32 %v7664, 0.0
        %v7685 = vmax.f32 %v7665, 0.0
        %v7686 = vmax.f32 %v7666, 0.0
        %v7687 = vmax.f32 %v7667, 0.0
        %v7688 = vmax.f32 %v7668, 0.0
        %v7689 = vmax.f32 %v7669, 0.0
        %v7690 = vmax.f32 %v7670, 0.0
        %v7691 = vmax.f32 %v7671, 0.0
        %v7692 = vmax.f32 %v7672, 0.0
        %v7693 = vmax.f32 %v7673, 0.0
        %v7694 = vmax.f32 %v7674, 0.0
        %v7695 = vmax.f32 %v7675, 0.0
        %v7696 = vmax.f32 %v7676, 0.0
        %v7697 = vmax.f32 %v7677, 0.0
        %v7698 = vmax.f32 %v7678, 0.0
        %v7699 = vmax.f32 %v7679, 0.0
        %v7700 = vmax.f32 %v7680, 0.0
        %v7721 = vcombine.low %v7681, %v7682
        %v7722 = vcombine.high %v7681, %v7682
        %v7724 = vunpack.c.l.s4 1983009808
        %v7725 = vunpack.c.0.s8 %v7724
        %v7726 = vlaneseq
        %v7727 = vshrl.u32 %v7726, 7
        %v7728 = vsub.s32 %v7725, %v7727
        %v7729 = vrot.slane %v7721, %v7728
        %v7731 = vunpack.c.l.s4 1983009808
        %v7732 = vunpack.c.0.s8 %v7731
        %v7733 = vlaneseq
        %v7734 = vshrl.u32 %v7733, 7
        %v7735 = vsub.s32 %v7732, %v7734
        %v7736 = vrot.slane %v7722, %v7735
        %v7737 = vcombine.high %v7729, %v7729
        %v7738 = vcombine.high %v7736, %v7736
        %v7739 = vcombine.low %v7683, %v7684
        %v7740 = vcombine.high %v7683, %v7684
        %v7742 = vunpack.c.l.s4 1983009808
        %v7743 = vunpack.c.0.s8 %v7742
        %v7744 = vlaneseq
        %v7745 = vshrl.u32 %v7744, 7
        %v7746 = vsub.s32 %v7743, %v7745
        %v7747 = vrot.slane %v7739, %v7746
        %v7749 = vunpack.c.l.s4 1983009808
        %v7750 = vunpack.c.0.s8 %v7749
        %v7751 = vlaneseq
        %v7752 = vshrl.u32 %v7751, 7
        %v7753 = vsub.s32 %v7750, %v7752
        %v7754 = vrot.slane %v7740, %v7753
        %v7755 = vcombine.high %v7747, %v7747
        %v7756 = vcombine.high %v7754, %v7754
        %v7757 = vcombine.low %v7685, %v7686
        %v7758 = vcombine.high %v7685, %v7686
        %v7760 = vunpack.c.l.s4 1983009808
        %v7761 = vunpack.c.0.s8 %v7760
        %v7762 = vlaneseq
        %v7763 = vshrl.u32 %v7762, 7
        %v7764 = vsub.s32 %v7761, %v7763
        %v7765 = vrot.slane %v7757, %v7764
        %v7767 = vunpack.c.l.s4 1983009808
        %v7768 = vunpack.c.0.s8 %v7767
        %v7769 = vlaneseq
        %v7770 = vshrl.u32 %v7769, 7
        %v7771 = vsub.s32 %v7768, %v7770
        %v7772 = vrot.slane %v7758, %v7771
        %v7773 = vcombine.high %v7765, %v7765
        %v7774 = vcombine.high %v7772, %v7772
        %v7775 = vcombine.low %v7687, %v7688
        %v7776 = vcombine.high %v7687, %v7688
        %v7778 = vunpack.c.l.s4 1983009808
        %v7779 = vunpack.c.0.s8 %v7778
        %v7780 = vlaneseq
        %v7781 = vshrl.u32 %v7780, 7
        %v7782 = vsub.s32 %v7779, %v7781
        %v7783 = vrot.slane %v7775, %v7782
        %v7785 = vunpack.c.l.s4 1983009808
        %v7786 = vunpack.c.0.s8 %v7785
        %v7787 = vlaneseq
        %v7788 = vshrl.u32 %v7787, 7
        %v7789 = vsub.s32 %v7786, %v7788
        %v7790 = vrot.slane %v7776, %v7789
        %v7791 = vcombine.high %v7783, %v7783
        %v7792 = vcombine.high %v7790, %v7790
        %v7793 = vcombine.low %v7689, %v7690
        %v7794 = vcombine.high %v7689, %v7690
        %v7796 = vunpack.c.l.s4 1983009808
        %v7797 = vunpack.c.0.s8 %v7796
        %v7798 = vlaneseq
        %v7799 = vshrl.u32 %v7798, 7
        %v7800 = vsub.s32 %v7797, %v7799
        %v7801 = vrot.slane %v7793, %v7800
        %v7803 = vunpack.c.l.s4 1983009808
        %v7804 = vunpack.c.0.s8 %v7803
        %v7805 = vlaneseq
        %v7806 = vshrl.u32 %v7805, 7
        %v7807 = vsub.s32 %v7804, %v7806
        %v7808 = vrot.slane %v7794, %v7807
        %v7809 = vcombine.high %v7801, %v7801
        %v7810 = vcombine.high %v7808, %v7808
        %v7811 = vcombine.low %v7691, %v7692
        %v7812 = vcombine.high %v7691, %v7692
        %v7814 = vunpack.c.l.s4 1983009808
        %v7815 = vunpack.c.0.s8 %v7814
        %v7816 = vlaneseq
        %v7817 = vshrl.u32 %v7816, 7
        %v7818 = vsub.s32 %v7815, %v7817
        %v7819 = vrot.slane %v7811, %v7818
        %v7821 = vunpack.c.l.s4 1983009808
        %v7822 = vunpack.c.0.s8 %v7821
        %v7823 = vlaneseq
        %v7824 = vshrl.u32 %v7823, 7
        %v7825 = vsub.s32 %v7822, %v7824
        %v7826 = vrot.slane %v7812, %v7825
        %v7827 = vcombine.high %v7819, %v7819
        %v7828 = vcombine.high %v7826, %v7826
        %v7829 = vcombine.low %v7693, %v7694
        %v7830 = vcombine.high %v7693, %v7694
        %v7832 = vunpack.c.l.s4 1983009808
        %v7833 = vunpack.c.0.s8 %v7832
        %v7834 = vlaneseq
        %v7835 = vshrl.u32 %v7834, 7
        %v7836 = vsub.s32 %v7833, %v7835
        %v7837 = vrot.slane %v7829, %v7836
        %v7839 = vunpack.c.l.s4 1983009808
        %v7840 = vunpack.c.0.s8 %v7839
        %v7841 = vlaneseq
        %v7842 = vshrl.u32 %v7841, 7
        %v7843 = vsub.s32 %v7840, %v7842
        %v7844 = vrot.slane %v7830, %v7843
        %v7845 = vcombine.high %v7837, %v7837
        %v7846 = vcombine.high %v7844, %v7844
        %v7847 = vcombine.low %v7695, %v7696
        %v7848 = vcombine.high %v7695, %v7696
        %v7850 = vunpack.c.l.s4 1983009808
        %v7851 = vunpack.c.0.s8 %v7850
        %v7852 = vlaneseq
        %v7853 = vshrl.u32 %v7852, 7
        %v7854 = vsub.s32 %v7851, %v7853
        %v7855 = vrot.slane %v7847, %v7854
        %v7857 = vunpack.c.l.s4 1983009808
        %v7858 = vunpack.c.0.s8 %v7857
        %v7859 = vlaneseq
        %v7860 = vshrl.u32 %v7859, 7
        %v7861 = vsub.s32 %v7858, %v7860
        %v7862 = vrot.slane %v7848, %v7861
        %v7863 = vcombine.high %v7855, %v7855
        %v7864 = vcombine.high %v7862, %v7862
        %v7865 = vcombine.low %v7697, %v7698
        %v7866 = vcombine.high %v7697, %v7698
        %v7868 = vunpack.c.l.s4 1983009808
        %v7869 = vunpack.c.0.s8 %v7868
        %v7870 = vlaneseq
        %v7871 = vshrl.u32 %v7870, 7
        %v7872 = vsub.s32 %v7869, %v7871
        %v7873 = vrot.slane %v7865, %v7872
        %v7875 = vunpack.c.l.s4 1983009808
        %v7876 = vunpack.c.0.s8 %v7875
        %v7877 = vlaneseq
        %v7878 = vshrl.u32 %v7877, 7
        %v7879 = vsub.s32 %v7876, %v7878
        %v7880 = vrot.slane %v7866, %v7879
        %v7881 = vcombine.high %v7873, %v7873
        %v7882 = vcombine.high %v7880, %v7880
        %v7883 = vcombine.low %v7699, %v7700
        %v7884 = vcombine.high %v7699, %v7700
        %v7886 = vunpack.c.l.s4 1983009808
        %v7887 = vunpack.c.0.s8 %v7886
        %v7888 = vlaneseq
        %v7889 = vshrl.u32 %v7888, 7
        %v7890 = vsub.s32 %v7887, %v7889
        %v7891 = vrot.slane %v7883, %v7890
        %v7893 = vunpack.c.l.s4 1983009808
        %v7894 = vunpack.c.0.s8 %v7893
        %v7895 = vlaneseq
        %v7896 = vshrl.u32 %v7895, 7
        %v7897 = vsub.s32 %v7894, %v7896
        %v7898 = vrot.slane %v7884, %v7897
        %v7899 = vcombine.high %v7891, %v7891
        %v7900 = vcombine.high %v7898, %v7898
        %v7941 = vrot.slane %v7729, 7
        %v7942 = vrot.slane %v7941, 2
        %v7943 = vrot.slane %v7737, 7
        %v7944 = vrot.slane %v7943, 2
        %v7945 = vrot.slane %v7736, 7
        %v7946 = vrot.slane %v7945, 2
        %v7947 = vrot.slane %v7738, 7
        %v7948 = vrot.slane %v7947, 2
        %v7949 = vrot.slane %v7747, 7
        %v7950 = vrot.slane %v7949, 2
        %v7951 = vrot.slane %v7755, 7
        %v7952 = vrot.slane %v7951, 2
        %v7953 = vrot.slane %v7754, 7
        %v7954 = vrot.slane %v7953, 2
        %v7955 = vrot.slane %v7756, 7
        %v7956 = vrot.slane %v7955, 2
        %v7957 = vrot.slane %v7765, 7
        %v7958 = vrot.slane %v7957, 2
        %v7959 = vrot.slane %v7773, 7
        %v7960 = vrot.slane %v7959, 2
        %v7961 = vrot.slane %v7772, 7
        %v7962 = vrot.slane %v7961, 2
        %v7963 = vrot.slane %v7774, 7
        %v7964 = vrot.slane %v7963, 2
        %v7965 = vrot.slane %v7783, 7
        %v7966 = vrot.slane %v7965, 2
        %v7967 = vrot.slane %v7791, 7
        %v7968 = vrot.slane %v7967, 2
        %v7969 = vrot.slane %v7790, 7
        %v7970 = vrot.slane %v7969, 2
        %v7971 = vrot.slane %v7792, 7
        %v7972 = vrot.slane %v7971, 2
        %v7973 = vrot.slane %v7801, 7
        %v7974 = vrot.slane %v7973, 2
        %v7975 = vrot.slane %v7809, 7
        %v7976 = vrot.slane %v7975, 2
        %v7977 = vrot.slane %v7808, 7
        %v7978 = vrot.slane %v7977, 2
        %v7979 = vrot.slane %v7810, 7
        %v7980 = vrot.slane %v7979, 2
        %v7981 = vrot.slane %v7819, 7
        %v7982 = vrot.slane %v7981, 2
        %v7983 = vrot.slane %v7827, 7
        %v7984 = vrot.slane %v7983, 2
        %v7985 = vrot.slane %v7826, 7
        %v7986 = vrot.slane %v7985, 2
        %v7987 = vrot.slane %v7828, 7
        %v7988 = vrot.slane %v7987, 2
        %v7989 = vrot.slane %v7837, 7
        %v7990 = vrot.slane %v7989, 2
        %v7991 = vrot.slane %v7845, 7
        %v7992 = vrot.slane %v7991, 2
        %v7993 = vrot.slane %v7844, 7
        %v7994 = vrot.slane %v7993, 2
        %v7995 = vrot.slane %v7846, 7
        %v7996 = vrot.slane %v7995, 2
        %v7997 = vrot.slane %v7855, 7
        %v7998 = vrot.slane %v7997, 2
        %v7999 = vrot.slane %v7863, 7
        %v8000 = vrot.slane %v7999, 2
        %v8001 = vrot.slane %v7862, 7
        %v8002 = vrot.slane %v8001, 2
        %v8003 = vrot.slane %v7864, 7
        %v8004 = vrot.slane %v8003, 2
        %v8005 = vrot.slane %v7873, 7
        %v8006 = vrot.slane %v8005, 2
        %v8007 = vrot.slane %v7881, 7
        %v8008 = vrot.slane %v8007, 2
        %v8009 = vrot.slane %v7880, 7
        %v8010 = vrot.slane %v8009, 2
        %v8011 = vrot.slane %v7882, 7
        %v8012 = vrot.slane %v8011, 2
        %v8013 = vrot.slane %v7891, 7
        %v8014 = vrot.slane %v8013, 2
        %v8015 = vrot.slane %v7899, 7
        %v8016 = vrot.slane %v8015, 2
        %v8017 = vrot.slane %v7898, 7
        %v8018 = vrot.slane %v8017, 2
        %v8019 = vrot.slane %v7900, 7
        %v8020 = vrot.slane %v8019, 2
        %v8061 = vadd.f32 %v7729, %v7942
        %v8062 = vadd.f32 %v7737, %v7944
        %v8063 = vadd.f32 %v7736, %v7946
        %v8064 = vadd.f32 %v7738, %v7948
        %v8065 = vadd.f32 %v7747, %v7950
        %v8066 = vadd.f32 %v7755, %v7952
        %v8067 = vadd.f32 %v7754, %v7954
        %v8068 = vadd.f32 %v7756, %v7956
        %v8069 = vadd.f32 %v7765, %v7958
        %v8070 = vadd.f32 %v7773, %v7960
        %v8071 = vadd.f32 %v7772, %v7962
        %v8072 = vadd.f32 %v7774, %v7964
        %v8073 = vadd.f32 %v7783, %v7966
        %v8074 = vadd.f32 %v7791, %v7968
        %v8075 = vadd.f32 %v7790, %v7970
        %v8076 = vadd.f32 %v7792, %v7972
        %v8077 = vadd.f32 %v7801, %v7974
        %v8078 = vadd.f32 %v7809, %v7976
        %v8079 = vadd.f32 %v7808, %v7978
        %v8080 = vadd.f32 %v7810, %v7980
        %v8081 = vadd.f32 %v7819, %v7982
        %v8082 = vadd.f32 %v7827, %v7984
        %v8083 = vadd.f32 %v7826, %v7986
        %v8084 = vadd.f32 %v7828, %v7988
        %v8085 = vadd.f32 %v7837, %v7990
        %v8086 = vadd.f32 %v7845, %v7992
        %v8087 = vadd.f32 %v7844, %v7994
        %v8088 = vadd.f32 %v7846, %v7996
        %v8089 = vadd.f32 %v7855, %v7998
        %v8090 = vadd.f32 %v7863, %v8000
        %v8091 = vadd.f32 %v7862, %v8002
        %v8092 = vadd.f32 %v7864, %v8004
        %v8093 = vadd.f32 %v7873, %v8006
        %v8094 = vadd.f32 %v7881, %v8008
        %v8095 = vadd.f32 %v7880, %v8010
        %v8096 = vadd.f32 %v7882, %v8012
        %v8097 = vadd.f32 %v7891, %v8014
        %v8098 = vadd.f32 %v7899, %v8016
        %v8099 = vadd.f32 %v7898, %v8018
        %v8100 = vadd.f32 %v7900, %v8020
        %v8101 = vld [vmem:[%s6] sm:$0xff]
        %v8102 = vld [vmem:[%s6 + $0x8] sm:$0xff]
        %v8103 = vld [vmem:[%s6 + $0x10] sm:$0xff]
        %v8104 = vld [vmem:[%s6 + $0x18] sm:$0xff]
        %v8105 = vld [vmem:[%s6 + $0x20] sm:$0xff]
        %v8106 = vld [vmem:[%s6 + $0x28] sm:$0xff]
        %v8107 = vld [vmem:[%s6 + $0x30] sm:$0xff]
        %v8108 = vld [vmem:[%s6 + $0x38] sm:$0xff]
        %v8109 = vld [vmem:[%s6 + $0x40] sm:$0xff]
        %v8110 = vld [vmem:[%s6 + $0x48] sm:$0xff]
        %v8111 = vld [vmem:[%s6 + $0x50] sm:$0xff]
        %v8112 = vld [vmem:[%s6 + $0x58] sm:$0xff]
        %v8113 = vld [vmem:[%s6 + $0x60] sm:$0xff]
        %v8114 = vld [vmem:[%s6 + $0x68] sm:$0xff]
        %v8115 = vld [vmem:[%s6 + $0x70] sm:$0xff]
        %v8116 = vld [vmem:[%s6 + $0x78] sm:$0xff]
        %v8117 = vld [vmem:[%s6 + $0x80] sm:$0xff]
        %v8118 = vld [vmem:[%s6 + $0x88] sm:$0xff]
        %v8119 = vld [vmem:[%s6 + $0x90] sm:$0xff]
        %v8120 = vld [vmem:[%s6 + $0x98] sm:$0xff]
        %v8161 = vlaneseq
        %v8162 = vshrl.u32 %v8161, 7
        %v8163 = vsub.s32 0, %v8162
        %v8164 = vrot.slane %v8061, %v8163
        %v8165 = vlaneseq
        %v8166 = vshrl.u32 %v8165, 7
        %v8167 = vsub.s32 2, %v8166
        %v8168 = vrot.slane %v8061, %v8167
        %v8169 = vlaneseq
        %v8170 = vshrl.u32 %v8169, 7
        %v8171 = vsub.s32 0, %v8170
        %v8172 = vrot.slane %v8062, %v8171
        %v8173 = vlaneseq
        %v8174 = vshrl.u32 %v8173, 7
        %v8175 = vsub.s32 2, %v8174
        %v8176 = vrot.slane %v8062, %v8175
        %v8177 = vlaneseq
        %v8178 = vshrl.u32 %v8177, 7
        %v8179 = vsub.s32 0, %v8178
        %v8180 = vrot.slane %v8063, %v8179
        %v8181 = vlaneseq
        %v8182 = vshrl.u32 %v8181, 7
        %v8183 = vsub.s32 2, %v8182
        %v8184 = vrot.slane %v8063, %v8183
        %v8185 = vlaneseq
        %v8186 = vshrl.u32 %v8185, 7
        %v8187 = vsub.s32 0, %v8186
        %v8188 = vrot.slane %v8064, %v8187
        %v8189 = vlaneseq
        %v8190 = vshrl.u32 %v8189, 7
        %v8191 = vsub.s32 2, %v8190
        %v8192 = vrot.slane %v8064, %v8191
        %v8193 = vlaneseq
        %v8194 = vshrl.u32 %v8193, 7
        %v8195 = vsub.s32 0, %v8194
        %v8196 = vrot.slane %v8065, %v8195
        %v8197 = vlaneseq
        %v8198 = vshrl.u32 %v8197, 7
        %v8199 = vsub.s32 2, %v8198
        %v8200 = vrot.slane %v8065, %v8199
        %v8201 = vlaneseq
        %v8202 = vshrl.u32 %v8201, 7
        %v8203 = vsub.s32 0, %v8202
        %v8204 = vrot.slane %v8066, %v8203
        %v8205 = vlaneseq
        %v8206 = vshrl.u32 %v8205, 7
        %v8207 = vsub.s32 2, %v8206
        %v8208 = vrot.slane %v8066, %v8207
        %v8209 = vlaneseq
        %v8210 = vshrl.u32 %v8209, 7
        %v8211 = vsub.s32 0, %v8210
        %v8212 = vrot.slane %v8067, %v8211
        %v8213 = vlaneseq
        %v8214 = vshrl.u32 %v8213, 7
        %v8215 = vsub.s32 2, %v8214
        %v8216 = vrot.slane %v8067, %v8215
        %v8217 = vlaneseq
        %v8218 = vshrl.u32 %v8217, 7
        %v8219 = vsub.s32 0, %v8218
        %v8220 = vrot.slane %v8068, %v8219
        %v8221 = vlaneseq
        %v8222 = vshrl.u32 %v8221, 7
        %v8223 = vsub.s32 2, %v8222
        %v8224 = vrot.slane %v8068, %v8223
        %v8225 = vlaneseq
        %v8226 = vshrl.u32 %v8225, 7
        %v8227 = vsub.s32 0, %v8226
        %v8228 = vrot.slane %v8069, %v8227
        %v8229 = vlaneseq
        %v8230 = vshrl.u32 %v8229, 7
        %v8231 = vsub.s32 2, %v8230
        %v8232 = vrot.slane %v8069, %v8231
        %v8233 = vlaneseq
        %v8234 = vshrl.u32 %v8233, 7
        %v8235 = vsub.s32 0, %v8234
        %v8236 = vrot.slane %v8070, %v8235
        %v8237 = vlaneseq
        %v8238 = vshrl.u32 %v8237, 7
        %v8239 = vsub.s32 2, %v8238
        %v8240 = vrot.slane %v8070, %v8239
        %v8241 = vlaneseq
        %v8242 = vshrl.u32 %v8241, 7
        %v8243 = vsub.s32 0, %v8242
        %v8244 = vrot.slane %v8071, %v8243
        %v8245 = vlaneseq
        %v8246 = vshrl.u32 %v8245, 7
        %v8247 = vsub.s32 2, %v8246
        %v8248 = vrot.slane %v8071, %v8247
        %v8249 = vlaneseq
        %v8250 = vshrl.u32 %v8249, 7
        %v8251 = vsub.s32 0, %v8250
        %v8252 = vrot.slane %v8072, %v8251
        %v8253 = vlaneseq
        %v8254 = vshrl.u32 %v8253, 7
        %v8255 = vsub.s32 2, %v8254
        %v8256 = vrot.slane %v8072, %v8255
        %v8257 = vlaneseq
        %v8258 = vshrl.u32 %v8257, 7
        %v8259 = vsub.s32 0, %v8258
        %v8260 = vrot.slane %v8073, %v8259
        %v8261 = vlaneseq
        %v8262 = vshrl.u32 %v8261, 7
        %v8263 = vsub.s32 2, %v8262
        %v8264 = vrot.slane %v8073, %v8263
        %v8265 = vlaneseq
        %v8266 = vshrl.u32 %v8265, 7
        %v8267 = vsub.s32 0, %v8266
        %v8268 = vrot.slane %v8074, %v8267
        %v8269 = vlaneseq
        %v8270 = vshrl.u32 %v8269, 7
        %v8271 = vsub.s32 2, %v8270
        %v8272 = vrot.slane %v8074, %v8271
        %v8273 = vlaneseq
        %v8274 = vshrl.u32 %v8273, 7
        %v8275 = vsub.s32 0, %v8274
        %v8276 = vrot.slane %v8075, %v8275
        %v8277 = vlaneseq
        %v8278 = vshrl.u32 %v8277, 7
        %v8279 = vsub.s32 2, %v8278
        %v8280 = vrot.slane %v8075, %v8279
        %v8281 = vlaneseq
        %v8282 = vshrl.u32 %v8281, 7
        %v8283 = vsub.s32 0, %v8282
        %v8284 = vrot.slane %v8076, %v8283
        %v8285 = vlaneseq
        %v8286 = vshrl.u32 %v8285, 7
        %v8287 = vsub.s32 2, %v8286
        %v8288 = vrot.slane %v8076, %v8287
        %v8289 = vlaneseq
        %v8290 = vshrl.u32 %v8289, 7
        %v8291 = vsub.s32 0, %v8290
        %v8292 = vrot.slane %v8077, %v8291
        %v8293 = vlaneseq
        %v8294 = vshrl.u32 %v8293, 7
        %v8295 = vsub.s32 2, %v8294
        %v8296 = vrot.slane %v8077, %v8295
        %v8297 = vlaneseq
        %v8298 = vshrl.u32 %v8297, 7
        %v8299 = vsub.s32 0, %v8298
        %v8300 = vrot.slane %v8078, %v8299
        %v8301 = vlaneseq
        %v8302 = vshrl.u32 %v8301, 7
        %v8303 = vsub.s32 2, %v8302
        %v8304 = vrot.slane %v8078, %v8303
        %v8305 = vlaneseq
        %v8306 = vshrl.u32 %v8305, 7
        %v8307 = vsub.s32 0, %v8306
        %v8308 = vrot.slane %v8079, %v8307
        %v8309 = vlaneseq
        %v8310 = vshrl.u32 %v8309, 7
        %v8311 = vsub.s32 2, %v8310
        %v8312 = vrot.slane %v8079, %v8311
        %v8313 = vlaneseq
        %v8314 = vshrl.u32 %v8313, 7
        %v8315 = vsub.s32 0, %v8314
        %v8316 = vrot.slane %v8080, %v8315
        %v8317 = vlaneseq
        %v8318 = vshrl.u32 %v8317, 7
        %v8319 = vsub.s32 2, %v8318
        %v8320 = vrot.slane %v8080, %v8319
        %v8321 = vlaneseq
        %v8322 = vshrl.u32 %v8321, 7
        %v8323 = vsub.s32 0, %v8322
        %v8324 = vrot.slane %v8081, %v8323
        %v8325 = vlaneseq
        %v8326 = vshrl.u32 %v8325, 7
        %v8327 = vsub.s32 2, %v8326
        %v8328 = vrot.slane %v8081, %v8327
        %v8329 = vlaneseq
        %v8330 = vshrl.u32 %v8329, 7
        %v8331 = vsub.s32 0, %v8330
        %v8332 = vrot.slane %v8082, %v8331
        %v8333 = vlaneseq
        %v8334 = vshrl.u32 %v8333, 7
        %v8335 = vsub.s32 2, %v8334
        %v8336 = vrot.slane %v8082, %v8335
        %v8337 = vlaneseq
        %v8338 = vshrl.u32 %v8337, 7
        %v8339 = vsub.s32 0, %v8338
        %v8340 = vrot.slane %v8083, %v8339
        %v8341 = vlaneseq
        %v8342 = vshrl.u32 %v8341, 7
        %v8343 = vsub.s32 2, %v8342
        %v8344 = vrot.slane %v8083, %v8343
        %v8345 = vlaneseq
        %v8346 = vshrl.u32 %v8345, 7
        %v8347 = vsub.s32 0, %v8346
        %v8348 = vrot.slane %v8084, %v8347
        %v8349 = vlaneseq
        %v8350 = vshrl.u32 %v8349, 7
        %v8351 = vsub.s32 2, %v8350
        %v8352 = vrot.slane %v8084, %v8351
        %v8353 = vlaneseq
        %v8354 = vshrl.u32 %v8353, 7
        %v8355 = vsub.s32 0, %v8354
        %v8356 = vrot.slane %v8085, %v8355
        %v8357 = vlaneseq
        %v8358 = vshrl.u32 %v8357, 7
        %v8359 = vsub.s32 2, %v8358
        %v8360 = vrot.slane %v8085, %v8359
        %v8361 = vlaneseq
        %v8362 = vshrl.u32 %v8361, 7
        %v8363 = vsub.s32 0, %v8362
        %v8364 = vrot.slane %v8086, %v8363
        %v8365 = vlaneseq
        %v8366 = vshrl.u32 %v8365, 7
        %v8367 = vsub.s32 2, %v8366
        %v8368 = vrot.slane %v8086, %v8367
        %v8369 = vlaneseq
        %v8370 = vshrl.u32 %v8369, 7
        %v8371 = vsub.s32 0, %v8370
        %v8372 = vrot.slane %v8087, %v8371
        %v8373 = vlaneseq
        %v8374 = vshrl.u32 %v8373, 7
        %v8375 = vsub.s32 2, %v8374
        %v8376 = vrot.slane %v8087, %v8375
        %v8377 = vlaneseq
        %v8378 = vshrl.u32 %v8377, 7
        %v8379 = vsub.s32 0, %v8378
        %v8380 = vrot.slane %v8088, %v8379
        %v8381 = vlaneseq
        %v8382 = vshrl.u32 %v8381, 7
        %v8383 = vsub.s32 2, %v8382
        %v8384 = vrot.slane %v8088, %v8383
        %v8385 = vlaneseq
        %v8386 = vshrl.u32 %v8385, 7
        %v8387 = vsub.s32 0, %v8386
        %v8388 = vrot.slane %v8089, %v8387
        %v8389 = vlaneseq
        %v8390 = vshrl.u32 %v8389, 7
        %v8391 = vsub.s32 2, %v8390
        %v8392 = vrot.slane %v8089, %v8391
        %v8393 = vlaneseq
        %v8394 = vshrl.u32 %v8393, 7
        %v8395 = vsub.s32 0, %v8394
        %v8396 = vrot.slane %v8090, %v8395
        %v8397 = vlaneseq
        %v8398 = vshrl.u32 %v8397, 7
        %v8399 = vsub.s32 2, %v8398
        %v8400 = vrot.slane %v8090, %v8399
        %v8401 = vlaneseq
        %v8402 = vshrl.u32 %v8401, 7
        %v8403 = vsub.s32 0, %v8402
        %v8404 = vrot.slane %v8091, %v8403
        %v8405 = vlaneseq
        %v8406 = vshrl.u32 %v8405, 7
        %v8407 = vsub.s32 2, %v8406
        %v8408 = vrot.slane %v8091, %v8407
        %v8409 = vlaneseq
        %v8410 = vshrl.u32 %v8409, 7
        %v8411 = vsub.s32 0, %v8410
        %v8412 = vrot.slane %v8092, %v8411
        %v8413 = vlaneseq
        %v8414 = vshrl.u32 %v8413, 7
        %v8415 = vsub.s32 2, %v8414
        %v8416 = vrot.slane %v8092, %v8415
        %v8417 = vlaneseq
        %v8418 = vshrl.u32 %v8417, 7
        %v8419 = vsub.s32 0, %v8418
        %v8420 = vrot.slane %v8093, %v8419
        %v8421 = vlaneseq
        %v8422 = vshrl.u32 %v8421, 7
        %v8423 = vsub.s32 2, %v8422
        %v8424 = vrot.slane %v8093, %v8423
        %v8425 = vlaneseq
        %v8426 = vshrl.u32 %v8425, 7
        %v8427 = vsub.s32 0, %v8426
        %v8428 = vrot.slane %v8094, %v8427
        %v8429 = vlaneseq
        %v8430 = vshrl.u32 %v8429, 7
        %v8431 = vsub.s32 2, %v8430
        %v8432 = vrot.slane %v8094, %v8431
        %v8433 = vlaneseq
        %v8434 = vshrl.u32 %v8433, 7
        %v8435 = vsub.s32 0, %v8434
        %v8436 = vrot.slane %v8095, %v8435
        %v8437 = vlaneseq
        %v8438 = vshrl.u32 %v8437, 7
        %v8439 = vsub.s32 2, %v8438
        %v8440 = vrot.slane %v8095, %v8439
        %v8441 = vlaneseq
        %v8442 = vshrl.u32 %v8441, 7
        %v8443 = vsub.s32 0, %v8442
        %v8444 = vrot.slane %v8096, %v8443
        %v8445 = vlaneseq
        %v8446 = vshrl.u32 %v8445, 7
        %v8447 = vsub.s32 2, %v8446
        %v8448 = vrot.slane %v8096, %v8447
        %v8449 = vlaneseq
        %v8450 = vshrl.u32 %v8449, 7
        %v8451 = vsub.s32 0, %v8450
        %v8452 = vrot.slane %v8097, %v8451
        %v8453 = vlaneseq
        %v8454 = vshrl.u32 %v8453, 7
        %v8455 = vsub.s32 2, %v8454
        %v8456 = vrot.slane %v8097, %v8455
        %v8457 = vlaneseq
        %v8458 = vshrl.u32 %v8457, 7
        %v8459 = vsub.s32 0, %v8458
        %v8460 = vrot.slane %v8098, %v8459
        %v8461 = vlaneseq
        %v8462 = vshrl.u32 %v8461, 7
        %v8463 = vsub.s32 2, %v8462
        %v8464 = vrot.slane %v8098, %v8463
        %v8465 = vlaneseq
        %v8466 = vshrl.u32 %v8465, 7
        %v8467 = vsub.s32 0, %v8466
        %v8468 = vrot.slane %v8099, %v8467
        %v8469 = vlaneseq
        %v8470 = vshrl.u32 %v8469, 7
        %v8471 = vsub.s32 2, %v8470
        %v8472 = vrot.slane %v8099, %v8471
        %v8473 = vlaneseq
        %v8474 = vshrl.u32 %v8473, 7
        %v8475 = vsub.s32 0, %v8474
        %v8476 = vrot.slane %v8100, %v8475
        %v8477 = vlaneseq
        %v8478 = vshrl.u32 %v8477, 7
        %v8479 = vsub.s32 2, %v8478
        %v8480 = vrot.slane %v8100, %v8479
        %v8481 = vsel %vm5145, %v8172, %v8164
        %v8482 = vsel %vm5147, %v8180, %v8481
        %v8483 = vsel %vm5149, %v8188, %v8482
        %v8484 = vsel %vm1930, %v8196, %v8483
        %v8485 = vsel %vm5152, %v8204, %v8484
        %v8486 = vsel %vm5154, %v8212, %v8485
        %v8487 = vsel %vm5156, %v8220, %v8486
        %v8488 = vsel %vm5145, %v8176, %v8168
        %v8489 = vsel %vm5147, %v8184, %v8488
        %v8490 = vsel %vm5149, %v8192, %v8489
        %v8491 = vsel %vm1930, %v8200, %v8490
        %v8492 = vsel %vm5152, %v8208, %v8491
        %v8493 = vsel %vm5154, %v8216, %v8492
        %v8494 = vsel %vm5156, %v8224, %v8493
        %v8495 = vsel %vm5145, %v8236, %v8228
        %v8496 = vsel %vm5147, %v8244, %v8495
        %v8497 = vsel %vm5149, %v8252, %v8496
        %v8498 = vsel %vm1930, %v8260, %v8497
        %v8499 = vsel %vm5152, %v8268, %v8498
        %v8500 = vsel %vm5154, %v8276, %v8499
        %v8501 = vsel %vm5156, %v8284, %v8500
        %v8502 = vsel %vm5145, %v8240, %v8232
        %v8503 = vsel %vm5147, %v8248, %v8502
        %v8504 = vsel %vm5149, %v8256, %v8503
        %v8505 = vsel %vm1930, %v8264, %v8504
        %v8506 = vsel %vm5152, %v8272, %v8505
        %v8507 = vsel %vm5154, %v8280, %v8506
        %v8508 = vsel %vm5156, %v8288, %v8507
        %v8509 = vsel %vm5145, %v8300, %v8292
        %v8510 = vsel %vm5147, %v8308, %v8509
        %v8511 = vsel %vm5149, %v8316, %v8510
        %v8512 = vsel %vm1930, %v8324, %v8511
        %v8513 = vsel %vm5152, %v8332, %v8512
        %v8514 = vsel %vm5154, %v8340, %v8513
        %v8515 = vsel %vm5156, %v8348, %v8514
        %v8516 = vsel %vm5145, %v8304, %v8296
        %v8517 = vsel %vm5147, %v8312, %v8516
        %v8518 = vsel %vm5149, %v8320, %v8517
        %v8519 = vsel %vm1930, %v8328, %v8518
        %v8520 = vsel %vm5152, %v8336, %v8519
        %v8521 = vsel %vm5154, %v8344, %v8520
        %v8522 = vsel %vm5156, %v8352, %v8521
        %v8523 = vsel %vm5145, %v8364, %v8356
        %v8524 = vsel %vm5147, %v8372, %v8523
        %v8525 = vsel %vm5149, %v8380, %v8524
        %v8526 = vsel %vm1930, %v8388, %v8525
        %v8527 = vsel %vm5152, %v8396, %v8526
        %v8528 = vsel %vm5154, %v8404, %v8527
        %v8529 = vsel %vm5156, %v8412, %v8528
        %v8530 = vsel %vm5145, %v8368, %v8360
        %v8531 = vsel %vm5147, %v8376, %v8530
        %v8532 = vsel %vm5149, %v8384, %v8531
        %v8533 = vsel %vm1930, %v8392, %v8532
        %v8534 = vsel %vm5152, %v8400, %v8533
        %v8535 = vsel %vm5154, %v8408, %v8534
        %v8536 = vsel %vm5156, %v8416, %v8535
        %v8537 = vsel %vm5145, %v8428, %v8420
        %v8538 = vsel %vm5147, %v8436, %v8537
        %v8539 = vsel %vm5149, %v8444, %v8538
        %v8540 = vsel %vm1930, %v8452, %v8539
        %v8541 = vsel %vm5152, %v8460, %v8540
        %v8542 = vsel %vm5154, %v8468, %v8541
        %v8543 = vsel %vm5156, %v8476, %v8542
        %v8544 = vsel %vm5145, %v8432, %v8424
        %v8545 = vsel %vm5147, %v8440, %v8544
        %v8546 = vsel %vm5149, %v8448, %v8545
        %v8547 = vsel %vm1930, %v8456, %v8546
        %v8548 = vsel %vm5152, %v8464, %v8547
        %v8549 = vsel %vm5154, %v8472, %v8548
        %v8550 = vsel %vm5156, %v8480, %v8549
        %v8556 = vsel %vm761, %v8494, 0
        %v8558 = vsel %vm761, %v8508, 0
        %v8560 = vsel %vm761, %v8522, 0
        %v8562 = vsel %vm761, %v8536, 0
        %v8564 = vsel %vm761, %v8550, 0
        %8566 = vmatprep.subr.mxu0 0.0
        %8567 = vmatpush1.msra.mxu0 %v8116
        %8568 = vmatprep.subr.mxu0 0.0
        %8569 = vmatpush1.msra.mxu0 %v8115
        %8570 = vmatprep.subr.mxu0 0.0
        %8571 = vmatpush1.msra.mxu0 %v8114
        %8572 = vmatprep.subr.mxu0 0.0
        %8573 = vmatpush1.msra.mxu0 %v8113
        %8574 = vmatprep.subr.mxu0 0.0
        %8575 = vmatpush1.msra.mxu0 %v8112
        %8576 = vmatprep.subr.mxu0 0.0
        %8577 = vmatpush1.msra.mxu0 %v8111
        %8578 = vmatprep.subr.mxu0 0.0
        %8579 = vmatpush1.msra.mxu0 %v8110
        %8580 = vmatprep.subr.mxu0 0.0
        %8581 = vmatpush1.msra.mxu0 %v8109
        %8582 = vmatprep.subr.mxu0 0.0
        %8583 = vmatpush1.msra.mxu0 %v8108
        %8584 = vmatprep.subr.mxu0 0.0
        %8585 = vmatpush1.msra.mxu0 %v8107
        %8586 = vmatprep.subr.mxu0 0.0
        %8587 = vmatpush1.msra.mxu0 %v8106
        %8588 = vmatprep.subr.mxu0 0.0
        %8589 = vmatpush1.msra.mxu0 %v8105
        %8590 = vmatprep.subr.mxu0 0.0
        %8591 = vmatpush1.msra.mxu0 %v8104
        %8592 = vmatprep.subr.mxu0 0.0
        %8593 = vmatpush1.msra.mxu0 %v8103
        %8594 = vmatprep.subr.mxu0 0.0
        %8595 = vmatpush1.msra.mxu0 %v8102
        %8596 = vmatprep.subr.mxu0 0.0
        %8597 = vmatpush1.msra.mxu0 %v8101
        %8598 = vmatprep.subr.mxu0 0.0
        %8599 = vmatpush2.msra.mxu0 0.0
        %8600 = vmatprep.subr.mxu0 0.0
        %8601 = vmatpush2.msra.mxu0 0.0
        %8602 = vmatprep.subr.mxu0 0.0
        %8603 = vmatpush2.msra.mxu0 0.0
        %8604 = vmatprep.subr.mxu0 0.0
        %8605 = vmatpush2.msra.mxu0 0.0
        %8606 = vmatprep.subr.mxu0 0.0
        %8607 = vmatpush2.msra.mxu0 0.0
        %8608 = vmatprep.subr.mxu0 0.0
        %8609 = vmatpush2.msra.mxu0 0.0
        %8610 = vmatprep.subr.mxu0 0.0
        %8611 = vmatpush2.msra.mxu0 0.0
        %8612 = vmatprep.subr.mxu0 0.0
        %8613 = vmatpush2.msra.mxu0 0.0
        %8614 = vmatprep.subr.mxu0 0.0
        %8615 = vmatpush2.msra.mxu0 0.0
        %8616 = vmatprep.subr.mxu0 0.0
        %8617 = vmatpush2.msra.mxu0 0.0
        %8618 = vmatprep.subr.mxu0 0.0
        %8619 = vmatpush2.msra.mxu0 0.0
        %8620 = vmatprep.subr.mxu0 0.0
        %8621 = vmatpush2.msra.mxu0 0.0
        %8622 = vmatprep.subr.mxu0 0.0
        %8623 = vmatpush2.msra.mxu0 %v8120
        %8624 = vmatprep.subr.mxu0 0.0
        %8625 = vmatpush2.msra.mxu0 %v8119
        %8626 = vmatprep.subr.mxu0 0.0
        %8627 = vmatpush2.msra.mxu0 %v8118
        %8628 = vmatprep.subr.mxu0 0.0
        %8629 = vmatpush2.msra.mxu0 %v8117
        %8630 = vmatprep.mubr.f32.mxu0 %v8556
        %8631 = vmatmul.mubr.f32.gmra.mxu0 %v8487
        %v8632 = vpop.f32.mrf.mxu0
        %v8633 = vadd.f32 0.0, %v8632
        %v8634 = vpop.f32.mrf.mxu0
        %8635 = vmatprep.mubr.f32.mxu0 %v8558
        %8636 = vmatmul.mubr.f32.gmra.mxu0 %v8501
        %v8637 = vpop.f32.mrf.mxu0
        %v8638 = vadd.f32 0.0, %v8637
        %v8639 = vpop.f32.mrf.mxu0
        %8640 = vmatprep.mubr.f32.mxu0 %v8560
        %8641 = vmatmul.mubr.f32.gmra.mxu0 %v8515
        %v8642 = vpop.f32.mrf.mxu0
        %v8643 = vadd.f32 0.0, %v8642
        %v8644 = vpop.f32.mrf.mxu0
        %8645 = vmatprep.mubr.f32.mxu0 %v8562
        %8646 = vmatmul.mubr.f32.gmra.mxu0 %v8529
        %v8647 = vpop.f32.mrf.mxu0
        %v8648 = vadd.f32 0.0, %v8647
        %v8649 = vpop.f32.mrf.mxu0
        %8650 = vmatprep.mubr.f32.mxu0 %v8564
        %8651 = vmatmul.mubr.f32.gmra.mxu0 %v8543
        %v8652 = vpop.f32.mrf.mxu0
        %v8653 = vadd.f32 0.0, %v8652
        %v8654 = vpop.f32.mrf.mxu0
        %8655 = vdwg.mxu0
        %v8661 = vcombine.high %v8633, %v8633
        %v8663 = vunpack.c.l.s4 1966171168
        %v8664 = vunpack.c.0.s8 %v8663
        %v8665 = vlaneseq
        %v8666 = vshrl.u32 %v8665, 7
        %v8667 = vsub.s32 %v8664, %v8666
        %v8668 = vrot.slane %v8633, %v8667
        %v8670 = vunpack.c.l.s4 1966171168
        %v8671 = vunpack.c.0.s8 %v8670
        %v8672 = vlaneseq
        %v8673 = vshrl.u32 %v8672, 7
        %v8674 = vsub.s32 %v8671, %v8673
        %v8675 = vrot.slane %v8661, %v8674
        %v8676 = vcombine.high %v8668, %v8668
        %v8677 = vcombine.high %v8675, %v8675
        %v8679 = vunpack.c.l.s4 1966171168
        %v8680 = vunpack.c.0.s8 %v8679
        %v8681 = vlaneseq
        %v8682 = vshrl.u32 %v8681, 7
        %v8683 = vsub.s32 %v8680, %v8682
        %v8684 = vrot.slane %v8668, %v8683
        %v8686 = vunpack.c.l.s4 1966171168
        %v8687 = vunpack.c.0.s8 %v8686
        %v8688 = vlaneseq
        %v8689 = vshrl.u32 %v8688, 7
        %v8690 = vsub.s32 %v8687, %v8689
        %v8691 = vrot.slane %v8675, %v8690
        %v8693 = vunpack.c.l.s4 1966171168
        %v8694 = vunpack.c.0.s8 %v8693
        %v8695 = vlaneseq
        %v8696 = vshrl.u32 %v8695, 7
        %v8697 = vsub.s32 %v8694, %v8696
        %v8698 = vrot.slane %v8676, %v8697
        %v8700 = vunpack.c.l.s4 1966171168
        %v8701 = vunpack.c.0.s8 %v8700
        %v8702 = vlaneseq
        %v8703 = vshrl.u32 %v8702, 7
        %v8704 = vsub.s32 %v8701, %v8703
        %v8705 = vrot.slane %v8677, %v8704
        %v8706 = vcombine.high %v8684, %v8684
        %v8707 = vcombine.high %v8691, %v8691
        %v8708 = vcombine.high %v8698, %v8698
        %v8709 = vcombine.high %v8705, %v8705
        %v8710 = vcombine.high %v8638, %v8638
        %v8712 = vunpack.c.l.s4 1966171168
        %v8713 = vunpack.c.0.s8 %v8712
        %v8714 = vlaneseq
        %v8715 = vshrl.u32 %v8714, 7
        %v8716 = vsub.s32 %v8713, %v8715
        %v8717 = vrot.slane %v8638, %v8716
        %v8719 = vunpack.c.l.s4 1966171168
        %v8720 = vunpack.c.0.s8 %v8719
        %v8721 = vlaneseq
        %v8722 = vshrl.u32 %v8721, 7
        %v8723 = vsub.s32 %v8720, %v8722
        %v8724 = vrot.slane %v8710, %v8723
        %v8725 = vcombine.high %v8717, %v8717
        %v8726 = vcombine.high %v8724, %v8724
        %v8728 = vunpack.c.l.s4 1966171168
        %v8729 = vunpack.c.0.s8 %v8728
        %v8730 = vlaneseq
        %v8731 = vshrl.u32 %v8730, 7
        %v8732 = vsub.s32 %v8729, %v8731
        %v8733 = vrot.slane %v8717, %v8732
        %v8735 = vunpack.c.l.s4 1966171168
        %v8736 = vunpack.c.0.s8 %v8735
        %v8737 = vlaneseq
        %v8738 = vshrl.u32 %v8737, 7
        %v8739 = vsub.s32 %v8736, %v8738
        %v8740 = vrot.slane %v8724, %v8739
        %v8742 = vunpack.c.l.s4 1966171168
        %v8743 = vunpack.c.0.s8 %v8742
        %v8744 = vlaneseq
        %v8745 = vshrl.u32 %v8744, 7
        %v8746 = vsub.s32 %v8743, %v8745
        %v8747 = vrot.slane %v8725, %v8746
        %v8749 = vunpack.c.l.s4 1966171168
        %v8750 = vunpack.c.0.s8 %v8749
        %v8751 = vlaneseq
        %v8752 = vshrl.u32 %v8751, 7
        %v8753 = vsub.s32 %v8750, %v8752
        %v8754 = vrot.slane %v8726, %v8753
        %v8755 = vcombine.high %v8733, %v8733
        %v8756 = vcombine.high %v8740, %v8740
        %v8757 = vcombine.high %v8747, %v8747
        %v8758 = vcombine.high %v8754, %v8754
        %v8759 = vcombine.high %v8643, %v8643
        %v8761 = vunpack.c.l.s4 1966171168
        %v8762 = vunpack.c.0.s8 %v8761
        %v8763 = vlaneseq
        %v8764 = vshrl.u32 %v8763, 7
        %v8765 = vsub.s32 %v8762, %v8764
        %v8766 = vrot.slane %v8643, %v8765
        %v8768 = vunpack.c.l.s4 1966171168
        %v8769 = vunpack.c.0.s8 %v8768
        %v8770 = vlaneseq
        %v8771 = vshrl.u32 %v8770, 7
        %v8772 = vsub.s32 %v8769, %v8771
        %v8773 = vrot.slane %v8759, %v8772
        %v8774 = vcombine.high %v8766, %v8766
        %v8775 = vcombine.high %v8773, %v8773
        %v8777 = vunpack.c.l.s4 1966171168
        %v8778 = vunpack.c.0.s8 %v8777
        %v8779 = vlaneseq
        %v8780 = vshrl.u32 %v8779, 7
        %v8781 = vsub.s32 %v8778, %v8780
        %v8782 = vrot.slane %v8766, %v8781
        %v8784 = vunpack.c.l.s4 1966171168
        %v8785 = vunpack.c.0.s8 %v8784
        %v8786 = vlaneseq
        %v8787 = vshrl.u32 %v8786, 7
        %v8788 = vsub.s32 %v8785, %v8787
        %v8789 = vrot.slane %v8773, %v8788
        %v8791 = vunpack.c.l.s4 1966171168
        %v8792 = vunpack.c.0.s8 %v8791
        %v8793 = vlaneseq
        %v8794 = vshrl.u32 %v8793, 7
        %v8795 = vsub.s32 %v8792, %v8794
        %v8796 = vrot.slane %v8774, %v8795
        %v8798 = vunpack.c.l.s4 1966171168
        %v8799 = vunpack.c.0.s8 %v8798
        %v8800 = vlaneseq
        %v8801 = vshrl.u32 %v8800, 7
        %v8802 = vsub.s32 %v8799, %v8801
        %v8803 = vrot.slane %v8775, %v8802
        %v8804 = vcombine.high %v8782, %v8782
        %v8805 = vcombine.high %v8789, %v8789
        %v8806 = vcombine.high %v8796, %v8796
        %v8807 = vcombine.high %v8803, %v8803
        %v8808 = vcombine.high %v8648, %v8648
        %v8810 = vunpack.c.l.s4 1966171168
        %v8811 = vunpack.c.0.s8 %v8810
        %v8812 = vlaneseq
        %v8813 = vshrl.u32 %v8812, 7
        %v8814 = vsub.s32 %v8811, %v8813
        %v8815 = vrot.slane %v8648, %v8814
        %v8817 = vunpack.c.l.s4 1966171168
        %v8818 = vunpack.c.0.s8 %v8817
        %v8819 = vlaneseq
        %v8820 = vshrl.u32 %v8819, 7
        %v8821 = vsub.s32 %v8818, %v8820
        %v8822 = vrot.slane %v8808, %v8821
        %v8823 = vcombine.high %v8815, %v8815
        %v8824 = vcombine.high %v8822, %v8822
        %v8826 = vunpack.c.l.s4 1966171168
        %v8827 = vunpack.c.0.s8 %v8826
        %v8828 = vlaneseq
        %v8829 = vshrl.u32 %v8828, 7
        %v8830 = vsub.s32 %v8827, %v8829
        %v8831 = vrot.slane %v8815, %v8830
        %v8833 = vunpack.c.l.s4 1966171168
        %v8834 = vunpack.c.0.s8 %v8833
        %v8835 = vlaneseq
        %v8836 = vshrl.u32 %v8835, 7
        %v8837 = vsub.s32 %v8834, %v8836
        %v8838 = vrot.slane %v8822, %v8837
        %v8840 = vunpack.c.l.s4 1966171168
        %v8841 = vunpack.c.0.s8 %v8840
        %v8842 = vlaneseq
        %v8843 = vshrl.u32 %v8842, 7
        %v8844 = vsub.s32 %v8841, %v8843
        %v8845 = vrot.slane %v8823, %v8844
        %v8847 = vunpack.c.l.s4 1966171168
        %v8848 = vunpack.c.0.s8 %v8847
        %v8849 = vlaneseq
        %v8850 = vshrl.u32 %v8849, 7
        %v8851 = vsub.s32 %v8848, %v8850
        %v8852 = vrot.slane %v8824, %v8851
        %v8853 = vcombine.high %v8831, %v8831
        %v8854 = vcombine.high %v8838, %v8838
        %v8855 = vcombine.high %v8845, %v8845
        %v8856 = vcombine.high %v8852, %v8852
        %v8857 = vcombine.high %v8653, %v8653
        %v8859 = vunpack.c.l.s4 1966171168
        %v8860 = vunpack.c.0.s8 %v8859
        %v8861 = vlaneseq
        %v8862 = vshrl.u32 %v8861, 7
        %v8863 = vsub.s32 %v8860, %v8862
        %v8864 = vrot.slane %v8653, %v8863
        %v8866 = vunpack.c.l.s4 1966171168
        %v8867 = vunpack.c.0.s8 %v8866
        %v8868 = vlaneseq
        %v8869 = vshrl.u32 %v8868, 7
        %v8870 = vsub.s32 %v8867, %v8869
        %v8871 = vrot.slane %v8857, %v8870
        %v8872 = vcombine.high %v8864, %v8864
        %v8873 = vcombine.high %v8871, %v8871
        %v8875 = vunpack.c.l.s4 1966171168
        %v8876 = vunpack.c.0.s8 %v8875
        %v8877 = vlaneseq
        %v8878 = vshrl.u32 %v8877, 7
        %v8879 = vsub.s32 %v8876, %v8878
        %v8880 = vrot.slane %v8864, %v8879
        %v8882 = vunpack.c.l.s4 1966171168
        %v8883 = vunpack.c.0.s8 %v8882
        %v8884 = vlaneseq
        %v8885 = vshrl.u32 %v8884, 7
        %v8886 = vsub.s32 %v8883, %v8885
        %v8887 = vrot.slane %v8871, %v8886
        %v8889 = vunpack.c.l.s4 1966171168
        %v8890 = vunpack.c.0.s8 %v8889
        %v8891 = vlaneseq
        %v8892 = vshrl.u32 %v8891, 7
        %v8893 = vsub.s32 %v8890, %v8892
        %v8894 = vrot.slane %v8872, %v8893
        %v8896 = vunpack.c.l.s4 1966171168
        %v8897 = vunpack.c.0.s8 %v8896
        %v8898 = vlaneseq
        %v8899 = vshrl.u32 %v8898, 7
        %v8900 = vsub.s32 %v8897, %v8899
        %v8901 = vrot.slane %v8873, %v8900
        %v8902 = vcombine.high %v8880, %v8880
        %v8903 = vcombine.high %v8887, %v8887
        %v8904 = vcombine.high %v8894, %v8894
        %v8905 = vcombine.high %v8901, %v8901
        %v8906 = vld [vmem:[%s7] sm:$0xff]
        %v8907 = vld [vmem:[%s7 + $0x8] sm:$0xff]
        %v8908 = vld [vmem:[%s7 + $0x10] sm:$0xff]
        %v8909 = vld [vmem:[%s7 + $0x18] sm:$0xff]
        %v8910 = vld [vmem:[%s7 + $0x20] sm:$0xff]
        %v8911 = vld [vmem:[%s7 + $0x28] sm:$0xff]
        %v8912 = vld [vmem:[%s7 + $0x30] sm:$0xff]
        %v8913 = vld [vmem:[%s7 + $0x38] sm:$0xff]
        %v8914 = vld [vmem:[%s7 + $0x40] sm:$0xff]
        %v8915 = vld [vmem:[%s7 + $0x48] sm:$0xff]
        %s8916 = scalar_lea.vmem %s7, 80
        %v8917 = vld [vmem:[%s8916] sm:$0xff]
        %v8918 = vld [vmem:[%s8916 + $0x8] sm:$0xff]
        %v8919 = vld [vmem:[%s8916 + $0x10] sm:$0xff]
        %v8920 = vld [vmem:[%s8916 + $0x18] sm:$0xff]
        %v8921 = vld [vmem:[%s8916 + $0x20] sm:$0xff]
        %v8922 = vld [vmem:[%s8916 + $0x28] sm:$0xff]
        %v8923 = vld [vmem:[%s8916 + $0x30] sm:$0xff]
        %v8924 = vld [vmem:[%s8916 + $0x38] sm:$0xff]
        %v8925 = vld [vmem:[%s8916 + $0x40] sm:$0xff]
        %v8926 = vld [vmem:[%s8916 + $0x48] sm:$0xff]
        %v8927 = vcombine.low %v8698, %v8707
        %v8928 = vcombine.low %v8757, %v8782
        %v8929 = vcombine.low %v8803, %v8853
        %v8930 = vcombine.low %v8856, %v8887
        %v8932 = vunpack.c.l.s4 1966171168
        %v8933 = vunpack.c.0.s8 %v8932
        %v8934 = vlaneseq
        %v8935 = vshrl.u32 %v8934, 7
        %v8936 = vsub.s32 %v8933, %v8935
        %v8937 = vrot.slane %v8927, %v8936
        %v8939 = vunpack.c.l.s4 1966171168
        %v8940 = vunpack.c.0.s8 %v8939
        %v8941 = vlaneseq
        %v8942 = vshrl.u32 %v8941, 7
        %v8943 = vsub.s32 %v8940, %v8942
        %v8944 = vrot.slane %v8928, %v8943
        %v8946 = vunpack.c.l.s4 1966171168
        %v8947 = vunpack.c.0.s8 %v8946
        %v8948 = vlaneseq
        %v8949 = vshrl.u32 %v8948, 7
        %v8950 = vsub.s32 %v8947, %v8949
        %v8951 = vrot.slane %v8929, %v8950
        %v8953 = vunpack.c.l.s4 1966171168
        %v8954 = vunpack.c.0.s8 %v8953
        %v8955 = vlaneseq
        %v8956 = vshrl.u32 %v8955, 7
        %v8957 = vsub.s32 %v8954, %v8956
        %v8958 = vrot.slane %v8930, %v8957
        %v8959 = vcombine.low %v8937, %v8944
        %v8960 = vcombine.low %v8951, %v8958
        %v8962 = vunpack.c.l.s4 1966171168
        %v8963 = vunpack.c.0.s8 %v8962
        %v8964 = vlaneseq
        %v8965 = vshrl.u32 %v8964, 7
        %v8966 = vsub.s32 %v8963, %v8965
        %v8967 = vrot.slane %v8959, %v8966
        %v8969 = vunpack.c.l.s4 1966171168
        %v8970 = vunpack.c.0.s8 %v8969
        %v8971 = vlaneseq
        %v8972 = vshrl.u32 %v8971, 7
        %v8973 = vsub.s32 %v8970, %v8972
        %v8974 = vrot.slane %v8960, %v8973
        %v8975 = vcombine.low %v8967, %v8974
        %vm8976 = vcmask 654336
        %v8977 = vsel %vm8976, %v8975, 0
        %8979 = vmatprep.subr.mxu0 0.0
        %8980 = vmatpush1.msra.mxu0 0.0
        %8981 = vmatprep.subr.mxu0 0.0
        %8982 = vmatpush1.msra.mxu0 0.0
        %8983 = vmatprep.subr.mxu0 0.0
        %8984 = vmatpush1.msra.mxu0 0.0
        %8985 = vmatprep.subr.mxu0 0.0
        %8986 = vmatpush1.msra.mxu0 0.0
        %8987 = vmatprep.subr.mxu0 0.0
        %8988 = vmatpush1.msra.mxu0 0.0
        %8989 = vmatprep.subr.mxu0 0.0
        %8990 = vmatpush1.msra.mxu0 0.0
        %8991 = vmatprep.subr.mxu0 0.0
        %8992 = vmatpush1.msra.mxu0 %v8926
        %8993 = vmatprep.subr.mxu0 0.0
        %8994 = vmatpush1.msra.mxu0 %v8925
        %8995 = vmatprep.subr.mxu0 0.0
        %8996 = vmatpush1.msra.mxu0 %v8924
        %8997 = vmatprep.subr.mxu0 0.0
        %8998 = vmatpush1.msra.mxu0 %v8923
        %8999 = vmatprep.subr.mxu0 0.0
        %9000 = vmatpush1.msra.mxu0 %v8922
        %9001 = vmatprep.subr.mxu0 0.0
        %9002 = vmatpush1.msra.mxu0 %v8921
        %9003 = vmatprep.subr.mxu0 0.0
        %9004 = vmatpush1.msra.mxu0 %v8920
        %9005 = vmatprep.subr.mxu0 0.0
        %9006 = vmatpush1.msra.mxu0 %v8919
        %9007 = vmatprep.subr.mxu0 0.0
        %9008 = vmatpush1.msra.mxu0 %v8918
        %9009 = vmatprep.subr.mxu0 0.0
        %9010 = vmatpush1.msra.mxu0 %v8917
        %9011 = vmatprep.subr.mxu0 0.0
        %9012 = vmatpush2.msra.mxu0 0.0
        %9013 = vmatprep.subr.mxu0 0.0
        %9014 = vmatpush2.msra.mxu0 0.0
        %9015 = vmatprep.subr.mxu0 0.0
        %9016 = vmatpush2.msra.mxu0 0.0
        %9017 = vmatprep.subr.mxu0 0.0
        %9018 = vmatpush2.msra.mxu0 0.0
        %9019 = vmatprep.subr.mxu0 0.0
        %9020 = vmatpush2.msra.mxu0 0.0
        %9021 = vmatprep.subr.mxu0 0.0
        %9022 = vmatpush2.msra.mxu0 0.0
        %9023 = vmatprep.subr.mxu0 0.0
        %9024 = vmatpush2.msra.mxu0 0.0
        %9025 = vmatprep.subr.mxu0 0.0
        %9026 = vmatpush2.msra.mxu0 0.0
        %9027 = vmatprep.subr.mxu0 0.0
        %9028 = vmatpush2.msra.mxu0 0.0
        %9029 = vmatprep.subr.mxu0 0.0
        %9030 = vmatpush2.msra.mxu0 0.0
        %9031 = vmatprep.subr.mxu0 0.0
        %9032 = vmatpush2.msra.mxu0 0.0
        %9033 = vmatprep.subr.mxu0 0.0
        %9034 = vmatpush2.msra.mxu0 0.0
        %9035 = vmatprep.subr.mxu0 0.0
        %9036 = vmatpush2.msra.mxu0 0.0
        %9037 = vmatprep.subr.mxu0 0.0
        %9038 = vmatpush2.msra.mxu0 0.0
        %9039 = vmatprep.subr.mxu0 0.0
        %9040 = vmatpush2.msra.mxu0 0.0
        %9041 = vmatprep.subr.mxu0 0.0
        %9042 = vmatpush2.msra.mxu0 0.0
        %9043 = vmatprep.mubr.f32.mxu0 0.0
        %9044 = vmatmul.mubr.f32.gmra.mxu0 %v8977
        %v9045 = vpop.f32.mrf.mxu0
        %v9046 = vadd.f32 0.0, %v9045
        %v9047 = vpop.f32.mrf.mxu0
        %9048 = vdwg.mxu0
        %v9049 = vcombine.low %v8684, %v8705
        %v9050 = vcombine.low %v8755, %v8758
        %v9051 = vcombine.low %v8789, %v8845
        %v9052 = vcombine.low %v8854, %v8904
        %v9054 = vunpack.c.l.s4 1966171168
        %v9055 = vunpack.c.0.s8 %v9054
        %v9056 = vlaneseq
        %v9057 = vshrl.u32 %v9056, 7
        %v9058 = vsub.s32 %v9055, %v9057
        %v9059 = vrot.slane %v9049, %v9058
        %v9061 = vunpack.c.l.s4 1966171168
        %v9062 = vunpack.c.0.s8 %v9061
        %v9063 = vlaneseq
        %v9064 = vshrl.u32 %v9063, 7
        %v9065 = vsub.s32 %v9062, %v9064
        %v9066 = vrot.slane %v9050, %v9065
        %v9068 = vunpack.c.l.s4 1966171168
        %v9069 = vunpack.c.0.s8 %v9068
        %v9070 = vlaneseq
        %v9071 = vshrl.u32 %v9070, 7
        %v9072 = vsub.s32 %v9069, %v9071
        %v9073 = vrot.slane %v9051, %v9072
        %v9075 = vunpack.c.l.s4 1966171168
        %v9076 = vunpack.c.0.s8 %v9075
        %v9077 = vlaneseq
        %v9078 = vshrl.u32 %v9077, 7
        %v9079 = vsub.s32 %v9076, %v9078
        %v9080 = vrot.slane %v9052, %v9079
        %v9081 = vcombine.low %v9059, %v9066
        %v9082 = vcombine.low %v9073, %v9080
        %v9084 = vunpack.c.l.s4 1966171168
        %v9085 = vunpack.c.0.s8 %v9084
        %v9086 = vlaneseq
        %v9087 = vshrl.u32 %v9086, 7
        %v9088 = vsub.s32 %v9085, %v9087
        %v9089 = vrot.slane %v9081, %v9088
        %v9091 = vunpack.c.l.s4 1966171168
        %v9092 = vunpack.c.0.s8 %v9091
        %v9093 = vlaneseq
        %v9094 = vshrl.u32 %v9093, 7
        %v9095 = vsub.s32 %v9092, %v9094
        %v9096 = vrot.slane %v9082, %v9095
        %v9097 = vcombine.low %v9089, %v9096
        %v9098 = vsel %vm8976, %v9097, 0
        %9100 = vmatprep.subr.mxu0 0.0
        %9101 = vmatpush1.msra.mxu0 0.0
        %9102 = vmatprep.subr.mxu0 0.0
        %9103 = vmatpush1.msra.mxu0 0.0
        %9104 = vmatprep.subr.mxu0 0.0
        %9105 = vmatpush1.msra.mxu0 0.0
        %9106 = vmatprep.subr.mxu0 0.0
        %9107 = vmatpush1.msra.mxu0 0.0
        %9108 = vmatprep.subr.mxu0 0.0
        %9109 = vmatpush1.msra.mxu0 0.0
        %9110 = vmatprep.subr.mxu0 0.0
        %9111 = vmatpush1.msra.mxu0 0.0
        %9112 = vmatprep.subr.mxu0 0.0
        %9113 = vmatpush1.msra.mxu0 %v8915
        %9114 = vmatprep.subr.mxu0 0.0
        %9115 = vmatpush1.msra.mxu0 %v8914
        %9116 = vmatprep.subr.mxu0 0.0
        %9117 = vmatpush1.msra.mxu0 %v8913
        %9118 = vmatprep.subr.mxu0 0.0
        %9119 = vmatpush1.msra.mxu0 %v8912
        %9120 = vmatprep.subr.mxu0 0.0
        %9121 = vmatpush1.msra.mxu0 %v8911
        %9122 = vmatprep.subr.mxu0 0.0
        %9123 = vmatpush1.msra.mxu0 %v8910
        %9124 = vmatprep.subr.mxu0 0.0
        %9125 = vmatpush1.msra.mxu0 %v8909
        %9126 = vmatprep.subr.mxu0 0.0
        %9127 = vmatpush1.msra.mxu0 %v8908
        %9128 = vmatprep.subr.mxu0 0.0
        %9129 = vmatpush1.msra.mxu0 %v8907
        %9130 = vmatprep.subr.mxu0 0.0
        %9131 = vmatpush1.msra.mxu0 %v8906
        %9132 = vmatprep.subr.mxu0 0.0
        %9133 = vmatpush2.msra.mxu0 0.0
        %9134 = vmatprep.subr.mxu0 0.0
        %9135 = vmatpush2.msra.mxu0 0.0
        %9136 = vmatprep.subr.mxu0 0.0
        %9137 = vmatpush2.msra.mxu0 0.0
        %9138 = vmatprep.subr.mxu0 0.0
        %9139 = vmatpush2.msra.mxu0 0.0
        %9140 = vmatprep.subr.mxu0 0.0
        %9141 = vmatpush2.msra.mxu0 0.0
        %9142 = vmatprep.subr.mxu0 0.0
        %9143 = vmatpush2.msra.mxu0 0.0
        %9144 = vmatprep.subr.mxu0 0.0
        %9145 = vmatpush2.msra.mxu0 0.0
        %9146 = vmatprep.subr.mxu0 0.0
        %9147 = vmatpush2.msra.mxu0 0.0
        %9148 = vmatprep.subr.mxu0 0.0
        %9149 = vmatpush2.msra.mxu0 0.0
        %9150 = vmatprep.subr.mxu0 0.0
        %9151 = vmatpush2.msra.mxu0 0.0
        %9152 = vmatprep.subr.mxu0 0.0
        %9153 = vmatpush2.msra.mxu0 0.0
        %9154 = vmatprep.subr.mxu0 0.0
        %9155 = vmatpush2.msra.mxu0 0.0
        %9156 = vmatprep.subr.mxu0 0.0
        %9157 = vmatpush2.msra.mxu0 0.0
        %9158 = vmatprep.subr.mxu0 0.0
        %9159 = vmatpush2.msra.mxu0 0.0
        %9160 = vmatprep.subr.mxu0 0.0
        %9161 = vmatpush2.msra.mxu0 0.0
        %9162 = vmatprep.subr.mxu0 0.0
        %9163 = vmatpush2.msra.mxu0 0.0
        %9164 = vmatprep.mubr.f32.mxu0 0.0
        %9165 = vmatmul.mubr.f32.gmra.mxu0 %v9098
        %v9166 = vpop.f32.mrf.mxu0
        %v9167 = vadd.f32 %v9046, %v9166
        %v9168 = vpop.f32.mrf.mxu0
        %9169 = vdwg.mxu0
        %s9170 = scalar_lea.vmem %s7, 160
        %v9171 = vld [vmem:[%s9170] sm:$0xff]
        %v9172 = vld [vmem:[%s9170 + $0x8] sm:$0xff]
        %v9173 = vld [vmem:[%s9170 + $0x10] sm:$0xff]
        %v9174 = vld [vmem:[%s9170 + $0x18] sm:$0xff]
        %v9175 = vld [vmem:[%s9170 + $0x20] sm:$0xff]
        %v9176 = vld [vmem:[%s9170 + $0x28] sm:$0xff]
        %v9177 = vld [vmem:[%s9170 + $0x30] sm:$0xff]
        %v9178 = vld [vmem:[%s9170 + $0x38] sm:$0xff]
        %v9179 = vld [vmem:[%s9170 + $0x40] sm:$0xff]
        %v9180 = vld [vmem:[%s9170 + $0x48] sm:$0xff]
        %v9181 = vcombine.low %v8706, %v8709
        %v9182 = vcombine.low %v8740, %v8796
        %v9183 = vcombine.low %v8805, %v8855
        %v9184 = vcombine.low %v8880, %v8901
        %v9186 = vunpack.c.l.s4 1966171168
        %v9187 = vunpack.c.0.s8 %v9186
        %v9188 = vlaneseq
        %v9189 = vshrl.u32 %v9188, 7
        %v9190 = vsub.s32 %v9187, %v9189
        %v9191 = vrot.slane %v9181, %v9190
        %v9193 = vunpack.c.l.s4 1966171168
        %v9194 = vunpack.c.0.s8 %v9193
        %v9195 = vlaneseq
        %v9196 = vshrl.u32 %v9195, 7
        %v9197 = vsub.s32 %v9194, %v9196
        %v9198 = vrot.slane %v9182, %v9197
        %v9200 = vunpack.c.l.s4 1966171168
        %v9201 = vunpack.c.0.s8 %v9200
        %v9202 = vlaneseq
        %v9203 = vshrl.u32 %v9202, 7
        %v9204 = vsub.s32 %v9201, %v9203
        %v9205 = vrot.slane %v9183, %v9204
        %v9207 = vunpack.c.l.s4 1966171168
        %v9208 = vunpack.c.0.s8 %v9207
        %v9209 = vlaneseq
        %v9210 = vshrl.u32 %v9209, 7
        %v9211 = vsub.s32 %v9208, %v9210
        %v9212 = vrot.slane %v9184, %v9211
        %v9213 = vcombine.low %v9191, %v9198
        %v9214 = vcombine.low %v9205, %v9212
        %v9216 = vunpack.c.l.s4 1966171168
        %v9217 = vunpack.c.0.s8 %v9216
        %v9218 = vlaneseq
        %v9219 = vshrl.u32 %v9218, 7
        %v9220 = vsub.s32 %v9217, %v9219
        %v9221 = vrot.slane %v9213, %v9220
        %v9223 = vunpack.c.l.s4 1966171168
        %v9224 = vunpack.c.0.s8 %v9223
        %v9225 = vlaneseq
        %v9226 = vshrl.u32 %v9225, 7
        %v9227 = vsub.s32 %v9224, %v9226
        %v9228 = vrot.slane %v9214, %v9227
        %v9229 = vcombine.low %v9221, %v9228
        %v9230 = vsel %vm8976, %v9229, 0
        %9232 = vmatprep.subr.mxu0 0.0
        %9233 = vmatpush1.msra.mxu0 0.0
        %9234 = vmatprep.subr.mxu0 0.0
        %9235 = vmatpush1.msra.mxu0 0.0
        %9236 = vmatprep.subr.mxu0 0.0
        %9237 = vmatpush1.msra.mxu0 0.0
        %9238 = vmatprep.subr.mxu0 0.0
        %9239 = vmatpush1.msra.mxu0 0.0
        %9240 = vmatprep.subr.mxu0 0.0
        %9241 = vmatpush1.msra.mxu0 0.0
        %9242 = vmatprep.subr.mxu0 0.0
        %9243 = vmatpush1.msra.mxu0 0.0
        %9244 = vmatprep.subr.mxu0 0.0
        %9245 = vmatpush1.msra.mxu0 %v9180
        %9246 = vmatprep.subr.mxu0 0.0
        %9247 = vmatpush1.msra.mxu0 %v9179
        %9248 = vmatprep.subr.mxu0 0.0
        %9249 = vmatpush1.msra.mxu0 %v9178
        %9250 = vmatprep.subr.mxu0 0.0
        %9251 = vmatpush1.msra.mxu0 %v9177
        %9252 = vmatprep.subr.mxu0 0.0
        %9253 = vmatpush1.msra.mxu0 %v9176
        %9254 = vmatprep.subr.mxu0 0.0
        %9255 = vmatpush1.msra.mxu0 %v9175
        %9256 = vmatprep.subr.mxu0 0.0
        %9257 = vmatpush1.msra.mxu0 %v9174
        %9258 = vmatprep.subr.mxu0 0.0
        %9259 = vmatpush1.msra.mxu0 %v9173
        %9260 = vmatprep.subr.mxu0 0.0
        %9261 = vmatpush1.msra.mxu0 %v9172
        %9262 = vmatprep.subr.mxu0 0.0
        %9263 = vmatpush1.msra.mxu0 %v9171
        %9264 = vmatprep.subr.mxu0 0.0
        %9265 = vmatpush2.msra.mxu0 0.0
        %9266 = vmatprep.subr.mxu0 0.0
        %9267 = vmatpush2.msra.mxu0 0.0
        %9268 = vmatprep.subr.mxu0 0.0
        %9269 = vmatpush2.msra.mxu0 0.0
        %9270 = vmatprep.subr.mxu0 0.0
        %9271 = vmatpush2.msra.mxu0 0.0
        %9272 = vmatprep.subr.mxu0 0.0
        %9273 = vmatpush2.msra.mxu0 0.0
        %9274 = vmatprep.subr.mxu0 0.0
        %9275 = vmatpush2.msra.mxu0 0.0
        %9276 = vmatprep.subr.mxu0 0.0
        %9277 = vmatpush2.msra.mxu0 0.0
        %9278 = vmatprep.subr.mxu0 0.0
        %9279 = vmatpush2.msra.mxu0 0.0
        %9280 = vmatprep.subr.mxu0 0.0
        %9281 = vmatpush2.msra.mxu0 0.0
        %9282 = vmatprep.subr.mxu0 0.0
        %9283 = vmatpush2.msra.mxu0 0.0
        %9284 = vmatprep.subr.mxu0 0.0
        %9285 = vmatpush2.msra.mxu0 0.0
        %9286 = vmatprep.subr.mxu0 0.0
        %9287 = vmatpush2.msra.mxu0 0.0
        %9288 = vmatprep.subr.mxu0 0.0
        %9289 = vmatpush2.msra.mxu0 0.0
        %9290 = vmatprep.subr.mxu0 0.0
        %9291 = vmatpush2.msra.mxu0 0.0
        %9292 = vmatprep.subr.mxu0 0.0
        %9293 = vmatpush2.msra.mxu0 0.0
        %9294 = vmatprep.subr.mxu0 0.0
        %9295 = vmatpush2.msra.mxu0 0.0
        %9296 = vmatprep.mubr.f32.mxu0 0.0
        %9297 = vmatmul.mubr.f32.gmra.mxu0 %v9230
        %v9298 = vpop.f32.mrf.mxu0
        %v9299 = vadd.f32 0.0, %v9298
        %v9300 = vpop.f32.mrf.mxu0
        %9301 = vdwg.mxu0
        %v9302 = vadd.f32 %v9167, %v9299
        %s9303 = scalar_lea.vmem %s7, 240
        %v9304 = vld [vmem:[%s9303] sm:$0xff]
        %v9305 = vld [vmem:[%s9303 + $0x8] sm:$0xff]
        %v9306 = vld [vmem:[%s9303 + $0x10] sm:$0xff]
        %v9307 = vld [vmem:[%s9303 + $0x18] sm:$0xff]
        %v9308 = vld [vmem:[%s9303 + $0x20] sm:$0xff]
        %v9309 = vld [vmem:[%s9303 + $0x28] sm:$0xff]
        %v9310 = vld [vmem:[%s9303 + $0x30] sm:$0xff]
        %v9311 = vld [vmem:[%s9303 + $0x38] sm:$0xff]
        %v9312 = vld [vmem:[%s9303 + $0x40] sm:$0xff]
        %v9313 = vld [vmem:[%s9303 + $0x48] sm:$0xff]
        %v9314 = vcombine.low %v8708, %v8733
        %v9315 = vcombine.low %v8754, %v8804
        %v9316 = vcombine.low %v8807, %v8838
        %v9317 = vcombine.low %v8894, %v8903
        %v9319 = vunpack.c.l.s4 1966171168
        %v9320 = vunpack.c.0.s8 %v9319
        %v9321 = vlaneseq
        %v9322 = vshrl.u32 %v9321, 7
        %v9323 = vsub.s32 %v9320, %v9322
        %v9324 = vrot.slane %v9314, %v9323
        %v9326 = vunpack.c.l.s4 1966171168
        %v9327 = vunpack.c.0.s8 %v9326
        %v9328 = vlaneseq
        %v9329 = vshrl.u32 %v9328, 7
        %v9330 = vsub.s32 %v9327, %v9329
        %v9331 = vrot.slane %v9315, %v9330
        %v9333 = vunpack.c.l.s4 1966171168
        %v9334 = vunpack.c.0.s8 %v9333
        %v9335 = vlaneseq
        %v9336 = vshrl.u32 %v9335, 7
        %v9337 = vsub.s32 %v9334, %v9336
        %v9338 = vrot.slane %v9316, %v9337
        %v9340 = vunpack.c.l.s4 1966171168
        %v9341 = vunpack.c.0.s8 %v9340
        %v9342 = vlaneseq
        %v9343 = vshrl.u32 %v9342, 7
        %v9344 = vsub.s32 %v9341, %v9343
        %v9345 = vrot.slane %v9317, %v9344
        %v9346 = vcombine.low %v9324, %v9331
        %v9347 = vcombine.low %v9338, %v9345
        %v9349 = vunpack.c.l.s4 1966171168
        %v9350 = vunpack.c.0.s8 %v9349
        %v9351 = vlaneseq
        %v9352 = vshrl.u32 %v9351, 7
        %v9353 = vsub.s32 %v9350, %v9352
        %v9354 = vrot.slane %v9346, %v9353
        %v9356 = vunpack.c.l.s4 1966171168
        %v9357 = vunpack.c.0.s8 %v9356
        %v9358 = vlaneseq
        %v9359 = vshrl.u32 %v9358, 7
        %v9360 = vsub.s32 %v9357, %v9359
        %v9361 = vrot.slane %v9347, %v9360
        %v9362 = vcombine.low %v9354, %v9361
        %v9363 = vsel %vm8976, %v9362, 0
        %9365 = vmatprep.subr.mxu0 0.0
        %9366 = vmatpush1.msra.mxu0 0.0
        %9367 = vmatprep.subr.mxu0 0.0
        %9368 = vmatpush1.msra.mxu0 0.0
        %9369 = vmatprep.subr.mxu0 0.0
        %9370 = vmatpush1.msra.mxu0 0.0
        %9371 = vmatprep.subr.mxu0 0.0
        %9372 = vmatpush1.msra.mxu0 0.0
        %9373 = vmatprep.subr.mxu0 0.0
        %9374 = vmatpush1.msra.mxu0 0.0
        %9375 = vmatprep.subr.mxu0 0.0
        %9376 = vmatpush1.msra.mxu0 0.0
        %9377 = vmatprep.subr.mxu0 0.0
        %9378 = vmatpush1.msra.mxu0 %v9313
        %9379 = vmatprep.subr.mxu0 0.0
        %9380 = vmatpush1.msra.mxu0 %v9312
        %9381 = vmatprep.subr.mxu0 0.0
        %9382 = vmatpush1.msra.mxu0 %v9311
        %9383 = vmatprep.subr.mxu0 0.0
        %9384 = vmatpush1.msra.mxu0 %v9310
        %9385 = vmatprep.subr.mxu0 0.0
        %9386 = vmatpush1.msra.mxu0 %v9309
        %9387 = vmatprep.subr.mxu0 0.0
        %9388 = vmatpush1.msra.mxu0 %v9308
        %9389 = vmatprep.subr.mxu0 0.0
        %9390 = vmatpush1.msra.mxu0 %v9307
        %9391 = vmatprep.subr.mxu0 0.0
        %9392 = vmatpush1.msra.mxu0 %v9306
        %9393 = vmatprep.subr.mxu0 0.0
        %9394 = vmatpush1.msra.mxu0 %v9305
        %9395 = vmatprep.subr.mxu0 0.0
        %9396 = vmatpush1.msra.mxu0 %v9304
        %9397 = vmatprep.subr.mxu0 0.0
        %9398 = vmatpush2.msra.mxu0 0.0
        %9399 = vmatprep.subr.mxu0 0.0
        %9400 = vmatpush2.msra.mxu0 0.0
        %9401 = vmatprep.subr.mxu0 0.0
        %9402 = vmatpush2.msra.mxu0 0.0
        %9403 = vmatprep.subr.mxu0 0.0
        %9404 = vmatpush2.msra.mxu0 0.0
        %9405 = vmatprep.subr.mxu0 0.0
        %9406 = vmatpush2.msra.mxu0 0.0
        %9407 = vmatprep.subr.mxu0 0.0
        %9408 = vmatpush2.msra.mxu0 0.0
        %9409 = vmatprep.subr.mxu0 0.0
        %9410 = vmatpush2.msra.mxu0 0.0
        %9411 = vmatprep.subr.mxu0 0.0
        %9412 = vmatpush2.msra.mxu0 0.0
        %9413 = vmatprep.subr.mxu0 0.0
        %9414 = vmatpush2.msra.mxu0 0.0
        %9415 = vmatprep.subr.mxu0 0.0
        %9416 = vmatpush2.msra.mxu0 0.0
        %9417 = vmatprep.subr.mxu0 0.0
        %9418 = vmatpush2.msra.mxu0 0.0
        %9419 = vmatprep.subr.mxu0 0.0
        %9420 = vmatpush2.msra.mxu0 0.0
        %9421 = vmatprep.subr.mxu0 0.0
        %9422 = vmatpush2.msra.mxu0 0.0
        %9423 = vmatprep.subr.mxu0 0.0
        %9424 = vmatpush2.msra.mxu0 0.0
        %9425 = vmatprep.subr.mxu0 0.0
        %9426 = vmatpush2.msra.mxu0 0.0
        %9427 = vmatprep.subr.mxu0 0.0
        %9428 = vmatpush2.msra.mxu0 0.0
        %9429 = vmatprep.mubr.f32.mxu0 0.0
        %9430 = vmatmul.mubr.f32.gmra.mxu0 %v9363
        %v9431 = vpop.f32.mrf.mxu0
        %v9432 = vadd.f32 0.0, %v9431
        %v9433 = vpop.f32.mrf.mxu0
        %9434 = vdwg.mxu0
        %v9435 = vadd.f32 %v9302, %v9432
        %s9436 = scalar_lea.vmem %s7, 320
        %v9437 = vld [vmem:[%s9436] sm:$0xff]
        %v9438 = vld [vmem:[%s9436 + $0x8] sm:$0xff]
        %v9439 = vld [vmem:[%s9436 + $0x10] sm:$0xff]
        %v9440 = vld [vmem:[%s9436 + $0x18] sm:$0xff]
        %v9441 = vld [vmem:[%s9436 + $0x20] sm:$0xff]
        %v9442 = vld [vmem:[%s9436 + $0x28] sm:$0xff]
        %v9443 = vld [vmem:[%s9436 + $0x30] sm:$0xff]
        %v9444 = vld [vmem:[%s9436 + $0x38] sm:$0xff]
        %v9445 = vld [vmem:[%s9436 + $0x40] sm:$0xff]
        %v9446 = vld [vmem:[%s9436 + $0x48] sm:$0xff]
        %v9447 = vcombine.low %v8691, %v8747
        %v9448 = vcombine.low %v8756, %v8806
        %v9449 = vcombine.low %v8831, %v8852
        %v9450 = vcombine.low %v8902, %v8905
        %v9452 = vunpack.c.l.s4 1966171168
        %v9453 = vunpack.c.0.s8 %v9452
        %v9454 = vlaneseq
        %v9455 = vshrl.u32 %v9454, 7
        %v9456 = vsub.s32 %v9453, %v9455
        %v9457 = vrot.slane %v9447, %v9456
        %v9459 = vunpack.c.l.s4 1966171168
        %v9460 = vunpack.c.0.s8 %v9459
        %v9461 = vlaneseq
        %v9462 = vshrl.u32 %v9461, 7
        %v9463 = vsub.s32 %v9460, %v9462
        %v9464 = vrot.slane %v9448, %v9463
        %v9466 = vunpack.c.l.s4 1966171168
        %v9467 = vunpack.c.0.s8 %v9466
        %v9468 = vlaneseq
        %v9469 = vshrl.u32 %v9468, 7
        %v9470 = vsub.s32 %v9467, %v9469
        %v9471 = vrot.slane %v9449, %v9470
        %v9473 = vunpack.c.l.s4 1966171168
        %v9474 = vunpack.c.0.s8 %v9473
        %v9475 = vlaneseq
        %v9476 = vshrl.u32 %v9475, 7
        %v9477 = vsub.s32 %v9474, %v9476
        %v9478 = vrot.slane %v9450, %v9477
        %v9479 = vcombine.low %v9457, %v9464
        %v9480 = vcombine.low %v9471, %v9478
        %v9482 = vunpack.c.l.s4 1966171168
        %v9483 = vunpack.c.0.s8 %v9482
        %v9484 = vlaneseq
        %v9485 = vshrl.u32 %v9484, 7
        %v9486 = vsub.s32 %v9483, %v9485
        %v9487 = vrot.slane %v9479, %v9486
        %v9489 = vunpack.c.l.s4 1966171168
        %v9490 = vunpack.c.0.s8 %v9489
        %v9491 = vlaneseq
        %v9492 = vshrl.u32 %v9491, 7
        %v9493 = vsub.s32 %v9490, %v9492
        %v9494 = vrot.slane %v9480, %v9493
        %v9495 = vcombine.low %v9487, %v9494
        %v9496 = vsel %vm8976, %v9495, 0
        %9498 = vmatprep.subr.mxu0 0.0
        %9499 = vmatpush1.msra.mxu0 0.0
        %9500 = vmatprep.subr.mxu0 0.0
        %9501 = vmatpush1.msra.mxu0 0.0
        %9502 = vmatprep.subr.mxu0 0.0
        %9503 = vmatpush1.msra.mxu0 0.0
        %9504 = vmatprep.subr.mxu0 0.0
        %9505 = vmatpush1.msra.mxu0 0.0
        %9506 = vmatprep.subr.mxu0 0.0
        %9507 = vmatpush1.msra.mxu0 0.0
        %9508 = vmatprep.subr.mxu0 0.0
        %9509 = vmatpush1.msra.mxu0 0.0
        %9510 = vmatprep.subr.mxu0 0.0
        %9511 = vmatpush1.msra.mxu0 %v9446
        %9512 = vmatprep.subr.mxu0 0.0
        %9513 = vmatpush1.msra.mxu0 %v9445
        %9514 = vmatprep.subr.mxu0 0.0
        %9515 = vmatpush1.msra.mxu0 %v9444
        %9516 = vmatprep.subr.mxu0 0.0
        %9517 = vmatpush1.msra.mxu0 %v9443
        %9518 = vmatprep.subr.mxu0 0.0
        %9519 = vmatpush1.msra.mxu0 %v9442
        %9520 = vmatprep.subr.mxu0 0.0
        %9521 = vmatpush1.msra.mxu0 %v9441
        %9522 = vmatprep.subr.mxu0 0.0
        %9523 = vmatpush1.msra.mxu0 %v9440
        %9524 = vmatprep.subr.mxu0 0.0
        %9525 = vmatpush1.msra.mxu0 %v9439
        %9526 = vmatprep.subr.mxu0 0.0
        %9527 = vmatpush1.msra.mxu0 %v9438
        %9528 = vmatprep.subr.mxu0 0.0
        %9529 = vmatpush1.msra.mxu0 %v9437
        %9530 = vmatprep.subr.mxu0 0.0
        %9531 = vmatpush2.msra.mxu0 0.0
        %9532 = vmatprep.subr.mxu0 0.0
        %9533 = vmatpush2.msra.mxu0 0.0
        %9534 = vmatprep.subr.mxu0 0.0
        %9535 = vmatpush2.msra.mxu0 0.0
        %9536 = vmatprep.subr.mxu0 0.0
        %9537 = vmatpush2.msra.mxu0 0.0
        %9538 = vmatprep.subr.mxu0 0.0
        %9539 = vmatpush2.msra.mxu0 0.0
        %9540 = vmatprep.subr.mxu0 0.0
        %9541 = vmatpush2.msra.mxu0 0.0
        %9542 = vmatprep.subr.mxu0 0.0
        %9543 = vmatpush2.msra.mxu0 0.0
        %9544 = vmatprep.subr.mxu0 0.0
        %9545 = vmatpush2.msra.mxu0 0.0
        %9546 = vmatprep.subr.mxu0 0.0
        %9547 = vmatpush2.msra.mxu0 0.0
        %9548 = vmatprep.subr.mxu0 0.0
        %9549 = vmatpush2.msra.mxu0 0.0
        %9550 = vmatprep.subr.mxu0 0.0
        %9551 = vmatpush2.msra.mxu0 0.0
        %9552 = vmatprep.subr.mxu0 0.0
        %9553 = vmatpush2.msra.mxu0 0.0
        %9554 = vmatprep.subr.mxu0 0.0
        %9555 = vmatpush2.msra.mxu0 0.0
        %9556 = vmatprep.subr.mxu0 0.0
        %9557 = vmatpush2.msra.mxu0 0.0
        %9558 = vmatprep.subr.mxu0 0.0
        %9559 = vmatpush2.msra.mxu0 0.0
        %9560 = vmatprep.subr.mxu0 0.0
        %9561 = vmatpush2.msra.mxu0 0.0
        %9562 = vmatprep.mubr.f32.mxu0 0.0
        %9563 = vmatmul.mubr.f32.gmra.mxu0 %v9496
        %v9564 = vpop.f32.mrf.mxu0
        %v9565 = vadd.f32 0.0, %v9564
        %v9566 = vpop.f32.mrf.mxu0
        %9567 = vdwg.mxu0
        %v9568 = vadd.f32 %v9435, %v9565
        %v9569 = vld [vmem:[%s8] sm:$0x1]
        %v9571 = vlaneseq
        %v9572 = vshrl.u32 %v9571, 7
        %v9573 = vsub.s32 0, %v9572
        %v9574 = vrot.slane %v9569, %v9573
        %v9576 = vadd.f32 %v9568, %v9574
        %v9577 = vmax.f32 %v9576, 0.0
        %v9578 = vld [vmem:[%s9] sm:$0xff]
        %v9579 = vld [vmem:[%s9 + $0x8] sm:$0xff]
        %v9580 = vld [vmem:[%s9 + $0x10] sm:$0xff]
        %v9581 = vld [vmem:[%s9 + $0x18] sm:$0xff]
        %v9582 = vld [vmem:[%s9 + $0x20] sm:$0xff]
        %v9583 = vld [vmem:[%s9 + $0x28] sm:$0xff]
        %v9584 = vld [vmem:[%s9 + $0x30] sm:$0xff]
        %v9585 = vld [vmem:[%s9 + $0x38] sm:$0xff]
        %v9586 = vld [vmem:[%s9 + $0x40] sm:$0xff]
        %v9587 = vld [vmem:[%s9 + $0x48] sm:$0xff]
        %v9588 = vld [vmem:[%s9 + $0x50] sm:$0xff]
        %v9589 = vld [vmem:[%s9 + $0x58] sm:$0xff]
        %v9590 = vld [vmem:[%s9 + $0x60] sm:$0xff]
        %v9591 = vld [vmem:[%s9 + $0x68] sm:$0xff]
        %v9592 = vld [vmem:[%s9 + $0x70] sm:$0xff]
        %v9593 = vld [vmem:[%s9 + $0x78] sm:$0xff]
        %v9594 = vld [vmem:[%s10] sm:$0x1]
        %v9596 = vlaneseq
        %v9597 = vshrl.u32 %v9596, 7
        %v9598 = vsub.s32 0, %v9597
        %v9599 = vrot.slane %v9594, %v9598
        %9601 = vmatprep.subr.mxu0 0.0
        %9602 = vmatpush1.msra.mxu0 %v9593
        %9603 = vmatprep.subr.mxu0 0.0
        %9604 = vmatpush1.msra.mxu0 %v9592
        %9605 = vmatprep.subr.mxu0 0.0
        %9606 = vmatpush1.msra.mxu0 %v9591
        %9607 = vmatprep.subr.mxu0 0.0
        %9608 = vmatpush1.msra.mxu0 %v9590
        %9609 = vmatprep.subr.mxu0 0.0
        %9610 = vmatpush1.msra.mxu0 %v9589
        %9611 = vmatprep.subr.mxu0 0.0
        %9612 = vmatpush1.msra.mxu0 %v9588
        %9613 = vmatprep.subr.mxu0 0.0
        %9614 = vmatpush1.msra.mxu0 %v9587
        %9615 = vmatprep.subr.mxu0 0.0
        %9616 = vmatpush1.msra.mxu0 %v9586
        %9617 = vmatprep.subr.mxu0 0.0
        %9618 = vmatpush1.msra.mxu0 %v9585
        %9619 = vmatprep.subr.mxu0 0.0
        %9620 = vmatpush1.msra.mxu0 %v9584
        %9621 = vmatprep.subr.mxu0 0.0
        %9622 = vmatpush1.msra.mxu0 %v9583
        %9623 = vmatprep.subr.mxu0 0.0
        %9624 = vmatpush1.msra.mxu0 %v9582
        %9625 = vmatprep.subr.mxu0 0.0
        %9626 = vmatpush1.msra.mxu0 %v9581
        %9627 = vmatprep.subr.mxu0 0.0
        %9628 = vmatpush1.msra.mxu0 %v9580
        %9629 = vmatprep.subr.mxu0 0.0
        %9630 = vmatpush1.msra.mxu0 %v9579
        %9631 = vmatprep.subr.mxu0 0.0
        %9632 = vmatpush1.msra.mxu0 %v9578
        %9633 = vmatprep.subr.mxu0 0.0
        %9634 = vmatpush2.msra.mxu0 0.0
        %9635 = vmatprep.subr.mxu0 0.0
        %9636 = vmatpush2.msra.mxu0 0.0
        %9637 = vmatprep.subr.mxu0 0.0
        %9638 = vmatpush2.msra.mxu0 0.0
        %9639 = vmatprep.subr.mxu0 0.0
        %9640 = vmatpush2.msra.mxu0 0.0
        %9641 = vmatprep.subr.mxu0 0.0
        %9642 = vmatpush2.msra.mxu0 0.0
        %9643 = vmatprep.subr.mxu0 0.0
        %9644 = vmatpush2.msra.mxu0 0.0
        %9645 = vmatprep.subr.mxu0 0.0
        %9646 = vmatpush2.msra.mxu0 0.0
        %9647 = vmatprep.subr.mxu0 0.0
        %9648 = vmatpush2.msra.mxu0 0.0
        %9649 = vmatprep.subr.mxu0 0.0
        %9650 = vmatpush2.msra.mxu0 0.0
        %9651 = vmatprep.subr.mxu0 0.0
        %9652 = vmatpush2.msra.mxu0 0.0
        %9653 = vmatprep.subr.mxu0 0.0
        %9654 = vmatpush2.msra.mxu0 0.0
        %9655 = vmatprep.subr.mxu0 0.0
        %9656 = vmatpush2.msra.mxu0 0.0
        %9657 = vmatprep.subr.mxu0 0.0
        %9658 = vmatpush2.msra.mxu0 0.0
        %9659 = vmatprep.subr.mxu0 0.0
        %9660 = vmatpush2.msra.mxu0 0.0
        %9661 = vmatprep.subr.mxu0 0.0
        %9662 = vmatpush2.msra.mxu0 0.0
        %9663 = vmatprep.subr.mxu0 0.0
        %9664 = vmatpush2.msra.mxu0 0.0
        %9665 = vmatprep.mubr.f32.mxu0 0.0
        %9666 = vmatmul.mubr.f32.gmra.mxu0 %v9577
        %v9667 = vpop.f32.mrf.mxu0
        %v9668 = vadd.f32 %v9599, %v9667
        %v9669 = vpop.f32.mrf.mxu0
        %9670 = vdwg.mxu0
        %v9671 = vmax.f32 %v9668, 0.0
        %v9672 = vld [vmem:[%s11] sm:$0xff]
        %v9673 = vld [vmem:[%s11 + $0x8] sm:$0xff]
        %v9674 = vld [vmem:[%s11 + $0x10] sm:$0xff]
        %v9675 = vld [vmem:[%s11 + $0x18] sm:$0xff]
        %v9676 = vld [vmem:[%s11 + $0x20] sm:$0xff]
        %v9677 = vld [vmem:[%s11 + $0x28] sm:$0xff]
        %v9678 = vld [vmem:[%s11 + $0x30] sm:$0xff]
        %v9679 = vld [vmem:[%s11 + $0x38] sm:$0xff]
        %v9680 = vld [vmem:[%s11 + $0x40] sm:$0xff]
        %v9681 = vld [vmem:[%s11 + $0x48] sm:$0xff]
        %v9682 = vld [vmem:[%s11 + $0x50] sm:$0xff]
        %v9683 = vld [vmem:[%s11 + $0x58] sm:$0xff]
        %v9684 = vld [vmem:[%s11 + $0x60] sm:$0xff]
        %v9685 = vld [vmem:[%s11 + $0x68] sm:$0xff]
        %v9686 = vld [vmem:[%s11 + $0x70] sm:$0xff]
        %v9687 = vld [vmem:[%s11 + $0x78] sm:$0xff]
        %v9688 = vld [vmem:[%s12] sm:$0x1]
        %v9690 = vlaneseq
        %v9691 = vshrl.u32 %v9690, 7
        %v9692 = vsub.s32 0, %v9691
        %v9693 = vrot.slane %v9688, %v9692
        %9695 = vmatprep.subr.mxu0 0.0
        %9696 = vmatpush1.msra.mxu0 %v9687
        %9697 = vmatprep.subr.mxu0 0.0
        %9698 = vmatpush1.msra.mxu0 %v9686
        %9699 = vmatprep.subr.mxu0 0.0
        %9700 = vmatpush1.msra.mxu0 %v9685
        %9701 = vmatprep.subr.mxu0 0.0
        %9702 = vmatpush1.msra.mxu0 %v9684
        %9703 = vmatprep.subr.mxu0 0.0
        %9704 = vmatpush1.msra.mxu0 %v9683
        %9705 = vmatprep.subr.mxu0 0.0
        %9706 = vmatpush1.msra.mxu0 %v9682
        %9707 = vmatprep.subr.mxu0 0.0
        %9708 = vmatpush1.msra.mxu0 %v9681
        %9709 = vmatprep.subr.mxu0 0.0
        %9710 = vmatpush1.msra.mxu0 %v9680
        %9711 = vmatprep.subr.mxu0 0.0
        %9712 = vmatpush1.msra.mxu0 %v9679
        %9713 = vmatprep.subr.mxu0 0.0
        %9714 = vmatpush1.msra.mxu0 %v9678
        %9715 = vmatprep.subr.mxu0 0.0
        %9716 = vmatpush1.msra.mxu0 %v9677
        %9717 = vmatprep.subr.mxu0 0.0
        %9718 = vmatpush1.msra.mxu0 %v9676
        %9719 = vmatprep.subr.mxu0 0.0
        %9720 = vmatpush1.msra.mxu0 %v9675
        %9721 = vmatprep.subr.mxu0 0.0
        %9722 = vmatpush1.msra.mxu0 %v9674
        %9723 = vmatprep.subr.mxu0 0.0
        %9724 = vmatpush1.msra.mxu0 %v9673
        %9725 = vmatprep.subr.mxu0 0.0
        %9726 = vmatpush1.msra.mxu0 %v9672
        %9727 = vmatprep.subr.mxu0 0.0
        %9728 = vmatpush2.msra.mxu0 0.0
        %9729 = vmatprep.subr.mxu0 0.0
        %9730 = vmatpush2.msra.mxu0 0.0
        %9731 = vmatprep.subr.mxu0 0.0
        %9732 = vmatpush2.msra.mxu0 0.0
        %9733 = vmatprep.subr.mxu0 0.0
        %9734 = vmatpush2.msra.mxu0 0.0
        %9735 = vmatprep.subr.mxu0 0.0
        %9736 = vmatpush2.msra.mxu0 0.0
        %9737 = vmatprep.subr.mxu0 0.0
        %9738 = vmatpush2.msra.mxu0 0.0
        %9739 = vmatprep.subr.mxu0 0.0
        %9740 = vmatpush2.msra.mxu0 0.0
        %9741 = vmatprep.subr.mxu0 0.0
        %9742 = vmatpush2.msra.mxu0 0.0
        %9743 = vmatprep.subr.mxu0 0.0
        %9744 = vmatpush2.msra.mxu0 0.0
        %9745 = vmatprep.subr.mxu0 0.0
        %9746 = vmatpush2.msra.mxu0 0.0
        %9747 = vmatprep.subr.mxu0 0.0
        %9748 = vmatpush2.msra.mxu0 0.0
        %9749 = vmatprep.subr.mxu0 0.0
        %9750 = vmatpush2.msra.mxu0 0.0
        %9751 = vmatprep.subr.mxu0 0.0
        %9752 = vmatpush2.msra.mxu0 0.0
        %9753 = vmatprep.subr.mxu0 0.0
        %9754 = vmatpush2.msra.mxu0 0.0
        %9755 = vmatprep.subr.mxu0 0.0
        %9756 = vmatpush2.msra.mxu0 0.0
        %9757 = vmatprep.subr.mxu0 0.0
        %9758 = vmatpush2.msra.mxu0 0.0
        %9759 = vmatprep.mubr.f32.mxu0 0.0
        %9760 = vmatmul.mubr.f32.gmra.mxu0 %v9671
        %v9761 = vpop.f32.mrf.mxu0
        %v9762 = vadd.f32 %v9693, %v9761
        %v9763 = vpop.f32.mrf.mxu0
        %9764 = vdwg.mxu0
        %9765 = vst [vmem:[%s434] sm:$0xff] %v9762
        %s9766 = sand.u32 %s313, 1
        %s9767 = scalar_lea.sflag [#allocation3], %s9766
        %s9768 = sand.u32 %s313, 1
        %s9769 = smul.addr %s9768, 8
        %s9770 = scalar_lea.vmem [#allocation2], %s9769
        // Predicated region
        $region73: #{tpu_custom_call.1} parent=71 // pred_check
          %p9771 = pneg %p323
        $region74: #{tpu_custom_call.1} parent=71 // pred_check_branch
          %9773 = sbr.rel (%p9771) target = $region76
        $region75: #{tpu_custom_call.1} parent=71 // pred_region
          %s9775 = ssub.s32 128, 128
          %9776 = vsyncadd %s9767, %s9775
          %s9777 = smul.addr %s27, 128
          %s9778 = scalar_lea.hbm %s13, %s9777
          %s9780 = sshll.u32 %s9770, 4
          %s9781 = int_to_ptr.vmem [resolvable:$true] %s9780
          %9783 = dma.vmem_to_hbm [thread:$0]  %s9781, 128, %s9778, %s9767
        $region76: #{tpu_custom_call.1} parent=71 // pred_fallthru
          _
      $region72: #{tpu_custom_call.1} parent=5 // pred_fallthru
        _
      %p9784 = scmp.le.s32.totalorder 2, %s22
      // Predicated region
      $region77: #{tpu_custom_call.1} parent=5 // pred_check
        %p9785 = pneg %p9784
      $region78: #{tpu_custom_call.1} parent=5 // pred_check_branch
        %9787 = sbr.rel (%p9785) target = $region80
      $region79: #{tpu_custom_call.1} parent=5 // pred_region
        %s9788 = ssub.s32 %s22, 2
        // Predicated region
        $region81: #{tpu_custom_call.1} parent=79 // pred_check
          %p9789 = pneg %p329
        $region82: #{tpu_custom_call.1} parent=79 // pred_check_branch
          %9791 = sbr.rel (%p9789) target = $region84
        $region83: #{tpu_custom_call.1} parent=79 // pred_region
          %s9792 = sand.u32 %s314, 1
          %s9793 = scalar_lea.sflag [#allocation3], %s9792
          %s9794 = sand.u32 %s314, 1
          %s9795 = smul.addr %s9794, 8
          %s9796 = scalar_lea.vmem [#allocation2], %s9795
          %9797 = dma.done %s9793, 128
        $region84: #{tpu_custom_call.1} parent=79 // pred_fallthru
          _
      $region80: #{tpu_custom_call.1} parent=5 // pred_fallthru
        _
    $region6: #{tpu_custom_call.1} parent=1 // loop_footer
      %s26 = sadd.s32 1, %s22
    $region7: #{tpu_custom_call.1} parent=1 // loop_footer_branch
      %21 = sbr.rel target = $region3
    $region8: #{tpu_custom_call.1} parent=1 // loop_exit
      _
    %9798 = vsyncpa [#allocation3], 1
    %s9799 = scalar_lea.sflag [#allocation3], 1
    %9800 = vsyncpa %s9799, 1

</llo_original>
